<compile_context>
chip_gen: v7x
topology: tpu7x:2x2x1
jax: 0.10.0
libtpu: 0.0.40
codegen_flags: <defaults>
</compile_context>

<pallas_src>
import jax
import jax.numpy as jnp
from jax.experimental import pallas as pl
from jax.experimental.pallas import tpu as pltpu

D = 256            # embed dim (fixed by the module)
H = 8              # num heads
HD = D // H        # head dim = 32
FF = 256           # TODO(synk): Transformer_layer FFN hidden width is not shown upstream; assume 256.
CONV_OUT = 128     # Conv1d out_channels
EPS = 1e-5


def _layer_norm(x, w, b):
    mu = jnp.mean(x, axis=-1, keepdims=True)
    var = jnp.mean((x - mu) ** 2, axis=-1, keepdims=True)
    return (x - mu) * jax.lax.rsqrt(var + EPS) * w + b


def make_fused_kernel(batch, seq_len):
    """Builds the fused forward kernel for static (batch, seq_len)."""
    BS = batch * seq_len
    scale = 1.0 / float(HD) ** 0.5

    def kernel(x_ref, pe_ref,
               wqkv_ref, bqkv_ref, wo_ref, bo_ref,
               ln1w_ref, ln1b_ref,
               w1_ref, b1_ref, w2_ref, b2_ref,
               ln2w_ref, ln2b_ref,
               wc_ref, bc_ref, bnw_ref, bnb_ref, wl_ref, bl_ref,
               o_ref, ctx_scr):
        pe = pe_ref[...]                     # (BS, D) positional encoding, tiled per batch

        def encoder_layer(x, l):
            """Post-norm transformer encoder layer on (BS, D) f32 activations."""
            xb = x.astype(jnp.bfloat16)
            # Fused lane-dense QKV: one (BS,256)@(256,768) matmul, f32 accumulation.
            qkv = jnp.dot(xb, wqkv_ref[l],
                          preferred_element_type=jnp.float32) + bqkv_ref[l]   # (BS, 3D)
            # Per-batch, per-head attention. Scores are (B, S, S): no cross-batch work,
            # no mask.  Head slices are static lane slices; reshapes only split/merge
            # the row (sublane) axis, the lane dim stays fixed.
            for h in range(H):
                qh = qkv[:, h * HD:(h + 1) * HD].reshape(batch, seq_len, HD)
                kh = qkv[:, D + h * HD:D + (h + 1) * HD].reshape(batch, seq_len, HD)
                vh = qkv[:, 2 * D + h * HD:2 * D + (h + 1) * HD].reshape(batch, seq_len, HD)
                s = jnp.einsum('bqd,bkd->bqk',
                               qh.astype(jnp.bfloat16), kh.astype(jnp.bfloat16),
                               preferred_element_type=jnp.float32) * scale    # (B, S, S)
                s = s - jnp.max(s, axis=-1, keepdims=True)
                p = jnp.exp(s)
                p = p * pl.reciprocal(jnp.sum(p, axis=-1, keepdims=True), approx=True)
                ctxh = jnp.einsum('bqk,bkd->bqd',
                                  p.astype(jnp.bfloat16), vh.astype(jnp.bfloat16),
                                  preferred_element_type=jnp.float32)         # (B, S, HD)
                ctx_scr[:, h * HD:(h + 1) * HD] = ctxh.reshape(BS, HD)
            # Output projection: ONE K=256 matmul on head-concatenated context.
            attn = jnp.dot(ctx_scr[...].astype(jnp.bfloat16), wo_ref[l],
                           preferred_element_type=jnp.float32) + bo_ref[l]    # (BS, D)
            y = _layer_norm(x + attn, ln1w_ref[l], ln1b_ref[l])
            h1 = jnp.dot(y.astype(jnp.bfloat16), w1_ref[l],
                         preferred_element_type=jnp.float32) + b1_ref[l]
            h1 = jnp.maximum(h1, 0.0)
            f = jnp.dot(h1.astype(jnp.bfloat16), w2_ref[l],
                        preferred_element_type=jnp.float32) + b2_ref[l]
            return _layer_norm(y + f, ln2w_ref[l], ln2b_ref[l])

        x = x_ref[...]                       # (BS, D), rows are batch-major (b*S + s)
        x = encoder_layer(x + pe, 0)         # block 1 (positional_encoding=True)
        x = encoder_layer(x + pe, 1)         # block 2 (positional_encoding=True)

        # ---- head ---------------------------------------------------------------
        # permute(0,2,1) + Conv1d(kernel=seq_len) + squeeze is a single contraction
        # over (s, d): conv = x.reshape(B, S*D) @ Wc_flat.  The (B, S*D) operand is
        # assembled with lane-aligned (256-wide) concatenation of per-step slices.
        x3 = x.reshape(batch, seq_len, D)
        xflat = jnp.concatenate([x3[:, s, :] for s in range(seq_len)], axis=-1)  # (B, S*D)
        conv = jnp.dot(xflat.astype(jnp.bfloat16), wc_ref[...],
                       preferred_element_type=jnp.float32) + bc_ref[...]         # (B, 128)
        # BatchNorm1d, training-mode (biased) batch statistics over the batch axis.
        mu = jnp.mean(conv, axis=0, keepdims=True)
        var = jnp.mean((conv - mu) ** 2, axis=0, keepdims=True)
        bn = (conv - mu) * jax.lax.rsqrt(var + EPS) * bnw_ref[...] + bnb_ref[...]
        # Linear(128, 2) kept lane-dense: weight zero-padded to 128 output lanes,
        # the real (B, 2) result is sliced out in the wrapper.
        y = jnp.dot(bn.astype(jnp.bfloat16), wl_ref[...],
                    preferred_element_type=jnp.float32) + bl_ref[...]
        o_ref[...] = jnp.tanh(y).astype(o_ref.dtype)

    return kernel


# -----------------------------------------------------------------------------
# Parameter init (deterministic, synthetic) and trace-time packing
# -----------------------------------------------------------------------------
def init_transformer_params(key):
    ks = jax.random.split(key, 4)
    return dict(
        # x @ W layout; columns = [q | k | v], head h of each at cols h*HD:(h+1)*HD.
        # NOTE: real PyTorch in_proj_weight is (3D, D) for x @ W^T — transpose when loading.
        wqkv=jax.random.normal(ks[0], (D, 3 * D), jnp.float32) * 0.02,
        bqkv=jnp.zeros((3 * D,), jnp.float32),
        wo=jax.random.normal(ks[1], (D, D), jnp.float32) * 0.02,
        bo=jnp.zeros((D,), jnp.float32),
        ln1w=jnp.ones((D,), jnp.float32), ln1b=jnp.zeros((D,), jnp.float32),
        w1=jax.random.normal(ks[2], (D, FF), jnp.float32) * 0.02,
        b1=jnp.zeros((FF,), jnp.float32),
        w2=jax.random.normal(ks[3], (FF, D), jnp.float32) * 0.02,
        b2=jnp.zeros((D,), jnp.float32),
        ln2w=jnp.ones((D,), jnp.float32), ln2b=jnp.zeros((D,), jnp.float32),
    )


def init_head_params(key, seq_len):
    ks = jax.random.split(key, 2)
    return dict(
        # PyTorch Conv1d weight layout: (out=128, in=256, kernel=seq_len)
        conv_w=jax.random.normal(ks[0], (CONV_OUT, D, seq_len), jnp.float32) * 0.02,
        conv_b=jnp.zeros((CONV_OUT,), jnp.float32),
        bn_w=jnp.ones((CONV_OUT,), jnp.float32),
        bn_b=jnp.zeros((CONV_OUT,), jnp.float32),
        # PyTorch Linear(128, 2) weight: (2, 128)
        lin_w=jax.random.normal(ks[1], (2, CONV_OUT), jnp.float32) * 0.05,
        lin_b=jnp.zeros((2,), jnp.float32),
    )


def sinusoidal_pe(seq_len, d):
    pos = jnp.arange(seq_len, dtype=jnp.float32)[:, None]
    i = jnp.arange(0, d, 2, dtype=jnp.float32)
    ang = pos / jnp.power(10000.0, i / d)
    pe = jnp.zeros((seq_len, d), jnp.float32)
    pe = pe.at[:, 0::2].set(jnp.sin(ang))
    pe = pe.at[:, 1::2].set(jnp.cos(ang))
    return pe


def _pack_layers(p1, p2):
    """Stack the two layers' params on a leading axis, matmul weights in bf16."""
    def stk(f):
        return jnp.stack([f(p1), f(p2)], axis=0)

    return dict(
        wqkv=stk(lambda p: p['wqkv']).astype(jnp.bfloat16),        # (2, D, 3D)
        bqkv=stk(lambda p: p['bqkv'].reshape(1, 3 * D)),
        wo=stk(lambda p: p['wo']).astype(jnp.bfloat16),            # (2, D, D)
        bo=stk(lambda p: p['bo'].reshape(1, D)),
        ln1w=stk(lambda p: p['ln1w'].reshape(1, D)),
        ln1b=stk(lambda p: p['ln1b'].reshape(1, D)),
        w1=stk(lambda p: p['w1']).astype(jnp.bfloat16),            # (2, D, FF)
        b1=stk(lambda p: p['b1'].reshape(1, FF)),
        w2=stk(lambda p: p['w2']).astype(jnp.bfloat16),            # (2, FF, D)
        b2=stk(lambda p: p['b2'].reshape(1, D)),
        ln2w=stk(lambda p: p['ln2w'].reshape(1, D)),
        ln2b=stk(lambda p: p['ln2b'].reshape(1, D)),
    )


def _pack_head(ph, seq_len):
    # (C, D, S) -> (S, D, C) -> flat (S*D, C) so conv is one K=S*D matmul.
    wc = jnp.transpose(ph['conv_w'], (2, 1, 0)).reshape(seq_len * D, CONV_OUT)
    bc = ph['conv_b'].reshape(1, CONV_OUT)
    bnw = ph['bn_w'].reshape(1, CONV_OUT)
    bnb = ph['bn_b'].reshape(1, CONV_OUT)
    wl = jnp.zeros((CONV_OUT, CONV_OUT), jnp.float32)
    wl = wl.at[:, :2].set(ph['lin_w'].T)                           # lane-dense pad
    bl = jnp.zeros((1, CONV_OUT), jnp.float32).at[:, :2].set(ph['lin_b'])
    return dict(wc=wc.astype(jnp.bfloat16), bc=bc, bnw=bnw, bnb=bnb,
                wl=wl.astype(jnp.bfloat16), bl=bl)


# -----------------------------------------------------------------------------
# Full forward pass (single fused pallas_call)
# -----------------------------------------------------------------------------
def transformer_model_b1_forward(x, p1, p2, ph):
    B, S, _ = x.shape
    BS = B * S
    lp = _pack_layers(p1, p2)
    hp = _pack_head(ph, S)
    pe = sinusoidal_pe(S, D)

    x_rows = x.reshape(BS, D)                       # fold batch into the matmul M dim
    pe_rows = jnp.tile(pe, (B, 1))                  # PE add happens inside the kernel

    inputs = [x_rows, pe_rows,
              lp['wqkv'], lp['bqkv'], lp['wo'], lp['bo'],
              lp['ln1w'], lp['ln1b'],
              lp['w1'], lp['b1'], lp['w2'], lp['b2'],
              lp['ln2w'], lp['ln2b'],
              hp['wc'], hp['bc'], hp['bnw'], hp['bnb'], hp['wl'], hp['bl']]

    out_padded = pl.pallas_call(
        make_fused_kernel(B, S),
        out_shape=jax.ShapeDtypeStruct((B, CONV_OUT), jnp.float32),
        in_specs=[pl.BlockSpec(memory_space=pltpu.MemorySpace.VMEM)] * len(inputs),
        out_specs=pl.BlockSpec(memory_space=pltpu.MemorySpace.VMEM),
        scratch_shapes=[pltpu.VMEM((BS, D), jnp.float32)],   # head-concat context buffer
    )(*inputs)
    return out_padded[:, :2]                        # real Linear(128, 2) outputs


if __name__ == "__main__":
    batch, seq_len = 2, 8
    key = jax.random.PRNGKey(0)
    kx, k1, k2, kh = jax.random.split(key, 4)

    x = jax.random.normal(kx, (batch, seq_len, D), jnp.float32)
    p1 = init_transformer_params(k1)
    p2 = init_transformer_params(k2)
    ph = init_head_params(kh, seq_len)

    out = jax.jit(transformer_model_b1_forward)(x, p1, p2, ph)
    jax.block_until_ready(out)
    assert out.shape == (batch, 2), out.shape
    print("KERNEL_OK")
</pallas_src>

<mosaic_0001>
module attributes {stable_mosaic.version = 11 : i64} {
  func.func @kernel(%arg0: memref<16x256xf32, #tpu.memory_space<vmem>>, %arg1: memref<16x256xf32, #tpu.memory_space<vmem>>, %arg2: memref<2x256x768xbf16, #tpu.memory_space<vmem>>, %arg3: memref<2x1x768xf32, #tpu.memory_space<vmem>>, %arg4: memref<2x256x256xbf16, #tpu.memory_space<vmem>>, %arg5: memref<2x1x256xf32, #tpu.memory_space<vmem>>, %arg6: memref<2x1x256xf32, #tpu.memory_space<vmem>>, %arg7: memref<2x1x256xf32, #tpu.memory_space<vmem>>, %arg8: memref<2x256x256xbf16, #tpu.memory_space<vmem>>, %arg9: memref<2x1x256xf32, #tpu.memory_space<vmem>>, %arg10: memref<2x256x256xbf16, #tpu.memory_space<vmem>>, %arg11: memref<2x1x256xf32, #tpu.memory_space<vmem>>, %arg12: memref<2x1x256xf32, #tpu.memory_space<vmem>>, %arg13: memref<2x1x256xf32, #tpu.memory_space<vmem>>, %arg14: memref<2048x128xbf16, #tpu.memory_space<vmem>>, %arg15: memref<1x128xf32, #tpu.memory_space<vmem>>, %arg16: memref<1x128xf32, #tpu.memory_space<vmem>>, %arg17: memref<1x128xf32, #tpu.memory_space<vmem>>, %arg18: memref<128x128xbf16, #tpu.memory_space<vmem>>, %arg19: memref<1x128xf32, #tpu.memory_space<vmem>>, %arg20: memref<2x128xf32, #tpu.memory_space<vmem>>, %arg21: memref<16x256xf32, #tpu.memory_space<vmem>>) attributes {dimension_semantics = [], scalar_prefetch = 0 : i64, scratch_operands = 1 : i64, tpu.core_type = #tpu.core_type<tc>} {
    %c0 = arith.constant 0 : index
    %c0_0 = arith.constant 0 : index
    %0 = vector.load %arg1[%c0, %c0_0] : memref<16x256xf32, #tpu.memory_space<vmem>>, vector<16x256xf32>
    %c0_1 = arith.constant 0 : index
    %c0_2 = arith.constant 0 : index
    %1 = vector.load %arg0[%c0_1, %c0_2] : memref<16x256xf32, #tpu.memory_space<vmem>>, vector<16x256xf32>
    %2 = arith.addf %1, %0 : vector<16x256xf32>
    %3 = arith.truncf %2 : vector<16x256xf32> to vector<16x256xbf16>
    %c0_3 = arith.constant 0 : index
    %c0_4 = arith.constant 0 : index
    %c0_5 = arith.constant 0 : index
    %4 = vector.load %arg2[%c0_3, %c0_4, %c0_5] : memref<2x256x768xbf16, #tpu.memory_space<vmem>>, vector<1x256x768xbf16>
    %5 = vector.shape_cast %4 : vector<1x256x768xbf16> to vector<256x768xbf16>
    %cst = arith.constant dense<0.000000e+00> : vector<16x768xf32>
    %6 = tpu.matmul %3, %5, %cst {dimension_numbers = #tpu.dot_dimension_numbers<[1], [0], [0], [1], [0, 0, 1, 1], [], []>} : vector<16x256xbf16>, vector<256x768xbf16>, vector<16x768xf32> -> vector<16x768xf32>
    %c0_6 = arith.constant 0 : index
    %c0_7 = arith.constant 0 : index
    %c0_8 = arith.constant 0 : index
    %7 = vector.load %arg3[%c0_6, %c0_7, %c0_8] : memref<2x1x768xf32, #tpu.memory_space<vmem>>, vector<1x1x768xf32>
    %8 = vector.shape_cast %7 : vector<1x1x768xf32> to vector<1x768xf32>
    %9 = vector.broadcast %8 : vector<1x768xf32> to vector<16x768xf32>
    %10 = arith.addf %6, %9 : vector<16x768xf32>
    %11 = vector.extract_strided_slice %10 {offsets = [0, 0], sizes = [16, 32], strides = [1, 1]} : vector<16x768xf32> to vector<16x32xf32>
    %12 = vector.shape_cast %11 : vector<16x32xf32> to vector<2x8x32xf32>
    %13 = vector.extract_strided_slice %10 {offsets = [0, 256], sizes = [16, 32], strides = [1, 1]} : vector<16x768xf32> to vector<16x32xf32>
    %14 = vector.shape_cast %13 : vector<16x32xf32> to vector<2x8x32xf32>
    %15 = vector.extract_strided_slice %10 {offsets = [0, 512], sizes = [16, 32], strides = [1, 1]} : vector<16x768xf32> to vector<16x32xf32>
    %16 = vector.shape_cast %15 : vector<16x32xf32> to vector<2x8x32xf32>
    %17 = arith.truncf %12 : vector<2x8x32xf32> to vector<2x8x32xbf16>
    %18 = arith.truncf %14 : vector<2x8x32xf32> to vector<2x8x32xbf16>
    "tpu.trace_start"() <{level = 10 : i32, message = "bqd,bkd->bqk"}> : () -> ()
    %cst_9 = arith.constant dense<0.000000e+00> : vector<2x8x8xf32>
    %19 = tpu.matmul %17, %18, %cst_9 {dimension_numbers = #tpu.dot_dimension_numbers<[2], [2], [1], [1], [0, 0, 0, 1, 1, 1], [0], [0]>} : vector<2x8x32xbf16>, vector<2x8x32xbf16>, vector<2x8x8xf32> -> vector<2x8x8xf32>
    "tpu.trace_stop"() : () -> ()
    %cst_10 = arith.constant 0.176776692 : f32
    %20 = vector.broadcast %cst_10 : f32 to vector<2x8x8xf32>
    %21 = arith.mulf %19, %20 : vector<2x8x8xf32>
    %cst_11 = arith.constant dense<0xFF800000> : vector<2x8xf32>
    %22 = vector.multi_reduction <maximumf>, %21, %cst_11 [2] : vector<2x8x8xf32> to vector<2x8xf32>
    %23 = vector.shape_cast %22 : vector<2x8xf32> to vector<2x8x1xf32>
    %24 = vector.broadcast %23 : vector<2x8x1xf32> to vector<2x8x8xf32>
    %25 = arith.subf %21, %24 : vector<2x8x8xf32>
    %26 = math.exp %25 : vector<2x8x8xf32>
    %cst_12 = arith.constant dense<0.000000e+00> : vector<2x8xf32>
    %27 = vector.multi_reduction <add>, %26, %cst_12 [2] : vector<2x8x8xf32> to vector<2x8xf32>
    %28 = vector.shape_cast %27 : vector<2x8xf32> to vector<2x8x1xf32>
    %29 = tpu.reciprocal %28 {approx = true} : vector<2x8x1xf32> -> vector<2x8x1xf32>
    %30 = vector.broadcast %29 : vector<2x8x1xf32> to vector<2x8x8xf32>
    %31 = arith.mulf %26, %30 : vector<2x8x8xf32>
    %32 = arith.truncf %31 : vector<2x8x8xf32> to vector<2x8x8xbf16>
    %33 = arith.truncf %16 : vector<2x8x32xf32> to vector<2x8x32xbf16>
    "tpu.trace_start"() <{level = 10 : i32, message = "bqk,bkd->bqd"}> : () -> ()
    %cst_13 = arith.constant dense<0.000000e+00> : vector<2x8x32xf32>
    %34 = tpu.matmul %32, %33, %cst_13 {dimension_numbers = #tpu.dot_dimension_numbers<[2], [1], [1], [2], [0, 0, 0, 1, 1, 2], [0], [0]>} : vector<2x8x8xbf16>, vector<2x8x32xbf16>, vector<2x8x32xf32> -> vector<2x8x32xf32>
    "tpu.trace_stop"() : () -> ()
    %35 = vector.shape_cast %34 : vector<2x8x32xf32> to vector<16x32xf32>
    %c0_14 = arith.constant 0 : index
    %c0_15 = arith.constant 0 : index
    %36 = vector.load %arg21[%c0_14, %c0_15] : memref<16x256xf32, #tpu.memory_space<vmem>>, vector<16x32xf32>
    tpu.vector_store %arg21[%c0_14, %c0_15], %35 {strides = array<i32>} : memref<16x256xf32, #tpu.memory_space<vmem>>, vector<16x32xf32>,
    %37 = vector.extract_strided_slice %10 {offsets = [0, 32], sizes = [16, 32], strides = [1, 1]} : vector<16x768xf32> to vector<16x32xf32>
    %38 = vector.shape_cast %37 : vector<16x32xf32> to vector<2x8x32xf32>
    %39 = vector.extract_strided_slice %10 {offsets = [0, 288], sizes = [16, 32], strides = [1, 1]} : vector<16x768xf32> to vector<16x32xf32>
    %40 = vector.shape_cast %39 : vector<16x32xf32> to vector<2x8x32xf32>
    %41 = vector.extract_strided_slice %10 {offsets = [0, 544], sizes = [16, 32], strides = [1, 1]} : vector<16x768xf32> to vector<16x32xf32>
    %42 = vector.shape_cast %41 : vector<16x32xf32> to vector<2x8x32xf32>
    %43 = arith.truncf %38 : vector<2x8x32xf32> to vector<2x8x32xbf16>
    %44 = arith.truncf %40 : vector<2x8x32xf32> to vector<2x8x32xbf16>
    "tpu.trace_start"() <{level = 10 : i32, message = "bqd,bkd->bqk"}> : () -> ()
    %cst_16 = arith.constant dense<0.000000e+00> : vector<2x8x8xf32>
    %45 = tpu.matmul %43, %44, %cst_16 {dimension_numbers = #tpu.dot_dimension_numbers<[2], [2], [1], [1], [0, 0, 0, 1, 1, 1], [0], [0]>} : vector<2x8x32xbf16>, vector<2x8x32xbf16>, vector<2x8x8xf32> -> vector<2x8x8xf32>
    "tpu.trace_stop"() : () -> ()
    %cst_17 = arith.constant 0.176776692 : f32
    %46 = vector.broadcast %cst_17 : f32 to vector<2x8x8xf32>
    %47 = arith.mulf %45, %46 : vector<2x8x8xf32>
    %cst_18 = arith.constant dense<0xFF800000> : vector<2x8xf32>
    %48 = vector.multi_reduction <maximumf>, %47, %cst_18 [2] : vector<2x8x8xf32> to vector<2x8xf32>
    %49 = vector.shape_cast %48 : vector<2x8xf32> to vector<2x8x1xf32>
    %50 = vector.broadcast %49 : vector<2x8x1xf32> to vector<2x8x8xf32>
    %51 = arith.subf %47, %50 : vector<2x8x8xf32>
    %52 = math.exp %51 : vector<2x8x8xf32>
    %cst_19 = arith.constant dense<0.000000e+00> : vector<2x8xf32>
    %53 = vector.multi_reduction <add>, %52, %cst_19 [2] : vector<2x8x8xf32> to vector<2x8xf32>
    %54 = vector.shape_cast %53 : vector<2x8xf32> to vector<2x8x1xf32>
    %55 = tpu.reciprocal %54 {approx = true} : vector<2x8x1xf32> -> vector<2x8x1xf32>
    %56 = vector.broadcast %55 : vector<2x8x1xf32> to vector<2x8x8xf32>
    %57 = arith.mulf %52, %56 : vector<2x8x8xf32>
    %58 = arith.truncf %57 : vector<2x8x8xf32> to vector<2x8x8xbf16>
    %59 = arith.truncf %42 : vector<2x8x32xf32> to vector<2x8x32xbf16>
    "tpu.trace_start"() <{level = 10 : i32, message = "bqk,bkd->bqd"}> : () -> ()
    %cst_20 = arith.constant dense<0.000000e+00> : vector<2x8x32xf32>
    %60 = tpu.matmul %58, %59, %cst_20 {dimension_numbers = #tpu.dot_dimension_numbers<[2], [1], [1], [2], [0, 0, 0, 1, 1, 2], [0], [0]>} : vector<2x8x8xbf16>, vector<2x8x32xbf16>, vector<2x8x32xf32> -> vector<2x8x32xf32>
    "tpu.trace_stop"() : () -> ()
    %61 = vector.shape_cast %60 : vector<2x8x32xf32> to vector<16x32xf32>
    %c0_21 = arith.constant 0 : index
    %c32 = arith.constant 32 : index
    %62 = vector.load %arg21[%c0_21, %c32] : memref<16x256xf32, #tpu.memory_space<vmem>>, vector<16x32xf32>
    tpu.vector_store %arg21[%c0_21, %c32], %61 {strides = array<i32>} : memref<16x256xf32, #tpu.memory_space<vmem>>, vector<16x32xf32>,
    %63 = vector.extract_strided_slice %10 {offsets = [0, 64], sizes = [16, 32], strides = [1, 1]} : vector<16x768xf32> to vector<16x32xf32>
    %64 = vector.shape_cast %63 : vector<16x32xf32> to vector<2x8x32xf32>
    %65 = vector.extract_strided_slice %10 {offsets = [0, 320], sizes = [16, 32], strides = [1, 1]} : vector<16x768xf32> to vector<16x32xf32>
    %66 = vector.shape_cast %65 : vector<16x32xf32> to vector<2x8x32xf32>
    %67 = vector.extract_strided_slice %10 {offsets = [0, 576], sizes = [16, 32], strides = [1, 1]} : vector<16x768xf32> to vector<16x32xf32>
    %68 = vector.shape_cast %67 : vector<16x32xf32> to vector<2x8x32xf32>
    %69 = arith.truncf %64 : vector<2x8x32xf32> to vector<2x8x32xbf16>
    %70 = arith.truncf %66 : vector<2x8x32xf32> to vector<2x8x32xbf16>
    "tpu.trace_start"() <{level = 10 : i32, message = "bqd,bkd->bqk"}> : () -> ()
    %cst_22 = arith.constant dense<0.000000e+00> : vector<2x8x8xf32>
    %71 = tpu.matmul %69, %70, %cst_22 {dimension_numbers = #tpu.dot_dimension_numbers<[2], [2], [1], [1], [0, 0, 0, 1, 1, 1], [0], [0]>} : vector<2x8x32xbf16>, vector<2x8x32xbf16>, vector<2x8x8xf32> -> vector<2x8x8xf32>
    "tpu.trace_stop"() : () -> ()
    %cst_23 = arith.constant 0.176776692 : f32
    %72 = vector.broadcast %cst_23 : f32 to vector<2x8x8xf32>
    %73 = arith.mulf %71, %72 : vector<2x8x8xf32>
    %cst_24 = arith.constant dense<0xFF800000> : vector<2x8xf32>
    %74 = vector.multi_reduction <maximumf>, %73, %cst_24 [2] : vector<2x8x8xf32> to vector<2x8xf32>
    %75 = vector.shape_cast %74 : vector<2x8xf32> to vector<2x8x1xf32>
    %76 = vector.broadcast %75 : vector<2x8x1xf32> to vector<2x8x8xf32>
    %77 = arith.subf %73, %76 : vector<2x8x8xf32>
    %78 = math.exp %77 : vector<2x8x8xf32>
    %cst_25 = arith.constant dense<0.000000e+00> : vector<2x8xf32>
    %79 = vector.multi_reduction <add>, %78, %cst_25 [2] : vector<2x8x8xf32> to vector<2x8xf32>
    %80 = vector.shape_cast %79 : vector<2x8xf32> to vector<2x8x1xf32>
    %81 = tpu.reciprocal %80 {approx = true} : vector<2x8x1xf32> -> vector<2x8x1xf32>
    %82 = vector.broadcast %81 : vector<2x8x1xf32> to vector<2x8x8xf32>
    %83 = arith.mulf %78, %82 : vector<2x8x8xf32>
    %84 = arith.truncf %83 : vector<2x8x8xf32> to vector<2x8x8xbf16>
    %85 = arith.truncf %68 : vector<2x8x32xf32> to vector<2x8x32xbf16>
    "tpu.trace_start"() <{level = 10 : i32, message = "bqk,bkd->bqd"}> : () -> ()
    %cst_26 = arith.constant dense<0.000000e+00> : vector<2x8x32xf32>
    %86 = tpu.matmul %84, %85, %cst_26 {dimension_numbers = #tpu.dot_dimension_numbers<[2], [1], [1], [2], [0, 0, 0, 1, 1, 2], [0], [0]>} : vector<2x8x8xbf16>, vector<2x8x32xbf16>, vector<2x8x32xf32> -> vector<2x8x32xf32>
    "tpu.trace_stop"() : () -> ()
    %87 = vector.shape_cast %86 : vector<2x8x32xf32> to vector<16x32xf32>
    %c0_27 = arith.constant 0 : index
    %c64 = arith.constant 64 : index
    %88 = vector.load %arg21[%c0_27, %c64] : memref<16x256xf32, #tpu.memory_space<vmem>>, vector<16x32xf32>
    tpu.vector_store %arg21[%c0_27, %c64], %87 {strides = array<i32>} : memref<16x256xf32, #tpu.memory_space<vmem>>, vector<16x32xf32>,
    %89 = vector.extract_strided_slice %10 {offsets = [0, 96], sizes = [16, 32], strides = [1, 1]} : vector<16x768xf32> to vector<16x32xf32>
    %90 = vector.shape_cast %89 : vector<16x32xf32> to vector<2x8x32xf32>
    %91 = vector.extract_strided_slice %10 {offsets = [0, 352], sizes = [16, 32], strides = [1, 1]} : vector<16x768xf32> to vector<16x32xf32>
    %92 = vector.shape_cast %91 : vector<16x32xf32> to vector<2x8x32xf32>
    %93 = vector.extract_strided_slice %10 {offsets = [0, 608], sizes = [16, 32], strides = [1, 1]} : vector<16x768xf32> to vector<16x32xf32>
    %94 = vector.shape_cast %93 : vector<16x32xf32> to vector<2x8x32xf32>
    %95 = arith.truncf %90 : vector<2x8x32xf32> to vector<2x8x32xbf16>
    %96 = arith.truncf %92 : vector<2x8x32xf32> to vector<2x8x32xbf16>
    "tpu.trace_start"() <{level = 10 : i32, message = "bqd,bkd->bqk"}> : () -> ()
    %cst_28 = arith.constant dense<0.000000e+00> : vector<2x8x8xf32>
    %97 = tpu.matmul %95, %96, %cst_28 {dimension_numbers = #tpu.dot_dimension_numbers<[2], [2], [1], [1], [0, 0, 0, 1, 1, 1], [0], [0]>} : vector<2x8x32xbf16>, vector<2x8x32xbf16>, vector<2x8x8xf32> -> vector<2x8x8xf32>
    "tpu.trace_stop"() : () -> ()
    %cst_29 = arith.constant 0.176776692 : f32
    %98 = vector.broadcast %cst_29 : f32 to vector<2x8x8xf32>
    %99 = arith.mulf %97, %98 : vector<2x8x8xf32>
    %cst_30 = arith.constant dense<0xFF800000> : vector<2x8xf32>
    %100 = vector.multi_reduction <maximumf>, %99, %cst_30 [2] : vector<2x8x8xf32> to vector<2x8xf32>
    %101 = vector.shape_cast %100 : vector<2x8xf32> to vector<2x8x1xf32>
    %102 = vector.broadcast %101 : vector<2x8x1xf32> to vector<2x8x8xf32>
    %103 = arith.subf %99, %102 : vector<2x8x8xf32>
    %104 = math.exp %103 : vector<2x8x8xf32>
    %cst_31 = arith.constant dense<0.000000e+00> : vector<2x8xf32>
    %105 = vector.multi_reduction <add>, %104, %cst_31 [2] : vector<2x8x8xf32> to vector<2x8xf32>
    %106 = vector.shape_cast %105 : vector<2x8xf32> to vector<2x8x1xf32>
    %107 = tpu.reciprocal %106 {approx = true} : vector<2x8x1xf32> -> vector<2x8x1xf32>
    %108 = vector.broadcast %107 : vector<2x8x1xf32> to vector<2x8x8xf32>
    %109 = arith.mulf %104, %108 : vector<2x8x8xf32>
    %110 = arith.truncf %109 : vector<2x8x8xf32> to vector<2x8x8xbf16>
    %111 = arith.truncf %94 : vector<2x8x32xf32> to vector<2x8x32xbf16>
    "tpu.trace_start"() <{level = 10 : i32, message = "bqk,bkd->bqd"}> : () -> ()
    %cst_32 = arith.constant dense<0.000000e+00> : vector<2x8x32xf32>
    %112 = tpu.matmul %110, %111, %cst_32 {dimension_numbers = #tpu.dot_dimension_numbers<[2], [1], [1], [2], [0, 0, 0, 1, 1, 2], [0], [0]>} : vector<2x8x8xbf16>, vector<2x8x32xbf16>, vector<2x8x32xf32> -> vector<2x8x32xf32>
    "tpu.trace_stop"() : () -> ()
    %113 = vector.shape_cast %112 : vector<2x8x32xf32> to vector<16x32xf32>
    %c0_33 = arith.constant 0 : index
    %c96 = arith.constant 96 : index
    %114 = vector.load %arg21[%c0_33, %c96] : memref<16x256xf32, #tpu.memory_space<vmem>>, vector<16x32xf32>
    tpu.vector_store %arg21[%c0_33, %c96], %113 {strides = array<i32>} : memref<16x256xf32, #tpu.memory_space<vmem>>, vector<16x32xf32>,
    %115 = vector.extract_strided_slice %10 {offsets = [0, 128], sizes = [16, 32], strides = [1, 1]} : vector<16x768xf32> to vector<16x32xf32>
    %116 = vector.shape_cast %115 : vector<16x32xf32> to vector<2x8x32xf32>
    %117 = vector.extract_strided_slice %10 {offsets = [0, 384], sizes = [16, 32], strides = [1, 1]} : vector<16x768xf32> to vector<16x32xf32>
    %118 = vector.shape_cast %117 : vector<16x32xf32> to vector<2x8x32xf32>
    %119 = vector.extract_strided_slice %10 {offsets = [0, 640], sizes = [16, 32], strides = [1, 1]} : vector<16x768xf32> to vector<16x32xf32>
    %120 = vector.shape_cast %119 : vector<16x32xf32> to vector<2x8x32xf32>
    %121 = arith.truncf %116 : vector<2x8x32xf32> to vector<2x8x32xbf16>
    %122 = arith.truncf %118 : vector<2x8x32xf32> to vector<2x8x32xbf16>
    "tpu.trace_start"() <{level = 10 : i32, message = "bqd,bkd->bqk"}> : () -> ()
    %cst_34 = arith.constant dense<0.000000e+00> : vector<2x8x8xf32>
    %123 = tpu.matmul %121, %122, %cst_34 {dimension_numbers = #tpu.dot_dimension_numbers<[2], [2], [1], [1], [0, 0, 0, 1, 1, 1], [0], [0]>} : vector<2x8x32xbf16>, vector<2x8x32xbf16>, vector<2x8x8xf32> -> vector<2x8x8xf32>
    "tpu.trace_stop"() : () -> ()
    %cst_35 = arith.constant 0.176776692 : f32
    %124 = vector.broadcast %cst_35 : f32 to vector<2x8x8xf32>
    %125 = arith.mulf %123, %124 : vector<2x8x8xf32>
    %cst_36 = arith.constant dense<0xFF800000> : vector<2x8xf32>
    %126 = vector.multi_reduction <maximumf>, %125, %cst_36 [2] : vector<2x8x8xf32> to vector<2x8xf32>
    %127 = vector.shape_cast %126 : vector<2x8xf32> to vector<2x8x1xf32>
    %128 = vector.broadcast %127 : vector<2x8x1xf32> to vector<2x8x8xf32>
    %129 = arith.subf %125, %128 : vector<2x8x8xf32>
    %130 = math.exp %129 : vector<2x8x8xf32>
    %cst_37 = arith.constant dense<0.000000e+00> : vector<2x8xf32>
    %131 = vector.multi_reduction <add>, %130, %cst_37 [2] : vector<2x8x8xf32> to vector<2x8xf32>
    %132 = vector.shape_cast %131 : vector<2x8xf32> to vector<2x8x1xf32>
    %133 = tpu.reciprocal %132 {approx = true} : vector<2x8x1xf32> -> vector<2x8x1xf32>
    %134 = vector.broadcast %133 : vector<2x8x1xf32> to vector<2x8x8xf32>
    %135 = arith.mulf %130, %134 : vector<2x8x8xf32>
    %136 = arith.truncf %135 : vector<2x8x8xf32> to vector<2x8x8xbf16>
    %137 = arith.truncf %120 : vector<2x8x32xf32> to vector<2x8x32xbf16>
    "tpu.trace_start"() <{level = 10 : i32, message = "bqk,bkd->bqd"}> : () -> ()
    %cst_38 = arith.constant dense<0.000000e+00> : vector<2x8x32xf32>
    %138 = tpu.matmul %136, %137, %cst_38 {dimension_numbers = #tpu.dot_dimension_numbers<[2], [1], [1], [2], [0, 0, 0, 1, 1, 2], [0], [0]>} : vector<2x8x8xbf16>, vector<2x8x32xbf16>, vector<2x8x32xf32> -> vector<2x8x32xf32>
    "tpu.trace_stop"() : () -> ()
    %139 = vector.shape_cast %138 : vector<2x8x32xf32> to vector<16x32xf32>
    %c0_39 = arith.constant 0 : index
    %c128 = arith.constant 128 : index
    %140 = vector.load %arg21[%c0_39, %c128] : memref<16x256xf32, #tpu.memory_space<vmem>>, vector<16x32xf32>
    tpu.vector_store %arg21[%c0_39, %c128], %139 {strides = array<i32>} : memref<16x256xf32, #tpu.memory_space<vmem>>, vector<16x32xf32>,
    %141 = vector.extract_strided_slice %10 {offsets = [0, 160], sizes = [16, 32], strides = [1, 1]} : vector<16x768xf32> to vector<16x32xf32>
    %142 = vector.shape_cast %141 : vector<16x32xf32> to vector<2x8x32xf32>
    %143 = vector.extract_strided_slice %10 {offsets = [0, 416], sizes = [16, 32], strides = [1, 1]} : vector<16x768xf32> to vector<16x32xf32>
    %144 = vector.shape_cast %143 : vector<16x32xf32> to vector<2x8x32xf32>
    %145 = vector.extract_strided_slice %10 {offsets = [0, 672], sizes = [16, 32], strides = [1, 1]} : vector<16x768xf32> to vector<16x32xf32>
    %146 = vector.shape_cast %145 : vector<16x32xf32> to vector<2x8x32xf32>
    %147 = arith.truncf %142 : vector<2x8x32xf32> to vector<2x8x32xbf16>
    %148 = arith.truncf %144 : vector<2x8x32xf32> to vector<2x8x32xbf16>
    "tpu.trace_start"() <{level = 10 : i32, message = "bqd,bkd->bqk"}> : () -> ()
    %cst_40 = arith.constant dense<0.000000e+00> : vector<2x8x8xf32>
    %149 = tpu.matmul %147, %148, %cst_40 {dimension_numbers = #tpu.dot_dimension_numbers<[2], [2], [1], [1], [0, 0, 0, 1, 1, 1], [0], [0]>} : vector<2x8x32xbf16>, vector<2x8x32xbf16>, vector<2x8x8xf32> -> vector<2x8x8xf32>
    "tpu.trace_stop"() : () -> ()
    %cst_41 = arith.constant 0.176776692 : f32
    %150 = vector.broadcast %cst_41 : f32 to vector<2x8x8xf32>
    %151 = arith.mulf %149, %150 : vector<2x8x8xf32>
    %cst_42 = arith.constant dense<0xFF800000> : vector<2x8xf32>
    %152 = vector.multi_reduction <maximumf>, %151, %cst_42 [2] : vector<2x8x8xf32> to vector<2x8xf32>
    %153 = vector.shape_cast %152 : vector<2x8xf32> to vector<2x8x1xf32>
    %154 = vector.broadcast %153 : vector<2x8x1xf32> to vector<2x8x8xf32>
    %155 = arith.subf %151, %154 : vector<2x8x8xf32>
    %156 = math.exp %155 : vector<2x8x8xf32>
    %cst_43 = arith.constant dense<0.000000e+00> : vector<2x8xf32>
    %157 = vector.multi_reduction <add>, %156, %cst_43 [2] : vector<2x8x8xf32> to vector<2x8xf32>
    %158 = vector.shape_cast %157 : vector<2x8xf32> to vector<2x8x1xf32>
    %159 = tpu.reciprocal %158 {approx = true} : vector<2x8x1xf32> -> vector<2x8x1xf32>
    %160 = vector.broadcast %159 : vector<2x8x1xf32> to vector<2x8x8xf32>
    %161 = arith.mulf %156, %160 : vector<2x8x8xf32>
    %162 = arith.truncf %161 : vector<2x8x8xf32> to vector<2x8x8xbf16>
    %163 = arith.truncf %146 : vector<2x8x32xf32> to vector<2x8x32xbf16>
    "tpu.trace_start"() <{level = 10 : i32, message = "bqk,bkd->bqd"}> : () -> ()
    %cst_44 = arith.constant dense<0.000000e+00> : vector<2x8x32xf32>
    %164 = tpu.matmul %162, %163, %cst_44 {dimension_numbers = #tpu.dot_dimension_numbers<[2], [1], [1], [2], [0, 0, 0, 1, 1, 2], [0], [0]>} : vector<2x8x8xbf16>, vector<2x8x32xbf16>, vector<2x8x32xf32> -> vector<2x8x32xf32>
    "tpu.trace_stop"() : () -> ()
    %165 = vector.shape_cast %164 : vector<2x8x32xf32> to vector<16x32xf32>
    %c0_45 = arith.constant 0 : index
    %c160 = arith.constant 160 : index
    %166 = vector.load %arg21[%c0_45, %c160] : memref<16x256xf32, #tpu.memory_space<vmem>>, vector<16x32xf32>
    tpu.vector_store %arg21[%c0_45, %c160], %165 {strides = array<i32>} : memref<16x256xf32, #tpu.memory_space<vmem>>, vector<16x32xf32>,
    %167 = vector.extract_strided_slice %10 {offsets = [0, 192], sizes = [16, 32], strides = [1, 1]} : vector<16x768xf32> to vector<16x32xf32>
    %168 = vector.shape_cast %167 : vector<16x32xf32> to vector<2x8x32xf32>
    %169 = vector.extract_strided_slice %10 {offsets = [0, 448], sizes = [16, 32], strides = [1, 1]} : vector<16x768xf32> to vector<16x32xf32>
    %170 = vector.shape_cast %169 : vector<16x32xf32> to vector<2x8x32xf32>
    %171 = vector.extract_strided_slice %10 {offsets = [0, 704], sizes = [16, 32], strides = [1, 1]} : vector<16x768xf32> to vector<16x32xf32>
    %172 = vector.shape_cast %171 : vector<16x32xf32> to vector<2x8x32xf32>
    %173 = arith.truncf %168 : vector<2x8x32xf32> to vector<2x8x32xbf16>
    %174 = arith.truncf %170 : vector<2x8x32xf32> to vector<2x8x32xbf16>
    "tpu.trace_start"() <{level = 10 : i32, message = "bqd,bkd->bqk"}> : () -> ()
    %cst_46 = arith.constant dense<0.000000e+00> : vector<2x8x8xf32>
    %175 = tpu.matmul %173, %174, %cst_46 {dimension_numbers = #tpu.dot_dimension_numbers<[2], [2], [1], [1], [0, 0, 0, 1, 1, 1], [0], [0]>} : vector<2x8x32xbf16>, vector<2x8x32xbf16>, vector<2x8x8xf32> -> vector<2x8x8xf32>
    "tpu.trace_stop"() : () -> ()
    %cst_47 = arith.constant 0.176776692 : f32
    %176 = vector.broadcast %cst_47 : f32 to vector<2x8x8xf32>
    %177 = arith.mulf %175, %176 : vector<2x8x8xf32>
    %cst_48 = arith.constant dense<0xFF800000> : vector<2x8xf32>
    %178 = vector.multi_reduction <maximumf>, %177, %cst_48 [2] : vector<2x8x8xf32> to vector<2x8xf32>
    %179 = vector.shape_cast %178 : vector<2x8xf32> to vector<2x8x1xf32>
    %180 = vector.broadcast %179 : vector<2x8x1xf32> to vector<2x8x8xf32>
    %181 = arith.subf %177, %180 : vector<2x8x8xf32>
    %182 = math.exp %181 : vector<2x8x8xf32>
    %cst_49 = arith.constant dense<0.000000e+00> : vector<2x8xf32>
    %183 = vector.multi_reduction <add>, %182, %cst_49 [2] : vector<2x8x8xf32> to vector<2x8xf32>
    %184 = vector.shape_cast %183 : vector<2x8xf32> to vector<2x8x1xf32>
    %185 = tpu.reciprocal %184 {approx = true} : vector<2x8x1xf32> -> vector<2x8x1xf32>
    %186 = vector.broadcast %185 : vector<2x8x1xf32> to vector<2x8x8xf32>
    %187 = arith.mulf %182, %186 : vector<2x8x8xf32>
    %188 = arith.truncf %187 : vector<2x8x8xf32> to vector<2x8x8xbf16>
    %189 = arith.truncf %172 : vector<2x8x32xf32> to vector<2x8x32xbf16>
    "tpu.trace_start"() <{level = 10 : i32, message = "bqk,bkd->bqd"}> : () -> ()
    %cst_50 = arith.constant dense<0.000000e+00> : vector<2x8x32xf32>
    %190 = tpu.matmul %188, %189, %cst_50 {dimension_numbers = #tpu.dot_dimension_numbers<[2], [1], [1], [2], [0, 0, 0, 1, 1, 2], [0], [0]>} : vector<2x8x8xbf16>, vector<2x8x32xbf16>, vector<2x8x32xf32> -> vector<2x8x32xf32>
    "tpu.trace_stop"() : () -> ()
    %191 = vector.shape_cast %190 : vector<2x8x32xf32> to vector<16x32xf32>
    %c0_51 = arith.constant 0 : index
    %c192 = arith.constant 192 : index
    %192 = vector.load %arg21[%c0_51, %c192] : memref<16x256xf32, #tpu.memory_space<vmem>>, vector<16x32xf32>
    tpu.vector_store %arg21[%c0_51, %c192], %191 {strides = array<i32>} : memref<16x256xf32, #tpu.memory_space<vmem>>, vector<16x32xf32>,
    %193 = vector.extract_strided_slice %10 {offsets = [0, 224], sizes = [16, 32], strides = [1, 1]} : vector<16x768xf32> to vector<16x32xf32>
    %194 = vector.shape_cast %193 : vector<16x32xf32> to vector<2x8x32xf32>
    %195 = vector.extract_strided_slice %10 {offsets = [0, 480], sizes = [16, 32], strides = [1, 1]} : vector<16x768xf32> to vector<16x32xf32>
    %196 = vector.shape_cast %195 : vector<16x32xf32> to vector<2x8x32xf32>
    %197 = vector.extract_strided_slice %10 {offsets = [0, 736], sizes = [16, 32], strides = [1, 1]} : vector<16x768xf32> to vector<16x32xf32>
    %198 = vector.shape_cast %197 : vector<16x32xf32> to vector<2x8x32xf32>
    %199 = arith.truncf %194 : vector<2x8x32xf32> to vector<2x8x32xbf16>
    %200 = arith.truncf %196 : vector<2x8x32xf32> to vector<2x8x32xbf16>
    "tpu.trace_start"() <{level = 10 : i32, message = "bqd,bkd->bqk"}> : () -> ()
    %cst_52 = arith.constant dense<0.000000e+00> : vector<2x8x8xf32>
    %201 = tpu.matmul %199, %200, %cst_52 {dimension_numbers = #tpu.dot_dimension_numbers<[2], [2], [1], [1], [0, 0, 0, 1, 1, 1], [0], [0]>} : vector<2x8x32xbf16>, vector<2x8x32xbf16>, vector<2x8x8xf32> -> vector<2x8x8xf32>
    "tpu.trace_stop"() : () -> ()
    %cst_53 = arith.constant 0.176776692 : f32
    %202 = vector.broadcast %cst_53 : f32 to vector<2x8x8xf32>
    %203 = arith.mulf %201, %202 : vector<2x8x8xf32>
    %cst_54 = arith.constant dense<0xFF800000> : vector<2x8xf32>
    %204 = vector.multi_reduction <maximumf>, %203, %cst_54 [2] : vector<2x8x8xf32> to vector<2x8xf32>
    %205 = vector.shape_cast %204 : vector<2x8xf32> to vector<2x8x1xf32>
    %206 = vector.broadcast %205 : vector<2x8x1xf32> to vector<2x8x8xf32>
    %207 = arith.subf %203, %206 : vector<2x8x8xf32>
    %208 = math.exp %207 : vector<2x8x8xf32>
    %cst_55 = arith.constant dense<0.000000e+00> : vector<2x8xf32>
    %209 = vector.multi_reduction <add>, %208, %cst_55 [2] : vector<2x8x8xf32> to vector<2x8xf32>
    %210 = vector.shape_cast %209 : vector<2x8xf32> to vector<2x8x1xf32>
    %211 = tpu.reciprocal %210 {approx = true} : vector<2x8x1xf32> -> vector<2x8x1xf32>
    %212 = vector.broadcast %211 : vector<2x8x1xf32> to vector<2x8x8xf32>
    %213 = arith.mulf %208, %212 : vector<2x8x8xf32>
    %214 = arith.truncf %213 : vector<2x8x8xf32> to vector<2x8x8xbf16>
    %215 = arith.truncf %198 : vector<2x8x32xf32> to vector<2x8x32xbf16>
    "tpu.trace_start"() <{level = 10 : i32, message = "bqk,bkd->bqd"}> : () -> ()
    %cst_56 = arith.constant dense<0.000000e+00> : vector<2x8x32xf32>
    %216 = tpu.matmul %214, %215, %cst_56 {dimension_numbers = #tpu.dot_dimension_numbers<[2], [1], [1], [2], [0, 0, 0, 1, 1, 2], [0], [0]>} : vector<2x8x8xbf16>, vector<2x8x32xbf16>, vector<2x8x32xf32> -> vector<2x8x32xf32>
    "tpu.trace_stop"() : () -> ()
    %217 = vector.shape_cast %216 : vector<2x8x32xf32> to vector<16x32xf32>
    %c0_57 = arith.constant 0 : index
    %c224 = arith.constant 224 : index
    %218 = vector.load %arg21[%c0_57, %c224] : memref<16x256xf32, #tpu.memory_space<vmem>>, vector<16x32xf32>
    tpu.vector_store %arg21[%c0_57, %c224], %217 {strides = array<i32>} : memref<16x256xf32, #tpu.memory_space<vmem>>, vector<16x32xf32>,
    %c0_58 = arith.constant 0 : index
    %c0_59 = arith.constant 0 : index
    %219 = vector.load %arg21[%c0_58, %c0_59] : memref<16x256xf32, #tpu.memory_space<vmem>>, vector<16x256xf32>
    %220 = arith.truncf %219 : vector<16x256xf32> to vector<16x256xbf16>
    %c0_60 = arith.constant 0 : index
    %c0_61 = arith.constant 0 : index
    %c0_62 = arith.constant 0 : index
    %221 = vector.load %arg4[%c0_60, %c0_61, %c0_62] : memref<2x256x256xbf16, #tpu.memory_space<vmem>>, vector<1x256x256xbf16>
    %222 = vector.shape_cast %221 : vector<1x256x256xbf16> to vector<256x256xbf16>
    %cst_63 = arith.constant dense<0.000000e+00> : vector<16x256xf32>
    %223 = tpu.matmul %220, %222, %cst_63 {dimension_numbers = #tpu.dot_dimension_numbers<[1], [0], [0], [1], [0, 0, 1, 1], [], []>} : vector<16x256xbf16>, vector<256x256xbf16>, vector<16x256xf32> -> vector<16x256xf32>
    %c0_64 = arith.constant 0 : index
    %c0_65 = arith.constant 0 : index
    %c0_66 = arith.constant 0 : index
    %224 = vector.load %arg5[%c0_64, %c0_65, %c0_66] : memref<2x1x256xf32, #tpu.memory_space<vmem>>, vector<1x1x256xf32>
    %225 = vector.shape_cast %224 : vector<1x1x256xf32> to vector<1x256xf32>
    %226 = vector.broadcast %225 : vector<1x256xf32> to vector<16x256xf32>
    %227 = arith.addf %223, %226 : vector<16x256xf32>
    %228 = arith.addf %2, %227 : vector<16x256xf32>
    %c0_67 = arith.constant 0 : index
    %c0_68 = arith.constant 0 : index
    %c0_69 = arith.constant 0 : index
    %229 = vector.load %arg6[%c0_67, %c0_68, %c0_69] : memref<2x1x256xf32, #tpu.memory_space<vmem>>, vector<1x1x256xf32>
    %230 = vector.shape_cast %229 : vector<1x1x256xf32> to vector<1x256xf32>
    %c0_70 = arith.constant 0 : index
    %c0_71 = arith.constant 0 : index
    %c0_72 = arith.constant 0 : index
    %231 = vector.load %arg7[%c0_70, %c0_71, %c0_72] : memref<2x1x256xf32, #tpu.memory_space<vmem>>, vector<1x1x256xf32>
    %232 = vector.shape_cast %231 : vector<1x1x256xf32> to vector<1x256xf32>
    %cst_73 = arith.constant dense<0.000000e+00> : vector<16xf32>
    %233 = vector.multi_reduction <add>, %228, %cst_73 [1] : vector<16x256xf32> to vector<16xf32>
    %234 = vector.shape_cast %233 : vector<16xf32> to vector<16x1xf32>
    %cst_74 = arith.constant 2.560000e+02 : f32
    %235 = vector.broadcast %cst_74 : f32 to vector<16x1xf32>
    %236 = arith.divf %234, %235 : vector<16x1xf32>
    %237 = vector.broadcast %236 : vector<16x1xf32> to vector<16x256xf32>
    %238 = arith.subf %228, %237 : vector<16x256xf32>
    %239 = arith.mulf %238, %238 : vector<16x256xf32>
    %cst_75 = arith.constant dense<0.000000e+00> : vector<16xf32>
    %240 = vector.multi_reduction <add>, %239, %cst_75 [1] : vector<16x256xf32> to vector<16xf32>
    %241 = vector.shape_cast %240 : vector<16xf32> to vector<16x1xf32>
    %cst_76 = arith.constant 2.560000e+02 : f32
    %242 = vector.broadcast %cst_76 : f32 to vector<16x1xf32>
    %243 = arith.divf %241, %242 : vector<16x1xf32>
    %244 = vector.broadcast %236 : vector<16x1xf32> to vector<16x256xf32>
    %245 = arith.subf %228, %244 : vector<16x256xf32>
    %cst_77 = arith.constant 9.99999974E-6 : f32
    %246 = vector.broadcast %cst_77 : f32 to vector<16x1xf32>
    %247 = arith.addf %243, %246 : vector<16x1xf32>
    %248 = math.rsqrt %247 : vector<16x1xf32>
    %249 = vector.broadcast %248 : vector<16x1xf32> to vector<16x256xf32>
    %250 = arith.mulf %245, %249 : vector<16x256xf32>
    %251 = vector.broadcast %230 : vector<1x256xf32> to vector<16x256xf32>
    %252 = arith.mulf %250, %251 : vector<16x256xf32>
    %253 = vector.broadcast %232 : vector<1x256xf32> to vector<16x256xf32>
    %254 = arith.addf %252, %253 : vector<16x256xf32>
    %255 = arith.truncf %254 : vector<16x256xf32> to vector<16x256xbf16>
    %c0_78 = arith.constant 0 : index
    %c0_79 = arith.constant 0 : index
    %c0_80 = arith.constant 0 : index
    %256 = vector.load %arg8[%c0_78, %c0_79, %c0_80] : memref<2x256x256xbf16, #tpu.memory_space<vmem>>, vector<1x256x256xbf16>
    %257 = vector.shape_cast %256 : vector<1x256x256xbf16> to vector<256x256xbf16>
    %cst_81 = arith.constant dense<0.000000e+00> : vector<16x256xf32>
    %258 = tpu.matmul %255, %257, %cst_81 {dimension_numbers = #tpu.dot_dimension_numbers<[1], [0], [0], [1], [0, 0, 1, 1], [], []>} : vector<16x256xbf16>, vector<256x256xbf16>, vector<16x256xf32> -> vector<16x256xf32>
    %c0_82 = arith.constant 0 : index
    %c0_83 = arith.constant 0 : index
    %c0_84 = arith.constant 0 : index
    %259 = vector.load %arg9[%c0_82, %c0_83, %c0_84] : memref<2x1x256xf32, #tpu.memory_space<vmem>>, vector<1x1x256xf32>
    %260 = vector.shape_cast %259 : vector<1x1x256xf32> to vector<1x256xf32>
    %261 = vector.broadcast %260 : vector<1x256xf32> to vector<16x256xf32>
    %262 = arith.addf %258, %261 : vector<16x256xf32>
    %cst_85 = arith.constant 0.000000e+00 : f32
    %263 = vector.broadcast %cst_85 : f32 to vector<16x256xf32>
    %264 = arith.maximumf %262, %263 : vector<16x256xf32>
    %265 = arith.truncf %264 : vector<16x256xf32> to vector<16x256xbf16>
    %c0_86 = arith.constant 0 : index
    %c0_87 = arith.constant 0 : index
    %c0_88 = arith.constant 0 : index
    %266 = vector.load %arg10[%c0_86, %c0_87, %c0_88] : memref<2x256x256xbf16, #tpu.memory_space<vmem>>, vector<1x256x256xbf16>
    %267 = vector.shape_cast %266 : vector<1x256x256xbf16> to vector<256x256xbf16>
    %cst_89 = arith.constant dense<0.000000e+00> : vector<16x256xf32>
    %268 = tpu.matmul %265, %267, %cst_89 {dimension_numbers = #tpu.dot_dimension_numbers<[1], [0], [0], [1], [0, 0, 1, 1], [], []>} : vector<16x256xbf16>, vector<256x256xbf16>, vector<16x256xf32> -> vector<16x256xf32>
    %c0_90 = arith.constant 0 : index
    %c0_91 = arith.constant 0 : index
    %c0_92 = arith.constant 0 : index
    %269 = vector.load %arg11[%c0_90, %c0_91, %c0_92] : memref<2x1x256xf32, #tpu.memory_space<vmem>>, vector<1x1x256xf32>
    %270 = vector.shape_cast %269 : vector<1x1x256xf32> to vector<1x256xf32>
    %271 = vector.broadcast %270 : vector<1x256xf32> to vector<16x256xf32>
    %272 = arith.addf %268, %271 : vector<16x256xf32>
    %273 = arith.addf %254, %272 : vector<16x256xf32>
    %c0_93 = arith.constant 0 : index
    %c0_94 = arith.constant 0 : index
    %c0_95 = arith.constant 0 : index
    %274 = vector.load %arg12[%c0_93, %c0_94, %c0_95] : memref<2x1x256xf32, #tpu.memory_space<vmem>>, vector<1x1x256xf32>
    %275 = vector.shape_cast %274 : vector<1x1x256xf32> to vector<1x256xf32>
    %c0_96 = arith.constant 0 : index
    %c0_97 = arith.constant 0 : index
    %c0_98 = arith.constant 0 : index
    %276 = vector.load %arg13[%c0_96, %c0_97, %c0_98] : memref<2x1x256xf32, #tpu.memory_space<vmem>>, vector<1x1x256xf32>
    %277 = vector.shape_cast %276 : vector<1x1x256xf32> to vector<1x256xf32>
    %cst_99 = arith.constant dense<0.000000e+00> : vector<16xf32>
    %278 = vector.multi_reduction <add>, %273, %cst_99 [1] : vector<16x256xf32> to vector<16xf32>
    %279 = vector.shape_cast %278 : vector<16xf32> to vector<16x1xf32>
    %cst_100 = arith.constant 2.560000e+02 : f32
    %280 = vector.broadcast %cst_100 : f32 to vector<16x1xf32>
    %281 = arith.divf %279, %280 : vector<16x1xf32>
    %282 = vector.broadcast %281 : vector<16x1xf32> to vector<16x256xf32>
    %283 = arith.subf %273, %282 : vector<16x256xf32>
    %284 = arith.mulf %283, %283 : vector<16x256xf32>
    %cst_101 = arith.constant dense<0.000000e+00> : vector<16xf32>
    %285 = vector.multi_reduction <add>, %284, %cst_101 [1] : vector<16x256xf32> to vector<16xf32>
    %286 = vector.shape_cast %285 : vector<16xf32> to vector<16x1xf32>
    %cst_102 = arith.constant 2.560000e+02 : f32
    %287 = vector.broadcast %cst_102 : f32 to vector<16x1xf32>
    %288 = arith.divf %286, %287 : vector<16x1xf32>
    %289 = vector.broadcast %281 : vector<16x1xf32> to vector<16x256xf32>
    %290 = arith.subf %273, %289 : vector<16x256xf32>
    %cst_103 = arith.constant 9.99999974E-6 : f32
    %291 = vector.broadcast %cst_103 : f32 to vector<16x1xf32>
    %292 = arith.addf %288, %291 : vector<16x1xf32>
    %293 = math.rsqrt %292 : vector<16x1xf32>
    %294 = vector.broadcast %293 : vector<16x1xf32> to vector<16x256xf32>
    %295 = arith.mulf %290, %294 : vector<16x256xf32>
    %296 = vector.broadcast %275 : vector<1x256xf32> to vector<16x256xf32>
    %297 = arith.mulf %295, %296 : vector<16x256xf32>
    %298 = vector.broadcast %277 : vector<1x256xf32> to vector<16x256xf32>
    %299 = arith.addf %297, %298 : vector<16x256xf32>
    %300 = arith.addf %299, %0 : vector<16x256xf32>
    %301 = arith.truncf %300 : vector<16x256xf32> to vector<16x256xbf16>
    %c1 = arith.constant 1 : index
    %c0_104 = arith.constant 0 : index
    %c0_105 = arith.constant 0 : index
    %302 = vector.load %arg2[%c1, %c0_104, %c0_105] : memref<2x256x768xbf16, #tpu.memory_space<vmem>>, vector<1x256x768xbf16>
    %303 = vector.shape_cast %302 : vector<1x256x768xbf16> to vector<256x768xbf16>
    %cst_106 = arith.constant dense<0.000000e+00> : vector<16x768xf32>
    %304 = tpu.matmul %301, %303, %cst_106 {dimension_numbers = #tpu.dot_dimension_numbers<[1], [0], [0], [1], [0, 0, 1, 1], [], []>} : vector<16x256xbf16>, vector<256x768xbf16>, vector<16x768xf32> -> vector<16x768xf32>
    %c1_107 = arith.constant 1 : index
    %c0_108 = arith.constant 0 : index
    %c0_109 = arith.constant 0 : index
    %305 = vector.load %arg3[%c1_107, %c0_108, %c0_109] : memref<2x1x768xf32, #tpu.memory_space<vmem>>, vector<1x1x768xf32>
    %306 = vector.shape_cast %305 : vector<1x1x768xf32> to vector<1x768xf32>
    %307 = vector.broadcast %306 : vector<1x768xf32> to vector<16x768xf32>
    %308 = arith.addf %304, %307 : vector<16x768xf32>
    %309 = vector.extract_strided_slice %308 {offsets = [0, 0], sizes = [16, 32], strides = [1, 1]} : vector<16x768xf32> to vector<16x32xf32>
    %310 = vector.shape_cast %309 : vector<16x32xf32> to vector<2x8x32xf32>
    %311 = vector.extract_strided_slice %308 {offsets = [0, 256], sizes = [16, 32], strides = [1, 1]} : vector<16x768xf32> to vector<16x32xf32>
    %312 = vector.shape_cast %311 : vector<16x32xf32> to vector<2x8x32xf32>
    %313 = vector.extract_strided_slice %308 {offsets = [0, 512], sizes = [16, 32], strides = [1, 1]} : vector<16x768xf32> to vector<16x32xf32>
    %314 = vector.shape_cast %313 : vector<16x32xf32> to vector<2x8x32xf32>
    %315 = arith.truncf %310 : vector<2x8x32xf32> to vector<2x8x32xbf16>
    %316 = arith.truncf %312 : vector<2x8x32xf32> to vector<2x8x32xbf16>
    "tpu.trace_start"() <{level = 10 : i32, message = "bqd,bkd->bqk"}> : () -> ()
    %cst_110 = arith.constant dense<0.000000e+00> : vector<2x8x8xf32>
    %317 = tpu.matmul %315, %316, %cst_110 {dimension_numbers = #tpu.dot_dimension_numbers<[2], [2], [1], [1], [0, 0, 0, 1, 1, 1], [0], [0]>} : vector<2x8x32xbf16>, vector<2x8x32xbf16>, vector<2x8x8xf32> -> vector<2x8x8xf32>
    "tpu.trace_stop"() : () -> ()
    %cst_111 = arith.constant 0.176776692 : f32
    %318 = vector.broadcast %cst_111 : f32 to vector<2x8x8xf32>
    %319 = arith.mulf %317, %318 : vector<2x8x8xf32>
    %cst_112 = arith.constant dense<0xFF800000> : vector<2x8xf32>
    %320 = vector.multi_reduction <maximumf>, %319, %cst_112 [2] : vector<2x8x8xf32> to vector<2x8xf32>
    %321 = vector.shape_cast %320 : vector<2x8xf32> to vector<2x8x1xf32>
    %322 = vector.broadcast %321 : vector<2x8x1xf32> to vector<2x8x8xf32>
    %323 = arith.subf %319, %322 : vector<2x8x8xf32>
    %324 = math.exp %323 : vector<2x8x8xf32>
    %cst_113 = arith.constant dense<0.000000e+00> : vector<2x8xf32>
    %325 = vector.multi_reduction <add>, %324, %cst_113 [2] : vector<2x8x8xf32> to vector<2x8xf32>
    %326 = vector.shape_cast %325 : vector<2x8xf32> to vector<2x8x1xf32>
    %327 = tpu.reciprocal %326 {approx = true} : vector<2x8x1xf32> -> vector<2x8x1xf32>
    %328 = vector.broadcast %327 : vector<2x8x1xf32> to vector<2x8x8xf32>
    %329 = arith.mulf %324, %328 : vector<2x8x8xf32>
    %330 = arith.truncf %329 : vector<2x8x8xf32> to vector<2x8x8xbf16>
    %331 = arith.truncf %314 : vector<2x8x32xf32> to vector<2x8x32xbf16>
    "tpu.trace_start"() <{level = 10 : i32, message = "bqk,bkd->bqd"}> : () -> ()
    %cst_114 = arith.constant dense<0.000000e+00> : vector<2x8x32xf32>
    %332 = tpu.matmul %330, %331, %cst_114 {dimension_numbers = #tpu.dot_dimension_numbers<[2], [1], [1], [2], [0, 0, 0, 1, 1, 2], [0], [0]>} : vector<2x8x8xbf16>, vector<2x8x32xbf16>, vector<2x8x32xf32> -> vector<2x8x32xf32>
    "tpu.trace_stop"() : () -> ()
    %333 = vector.shape_cast %332 : vector<2x8x32xf32> to vector<16x32xf32>
    %c0_115 = arith.constant 0 : index
    %c0_116 = arith.constant 0 : index
    %334 = vector.load %arg21[%c0_115, %c0_116] : memref<16x256xf32, #tpu.memory_space<vmem>>, vector<16x32xf32>
    tpu.vector_store %arg21[%c0_115, %c0_116], %333 {strides = array<i32>} : memref<16x256xf32, #tpu.memory_space<vmem>>, vector<16x32xf32>,
    %335 = vector.extract_strided_slice %308 {offsets = [0, 32], sizes = [16, 32], strides = [1, 1]} : vector<16x768xf32> to vector<16x32xf32>
    %336 = vector.shape_cast %335 : vector<16x32xf32> to vector<2x8x32xf32>
    %337 = vector.extract_strided_slice %308 {offsets = [0, 288], sizes = [16, 32], strides = [1, 1]} : vector<16x768xf32> to vector<16x32xf32>
    %338 = vector.shape_cast %337 : vector<16x32xf32> to vector<2x8x32xf32>
    %339 = vector.extract_strided_slice %308 {offsets = [0, 544], sizes = [16, 32], strides = [1, 1]} : vector<16x768xf32> to vector<16x32xf32>
    %340 = vector.shape_cast %339 : vector<16x32xf32> to vector<2x8x32xf32>
    %341 = arith.truncf %336 : vector<2x8x32xf32> to vector<2x8x32xbf16>
    %342 = arith.truncf %338 : vector<2x8x32xf32> to vector<2x8x32xbf16>
    "tpu.trace_start"() <{level = 10 : i32, message = "bqd,bkd->bqk"}> : () -> ()
    %cst_117 = arith.constant dense<0.000000e+00> : vector<2x8x8xf32>
    %343 = tpu.matmul %341, %342, %cst_117 {dimension_numbers = #tpu.dot_dimension_numbers<[2], [2], [1], [1], [0, 0, 0, 1, 1, 1], [0], [0]>} : vector<2x8x32xbf16>, vector<2x8x32xbf16>, vector<2x8x8xf32> -> vector<2x8x8xf32>
    "tpu.trace_stop"() : () -> ()
    %cst_118 = arith.constant 0.176776692 : f32
    %344 = vector.broadcast %cst_118 : f32 to vector<2x8x8xf32>
    %345 = arith.mulf %343, %344 : vector<2x8x8xf32>
    %cst_119 = arith.constant dense<0xFF800000> : vector<2x8xf32>
    %346 = vector.multi_reduction <maximumf>, %345, %cst_119 [2] : vector<2x8x8xf32> to vector<2x8xf32>
    %347 = vector.shape_cast %346 : vector<2x8xf32> to vector<2x8x1xf32>
    %348 = vector.broadcast %347 : vector<2x8x1xf32> to vector<2x8x8xf32>
    %349 = arith.subf %345, %348 : vector<2x8x8xf32>
    %350 = math.exp %349 : vector<2x8x8xf32>
    %cst_120 = arith.constant dense<0.000000e+00> : vector<2x8xf32>
    %351 = vector.multi_reduction <add>, %350, %cst_120 [2] : vector<2x8x8xf32> to vector<2x8xf32>
    %352 = vector.shape_cast %351 : vector<2x8xf32> to vector<2x8x1xf32>
    %353 = tpu.reciprocal %352 {approx = true} : vector<2x8x1xf32> -> vector<2x8x1xf32>
    %354 = vector.broadcast %353 : vector<2x8x1xf32> to vector<2x8x8xf32>
    %355 = arith.mulf %350, %354 : vector<2x8x8xf32>
    %356 = arith.truncf %355 : vector<2x8x8xf32> to vector<2x8x8xbf16>
    %357 = arith.truncf %340 : vector<2x8x32xf32> to vector<2x8x32xbf16>
    "tpu.trace_start"() <{level = 10 : i32, message = "bqk,bkd->bqd"}> : () -> ()
    %cst_121 = arith.constant dense<0.000000e+00> : vector<2x8x32xf32>
    %358 = tpu.matmul %356, %357, %cst_121 {dimension_numbers = #tpu.dot_dimension_numbers<[2], [1], [1], [2], [0, 0, 0, 1, 1, 2], [0], [0]>} : vector<2x8x8xbf16>, vector<2x8x32xbf16>, vector<2x8x32xf32> -> vector<2x8x32xf32>
    "tpu.trace_stop"() : () -> ()
    %359 = vector.shape_cast %358 : vector<2x8x32xf32> to vector<16x32xf32>
    %c0_122 = arith.constant 0 : index
    %c32_123 = arith.constant 32 : index
    %360 = vector.load %arg21[%c0_122, %c32_123] : memref<16x256xf32, #tpu.memory_space<vmem>>, vector<16x32xf32>
    tpu.vector_store %arg21[%c0_122, %c32_123], %359 {strides = array<i32>} : memref<16x256xf32, #tpu.memory_space<vmem>>, vector<16x32xf32>,
    %361 = vector.extract_strided_slice %308 {offsets = [0, 64], sizes = [16, 32], strides = [1, 1]} : vector<16x768xf32> to vector<16x32xf32>
    %362 = vector.shape_cast %361 : vector<16x32xf32> to vector<2x8x32xf32>
    %363 = vector.extract_strided_slice %308 {offsets = [0, 320], sizes = [16, 32], strides = [1, 1]} : vector<16x768xf32> to vector<16x32xf32>
    %364 = vector.shape_cast %363 : vector<16x32xf32> to vector<2x8x32xf32>
    %365 = vector.extract_strided_slice %308 {offsets = [0, 576], sizes = [16, 32], strides = [1, 1]} : vector<16x768xf32> to vector<16x32xf32>
    %366 = vector.shape_cast %365 : vector<16x32xf32> to vector<2x8x32xf32>
    %367 = arith.truncf %362 : vector<2x8x32xf32> to vector<2x8x32xbf16>
    %368 = arith.truncf %364 : vector<2x8x32xf32> to vector<2x8x32xbf16>
    "tpu.trace_start"() <{level = 10 : i32, message = "bqd,bkd->bqk"}> : () -> ()
    %cst_124 = arith.constant dense<0.000000e+00> : vector<2x8x8xf32>
    %369 = tpu.matmul %367, %368, %cst_124 {dimension_numbers = #tpu.dot_dimension_numbers<[2], [2], [1], [1], [0, 0, 0, 1, 1, 1], [0], [0]>} : vector<2x8x32xbf16>, vector<2x8x32xbf16>, vector<2x8x8xf32> -> vector<2x8x8xf32>
    "tpu.trace_stop"() : () -> ()
    %cst_125 = arith.constant 0.176776692 : f32
    %370 = vector.broadcast %cst_125 : f32 to vector<2x8x8xf32>
    %371 = arith.mulf %369, %370 : vector<2x8x8xf32>
    %cst_126 = arith.constant dense<0xFF800000> : vector<2x8xf32>
    %372 = vector.multi_reduction <maximumf>, %371, %cst_126 [2] : vector<2x8x8xf32> to vector<2x8xf32>
    %373 = vector.shape_cast %372 : vector<2x8xf32> to vector<2x8x1xf32>
    %374 = vector.broadcast %373 : vector<2x8x1xf32> to vector<2x8x8xf32>
    %375 = arith.subf %371, %374 : vector<2x8x8xf32>
    %376 = math.exp %375 : vector<2x8x8xf32>
    %cst_127 = arith.constant dense<0.000000e+00> : vector<2x8xf32>
    %377 = vector.multi_reduction <add>, %376, %cst_127 [2] : vector<2x8x8xf32> to vector<2x8xf32>
    %378 = vector.shape_cast %377 : vector<2x8xf32> to vector<2x8x1xf32>
    %379 = tpu.reciprocal %378 {approx = true} : vector<2x8x1xf32> -> vector<2x8x1xf32>
    %380 = vector.broadcast %379 : vector<2x8x1xf32> to vector<2x8x8xf32>
    %381 = arith.mulf %376, %380 : vector<2x8x8xf32>
    %382 = arith.truncf %381 : vector<2x8x8xf32> to vector<2x8x8xbf16>
    %383 = arith.truncf %366 : vector<2x8x32xf32> to vector<2x8x32xbf16>
    "tpu.trace_start"() <{level = 10 : i32, message = "bqk,bkd->bqd"}> : () -> ()
    %cst_128 = arith.constant dense<0.000000e+00> : vector<2x8x32xf32>
    %384 = tpu.matmul %382, %383, %cst_128 {dimension_numbers = #tpu.dot_dimension_numbers<[2], [1], [1], [2], [0, 0, 0, 1, 1, 2], [0], [0]>} : vector<2x8x8xbf16>, vector<2x8x32xbf16>, vector<2x8x32xf32> -> vector<2x8x32xf32>
    "tpu.trace_stop"() : () -> ()
    %385 = vector.shape_cast %384 : vector<2x8x32xf32> to vector<16x32xf32>
    %c0_129 = arith.constant 0 : index
    %c64_130 = arith.constant 64 : index
    %386 = vector.load %arg21[%c0_129, %c64_130] : memref<16x256xf32, #tpu.memory_space<vmem>>, vector<16x32xf32>
    tpu.vector_store %arg21[%c0_129, %c64_130], %385 {strides = array<i32>} : memref<16x256xf32, #tpu.memory_space<vmem>>, vector<16x32xf32>,
    %387 = vector.extract_strided_slice %308 {offsets = [0, 96], sizes = [16, 32], strides = [1, 1]} : vector<16x768xf32> to vector<16x32xf32>
    %388 = vector.shape_cast %387 : vector<16x32xf32> to vector<2x8x32xf32>
    %389 = vector.extract_strided_slice %308 {offsets = [0, 352], sizes = [16, 32], strides = [1, 1]} : vector<16x768xf32> to vector<16x32xf32>
    %390 = vector.shape_cast %389 : vector<16x32xf32> to vector<2x8x32xf32>
    %391 = vector.extract_strided_slice %308 {offsets = [0, 608], sizes = [16, 32], strides = [1, 1]} : vector<16x768xf32> to vector<16x32xf32>
    %392 = vector.shape_cast %391 : vector<16x32xf32> to vector<2x8x32xf32>
    %393 = arith.truncf %388 : vector<2x8x32xf32> to vector<2x8x32xbf16>
    %394 = arith.truncf %390 : vector<2x8x32xf32> to vector<2x8x32xbf16>
    "tpu.trace_start"() <{level = 10 : i32, message = "bqd,bkd->bqk"}> : () -> ()
    %cst_131 = arith.constant dense<0.000000e+00> : vector<2x8x8xf32>
    %395 = tpu.matmul %393, %394, %cst_131 {dimension_numbers = #tpu.dot_dimension_numbers<[2], [2], [1], [1], [0, 0, 0, 1, 1, 1], [0], [0]>} : vector<2x8x32xbf16>, vector<2x8x32xbf16>, vector<2x8x8xf32> -> vector<2x8x8xf32>
    "tpu.trace_stop"() : () -> ()
    %cst_132 = arith.constant 0.176776692 : f32
    %396 = vector.broadcast %cst_132 : f32 to vector<2x8x8xf32>
    %397 = arith.mulf %395, %396 : vector<2x8x8xf32>
    %cst_133 = arith.constant dense<0xFF800000> : vector<2x8xf32>
    %398 = vector.multi_reduction <maximumf>, %397, %cst_133 [2] : vector<2x8x8xf32> to vector<2x8xf32>
    %399 = vector.shape_cast %398 : vector<2x8xf32> to vector<2x8x1xf32>
    %400 = vector.broadcast %399 : vector<2x8x1xf32> to vector<2x8x8xf32>
    %401 = arith.subf %397, %400 : vector<2x8x8xf32>
    %402 = math.exp %401 : vector<2x8x8xf32>
    %cst_134 = arith.constant dense<0.000000e+00> : vector<2x8xf32>
    %403 = vector.multi_reduction <add>, %402, %cst_134 [2] : vector<2x8x8xf32> to vector<2x8xf32>
    %404 = vector.shape_cast %403 : vector<2x8xf32> to vector<2x8x1xf32>
    %405 = tpu.reciprocal %404 {approx = true} : vector<2x8x1xf32> -> vector<2x8x1xf32>
    %406 = vector.broadcast %405 : vector<2x8x1xf32> to vector<2x8x8xf32>
    %407 = arith.mulf %402, %406 : vector<2x8x8xf32>
    %408 = arith.truncf %407 : vector<2x8x8xf32> to vector<2x8x8xbf16>
    %409 = arith.truncf %392 : vector<2x8x32xf32> to vector<2x8x32xbf16>
    "tpu.trace_start"() <{level = 10 : i32, message = "bqk,bkd->bqd"}> : () -> ()
    %cst_135 = arith.constant dense<0.000000e+00> : vector<2x8x32xf32>
    %410 = tpu.matmul %408, %409, %cst_135 {dimension_numbers = #tpu.dot_dimension_numbers<[2], [1], [1], [2], [0, 0, 0, 1, 1, 2], [0], [0]>} : vector<2x8x8xbf16>, vector<2x8x32xbf16>, vector<2x8x32xf32> -> vector<2x8x32xf32>
    "tpu.trace_stop"() : () -> ()
    %411 = vector.shape_cast %410 : vector<2x8x32xf32> to vector<16x32xf32>
    %c0_136 = arith.constant 0 : index
    %c96_137 = arith.constant 96 : index
    %412 = vector.load %arg21[%c0_136, %c96_137] : memref<16x256xf32, #tpu.memory_space<vmem>>, vector<16x32xf32>
    tpu.vector_store %arg21[%c0_136, %c96_137], %411 {strides = array<i32>} : memref<16x256xf32, #tpu.memory_space<vmem>>, vector<16x32xf32>,
    %413 = vector.extract_strided_slice %308 {offsets = [0, 128], sizes = [16, 32], strides = [1, 1]} : vector<16x768xf32> to vector<16x32xf32>
    %414 = vector.shape_cast %413 : vector<16x32xf32> to vector<2x8x32xf32>
    %415 = vector.extract_strided_slice %308 {offsets = [0, 384], sizes = [16, 32], strides = [1, 1]} : vector<16x768xf32> to vector<16x32xf32>
    %416 = vector.shape_cast %415 : vector<16x32xf32> to vector<2x8x32xf32>
    %417 = vector.extract_strided_slice %308 {offsets = [0, 640], sizes = [16, 32], strides = [1, 1]} : vector<16x768xf32> to vector<16x32xf32>
    %418 = vector.shape_cast %417 : vector<16x32xf32> to vector<2x8x32xf32>
    %419 = arith.truncf %414 : vector<2x8x32xf32> to vector<2x8x32xbf16>
    %420 = arith.truncf %416 : vector<2x8x32xf32> to vector<2x8x32xbf16>
    "tpu.trace_start"() <{level = 10 : i32, message = "bqd,bkd->bqk"}> : () -> ()
    %cst_138 = arith.constant dense<0.000000e+00> : vector<2x8x8xf32>
    %421 = tpu.matmul %419, %420, %cst_138 {dimension_numbers = #tpu.dot_dimension_numbers<[2], [2], [1], [1], [0, 0, 0, 1, 1, 1], [0], [0]>} : vector<2x8x32xbf16>, vector<2x8x32xbf16>, vector<2x8x8xf32> -> vector<2x8x8xf32>
    "tpu.trace_stop"() : () -> ()
    %cst_139 = arith.constant 0.176776692 : f32
    %422 = vector.broadcast %cst_139 : f32 to vector<2x8x8xf32>
    %423 = arith.mulf %421, %422 : vector<2x8x8xf32>
    %cst_140 = arith.constant dense<0xFF800000> : vector<2x8xf32>
    %424 = vector.multi_reduction <maximumf>, %423, %cst_140 [2] : vector<2x8x8xf32> to vector<2x8xf32>
    %425 = vector.shape_cast %424 : vector<2x8xf32> to vector<2x8x1xf32>
    %426 = vector.broadcast %425 : vector<2x8x1xf32> to vector<2x8x8xf32>
    %427 = arith.subf %423, %426 : vector<2x8x8xf32>
    %428 = math.exp %427 : vector<2x8x8xf32>
    %cst_141 = arith.constant dense<0.000000e+00> : vector<2x8xf32>
    %429 = vector.multi_reduction <add>, %428, %cst_141 [2] : vector<2x8x8xf32> to vector<2x8xf32>
    %430 = vector.shape_cast %429 : vector<2x8xf32> to vector<2x8x1xf32>
    %431 = tpu.reciprocal %430 {approx = true} : vector<2x8x1xf32> -> vector<2x8x1xf32>
    %432 = vector.broadcast %431 : vector<2x8x1xf32> to vector<2x8x8xf32>
    %433 = arith.mulf %428, %432 : vector<2x8x8xf32>
    %434 = arith.truncf %433 : vector<2x8x8xf32> to vector<2x8x8xbf16>
    %435 = arith.truncf %418 : vector<2x8x32xf32> to vector<2x8x32xbf16>
    "tpu.trace_start"() <{level = 10 : i32, message = "bqk,bkd->bqd"}> : () -> ()
    %cst_142 = arith.constant dense<0.000000e+00> : vector<2x8x32xf32>
    %436 = tpu.matmul %434, %435, %cst_142 {dimension_numbers = #tpu.dot_dimension_numbers<[2], [1], [1], [2], [0, 0, 0, 1, 1, 2], [0], [0]>} : vector<2x8x8xbf16>, vector<2x8x32xbf16>, vector<2x8x32xf32> -> vector<2x8x32xf32>
    "tpu.trace_stop"() : () -> ()
    %437 = vector.shape_cast %436 : vector<2x8x32xf32> to vector<16x32xf32>
    %c0_143 = arith.constant 0 : index
    %c128_144 = arith.constant 128 : index
    %438 = vector.load %arg21[%c0_143, %c128_144] : memref<16x256xf32, #tpu.memory_space<vmem>>, vector<16x32xf32>
    tpu.vector_store %arg21[%c0_143, %c128_144], %437 {strides = array<i32>} : memref<16x256xf32, #tpu.memory_space<vmem>>, vector<16x32xf32>,
    %439 = vector.extract_strided_slice %308 {offsets = [0, 160], sizes = [16, 32], strides = [1, 1]} : vector<16x768xf32> to vector<16x32xf32>
    %440 = vector.shape_cast %439 : vector<16x32xf32> to vector<2x8x32xf32>
    %441 = vector.extract_strided_slice %308 {offsets = [0, 416], sizes = [16, 32], strides = [1, 1]} : vector<16x768xf32> to vector<16x32xf32>
    %442 = vector.shape_cast %441 : vector<16x32xf32> to vector<2x8x32xf32>
    %443 = vector.extract_strided_slice %308 {offsets = [0, 672], sizes = [16, 32], strides = [1, 1]} : vector<16x768xf32> to vector<16x32xf32>
    %444 = vector.shape_cast %443 : vector<16x32xf32> to vector<2x8x32xf32>
    %445 = arith.truncf %440 : vector<2x8x32xf32> to vector<2x8x32xbf16>
    %446 = arith.truncf %442 : vector<2x8x32xf32> to vector<2x8x32xbf16>
    "tpu.trace_start"() <{level = 10 : i32, message = "bqd,bkd->bqk"}> : () -> ()
    %cst_145 = arith.constant dense<0.000000e+00> : vector<2x8x8xf32>
    %447 = tpu.matmul %445, %446, %cst_145 {dimension_numbers = #tpu.dot_dimension_numbers<[2], [2], [1], [1], [0, 0, 0, 1, 1, 1], [0], [0]>} : vector<2x8x32xbf16>, vector<2x8x32xbf16>, vector<2x8x8xf32> -> vector<2x8x8xf32>
    "tpu.trace_stop"() : () -> ()
    %cst_146 = arith.constant 0.176776692 : f32
    %448 = vector.broadcast %cst_146 : f32 to vector<2x8x8xf32>
    %449 = arith.mulf %447, %448 : vector<2x8x8xf32>
    %cst_147 = arith.constant dense<0xFF800000> : vector<2x8xf32>
    %450 = vector.multi_reduction <maximumf>, %449, %cst_147 [2] : vector<2x8x8xf32> to vector<2x8xf32>
    %451 = vector.shape_cast %450 : vector<2x8xf32> to vector<2x8x1xf32>
    %452 = vector.broadcast %451 : vector<2x8x1xf32> to vector<2x8x8xf32>
    %453 = arith.subf %449, %452 : vector<2x8x8xf32>
    %454 = math.exp %453 : vector<2x8x8xf32>
    %cst_148 = arith.constant dense<0.000000e+00> : vector<2x8xf32>
    %455 = vector.multi_reduction <add>, %454, %cst_148 [2] : vector<2x8x8xf32> to vector<2x8xf32>
    %456 = vector.shape_cast %455 : vector<2x8xf32> to vector<2x8x1xf32>
    %457 = tpu.reciprocal %456 {approx = true} : vector<2x8x1xf32> -> vector<2x8x1xf32>
    %458 = vector.broadcast %457 : vector<2x8x1xf32> to vector<2x8x8xf32>
    %459 = arith.mulf %454, %458 : vector<2x8x8xf32>
    %460 = arith.truncf %459 : vector<2x8x8xf32> to vector<2x8x8xbf16>
    %461 = arith.truncf %444 : vector<2x8x32xf32> to vector<2x8x32xbf16>
    "tpu.trace_start"() <{level = 10 : i32, message = "bqk,bkd->bqd"}> : () -> ()
    %cst_149 = arith.constant dense<0.000000e+00> : vector<2x8x32xf32>
    %462 = tpu.matmul %460, %461, %cst_149 {dimension_numbers = #tpu.dot_dimension_numbers<[2], [1], [1], [2], [0, 0, 0, 1, 1, 2], [0], [0]>} : vector<2x8x8xbf16>, vector<2x8x32xbf16>, vector<2x8x32xf32> -> vector<2x8x32xf32>
    "tpu.trace_stop"() : () -> ()
    %463 = vector.shape_cast %462 : vector<2x8x32xf32> to vector<16x32xf32>
    %c0_150 = arith.constant 0 : index
    %c160_151 = arith.constant 160 : index
    %464 = vector.load %arg21[%c0_150, %c160_151] : memref<16x256xf32, #tpu.memory_space<vmem>>, vector<16x32xf32>
    tpu.vector_store %arg21[%c0_150, %c160_151], %463 {strides = array<i32>} : memref<16x256xf32, #tpu.memory_space<vmem>>, vector<16x32xf32>,
    %465 = vector.extract_strided_slice %308 {offsets = [0, 192], sizes = [16, 32], strides = [1, 1]} : vector<16x768xf32> to vector<16x32xf32>
    %466 = vector.shape_cast %465 : vector<16x32xf32> to vector<2x8x32xf32>
    %467 = vector.extract_strided_slice %308 {offsets = [0, 448], sizes = [16, 32], strides = [1, 1]} : vector<16x768xf32> to vector<16x32xf32>
    %468 = vector.shape_cast %467 : vector<16x32xf32> to vector<2x8x32xf32>
    %469 = vector.extract_strided_slice %308 {offsets = [0, 704], sizes = [16, 32], strides = [1, 1]} : vector<16x768xf32> to vector<16x32xf32>
    %470 = vector.shape_cast %469 : vector<16x32xf32> to vector<2x8x32xf32>
    %471 = arith.truncf %466 : vector<2x8x32xf32> to vector<2x8x32xbf16>
    %472 = arith.truncf %468 : vector<2x8x32xf32> to vector<2x8x32xbf16>
    "tpu.trace_start"() <{level = 10 : i32, message = "bqd,bkd->bqk"}> : () -> ()
    %cst_152 = arith.constant dense<0.000000e+00> : vector<2x8x8xf32>
    %473 = tpu.matmul %471, %472, %cst_152 {dimension_numbers = #tpu.dot_dimension_numbers<[2], [2], [1], [1], [0, 0, 0, 1, 1, 1], [0], [0]>} : vector<2x8x32xbf16>, vector<2x8x32xbf16>, vector<2x8x8xf32> -> vector<2x8x8xf32>
    "tpu.trace_stop"() : () -> ()
    %cst_153 = arith.constant 0.176776692 : f32
    %474 = vector.broadcast %cst_153 : f32 to vector<2x8x8xf32>
    %475 = arith.mulf %473, %474 : vector<2x8x8xf32>
    %cst_154 = arith.constant dense<0xFF800000> : vector<2x8xf32>
    %476 = vector.multi_reduction <maximumf>, %475, %cst_154 [2] : vector<2x8x8xf32> to vector<2x8xf32>
    %477 = vector.shape_cast %476 : vector<2x8xf32> to vector<2x8x1xf32>
    %478 = vector.broadcast %477 : vector<2x8x1xf32> to vector<2x8x8xf32>
    %479 = arith.subf %475, %478 : vector<2x8x8xf32>
    %480 = math.exp %479 : vector<2x8x8xf32>
    %cst_155 = arith.constant dense<0.000000e+00> : vector<2x8xf32>
    %481 = vector.multi_reduction <add>, %480, %cst_155 [2] : vector<2x8x8xf32> to vector<2x8xf32>
    %482 = vector.shape_cast %481 : vector<2x8xf32> to vector<2x8x1xf32>
    %483 = tpu.reciprocal %482 {approx = true} : vector<2x8x1xf32> -> vector<2x8x1xf32>
    %484 = vector.broadcast %483 : vector<2x8x1xf32> to vector<2x8x8xf32>
    %485 = arith.mulf %480, %484 : vector<2x8x8xf32>
    %486 = arith.truncf %485 : vector<2x8x8xf32> to vector<2x8x8xbf16>
    %487 = arith.truncf %470 : vector<2x8x32xf32> to vector<2x8x32xbf16>
    "tpu.trace_start"() <{level = 10 : i32, message = "bqk,bkd->bqd"}> : () -> ()
    %cst_156 = arith.constant dense<0.000000e+00> : vector<2x8x32xf32>
    %488 = tpu.matmul %486, %487, %cst_156 {dimension_numbers = #tpu.dot_dimension_numbers<[2], [1], [1], [2], [0, 0, 0, 1, 1, 2], [0], [0]>} : vector<2x8x8xbf16>, vector<2x8x32xbf16>, vector<2x8x32xf32> -> vector<2x8x32xf32>
    "tpu.trace_stop"() : () -> ()
    %489 = vector.shape_cast %488 : vector<2x8x32xf32> to vector<16x32xf32>
    %c0_157 = arith.constant 0 : index
    %c192_158 = arith.constant 192 : index
    %490 = vector.load %arg21[%c0_157, %c192_158] : memref<16x256xf32, #tpu.memory_space<vmem>>, vector<16x32xf32>
    tpu.vector_store %arg21[%c0_157, %c192_158], %489 {strides = array<i32>} : memref<16x256xf32, #tpu.memory_space<vmem>>, vector<16x32xf32>,
    %491 = vector.extract_strided_slice %308 {offsets = [0, 224], sizes = [16, 32], strides = [1, 1]} : vector<16x768xf32> to vector<16x32xf32>
    %492 = vector.shape_cast %491 : vector<16x32xf32> to vector<2x8x32xf32>
    %493 = vector.extract_strided_slice %308 {offsets = [0, 480], sizes = [16, 32], strides = [1, 1]} : vector<16x768xf32> to vector<16x32xf32>
    %494 = vector.shape_cast %493 : vector<16x32xf32> to vector<2x8x32xf32>
    %495 = vector.extract_strided_slice %308 {offsets = [0, 736], sizes = [16, 32], strides = [1, 1]} : vector<16x768xf32> to vector<16x32xf32>
    %496 = vector.shape_cast %495 : vector<16x32xf32> to vector<2x8x32xf32>
    %497 = arith.truncf %492 : vector<2x8x32xf32> to vector<2x8x32xbf16>
    %498 = arith.truncf %494 : vector<2x8x32xf32> to vector<2x8x32xbf16>
    "tpu.trace_start"() <{level = 10 : i32, message = "bqd,bkd->bqk"}> : () -> ()
    %cst_159 = arith.constant dense<0.000000e+00> : vector<2x8x8xf32>
    %499 = tpu.matmul %497, %498, %cst_159 {dimension_numbers = #tpu.dot_dimension_numbers<[2], [2], [1], [1], [0, 0, 0, 1, 1, 1], [0], [0]>} : vector<2x8x32xbf16>, vector<2x8x32xbf16>, vector<2x8x8xf32> -> vector<2x8x8xf32>
    "tpu.trace_stop"() : () -> ()
    %cst_160 = arith.constant 0.176776692 : f32
    %500 = vector.broadcast %cst_160 : f32 to vector<2x8x8xf32>
    %501 = arith.mulf %499, %500 : vector<2x8x8xf32>
    %cst_161 = arith.constant dense<0xFF800000> : vector<2x8xf32>
    %502 = vector.multi_reduction <maximumf>, %501, %cst_161 [2] : vector<2x8x8xf32> to vector<2x8xf32>
    %503 = vector.shape_cast %502 : vector<2x8xf32> to vector<2x8x1xf32>
    %504 = vector.broadcast %503 : vector<2x8x1xf32> to vector<2x8x8xf32>
    %505 = arith.subf %501, %504 : vector<2x8x8xf32>
    %506 = math.exp %505 : vector<2x8x8xf32>
    %cst_162 = arith.constant dense<0.000000e+00> : vector<2x8xf32>
    %507 = vector.multi_reduction <add>, %506, %cst_162 [2] : vector<2x8x8xf32> to vector<2x8xf32>
    %508 = vector.shape_cast %507 : vector<2x8xf32> to vector<2x8x1xf32>
    %509 = tpu.reciprocal %508 {approx = true} : vector<2x8x1xf32> -> vector<2x8x1xf32>
    %510 = vector.broadcast %509 : vector<2x8x1xf32> to vector<2x8x8xf32>
    %511 = arith.mulf %506, %510 : vector<2x8x8xf32>
    %512 = arith.truncf %511 : vector<2x8x8xf32> to vector<2x8x8xbf16>
    %513 = arith.truncf %496 : vector<2x8x32xf32> to vector<2x8x32xbf16>
    "tpu.trace_start"() <{level = 10 : i32, message = "bqk,bkd->bqd"}> : () -> ()
    %cst_163 = arith.constant dense<0.000000e+00> : vector<2x8x32xf32>
    %514 = tpu.matmul %512, %513, %cst_163 {dimension_numbers = #tpu.dot_dimension_numbers<[2], [1], [1], [2], [0, 0, 0, 1, 1, 2], [0], [0]>} : vector<2x8x8xbf16>, vector<2x8x32xbf16>, vector<2x8x32xf32> -> vector<2x8x32xf32>
    "tpu.trace_stop"() : () -> ()
    %515 = vector.shape_cast %514 : vector<2x8x32xf32> to vector<16x32xf32>
    %c0_164 = arith.constant 0 : index
    %c224_165 = arith.constant 224 : index
    %516 = vector.load %arg21[%c0_164, %c224_165] : memref<16x256xf32, #tpu.memory_space<vmem>>, vector<16x32xf32>
    tpu.vector_store %arg21[%c0_164, %c224_165], %515 {strides = array<i32>} : memref<16x256xf32, #tpu.memory_space<vmem>>, vector<16x32xf32>,
    %c0_166 = arith.constant 0 : index
    %c0_167 = arith.constant 0 : index
    %517 = vector.load %arg21[%c0_166, %c0_167] : memref<16x256xf32, #tpu.memory_space<vmem>>, vector<16x256xf32>
    %518 = arith.truncf %517 : vector<16x256xf32> to vector<16x256xbf16>
    %c1_168 = arith.constant 1 : index
    %c0_169 = arith.constant 0 : index
    %c0_170 = arith.constant 0 : index
    %519 = vector.load %arg4[%c1_168, %c0_169, %c0_170] : memref<2x256x256xbf16, #tpu.memory_space<vmem>>, vector<1x256x256xbf16>
    %520 = vector.shape_cast %519 : vector<1x256x256xbf16> to vector<256x256xbf16>
    %cst_171 = arith.constant dense<0.000000e+00> : vector<16x256xf32>
    %521 = tpu.matmul %518, %520, %cst_171 {dimension_numbers = #tpu.dot_dimension_numbers<[1], [0], [0], [1], [0, 0, 1, 1], [], []>} : vector<16x256xbf16>, vector<256x256xbf16>, vector<16x256xf32> -> vector<16x256xf32>
    %c1_172 = arith.constant 1 : index
    %c0_173 = arith.constant 0 : index
    %c0_174 = arith.constant 0 : index
    %522 = vector.load %arg5[%c1_172, %c0_173, %c0_174] : memref<2x1x256xf32, #tpu.memory_space<vmem>>, vector<1x1x256xf32>
    %523 = vector.shape_cast %522 : vector<1x1x256xf32> to vector<1x256xf32>
    %524 = vector.broadcast %523 : vector<1x256xf32> to vector<16x256xf32>
    %525 = arith.addf %521, %524 : vector<16x256xf32>
    %526 = arith.addf %300, %525 : vector<16x256xf32>
    %c1_175 = arith.constant 1 : index
    %c0_176 = arith.constant 0 : index
    %c0_177 = arith.constant 0 : index
    %527 = vector.load %arg6[%c1_175, %c0_176, %c0_177] : memref<2x1x256xf32, #tpu.memory_space<vmem>>, vector<1x1x256xf32>
    %528 = vector.shape_cast %527 : vector<1x1x256xf32> to vector<1x256xf32>
    %c1_178 = arith.constant 1 : index
    %c0_179 = arith.constant 0 : index
    %c0_180 = arith.constant 0 : index
    %529 = vector.load %arg7[%c1_178, %c0_179, %c0_180] : memref<2x1x256xf32, #tpu.memory_space<vmem>>, vector<1x1x256xf32>
    %530 = vector.shape_cast %529 : vector<1x1x256xf32> to vector<1x256xf32>
    %cst_181 = arith.constant dense<0.000000e+00> : vector<16xf32>
    %531 = vector.multi_reduction <add>, %526, %cst_181 [1] : vector<16x256xf32> to vector<16xf32>
    %532 = vector.shape_cast %531 : vector<16xf32> to vector<16x1xf32>
    %cst_182 = arith.constant 2.560000e+02 : f32
    %533 = vector.broadcast %cst_182 : f32 to vector<16x1xf32>
    %534 = arith.divf %532, %533 : vector<16x1xf32>
    %535 = vector.broadcast %534 : vector<16x1xf32> to vector<16x256xf32>
    %536 = arith.subf %526, %535 : vector<16x256xf32>
    %537 = arith.mulf %536, %536 : vector<16x256xf32>
    %cst_183 = arith.constant dense<0.000000e+00> : vector<16xf32>
    %538 = vector.multi_reduction <add>, %537, %cst_183 [1] : vector<16x256xf32> to vector<16xf32>
    %539 = vector.shape_cast %538 : vector<16xf32> to vector<16x1xf32>
    %cst_184 = arith.constant 2.560000e+02 : f32
    %540 = vector.broadcast %cst_184 : f32 to vector<16x1xf32>
    %541 = arith.divf %539, %540 : vector<16x1xf32>
    %542 = vector.broadcast %534 : vector<16x1xf32> to vector<16x256xf32>
    %543 = arith.subf %526, %542 : vector<16x256xf32>
    %cst_185 = arith.constant 9.99999974E-6 : f32
    %544 = vector.broadcast %cst_185 : f32 to vector<16x1xf32>
    %545 = arith.addf %541, %544 : vector<16x1xf32>
    %546 = math.rsqrt %545 : vector<16x1xf32>
    %547 = vector.broadcast %546 : vector<16x1xf32> to vector<16x256xf32>
    %548 = arith.mulf %543, %547 : vector<16x256xf32>
    %549 = vector.broadcast %528 : vector<1x256xf32> to vector<16x256xf32>
    %550 = arith.mulf %548, %549 : vector<16x256xf32>
    %551 = vector.broadcast %530 : vector<1x256xf32> to vector<16x256xf32>
    %552 = arith.addf %550, %551 : vector<16x256xf32>
    %553 = arith.truncf %552 : vector<16x256xf32> to vector<16x256xbf16>
    %c1_186 = arith.constant 1 : index
    %c0_187 = arith.constant 0 : index
    %c0_188 = arith.constant 0 : index
    %554 = vector.load %arg8[%c1_186, %c0_187, %c0_188] : memref<2x256x256xbf16, #tpu.memory_space<vmem>>, vector<1x256x256xbf16>
    %555 = vector.shape_cast %554 : vector<1x256x256xbf16> to vector<256x256xbf16>
    %cst_189 = arith.constant dense<0.000000e+00> : vector<16x256xf32>
    %556 = tpu.matmul %553, %555, %cst_189 {dimension_numbers = #tpu.dot_dimension_numbers<[1], [0], [0], [1], [0, 0, 1, 1], [], []>} : vector<16x256xbf16>, vector<256x256xbf16>, vector<16x256xf32> -> vector<16x256xf32>
    %c1_190 = arith.constant 1 : index
    %c0_191 = arith.constant 0 : index
    %c0_192 = arith.constant 0 : index
    %557 = vector.load %arg9[%c1_190, %c0_191, %c0_192] : memref<2x1x256xf32, #tpu.memory_space<vmem>>, vector<1x1x256xf32>
    %558 = vector.shape_cast %557 : vector<1x1x256xf32> to vector<1x256xf32>
    %559 = vector.broadcast %558 : vector<1x256xf32> to vector<16x256xf32>
    %560 = arith.addf %556, %559 : vector<16x256xf32>
    %cst_193 = arith.constant 0.000000e+00 : f32
    %561 = vector.broadcast %cst_193 : f32 to vector<16x256xf32>
    %562 = arith.maximumf %560, %561 : vector<16x256xf32>
    %563 = arith.truncf %562 : vector<16x256xf32> to vector<16x256xbf16>
    %c1_194 = arith.constant 1 : index
    %c0_195 = arith.constant 0 : index
    %c0_196 = arith.constant 0 : index
    %564 = vector.load %arg10[%c1_194, %c0_195, %c0_196] : memref<2x256x256xbf16, #tpu.memory_space<vmem>>, vector<1x256x256xbf16>
    %565 = vector.shape_cast %564 : vector<1x256x256xbf16> to vector<256x256xbf16>
    %cst_197 = arith.constant dense<0.000000e+00> : vector<16x256xf32>
    %566 = tpu.matmul %563, %565, %cst_197 {dimension_numbers = #tpu.dot_dimension_numbers<[1], [0], [0], [1], [0, 0, 1, 1], [], []>} : vector<16x256xbf16>, vector<256x256xbf16>, vector<16x256xf32> -> vector<16x256xf32>
    %c1_198 = arith.constant 1 : index
    %c0_199 = arith.constant 0 : index
    %c0_200 = arith.constant 0 : index
    %567 = vector.load %arg11[%c1_198, %c0_199, %c0_200] : memref<2x1x256xf32, #tpu.memory_space<vmem>>, vector<1x1x256xf32>
    %568 = vector.shape_cast %567 : vector<1x1x256xf32> to vector<1x256xf32>
    %569 = vector.broadcast %568 : vector<1x256xf32> to vector<16x256xf32>
    %570 = arith.addf %566, %569 : vector<16x256xf32>
    %571 = arith.addf %552, %570 : vector<16x256xf32>
    %c1_201 = arith.constant 1 : index
    %c0_202 = arith.constant 0 : index
    %c0_203 = arith.constant 0 : index
    %572 = vector.load %arg12[%c1_201, %c0_202, %c0_203] : memref<2x1x256xf32, #tpu.memory_space<vmem>>, vector<1x1x256xf32>
    %573 = vector.shape_cast %572 : vector<1x1x256xf32> to vector<1x256xf32>
    %c1_204 = arith.constant 1 : index
    %c0_205 = arith.constant 0 : index
    %c0_206 = arith.constant 0 : index
    %574 = vector.load %arg13[%c1_204, %c0_205, %c0_206] : memref<2x1x256xf32, #tpu.memory_space<vmem>>, vector<1x1x256xf32>
    %575 = vector.shape_cast %574 : vector<1x1x256xf32> to vector<1x256xf32>
    %cst_207 = arith.constant dense<0.000000e+00> : vector<16xf32>
    %576 = vector.multi_reduction <add>, %571, %cst_207 [1] : vector<16x256xf32> to vector<16xf32>
    %577 = vector.shape_cast %576 : vector<16xf32> to vector<16x1xf32>
    %cst_208 = arith.constant 2.560000e+02 : f32
    %578 = vector.broadcast %cst_208 : f32 to vector<16x1xf32>
    %579 = arith.divf %577, %578 : vector<16x1xf32>
    %580 = vector.broadcast %579 : vector<16x1xf32> to vector<16x256xf32>
    %581 = arith.subf %571, %580 : vector<16x256xf32>
    %582 = arith.mulf %581, %581 : vector<16x256xf32>
    %cst_209 = arith.constant dense<0.000000e+00> : vector<16xf32>
    %583 = vector.multi_reduction <add>, %582, %cst_209 [1] : vector<16x256xf32> to vector<16xf32>
    %584 = vector.shape_cast %583 : vector<16xf32> to vector<16x1xf32>
    %cst_210 = arith.constant 2.560000e+02 : f32
    %585 = vector.broadcast %cst_210 : f32 to vector<16x1xf32>
    %586 = arith.divf %584, %585 : vector<16x1xf32>
    %587 = vector.broadcast %579 : vector<16x1xf32> to vector<16x256xf32>
    %588 = arith.subf %571, %587 : vector<16x256xf32>
    %cst_211 = arith.constant 9.99999974E-6 : f32
    %589 = vector.broadcast %cst_211 : f32 to vector<16x1xf32>
    %590 = arith.addf %586, %589 : vector<16x1xf32>
    %591 = math.rsqrt %590 : vector<16x1xf32>
    %592 = vector.broadcast %591 : vector<16x1xf32> to vector<16x256xf32>
    %593 = arith.mulf %588, %592 : vector<16x256xf32>
    %594 = vector.broadcast %573 : vector<1x256xf32> to vector<16x256xf32>
    %595 = arith.mulf %593, %594 : vector<16x256xf32>
    %596 = vector.broadcast %575 : vector<1x256xf32> to vector<16x256xf32>
    %597 = arith.addf %595, %596 : vector<16x256xf32>
    %598 = vector.shape_cast %597 : vector<16x256xf32> to vector<2x8x256xf32>
    %599 = vector.extract_strided_slice %598 {offsets = [0, 0, 0], sizes = [2, 1, 256], strides = [1, 1, 1]} : vector<2x8x256xf32> to vector<2x1x256xf32>
    %600 = vector.shape_cast %599 : vector<2x1x256xf32> to vector<2x256xf32>
    %601 = vector.extract_strided_slice %598 {offsets = [0, 1, 0], sizes = [2, 1, 256], strides = [1, 1, 1]} : vector<2x8x256xf32> to vector<2x1x256xf32>
    %602 = vector.shape_cast %601 : vector<2x1x256xf32> to vector<2x256xf32>
    %603 = vector.extract_strided_slice %598 {offsets = [0, 2, 0], sizes = [2, 1, 256], strides = [1, 1, 1]} : vector<2x8x256xf32> to vector<2x1x256xf32>
    %604 = vector.shape_cast %603 : vector<2x1x256xf32> to vector<2x256xf32>
    %605 = vector.extract_strided_slice %598 {offsets = [0, 3, 0], sizes = [2, 1, 256], strides = [1, 1, 1]} : vector<2x8x256xf32> to vector<2x1x256xf32>
    %606 = vector.shape_cast %605 : vector<2x1x256xf32> to vector<2x256xf32>
    %607 = vector.extract_strided_slice %598 {offsets = [0, 4, 0], sizes = [2, 1, 256], strides = [1, 1, 1]} : vector<2x8x256xf32> to vector<2x1x256xf32>
    %608 = vector.shape_cast %607 : vector<2x1x256xf32> to vector<2x256xf32>
    %609 = vector.extract_strided_slice %598 {offsets = [0, 5, 0], sizes = [2, 1, 256], strides = [1, 1, 1]} : vector<2x8x256xf32> to vector<2x1x256xf32>
    %610 = vector.shape_cast %609 : vector<2x1x256xf32> to vector<2x256xf32>
    %611 = vector.extract_strided_slice %598 {offsets = [0, 6, 0], sizes = [2, 1, 256], strides = [1, 1, 1]} : vector<2x8x256xf32> to vector<2x1x256xf32>
    %612 = vector.shape_cast %611 : vector<2x1x256xf32> to vector<2x256xf32>
    %613 = vector.extract_strided_slice %598 {offsets = [0, 7, 0], sizes = [2, 1, 256], strides = [1, 1, 1]} : vector<2x8x256xf32> to vector<2x1x256xf32>
    %614 = vector.shape_cast %613 : vector<2x1x256xf32> to vector<2x256xf32>
    %615 = tpu.concatenate %600, %602, %604, %606, %608, %610, %612, %614 in 1 : vector<2x256xf32>, vector<2x256xf32>, vector<2x256xf32>, vector<2x256xf32>, vector<2x256xf32>, vector<2x256xf32>, vector<2x256xf32>, vector<2x256xf32> -> vector<2x2048xf32>
    %616 = arith.truncf %615 : vector<2x2048xf32> to vector<2x2048xbf16>
    %c0_212 = arith.constant 0 : index
    %c0_213 = arith.constant 0 : index
    %617 = vector.load %arg14[%c0_212, %c0_213] : memref<2048x128xbf16, #tpu.memory_space<vmem>>, vector<2048x128xbf16>
    %cst_214 = arith.constant dense<0.000000e+00> : vector<2x128xf32>
    %618 = tpu.matmul %616, %617, %cst_214 {dimension_numbers = #tpu.dot_dimension_numbers<[1], [0], [0], [1], [0, 0, 1, 1], [], []>} : vector<2x2048xbf16>, vector<2048x128xbf16>, vector<2x128xf32> -> vector<2x128xf32>
    %c0_215 = arith.constant 0 : index
    %c0_216 = arith.constant 0 : index
    %619 = vector.load %arg15[%c0_215, %c0_216] : memref<1x128xf32, #tpu.memory_space<vmem>>, vector<1x128xf32>
    %620 = vector.broadcast %619 : vector<1x128xf32> to vector<2x128xf32>
    %621 = arith.addf %618, %620 : vector<2x128xf32>
    %cst_217 = arith.constant dense<0.000000e+00> : vector<128xf32>
    %622 = vector.multi_reduction <add>, %621, %cst_217 [0] : vector<2x128xf32> to vector<128xf32>
    %623 = vector.shape_cast %622 : vector<128xf32> to vector<1x128xf32>
    %cst_218 = arith.constant 2.000000e+00 : f32
    %624 = vector.broadcast %cst_218 : f32 to vector<1x128xf32>
    %625 = arith.divf %623, %624 : vector<1x128xf32>
    %626 = vector.broadcast %625 : vector<1x128xf32> to vector<2x128xf32>
    %627 = arith.subf %621, %626 : vector<2x128xf32>
    %628 = arith.mulf %627, %627 : vector<2x128xf32>
    %cst_219 = arith.constant dense<0.000000e+00> : vector<128xf32>
    %629 = vector.multi_reduction <add>, %628, %cst_219 [0] : vector<2x128xf32> to vector<128xf32>
    %630 = vector.shape_cast %629 : vector<128xf32> to vector<1x128xf32>
    %cst_220 = arith.constant 2.000000e+00 : f32
    %631 = vector.broadcast %cst_220 : f32 to vector<1x128xf32>
    %632 = arith.divf %630, %631 : vector<1x128xf32>
    %633 = vector.broadcast %625 : vector<1x128xf32> to vector<2x128xf32>
    %634 = arith.subf %621, %633 : vector<2x128xf32>
    %cst_221 = arith.constant 9.99999974E-6 : f32
    %635 = vector.broadcast %cst_221 : f32 to vector<1x128xf32>
    %636 = arith.addf %632, %635 : vector<1x128xf32>
    %637 = math.rsqrt %636 : vector<1x128xf32>
    %638 = vector.broadcast %637 : vector<1x128xf32> to vector<2x128xf32>
    %639 = arith.mulf %634, %638 : vector<2x128xf32>
    %c0_222 = arith.constant 0 : index
    %c0_223 = arith.constant 0 : index
    %640 = vector.load %arg16[%c0_222, %c0_223] : memref<1x128xf32, #tpu.memory_space<vmem>>, vector<1x128xf32>
    %641 = vector.broadcast %640 : vector<1x128xf32> to vector<2x128xf32>
    %642 = arith.mulf %639, %641 : vector<2x128xf32>
    %c0_224 = arith.constant 0 : index
    %c0_225 = arith.constant 0 : index
    %643 = vector.load %arg17[%c0_224, %c0_225] : memref<1x128xf32, #tpu.memory_space<vmem>>, vector<1x128xf32>
    %644 = vector.broadcast %643 : vector<1x128xf32> to vector<2x128xf32>
    %645 = arith.addf %642, %644 : vector<2x128xf32>
    %646 = arith.truncf %645 : vector<2x128xf32> to vector<2x128xbf16>
    %c0_226 = arith.constant 0 : index
    %c0_227 = arith.constant 0 : index
    %647 = vector.load %arg18[%c0_226, %c0_227] : memref<128x128xbf16, #tpu.memory_space<vmem>>, vector<128x128xbf16>
    %cst_228 = arith.constant dense<0.000000e+00> : vector<2x128xf32>
    %648 = tpu.matmul %646, %647, %cst_228 {dimension_numbers = #tpu.dot_dimension_numbers<[1], [0], [0], [1], [0, 0, 1, 1], [], []>} : vector<2x128xbf16>, vector<128x128xbf16>, vector<2x128xf32> -> vector<2x128xf32>
    %c0_229 = arith.constant 0 : index
    %c0_230 = arith.constant 0 : index
    %649 = vector.load %arg19[%c0_229, %c0_230] : memref<1x128xf32, #tpu.memory_space<vmem>>, vector<1x128xf32>
    %650 = vector.broadcast %649 : vector<1x128xf32> to vector<2x128xf32>
    %651 = arith.addf %648, %650 : vector<2x128xf32>
    %652 = math.tanh %651 : vector<2x128xf32>
    %c0_231 = arith.constant 0 : index
    %c0_232 = arith.constant 0 : index
    %653 = vector.load %arg20[%c0_231, %c0_232] : memref<2x128xf32, #tpu.memory_space<vmem>>, vector<2x128xf32>
    tpu.vector_store %arg20[%c0_231, %c0_232], %652 {strides = array<i32>} : memref<2x128xf32, #tpu.memory_space<vmem>>, vector<2x128xf32>,
    return
  }
}

</mosaic_0001>

<llo_original>
// kernel: transformer_model_b1_forward.1
$region0: #{transformer_model_b1_forward.1}
  #allocation0 [shape = 'u32[]', space=smem, size = 0x4, offset = 0x4, fixed_abs, tag = 'smem constant byte address 0x4 - core index']
  #allocation1 [shape = 'u32[144,128]{1,0:T(1,128)}', space=vmem, size = 0x12000, scoped, tag = 'internal scratch']
  #allocation2 [shape = 'f32[16,256]{1,0:T(8,128)}', space=vmem, size = 0x4000, scoped, tag = 'scratch operand']
  %s0 = inlined_call_operand.vmem [shape: f32[16,256], index: 0, kind: input, shape index: {}]
  %s1 = inlined_call_operand.vmem [shape: f32[16,256], index: 1, kind: input, shape index: {}]
  %s2 = inlined_call_operand.vmem [shape: bf16[2,256,768], index: 2, kind: input, shape index: {}]
  %s3 = inlined_call_operand.vmem [shape: f32[2,1,768], index: 3, kind: input, shape index: {}]
  %s4 = inlined_call_operand.vmem [shape: bf16[2,256,256], index: 4, kind: input, shape index: {}]
  %s5 = inlined_call_operand.vmem [shape: f32[2,1,256], index: 5, kind: input, shape index: {}]
  %s6 = inlined_call_operand.vmem [shape: f32[2,1,256], index: 6, kind: input, shape index: {}]
  %s7 = inlined_call_operand.vmem [shape: f32[2,1,256], index: 7, kind: input, shape index: {}]
  %s8 = inlined_call_operand.vmem [shape: bf16[2,256,256], index: 8, kind: input, shape index: {}]
  %s9 = inlined_call_operand.vmem [shape: f32[2,1,256], index: 9, kind: input, shape index: {}]
  %s10 = inlined_call_operand.vmem [shape: bf16[2,256,256], index: 10, kind: input, shape index: {}]
  %s11 = inlined_call_operand.vmem [shape: f32[2,1,256], index: 11, kind: input, shape index: {}]
  %s12 = inlined_call_operand.vmem [shape: f32[2,1,256], index: 12, kind: input, shape index: {}]
  %s13 = inlined_call_operand.vmem [shape: f32[2,1,256], index: 13, kind: input, shape index: {}]
  %s14 = inlined_call_operand.vmem [shape: bf16[2048,128], index: 14, kind: input, shape index: {}]
  %s15 = inlined_call_operand.vmem [shape: f32[1,128], index: 15, kind: input, shape index: {}]
  %s16 = inlined_call_operand.vmem [shape: f32[1,128], index: 16, kind: input, shape index: {}]
  %s17 = inlined_call_operand.vmem [shape: f32[1,128], index: 17, kind: input, shape index: {}]
  %s18 = inlined_call_operand.vmem [shape: bf16[128,128], index: 18, kind: input, shape index: {}]
  %s19 = inlined_call_operand.vmem [shape: f32[1,128], index: 19, kind: input, shape index: {}]
  %s20 = inlined_call_operand.hbm [shape: f32[2,128], index: 20, kind: output, shape index: {}]
  %s21 = sld [smem:[#allocation0]]
  $region90: #{transformer_model_b1_forward.1} parent=0
    _
  %s23 = ssub.s32 1, %s21
  %s24 = scalar_select 0, %s23, %s21
  $region1: #{transformer_model_b1_forward.1} parent=0
    #allocation3 [shape = 'u8[1024]{0}', space=vmem, size = 0x400, scoped, tag = 'output window, operand 0, single buffered']
    #allocation4 [shape = 's32[1]{0}', space=sflag, size = 0x4, scoped, tag = 'scoped memory for transformer_model_b1_forward.1']
    %25 = vsyncpa [#allocation4], 0
    // Predicated region
    $region2: #{transformer_model_b1_forward.1} parent=1 // pred_check
      _
    $region3: #{transformer_model_b1_forward.1} parent=1 // pred_check_branch
      %27 = sbr.rel (0) target = $region5
    $region4: #{transformer_model_b1_forward.1} parent=1 // pred_region
      _
    $region5: #{transformer_model_b1_forward.1} parent=1 // pred_fallthru
      _
    // Predicated region
    $region6: #{transformer_model_b1_forward.1} parent=1 // pred_check
      _
    $region7: #{transformer_model_b1_forward.1} parent=1 // pred_check_branch
      %29 = sbr.rel (0) target = $region9
    $region8: #{transformer_model_b1_forward.1} parent=1 // pred_region
      _
    $region9: #{transformer_model_b1_forward.1} parent=1 // pred_fallthru
      _
    // Predicated region
    $region10: #{transformer_model_b1_forward.1} parent=1 // pred_check
      _
    $region11: #{transformer_model_b1_forward.1} parent=1 // pred_check_branch
      %31 = sbr.rel (0) target = $region13
    $region12: #{transformer_model_b1_forward.1} parent=1 // pred_region
      _
    $region13: #{transformer_model_b1_forward.1} parent=1 // pred_fallthru
      _
    // Predicated region
    $region14: #{transformer_model_b1_forward.1} parent=1 // pred_check
      _
    $region15: #{transformer_model_b1_forward.1} parent=1 // pred_check_branch
      %33 = sbr.rel (0) target = $region17
    $region16: #{transformer_model_b1_forward.1} parent=1 // pred_region
      _
    $region17: #{transformer_model_b1_forward.1} parent=1 // pred_fallthru
      _
    // Predicated region
    $region18: #{transformer_model_b1_forward.1} parent=1 // pred_check
      _
    $region19: #{transformer_model_b1_forward.1} parent=1 // pred_check_branch
      %35 = sbr.rel (0) target = $region21
    $region20: #{transformer_model_b1_forward.1} parent=1 // pred_region
      _
    $region21: #{transformer_model_b1_forward.1} parent=1 // pred_fallthru
      _
    // Predicated region
    $region22: #{transformer_model_b1_forward.1} parent=1 // pred_check
      _
    $region23: #{transformer_model_b1_forward.1} parent=1 // pred_check_branch
      %37 = sbr.rel (0) target = $region25
    $region24: #{transformer_model_b1_forward.1} parent=1 // pred_region
      _
    $region25: #{transformer_model_b1_forward.1} parent=1 // pred_fallthru
      _
    // Predicated region
    $region26: #{transformer_model_b1_forward.1} parent=1 // pred_check
      _
    $region27: #{transformer_model_b1_forward.1} parent=1 // pred_check_branch
      %39 = sbr.rel (0) target = $region29
    $region28: #{transformer_model_b1_forward.1} parent=1 // pred_region
      _
    $region29: #{transformer_model_b1_forward.1} parent=1 // pred_fallthru
      _
    // Predicated region
    $region30: #{transformer_model_b1_forward.1} parent=1 // pred_check
      _
    $region31: #{transformer_model_b1_forward.1} parent=1 // pred_check_branch
      %41 = sbr.rel (0) target = $region33
    $region32: #{transformer_model_b1_forward.1} parent=1 // pred_region
      _
    $region33: #{transformer_model_b1_forward.1} parent=1 // pred_fallthru
      _
    // Predicated region
    $region34: #{transformer_model_b1_forward.1} parent=1 // pred_check
      _
    $region35: #{transformer_model_b1_forward.1} parent=1 // pred_check_branch
      %43 = sbr.rel (0) target = $region37
    $region36: #{transformer_model_b1_forward.1} parent=1 // pred_region
      _
    $region37: #{transformer_model_b1_forward.1} parent=1 // pred_fallthru
      _
    // Predicated region
    $region38: #{transformer_model_b1_forward.1} parent=1 // pred_check
      _
    $region39: #{transformer_model_b1_forward.1} parent=1 // pred_check_branch
      %45 = sbr.rel (0) target = $region41
    $region40: #{transformer_model_b1_forward.1} parent=1 // pred_region
      _
    $region41: #{transformer_model_b1_forward.1} parent=1 // pred_fallthru
      _
    // Predicated region
    $region42: #{transformer_model_b1_forward.1} parent=1 // pred_check
      _
    $region43: #{transformer_model_b1_forward.1} parent=1 // pred_check_branch
      %47 = sbr.rel (0) target = $region45
    $region44: #{transformer_model_b1_forward.1} parent=1 // pred_region
      _
    $region45: #{transformer_model_b1_forward.1} parent=1 // pred_fallthru
      _
    // Predicated region
    $region46: #{transformer_model_b1_forward.1} parent=1 // pred_check
      _
    $region47: #{transformer_model_b1_forward.1} parent=1 // pred_check_branch
      %49 = sbr.rel (0) target = $region49
    $region48: #{transformer_model_b1_forward.1} parent=1 // pred_region
      _
    $region49: #{transformer_model_b1_forward.1} parent=1 // pred_fallthru
      _
    // Predicated region
    $region50: #{transformer_model_b1_forward.1} parent=1 // pred_check
      _
    $region51: #{transformer_model_b1_forward.1} parent=1 // pred_check_branch
      %51 = sbr.rel (0) target = $region53
    $region52: #{transformer_model_b1_forward.1} parent=1 // pred_region
      _
    $region53: #{transformer_model_b1_forward.1} parent=1 // pred_fallthru
      _
    // Predicated region
    $region54: #{transformer_model_b1_forward.1} parent=1 // pred_check
      _
    $region55: #{transformer_model_b1_forward.1} parent=1 // pred_check_branch
      %53 = sbr.rel (0) target = $region57
    $region56: #{transformer_model_b1_forward.1} parent=1 // pred_region
      _
    $region57: #{transformer_model_b1_forward.1} parent=1 // pred_fallthru
      _
    // Predicated region
    $region58: #{transformer_model_b1_forward.1} parent=1 // pred_check
      _
    $region59: #{transformer_model_b1_forward.1} parent=1 // pred_check_branch
      %55 = sbr.rel (0) target = $region61
    $region60: #{transformer_model_b1_forward.1} parent=1 // pred_region
      _
    $region61: #{transformer_model_b1_forward.1} parent=1 // pred_fallthru
      _
    // Predicated region
    $region62: #{transformer_model_b1_forward.1} parent=1 // pred_check
      _
    $region63: #{transformer_model_b1_forward.1} parent=1 // pred_check_branch
      %57 = sbr.rel (0) target = $region65
    $region64: #{transformer_model_b1_forward.1} parent=1 // pred_region
      _
    $region65: #{transformer_model_b1_forward.1} parent=1 // pred_fallthru
      _
    // Predicated region
    $region66: #{transformer_model_b1_forward.1} parent=1 // pred_check
      _
    $region67: #{transformer_model_b1_forward.1} parent=1 // pred_check_branch
      %59 = sbr.rel (0) target = $region69
    $region68: #{transformer_model_b1_forward.1} parent=1 // pred_region
      _
    $region69: #{transformer_model_b1_forward.1} parent=1 // pred_fallthru
      _
    // Predicated region
    $region70: #{transformer_model_b1_forward.1} parent=1 // pred_check
      _
    $region71: #{transformer_model_b1_forward.1} parent=1 // pred_check_branch
      %61 = sbr.rel (0) target = $region73
    $region72: #{transformer_model_b1_forward.1} parent=1 // pred_region
      _
    $region73: #{transformer_model_b1_forward.1} parent=1 // pred_fallthru
      _
    // Predicated region
    $region74: #{transformer_model_b1_forward.1} parent=1 // pred_check
      _
    $region75: #{transformer_model_b1_forward.1} parent=1 // pred_check_branch
      %63 = sbr.rel (0) target = $region77
    $region76: #{transformer_model_b1_forward.1} parent=1 // pred_region
      _
    $region77: #{transformer_model_b1_forward.1} parent=1 // pred_fallthru
      _
    // Predicated region
    $region78: #{transformer_model_b1_forward.1} parent=1 // pred_check
      _
    $region79: #{transformer_model_b1_forward.1} parent=1 // pred_check_branch
      %65 = sbr.rel (0) target = $region81
    $region80: #{transformer_model_b1_forward.1} parent=1 // pred_region
      _
    $region81: #{transformer_model_b1_forward.1} parent=1 // pred_fallthru
      _
    %v67 = vld [vmem:[%s1] sm:$0xff]
    %v68 = vld [vmem:[%s1 + $0x8] sm:$0xff]
    %v69 = vld [vmem:[%s1 + $0x10] sm:$0xff]
    %v70 = vld [vmem:[%s1 + $0x18] sm:$0xff]
    %v71 = vld [vmem:[%s0] sm:$0xff]
    %v72 = vld [vmem:[%s0 + $0x8] sm:$0xff]
    %v73 = vld [vmem:[%s0 + $0x10] sm:$0xff]
    %v74 = vld [vmem:[%s0 + $0x18] sm:$0xff]
    %v75 = vadd.f32 %v71, %v67
    %v76 = vadd.f32 %v72, %v68
    %v77 = vadd.f32 %v73, %v69
    %v78 = vadd.f32 %v74, %v70
    %v79 = vpack.c.bf16 %v77, %v75
    %v80 = vpack.c.bf16 %v78, %v76
    %v81 = vld [vmem:[%s2] sm:$0xff]
    %v82 = vld [vmem:[%s2 + $0x8] sm:$0xff]
    %v83 = vld [vmem:[%s2 + $0x10] sm:$0xff]
    %v84 = vld [vmem:[%s2 + $0x18] sm:$0xff]
    %v85 = vld [vmem:[%s2 + $0x20] sm:$0xff]
    %v86 = vld [vmem:[%s2 + $0x28] sm:$0xff]
    %v87 = vld [vmem:[%s2 + $0x30] sm:$0xff]
    %v88 = vld [vmem:[%s2 + $0x38] sm:$0xff]
    %v89 = vld [vmem:[%s2 + $0x40] sm:$0xff]
    %v90 = vld [vmem:[%s2 + $0x48] sm:$0xff]
    %v91 = vld [vmem:[%s2 + $0x50] sm:$0xff]
    %v92 = vld [vmem:[%s2 + $0x58] sm:$0xff]
    %v93 = vld [vmem:[%s2 + $0x60] sm:$0xff]
    %v94 = vld [vmem:[%s2 + $0x68] sm:$0xff]
    %v95 = vld [vmem:[%s2 + $0x70] sm:$0xff]
    %v96 = vld [vmem:[%s2 + $0x78] sm:$0xff]
    %v97 = vld [vmem:[%s2 + $0x80] sm:$0xff]
    %v98 = vld [vmem:[%s2 + $0x88] sm:$0xff]
    %v99 = vld [vmem:[%s2 + $0x90] sm:$0xff]
    %v100 = vld [vmem:[%s2 + $0x98] sm:$0xff]
    %v101 = vld [vmem:[%s2 + $0xa0] sm:$0xff]
    %v102 = vld [vmem:[%s2 + $0xa8] sm:$0xff]
    %v103 = vld [vmem:[%s2 + $0xb0] sm:$0xff]
    %v104 = vld [vmem:[%s2 + $0xb8] sm:$0xff]
    %v105 = vld [vmem:[%s2 + $0xc0] sm:$0xff]
    %v106 = vld [vmem:[%s2 + $0xc8] sm:$0xff]
    %v107 = vld [vmem:[%s2 + $0xd0] sm:$0xff]
    %v108 = vld [vmem:[%s2 + $0xd8] sm:$0xff]
    %v109 = vld [vmem:[%s2 + $0xe0] sm:$0xff]
    %v110 = vld [vmem:[%s2 + $0xe8] sm:$0xff]
    %v111 = vld [vmem:[%s2 + $0xf0] sm:$0xff]
    %v112 = vld [vmem:[%s2 + $0xf8] sm:$0xff]
    %v113 = vld [vmem:[%s2 + $0x100] sm:$0xff]
    %v114 = vld [vmem:[%s2 + $0x108] sm:$0xff]
    %v115 = vld [vmem:[%s2 + $0x110] sm:$0xff]
    %v116 = vld [vmem:[%s2 + $0x118] sm:$0xff]
    %v117 = vld [vmem:[%s2 + $0x120] sm:$0xff]
    %v118 = vld [vmem:[%s2 + $0x128] sm:$0xff]
    %v119 = vld [vmem:[%s2 + $0x130] sm:$0xff]
    %v120 = vld [vmem:[%s2 + $0x138] sm:$0xff]
    %v121 = vld [vmem:[%s2 + $0x140] sm:$0xff]
    %v122 = vld [vmem:[%s2 + $0x148] sm:$0xff]
    %v123 = vld [vmem:[%s2 + $0x150] sm:$0xff]
    %v124 = vld [vmem:[%s2 + $0x158] sm:$0xff]
    %v125 = vld [vmem:[%s2 + $0x160] sm:$0xff]
    %v126 = vld [vmem:[%s2 + $0x168] sm:$0xff]
    %v127 = vld [vmem:[%s2 + $0x170] sm:$0xff]
    %v128 = vld [vmem:[%s2 + $0x178] sm:$0xff]
    %v129 = vld [vmem:[%s2 + $0x180] sm:$0xff]
    %v130 = vld [vmem:[%s2 + $0x188] sm:$0xff]
    %v131 = vld [vmem:[%s2 + $0x190] sm:$0xff]
    %v132 = vld [vmem:[%s2 + $0x198] sm:$0xff]
    %v133 = vld [vmem:[%s2 + $0x1a0] sm:$0xff]
    %v134 = vld [vmem:[%s2 + $0x1a8] sm:$0xff]
    %v135 = vld [vmem:[%s2 + $0x1b0] sm:$0xff]
    %v136 = vld [vmem:[%s2 + $0x1b8] sm:$0xff]
    %v137 = vld [vmem:[%s2 + $0x1c0] sm:$0xff]
    %v138 = vld [vmem:[%s2 + $0x1c8] sm:$0xff]
    %v139 = vld [vmem:[%s2 + $0x1d0] sm:$0xff]
    %v140 = vld [vmem:[%s2 + $0x1d8] sm:$0xff]
    %v141 = vld [vmem:[%s2 + $0x1e0] sm:$0xff]
    %v142 = vld [vmem:[%s2 + $0x1e8] sm:$0xff]
    %v143 = vld [vmem:[%s2 + $0x1f0] sm:$0xff]
    %v144 = vld [vmem:[%s2 + $0x1f8] sm:$0xff]
    %v145 = vld [vmem:[%s2 + $0x200] sm:$0xff]
    %v146 = vld [vmem:[%s2 + $0x208] sm:$0xff]
    %v147 = vld [vmem:[%s2 + $0x210] sm:$0xff]
    %v148 = vld [vmem:[%s2 + $0x218] sm:$0xff]
    %v149 = vld [vmem:[%s2 + $0x220] sm:$0xff]
    %v150 = vld [vmem:[%s2 + $0x228] sm:$0xff]
    %v151 = vld [vmem:[%s2 + $0x230] sm:$0xff]
    %v152 = vld [vmem:[%s2 + $0x238] sm:$0xff]
    %v153 = vld [vmem:[%s2 + $0x240] sm:$0xff]
    %v154 = vld [vmem:[%s2 + $0x248] sm:$0xff]
    %v155 = vld [vmem:[%s2 + $0x250] sm:$0xff]
    %v156 = vld [vmem:[%s2 + $0x258] sm:$0xff]
    %v157 = vld [vmem:[%s2 + $0x260] sm:$0xff]
    %v158 = vld [vmem:[%s2 + $0x268] sm:$0xff]
    %v159 = vld [vmem:[%s2 + $0x270] sm:$0xff]
    %v160 = vld [vmem:[%s2 + $0x278] sm:$0xff]
    %v161 = vld [vmem:[%s2 + $0x280] sm:$0xff]
    %v162 = vld [vmem:[%s2 + $0x288] sm:$0xff]
    %v163 = vld [vmem:[%s2 + $0x290] sm:$0xff]
    %v164 = vld [vmem:[%s2 + $0x298] sm:$0xff]
    %v165 = vld [vmem:[%s2 + $0x2a0] sm:$0xff]
    %v166 = vld [vmem:[%s2 + $0x2a8] sm:$0xff]
    %v167 = vld [vmem:[%s2 + $0x2b0] sm:$0xff]
    %v168 = vld [vmem:[%s2 + $0x2b8] sm:$0xff]
    %v169 = vld [vmem:[%s2 + $0x2c0] sm:$0xff]
    %v170 = vld [vmem:[%s2 + $0x2c8] sm:$0xff]
    %v171 = vld [vmem:[%s2 + $0x2d0] sm:$0xff]
    %v172 = vld [vmem:[%s2 + $0x2d8] sm:$0xff]
    %v173 = vld [vmem:[%s2 + $0x2e0] sm:$0xff]
    %v174 = vld [vmem:[%s2 + $0x2e8] sm:$0xff]
    %v175 = vld [vmem:[%s2 + $0x2f0] sm:$0xff]
    %v176 = vld [vmem:[%s2 + $0x2f8] sm:$0xff]
    %v177 = vld [vmem:[%s3] sm:$0x3f]
    %v179 = vlaneseq
    %v180 = vshrl.u32 %v179, 7
    %v181 = vsub.s32 0, %v180
    %v182 = vrot.slane %v177, %v181
    %v183 = vlaneseq
    %v184 = vshrl.u32 %v183, 7
    %v185 = vsub.s32 1, %v184
    %v186 = vrot.slane %v177, %v185
    %v187 = vlaneseq
    %v188 = vshrl.u32 %v187, 7
    %v189 = vsub.s32 2, %v188
    %v190 = vrot.slane %v177, %v189
    %v191 = vlaneseq
    %v192 = vshrl.u32 %v191, 7
    %v193 = vsub.s32 3, %v192
    %v194 = vrot.slane %v177, %v193
    %v195 = vlaneseq
    %v196 = vshrl.u32 %v195, 7
    %v197 = vsub.s32 4, %v196
    %v198 = vrot.slane %v177, %v197
    %v199 = vlaneseq
    %v200 = vshrl.u32 %v199, 7
    %v201 = vsub.s32 5, %v200
    %v202 = vrot.slane %v177, %v201
    %v305 = vunpack.c.l.b16 %v81
    %v306 = vunpack.c.h.b16 %v81
    %v307 = vunpack.c.l.b16 %v82
    %v308 = vunpack.c.h.b16 %v82
    %v309 = vunpack.c.l.b16 %v83
    %v310 = vunpack.c.h.b16 %v83
    %v311 = vunpack.c.l.b16 %v84
    %v312 = vunpack.c.h.b16 %v84
    %v313 = vunpack.c.l.b16 %v85
    %v314 = vunpack.c.h.b16 %v85
    %v315 = vunpack.c.l.b16 %v86
    %v316 = vunpack.c.h.b16 %v86
    %v317 = vunpack.c.l.b16 %v87
    %v318 = vunpack.c.h.b16 %v87
    %v319 = vunpack.c.l.b16 %v88
    %v320 = vunpack.c.h.b16 %v88
    %v321 = vunpack.c.l.b16 %v89
    %v322 = vunpack.c.h.b16 %v89
    %v323 = vunpack.c.l.b16 %v90
    %v324 = vunpack.c.h.b16 %v90
    %v325 = vunpack.c.l.b16 %v91
    %v326 = vunpack.c.h.b16 %v91
    %v327 = vunpack.c.l.b16 %v92
    %v328 = vunpack.c.h.b16 %v92
    %v329 = vunpack.c.l.b16 %v93
    %v330 = vunpack.c.h.b16 %v93
    %v331 = vunpack.c.l.b16 %v94
    %v332 = vunpack.c.h.b16 %v94
    %v333 = vunpack.c.l.b16 %v95
    %v334 = vunpack.c.h.b16 %v95
    %v335 = vunpack.c.l.b16 %v96
    %v336 = vunpack.c.h.b16 %v96
    %v337 = vunpack.c.l.b16 %v97
    %v338 = vunpack.c.h.b16 %v97
    %v339 = vunpack.c.l.b16 %v98
    %v340 = vunpack.c.h.b16 %v98
    %v341 = vunpack.c.l.b16 %v99
    %v342 = vunpack.c.h.b16 %v99
    %v343 = vunpack.c.l.b16 %v100
    %v344 = vunpack.c.h.b16 %v100
    %v345 = vunpack.c.l.b16 %v101
    %v346 = vunpack.c.h.b16 %v101
    %v347 = vunpack.c.l.b16 %v102
    %v348 = vunpack.c.h.b16 %v102
    %v349 = vunpack.c.l.b16 %v103
    %v350 = vunpack.c.h.b16 %v103
    %v351 = vunpack.c.l.b16 %v104
    %v352 = vunpack.c.h.b16 %v104
    %v353 = vunpack.c.l.b16 %v105
    %v354 = vunpack.c.h.b16 %v105
    %v355 = vunpack.c.l.b16 %v106
    %v356 = vunpack.c.h.b16 %v106
    %v357 = vunpack.c.l.b16 %v107
    %v358 = vunpack.c.h.b16 %v107
    %v359 = vunpack.c.l.b16 %v108
    %v360 = vunpack.c.h.b16 %v108
    %v361 = vunpack.c.l.b16 %v109
    %v362 = vunpack.c.h.b16 %v109
    %v363 = vunpack.c.l.b16 %v110
    %v364 = vunpack.c.h.b16 %v110
    %v365 = vunpack.c.l.b16 %v111
    %v366 = vunpack.c.h.b16 %v111
    %v367 = vunpack.c.l.b16 %v112
    %v368 = vunpack.c.h.b16 %v112
    %v369 = vunpack.c.l.b16 %v113
    %v370 = vunpack.c.h.b16 %v113
    %v371 = vunpack.c.l.b16 %v114
    %v372 = vunpack.c.h.b16 %v114
    %v373 = vunpack.c.l.b16 %v115
    %v374 = vunpack.c.h.b16 %v115
    %v375 = vunpack.c.l.b16 %v116
    %v376 = vunpack.c.h.b16 %v116
    %v377 = vunpack.c.l.b16 %v117
    %v378 = vunpack.c.h.b16 %v117
    %v379 = vunpack.c.l.b16 %v118
    %v380 = vunpack.c.h.b16 %v118
    %v381 = vunpack.c.l.b16 %v119
    %v382 = vunpack.c.h.b16 %v119
    %v383 = vunpack.c.l.b16 %v120
    %v384 = vunpack.c.h.b16 %v120
    %v385 = vunpack.c.l.b16 %v121
    %v386 = vunpack.c.h.b16 %v121
    %v387 = vunpack.c.l.b16 %v122
    %v388 = vunpack.c.h.b16 %v122
    %v389 = vunpack.c.l.b16 %v123
    %v390 = vunpack.c.h.b16 %v123
    %v391 = vunpack.c.l.b16 %v124
    %v392 = vunpack.c.h.b16 %v124
    %v393 = vunpack.c.l.b16 %v125
    %v394 = vunpack.c.h.b16 %v125
    %v395 = vunpack.c.l.b16 %v126
    %v396 = vunpack.c.h.b16 %v126
    %v397 = vunpack.c.l.b16 %v127
    %v398 = vunpack.c.h.b16 %v127
    %v399 = vunpack.c.l.b16 %v128
    %v400 = vunpack.c.h.b16 %v128
    %v401 = vunpack.c.l.b16 %v129
    %v402 = vunpack.c.h.b16 %v129
    %v403 = vunpack.c.l.b16 %v130
    %v404 = vunpack.c.h.b16 %v130
    %v405 = vunpack.c.l.b16 %v131
    %v406 = vunpack.c.h.b16 %v131
    %v407 = vunpack.c.l.b16 %v132
    %v408 = vunpack.c.h.b16 %v132
    %v409 = vunpack.c.l.b16 %v133
    %v410 = vunpack.c.h.b16 %v133
    %v411 = vunpack.c.l.b16 %v134
    %v412 = vunpack.c.h.b16 %v134
    %v413 = vunpack.c.l.b16 %v135
    %v414 = vunpack.c.h.b16 %v135
    %v415 = vunpack.c.l.b16 %v136
    %v416 = vunpack.c.h.b16 %v136
    %v417 = vunpack.c.l.b16 %v137
    %v418 = vunpack.c.h.b16 %v137
    %v419 = vunpack.c.l.b16 %v138
    %v420 = vunpack.c.h.b16 %v138
    %v421 = vunpack.c.l.b16 %v139
    %v422 = vunpack.c.h.b16 %v139
    %v423 = vunpack.c.l.b16 %v140
    %v424 = vunpack.c.h.b16 %v140
    %v425 = vunpack.c.l.b16 %v141
    %v426 = vunpack.c.h.b16 %v141
    %v427 = vunpack.c.l.b16 %v142
    %v428 = vunpack.c.h.b16 %v142
    %v429 = vunpack.c.l.b16 %v143
    %v430 = vunpack.c.h.b16 %v143
    %v431 = vunpack.c.l.b16 %v144
    %v432 = vunpack.c.h.b16 %v144
    %v433 = vunpack.c.l.b16 %v145
    %v434 = vunpack.c.h.b16 %v145
    %v435 = vunpack.c.l.b16 %v146
    %v436 = vunpack.c.h.b16 %v146
    %v437 = vunpack.c.l.b16 %v147
    %v438 = vunpack.c.h.b16 %v147
    %v439 = vunpack.c.l.b16 %v148
    %v440 = vunpack.c.h.b16 %v148
    %v441 = vunpack.c.l.b16 %v149
    %v442 = vunpack.c.h.b16 %v149
    %v443 = vunpack.c.l.b16 %v150
    %v444 = vunpack.c.h.b16 %v150
    %v445 = vunpack.c.l.b16 %v151
    %v446 = vunpack.c.h.b16 %v151
    %v447 = vunpack.c.l.b16 %v152
    %v448 = vunpack.c.h.b16 %v152
    %v449 = vunpack.c.l.b16 %v153
    %v450 = vunpack.c.h.b16 %v153
    %v451 = vunpack.c.l.b16 %v154
    %v452 = vunpack.c.h.b16 %v154
    %v453 = vunpack.c.l.b16 %v155
    %v454 = vunpack.c.h.b16 %v155
    %v455 = vunpack.c.l.b16 %v156
    %v456 = vunpack.c.h.b16 %v156
    %v457 = vunpack.c.l.b16 %v157
    %v458 = vunpack.c.h.b16 %v157
    %v459 = vunpack.c.l.b16 %v158
    %v460 = vunpack.c.h.b16 %v158
    %v461 = vunpack.c.l.b16 %v159
    %v462 = vunpack.c.h.b16 %v159
    %v463 = vunpack.c.l.b16 %v160
    %v464 = vunpack.c.h.b16 %v160
    %v465 = vunpack.c.l.b16 %v161
    %v466 = vunpack.c.h.b16 %v161
    %v467 = vunpack.c.l.b16 %v162
    %v468 = vunpack.c.h.b16 %v162
    %v469 = vunpack.c.l.b16 %v163
    %v470 = vunpack.c.h.b16 %v163
    %v471 = vunpack.c.l.b16 %v164
    %v472 = vunpack.c.h.b16 %v164
    %v473 = vunpack.c.l.b16 %v165
    %v474 = vunpack.c.h.b16 %v165
    %v475 = vunpack.c.l.b16 %v166
    %v476 = vunpack.c.h.b16 %v166
    %v477 = vunpack.c.l.b16 %v167
    %v478 = vunpack.c.h.b16 %v167
    %v479 = vunpack.c.l.b16 %v168
    %v480 = vunpack.c.h.b16 %v168
    %v481 = vunpack.c.l.b16 %v169
    %v482 = vunpack.c.h.b16 %v169
    %v483 = vunpack.c.l.b16 %v170
    %v484 = vunpack.c.h.b16 %v170
    %v485 = vunpack.c.l.b16 %v171
    %v486 = vunpack.c.h.b16 %v171
    %v487 = vunpack.c.l.b16 %v172
    %v488 = vunpack.c.h.b16 %v172
    %v489 = vunpack.c.l.b16 %v173
    %v490 = vunpack.c.h.b16 %v173
    %v491 = vunpack.c.l.b16 %v174
    %v492 = vunpack.c.h.b16 %v174
    %v493 = vunpack.c.l.b16 %v175
    %v494 = vunpack.c.h.b16 %v175
    %v495 = vunpack.c.l.b16 %v176
    %v496 = vunpack.c.h.b16 %v176
    %v497 = vpack.c.b16 %v311, %v305
    %v498 = vpack.c.b16 %v312, %v306
    %v499 = vpack.c.b16 %v313, %v307
    %v500 = vpack.c.b16 %v314, %v308
    %v501 = vpack.c.b16 %v315, %v309
    %v502 = vpack.c.b16 %v316, %v310
    %v503 = vpack.c.b16 %v323, %v317
    %v504 = vpack.c.b16 %v324, %v318
    %v505 = vpack.c.b16 %v325, %v319
    %v506 = vpack.c.b16 %v326, %v320
    %v507 = vpack.c.b16 %v327, %v321
    %v508 = vpack.c.b16 %v328, %v322
    %v509 = vpack.c.b16 %v335, %v329
    %v510 = vpack.c.b16 %v336, %v330
    %v511 = vpack.c.b16 %v337, %v331
    %v512 = vpack.c.b16 %v338, %v332
    %v513 = vpack.c.b16 %v339, %v333
    %v514 = vpack.c.b16 %v340, %v334
    %v515 = vpack.c.b16 %v347, %v341
    %v516 = vpack.c.b16 %v348, %v342
    %v517 = vpack.c.b16 %v349, %v343
    %v518 = vpack.c.b16 %v350, %v344
    %v519 = vpack.c.b16 %v351, %v345
    %v520 = vpack.c.b16 %v352, %v346
    %v521 = vpack.c.b16 %v359, %v353
    %v522 = vpack.c.b16 %v360, %v354
    %v523 = vpack.c.b16 %v361, %v355
    %v524 = vpack.c.b16 %v362, %v356
    %v525 = vpack.c.b16 %v363, %v357
    %v526 = vpack.c.b16 %v364, %v358
    %v527 = vpack.c.b16 %v371, %v365
    %v528 = vpack.c.b16 %v372, %v366
    %v529 = vpack.c.b16 %v373, %v367
    %v530 = vpack.c.b16 %v374, %v368
    %v531 = vpack.c.b16 %v375, %v369
    %v532 = vpack.c.b16 %v376, %v370
    %v533 = vpack.c.b16 %v383, %v377
    %v534 = vpack.c.b16 %v384, %v378
    %v535 = vpack.c.b16 %v385, %v379
    %v536 = vpack.c.b16 %v386, %v380
    %v537 = vpack.c.b16 %v387, %v381
    %v538 = vpack.c.b16 %v388, %v382
    %v539 = vpack.c.b16 %v395, %v389
    %v540 = vpack.c.b16 %v396, %v390
    %v541 = vpack.c.b16 %v397, %v391
    %v542 = vpack.c.b16 %v398, %v392
    %v543 = vpack.c.b16 %v399, %v393
    %v544 = vpack.c.b16 %v400, %v394
    %v545 = vpack.c.b16 %v407, %v401
    %v546 = vpack.c.b16 %v408, %v402
    %v547 = vpack.c.b16 %v409, %v403
    %v548 = vpack.c.b16 %v410, %v404
    %v549 = vpack.c.b16 %v411, %v405
    %v550 = vpack.c.b16 %v412, %v406
    %v551 = vpack.c.b16 %v419, %v413
    %v552 = vpack.c.b16 %v420, %v414
    %v553 = vpack.c.b16 %v421, %v415
    %v554 = vpack.c.b16 %v422, %v416
    %v555 = vpack.c.b16 %v423, %v417
    %v556 = vpack.c.b16 %v424, %v418
    %v557 = vpack.c.b16 %v431, %v425
    %v558 = vpack.c.b16 %v432, %v426
    %v559 = vpack.c.b16 %v433, %v427
    %v560 = vpack.c.b16 %v434, %v428
    %v561 = vpack.c.b16 %v435, %v429
    %v562 = vpack.c.b16 %v436, %v430
    %v563 = vpack.c.b16 %v443, %v437
    %v564 = vpack.c.b16 %v444, %v438
    %v565 = vpack.c.b16 %v445, %v439
    %v566 = vpack.c.b16 %v446, %v440
    %v567 = vpack.c.b16 %v447, %v441
    %v568 = vpack.c.b16 %v448, %v442
    %v569 = vpack.c.b16 %v455, %v449
    %v570 = vpack.c.b16 %v456, %v450
    %v571 = vpack.c.b16 %v457, %v451
    %v572 = vpack.c.b16 %v458, %v452
    %v573 = vpack.c.b16 %v459, %v453
    %v574 = vpack.c.b16 %v460, %v454
    %v575 = vpack.c.b16 %v467, %v461
    %v576 = vpack.c.b16 %v468, %v462
    %v577 = vpack.c.b16 %v469, %v463
    %v578 = vpack.c.b16 %v470, %v464
    %v579 = vpack.c.b16 %v471, %v465
    %v580 = vpack.c.b16 %v472, %v466
    %v581 = vpack.c.b16 %v479, %v473
    %v582 = vpack.c.b16 %v480, %v474
    %v583 = vpack.c.b16 %v481, %v475
    %v584 = vpack.c.b16 %v482, %v476
    %v585 = vpack.c.b16 %v483, %v477
    %v586 = vpack.c.b16 %v484, %v478
    %v587 = vpack.c.b16 %v491, %v485
    %v588 = vpack.c.b16 %v492, %v486
    %v589 = vpack.c.b16 %v493, %v487
    %v590 = vpack.c.b16 %v494, %v488
    %v591 = vpack.c.b16 %v495, %v489
    %v592 = vpack.c.b16 %v496, %v490
    %689 = vmatprep.subr.bf16.mxu0 %v498
    %690 = vmatpush1.bf16.msra.mxu0 %v497
    %691 = vmatprep.subr.bf16.mxu0 %v504
    %692 = vmatpush1.bf16.msra.mxu0 %v503
    %693 = vmatprep.subr.bf16.mxu0 %v510
    %694 = vmatpush1.bf16.msra.mxu0 %v509
    %695 = vmatprep.subr.bf16.mxu0 %v516
    %696 = vmatpush1.bf16.msra.mxu0 %v515
    %697 = vmatprep.subr.bf16.mxu0 %v522
    %698 = vmatpush1.bf16.msra.mxu0 %v521
    %699 = vmatprep.subr.bf16.mxu0 %v528
    %700 = vmatpush1.bf16.msra.mxu0 %v527
    %701 = vmatprep.subr.bf16.mxu0 %v534
    %702 = vmatpush1.bf16.msra.mxu0 %v533
    %703 = vmatprep.subr.bf16.mxu0 %v540
    %704 = vmatpush1.bf16.msra.mxu0 %v539
    %705 = vmatprep.subr.bf16.mxu0 %v546
    %706 = vmatpush1.bf16.msra.mxu0 %v545
    %707 = vmatprep.subr.bf16.mxu0 %v552
    %708 = vmatpush1.bf16.msra.mxu0 %v551
    %709 = vmatprep.subr.bf16.mxu0 %v558
    %710 = vmatpush1.bf16.msra.mxu0 %v557
    %711 = vmatprep.subr.bf16.mxu0 %v564
    %712 = vmatpush1.bf16.msra.mxu0 %v563
    %713 = vmatprep.subr.bf16.mxu0 %v570
    %714 = vmatpush1.bf16.msra.mxu0 %v569
    %715 = vmatprep.subr.bf16.mxu0 %v576
    %716 = vmatpush1.bf16.msra.mxu0 %v575
    %717 = vmatprep.subr.bf16.mxu0 %v582
    %718 = vmatpush1.bf16.msra.mxu0 %v581
    %719 = vmatprep.subr.bf16.mxu0 %v588
    %720 = vmatpush1.bf16.msra.mxu0 %v587
    %721 = vmatprep.mubr.bf16.mxu0 %v80
    %722 = vmatmul.mubr.bf16.gmra.mrb[0].mxu0 %v79
    %v723 = vpop.f32.mrb[0].mxu0
    %v724 = vadd.f32 %v182, %v723
    %v725 = vpop.f32.mrb[0].mxu0
    %v726 = vadd.f32 %v186, %v725
    %v727 = vpop.f32.mrb[0].mxu0
    %v728 = vadd.f32 %v182, %v727
    %v729 = vpop.f32.mrb[0].mxu0
    %v730 = vadd.f32 %v186, %v729
    %731 = vdwg.mxu0
    %732 = vmatprep.subr.bf16.mxu0 %v500
    %733 = vmatpush1.bf16.msra.mxu0 %v499
    %734 = vmatprep.subr.bf16.mxu0 %v506
    %735 = vmatpush1.bf16.msra.mxu0 %v505
    %736 = vmatprep.subr.bf16.mxu0 %v512
    %737 = vmatpush1.bf16.msra.mxu0 %v511
    %738 = vmatprep.subr.bf16.mxu0 %v518
    %739 = vmatpush1.bf16.msra.mxu0 %v517
    %740 = vmatprep.subr.bf16.mxu0 %v524
    %741 = vmatpush1.bf16.msra.mxu0 %v523
    %742 = vmatprep.subr.bf16.mxu0 %v530
    %743 = vmatpush1.bf16.msra.mxu0 %v529
    %744 = vmatprep.subr.bf16.mxu0 %v536
    %745 = vmatpush1.bf16.msra.mxu0 %v535
    %746 = vmatprep.subr.bf16.mxu0 %v542
    %747 = vmatpush1.bf16.msra.mxu0 %v541
    %748 = vmatprep.subr.bf16.mxu0 %v548
    %749 = vmatpush1.bf16.msra.mxu0 %v547
    %750 = vmatprep.subr.bf16.mxu0 %v554
    %751 = vmatpush1.bf16.msra.mxu0 %v553
    %752 = vmatprep.subr.bf16.mxu0 %v560
    %753 = vmatpush1.bf16.msra.mxu0 %v559
    %754 = vmatprep.subr.bf16.mxu0 %v566
    %755 = vmatpush1.bf16.msra.mxu0 %v565
    %756 = vmatprep.subr.bf16.mxu0 %v572
    %757 = vmatpush1.bf16.msra.mxu0 %v571
    %758 = vmatprep.subr.bf16.mxu0 %v578
    %759 = vmatpush1.bf16.msra.mxu0 %v577
    %760 = vmatprep.subr.bf16.mxu0 %v584
    %761 = vmatpush1.bf16.msra.mxu0 %v583
    %762 = vmatprep.subr.bf16.mxu0 %v590
    %763 = vmatpush1.bf16.msra.mxu0 %v589
    %764 = vmatprep.mubr.bf16.mxu0 %v80
    %765 = vmatmul.mubr.bf16.gmra.mrb[0].mxu0 %v79
    %v766 = vpop.f32.mrb[0].mxu0
    %v767 = vadd.f32 %v190, %v766
    %v768 = vpop.f32.mrb[0].mxu0
    %v769 = vadd.f32 %v194, %v768
    %v770 = vpop.f32.mrb[0].mxu0
    %v771 = vadd.f32 %v190, %v770
    %v772 = vpop.f32.mrb[0].mxu0
    %v773 = vadd.f32 %v194, %v772
    %774 = vdwg.mxu0
    %775 = vmatprep.subr.bf16.mxu0 %v502
    %776 = vmatpush1.bf16.msra.mxu0 %v501
    %777 = vmatprep.subr.bf16.mxu0 %v508
    %778 = vmatpush1.bf16.msra.mxu0 %v507
    %779 = vmatprep.subr.bf16.mxu0 %v514
    %780 = vmatpush1.bf16.msra.mxu0 %v513
    %781 = vmatprep.subr.bf16.mxu0 %v520
    %782 = vmatpush1.bf16.msra.mxu0 %v519
    %783 = vmatprep.subr.bf16.mxu0 %v526
    %784 = vmatpush1.bf16.msra.mxu0 %v525
    %785 = vmatprep.subr.bf16.mxu0 %v532
    %786 = vmatpush1.bf16.msra.mxu0 %v531
    %787 = vmatprep.subr.bf16.mxu0 %v538
    %788 = vmatpush1.bf16.msra.mxu0 %v537
    %789 = vmatprep.subr.bf16.mxu0 %v544
    %790 = vmatpush1.bf16.msra.mxu0 %v543
    %791 = vmatprep.subr.bf16.mxu0 %v550
    %792 = vmatpush1.bf16.msra.mxu0 %v549
    %793 = vmatprep.subr.bf16.mxu0 %v556
    %794 = vmatpush1.bf16.msra.mxu0 %v555
    %795 = vmatprep.subr.bf16.mxu0 %v562
    %796 = vmatpush1.bf16.msra.mxu0 %v561
    %797 = vmatprep.subr.bf16.mxu0 %v568
    %798 = vmatpush1.bf16.msra.mxu0 %v567
    %799 = vmatprep.subr.bf16.mxu0 %v574
    %800 = vmatpush1.bf16.msra.mxu0 %v573
    %801 = vmatprep.subr.bf16.mxu0 %v580
    %802 = vmatpush1.bf16.msra.mxu0 %v579
    %803 = vmatprep.subr.bf16.mxu0 %v586
    %804 = vmatpush1.bf16.msra.mxu0 %v585
    %805 = vmatprep.subr.bf16.mxu0 %v592
    %806 = vmatpush1.bf16.msra.mxu0 %v591
    %807 = vmatprep.mubr.bf16.mxu0 %v80
    %808 = vmatmul.mubr.bf16.gmra.mrb[0].mxu0 %v79
    %v809 = vpop.f32.mrb[0].mxu0
    %v810 = vadd.f32 %v198, %v809
    %v811 = vpop.f32.mrb[0].mxu0
    %v812 = vadd.f32 %v202, %v811
    %v813 = vpop.f32.mrb[0].mxu0
    %v814 = vadd.f32 %v198, %v813
    %v815 = vpop.f32.mrb[0].mxu0
    %v816 = vadd.f32 %v202, %v815
    %817 = vdwg.mxu0
    %v818 = vpack.c.bf16 %v724, %v724
    %v819 = vpack.c.bf16 %v728, %v728
    %v820 = vpack.c.bf16 %v767, %v767
    %v821 = vpack.c.bf16 %v771, %v771
    %vm822 = vcmask 261120
    %v824 = vsel %vm822, %v818, 0
    %v827 = vsel %vm822, %v820, 0
    %829 = vmatprep.subr.bf16.mxu0 0
    %830 = vmatpush1.bf16.xpose.msra.mxu0 %v827
    %831 = vmatprep.subr.bf16.mxu0 0
    %832 = vmatpush1.bf16.xpose.msra.mxu0 0
    %833 = vmatprep.subr.bf16.mxu0 0
    %834 = vmatpush1.bf16.xpose.msra.mxu0 0
    %835 = vmatprep.subr.bf16.mxu0 0
    %836 = vmatpush1.bf16.xpose.msra.mxu0 0
    %837 = vmatprep.subr.bf16.mxu0 0
    %838 = vmatpush1.bf16.xpose.msra.mxu0 0
    %839 = vmatprep.subr.bf16.mxu0 0
    %840 = vmatpush1.bf16.xpose.msra.mxu0 0
    %841 = vmatprep.subr.bf16.mxu0 0
    %842 = vmatpush1.bf16.xpose.msra.mxu0 0
    %843 = vmatprep.subr.bf16.mxu0 0
    %844 = vmatpush1.bf16.xpose.msra.mxu0 0
    %845 = vmatprep.subr.bf16.mxu0 0
    %846 = vmatpush1.bf16.xpose.msra.mxu0 0
    %847 = vmatprep.subr.bf16.mxu0 0
    %848 = vmatpush1.bf16.xpose.msra.mxu0 0
    %849 = vmatprep.subr.bf16.mxu0 0
    %850 = vmatpush1.bf16.xpose.msra.mxu0 0
    %851 = vmatprep.subr.bf16.mxu0 0
    %852 = vmatpush1.bf16.xpose.msra.mxu0 0
    %853 = vmatprep.subr.bf16.mxu0 0
    %854 = vmatpush1.bf16.xpose.msra.mxu0 0
    %855 = vmatprep.subr.bf16.mxu0 0
    %856 = vmatpush1.bf16.xpose.msra.mxu0 0
    %857 = vmatprep.subr.bf16.mxu0 0
    %858 = vmatpush1.bf16.xpose.msra.mxu0 0
    %859 = vmatprep.subr.bf16.mxu0 0
    %860 = vmatpush1.bf16.xpose.msra.mxu0 0
    %861 = vmatprep.mubr.bf16.mxu0 0
    %862 = vmatmul.mubr.bf16.gmra.mrb[0].mxu0 %v824
    %v863 = vpop.f32.mrb[0].mxu0
    %v864 = vadd.f32 0.0, %v863
    %v865 = vpop.f32.mrb[0].mxu0
    %v866 = vpop.f32.mrb[0].mxu0
    %v867 = vpop.f32.mrb[0].mxu0
    %868 = vdwg.mxu0
    %v870 = vsel %vm822, %v819, 0
    %v873 = vsel %vm822, %v821, 0
    %875 = vmatprep.subr.bf16.mxu0 0
    %876 = vmatpush1.bf16.xpose.msra.mxu0 %v873
    %877 = vmatprep.subr.bf16.mxu0 0
    %878 = vmatpush1.bf16.xpose.msra.mxu0 0
    %879 = vmatprep.subr.bf16.mxu0 0
    %880 = vmatpush1.bf16.xpose.msra.mxu0 0
    %881 = vmatprep.subr.bf16.mxu0 0
    %882 = vmatpush1.bf16.xpose.msra.mxu0 0
    %883 = vmatprep.subr.bf16.mxu0 0
    %884 = vmatpush1.bf16.xpose.msra.mxu0 0
    %885 = vmatprep.subr.bf16.mxu0 0
    %886 = vmatpush1.bf16.xpose.msra.mxu0 0
    %887 = vmatprep.subr.bf16.mxu0 0
    %888 = vmatpush1.bf16.xpose.msra.mxu0 0
    %889 = vmatprep.subr.bf16.mxu0 0
    %890 = vmatpush1.bf16.xpose.msra.mxu0 0
    %891 = vmatprep.subr.bf16.mxu0 0
    %892 = vmatpush1.bf16.xpose.msra.mxu0 0
    %893 = vmatprep.subr.bf16.mxu0 0
    %894 = vmatpush1.bf16.xpose.msra.mxu0 0
    %895 = vmatprep.subr.bf16.mxu0 0
    %896 = vmatpush1.bf16.xpose.msra.mxu0 0
    %897 = vmatprep.subr.bf16.mxu0 0
    %898 = vmatpush1.bf16.xpose.msra.mxu0 0
    %899 = vmatprep.subr.bf16.mxu0 0
    %900 = vmatpush1.bf16.xpose.msra.mxu0 0
    %901 = vmatprep.subr.bf16.mxu0 0
    %902 = vmatpush1.bf16.xpose.msra.mxu0 0
    %903 = vmatprep.subr.bf16.mxu0 0
    %904 = vmatpush1.bf16.xpose.msra.mxu0 0
    %905 = vmatprep.subr.bf16.mxu0 0
    %906 = vmatpush1.bf16.xpose.msra.mxu0 0
    %907 = vmatprep.mubr.bf16.mxu0 0
    %908 = vmatmul.mubr.bf16.gmra.mrb[0].mxu0 %v870
    %v909 = vpop.f32.mrb[0].mxu0
    %v910 = vadd.f32 0.0, %v909
    %v911 = vpop.f32.mrb[0].mxu0
    %v912 = vpop.f32.mrb[0].mxu0
    %v913 = vpop.f32.mrb[0].mxu0
    %914 = vdwg.mxu0
    %v915 = vmul.f32 %v864, 0.17677669
    %v916 = vmul.f32 %v910, 0.17677669
    %vm917 = vcmask 64512
    %v918 = vsel %vm917, %v915, -inf
    %919 = vmax.xlane.f32.xlu0 %v918
    %v920 = vpop.xlane.xlu0 %919
    %v921 = vsel %vm917, %v916, -inf
    %922 = vmax.xlane.f32.xlu0 %v921
    %v923 = vpop.xlane.xlu0 %922
    %v924 = vsub.f32 %v915, %v920
    %v925 = vsub.f32 %v916, %v923
    %v926 = vmul.f32 %v924, 1.442695
    %v927 = vpow.pop %v926
    %v928 = vmul.f32 %v925, 1.442695
    %v929 = vpow.pop %v928
    %v930 = vsel %vm917, %v927, 0.0
    %931 = vadd.xlane.f32.xlu0 %v930
    %v932 = vpop.xlane.xlu0 %931
    %v933 = vsel %vm917, %v929, 0.0
    %934 = vadd.xlane.f32.xlu0 %v933
    %v935 = vpop.xlane.xlu0 %934
    %v936 = vrcp.pop %v932
    %v937 = vrcp.pop %v935
    %v938 = vmul.f32 %v927, %v936
    %v939 = vmul.f32 %v929, %v937
    %v940 = vpack.c.bf16 %v938, %v938
    %v941 = vpack.c.bf16 %v939, %v939
    %v942 = vpack.c.bf16 %v810, %v810
    %v943 = vpack.c.bf16 %v814, %v814
    %v945 = vsel %vm917, %v940, 0
    %vm947 = vcmask 1043456
    %v949 = vsel %vm947, %v942, 0
    %951 = vmatprep.subr.bf16.mxu0 0
    %952 = vmatpush1.bf16.msra.mxu0 %v949
    %953 = vmatprep.subr.bf16.mxu0 0
    %954 = vmatpush1.bf16.msra.mxu0 0
    %955 = vmatprep.subr.bf16.mxu0 0
    %956 = vmatpush1.bf16.msra.mxu0 0
    %957 = vmatprep.subr.bf16.mxu0 0
    %958 = vmatpush1.bf16.msra.mxu0 0
    %959 = vmatprep.subr.bf16.mxu0 0
    %960 = vmatpush1.bf16.msra.mxu0 0
    %961 = vmatprep.subr.bf16.mxu0 0
    %962 = vmatpush1.bf16.msra.mxu0 0
    %963 = vmatprep.subr.bf16.mxu0 0
    %964 = vmatpush1.bf16.msra.mxu0 0
    %965 = vmatprep.subr.bf16.mxu0 0
    %966 = vmatpush1.bf16.msra.mxu0 0
    %967 = vmatprep.subr.bf16.mxu0 0
    %968 = vmatpush1.bf16.msra.mxu0 0
    %969 = vmatprep.subr.bf16.mxu0 0
    %970 = vmatpush1.bf16.msra.mxu0 0
    %971 = vmatprep.subr.bf16.mxu0 0
    %972 = vmatpush1.bf16.msra.mxu0 0
    %973 = vmatprep.subr.bf16.mxu0 0
    %974 = vmatpush1.bf16.msra.mxu0 0
    %975 = vmatprep.subr.bf16.mxu0 0
    %976 = vmatpush1.bf16.msra.mxu0 0
    %977 = vmatprep.subr.bf16.mxu0 0
    %978 = vmatpush1.bf16.msra.mxu0 0
    %979 = vmatprep.subr.bf16.mxu0 0
    %980 = vmatpush1.bf16.msra.mxu0 0
    %981 = vmatprep.subr.bf16.mxu0 0
    %982 = vmatpush1.bf16.msra.mxu0 0
    %983 = vmatprep.mubr.bf16.mxu0 0
    %984 = vmatmul.mubr.bf16.gmra.mrb[0].mxu0 %v945
    %v985 = vpop.f32.mrb[0].mxu0
    %v986 = vadd.f32 0.0, %v985
    %v987 = vpop.f32.mrb[0].mxu0
    %v988 = vpop.f32.mrb[0].mxu0
    %v989 = vpop.f32.mrb[0].mxu0
    %990 = vdwg.mxu0
    %v992 = vsel %vm917, %v941, 0
    %v995 = vsel %vm947, %v943, 0
    %997 = vmatprep.subr.bf16.mxu0 0
    %998 = vmatpush1.bf16.msra.mxu0 %v995
    %999 = vmatprep.subr.bf16.mxu0 0
    %1000 = vmatpush1.bf16.msra.mxu0 0
    %1001 = vmatprep.subr.bf16.mxu0 0
    %1002 = vmatpush1.bf16.msra.mxu0 0
    %1003 = vmatprep.subr.bf16.mxu0 0
    %1004 = vmatpush1.bf16.msra.mxu0 0
    %1005 = vmatprep.subr.bf16.mxu0 0
    %1006 = vmatpush1.bf16.msra.mxu0 0
    %1007 = vmatprep.subr.bf16.mxu0 0
    %1008 = vmatpush1.bf16.msra.mxu0 0
    %1009 = vmatprep.subr.bf16.mxu0 0
    %1010 = vmatpush1.bf16.msra.mxu0 0
    %1011 = vmatprep.subr.bf16.mxu0 0
    %1012 = vmatpush1.bf16.msra.mxu0 0
    %1013 = vmatprep.subr.bf16.mxu0 0
    %1014 = vmatpush1.bf16.msra.mxu0 0
    %1015 = vmatprep.subr.bf16.mxu0 0
    %1016 = vmatpush1.bf16.msra.mxu0 0
    %1017 = vmatprep.subr.bf16.mxu0 0
    %1018 = vmatpush1.bf16.msra.mxu0 0
    %1019 = vmatprep.subr.bf16.mxu0 0
    %1020 = vmatpush1.bf16.msra.mxu0 0
    %1021 = vmatprep.subr.bf16.mxu0 0
    %1022 = vmatpush1.bf16.msra.mxu0 0
    %1023 = vmatprep.subr.bf16.mxu0 0
    %1024 = vmatpush1.bf16.msra.mxu0 0
    %1025 = vmatprep.subr.bf16.mxu0 0
    %1026 = vmatpush1.bf16.msra.mxu0 0
    %1027 = vmatprep.subr.bf16.mxu0 0
    %1028 = vmatpush1.bf16.msra.mxu0 0
    %1029 = vmatprep.mubr.bf16.mxu0 0
    %1030 = vmatmul.mubr.bf16.gmra.mrb[0].mxu0 %v992
    %v1031 = vpop.f32.mrb[0].mxu0
    %v1032 = vadd.f32 0.0, %v1031
    %v1033 = vpop.f32.mrb[0].mxu0
    %v1034 = vpop.f32.mrb[0].mxu0
    %v1035 = vpop.f32.mrb[0].mxu0
    %1036 = vdwg.mxu0
    %1037 = vst.msk [vmem:[#allocation2] sm:$0xff] %vm822, %v986
    %1038 = vst.msk [vmem:[#allocation2 + $0x10] sm:$0xff] %vm822, %v1032
    %1040 = vrot.lane.b32.xlu0 %v818, 96
    %v1041 = vpop.permute.xlu0 %1040
    %1043 = vrot.lane.b32.xlu0 %v820, 96
    %v1044 = vpop.permute.xlu0 %1043
    %v1046 = vsel %vm822, %v1041, 0
    %v1049 = vsel %vm822, %v1044, 0
    %1051 = vmatprep.subr.bf16.mxu0 0
    %1052 = vmatpush1.bf16.xpose.msra.mxu0 %v1049
    %1053 = vmatprep.subr.bf16.mxu0 0
    %1054 = vmatpush1.bf16.xpose.msra.mxu0 0
    %1055 = vmatprep.subr.bf16.mxu0 0
    %1056 = vmatpush1.bf16.xpose.msra.mxu0 0
    %1057 = vmatprep.subr.bf16.mxu0 0
    %1058 = vmatpush1.bf16.xpose.msra.mxu0 0
    %1059 = vmatprep.subr.bf16.mxu0 0
    %1060 = vmatpush1.bf16.xpose.msra.mxu0 0
    %1061 = vmatprep.subr.bf16.mxu0 0
    %1062 = vmatpush1.bf16.xpose.msra.mxu0 0
    %1063 = vmatprep.subr.bf16.mxu0 0
    %1064 = vmatpush1.bf16.xpose.msra.mxu0 0
    %1065 = vmatprep.subr.bf16.mxu0 0
    %1066 = vmatpush1.bf16.xpose.msra.mxu0 0
    %1067 = vmatprep.subr.bf16.mxu0 0
    %1068 = vmatpush1.bf16.xpose.msra.mxu0 0
    %1069 = vmatprep.subr.bf16.mxu0 0
    %1070 = vmatpush1.bf16.xpose.msra.mxu0 0
    %1071 = vmatprep.subr.bf16.mxu0 0
    %1072 = vmatpush1.bf16.xpose.msra.mxu0 0
    %1073 = vmatprep.subr.bf16.mxu0 0
    %1074 = vmatpush1.bf16.xpose.msra.mxu0 0
    %1075 = vmatprep.subr.bf16.mxu0 0
    %1076 = vmatpush1.bf16.xpose.msra.mxu0 0
    %1077 = vmatprep.subr.bf16.mxu0 0
    %1078 = vmatpush1.bf16.xpose.msra.mxu0 0
    %1079 = vmatprep.subr.bf16.mxu0 0
    %1080 = vmatpush1.bf16.xpose.msra.mxu0 0
    %1081 = vmatprep.subr.bf16.mxu0 0
    %1082 = vmatpush1.bf16.xpose.msra.mxu0 0
    %1083 = vmatprep.mubr.bf16.mxu0 0
    %1084 = vmatmul.mubr.bf16.gmra.mrb[0].mxu0 %v1046
    %v1085 = vpop.f32.mrb[0].mxu0
    %v1086 = vadd.f32 0.0, %v1085
    %v1087 = vpop.f32.mrb[0].mxu0
    %v1088 = vpop.f32.mrb[0].mxu0
    %v1089 = vpop.f32.mrb[0].mxu0
    %1090 = vdwg.mxu0
    %1092 = vrot.lane.b32.xlu0 %v819, 96
    %v1093 = vpop.permute.xlu0 %1092
    %1095 = vrot.lane.b32.xlu0 %v821, 96
    %v1096 = vpop.permute.xlu0 %1095
    %v1098 = vsel %vm822, %v1093, 0
    %v1101 = vsel %vm822, %v1096, 0
    %1103 = vmatprep.subr.bf16.mxu0 0
    %1104 = vmatpush1.bf16.xpose.msra.mxu0 %v1101
    %1105 = vmatprep.subr.bf16.mxu0 0
    %1106 = vmatpush1.bf16.xpose.msra.mxu0 0
    %1107 = vmatprep.subr.bf16.mxu0 0
    %1108 = vmatpush1.bf16.xpose.msra.mxu0 0
    %1109 = vmatprep.subr.bf16.mxu0 0
    %1110 = vmatpush1.bf16.xpose.msra.mxu0 0
    %1111 = vmatprep.subr.bf16.mxu0 0
    %1112 = vmatpush1.bf16.xpose.msra.mxu0 0
    %1113 = vmatprep.subr.bf16.mxu0 0
    %1114 = vmatpush1.bf16.xpose.msra.mxu0 0
    %1115 = vmatprep.subr.bf16.mxu0 0
    %1116 = vmatpush1.bf16.xpose.msra.mxu0 0
    %1117 = vmatprep.subr.bf16.mxu0 0
    %1118 = vmatpush1.bf16.xpose.msra.mxu0 0
    %1119 = vmatprep.subr.bf16.mxu0 0
    %1120 = vmatpush1.bf16.xpose.msra.mxu0 0
    %1121 = vmatprep.subr.bf16.mxu0 0
    %1122 = vmatpush1.bf16.xpose.msra.mxu0 0
    %1123 = vmatprep.subr.bf16.mxu0 0
    %1124 = vmatpush1.bf16.xpose.msra.mxu0 0
    %1125 = vmatprep.subr.bf16.mxu0 0
    %1126 = vmatpush1.bf16.xpose.msra.mxu0 0
    %1127 = vmatprep.subr.bf16.mxu0 0
    %1128 = vmatpush1.bf16.xpose.msra.mxu0 0
    %1129 = vmatprep.subr.bf16.mxu0 0
    %1130 = vmatpush1.bf16.xpose.msra.mxu0 0
    %1131 = vmatprep.subr.bf16.mxu0 0
    %1132 = vmatpush1.bf16.xpose.msra.mxu0 0
    %1133 = vmatprep.subr.bf16.mxu0 0
    %1134 = vmatpush1.bf16.xpose.msra.mxu0 0
    %1135 = vmatprep.mubr.bf16.mxu0 0
    %1136 = vmatmul.mubr.bf16.gmra.mrb[0].mxu0 %v1098
    %v1137 = vpop.f32.mrb[0].mxu0
    %v1138 = vadd.f32 0.0, %v1137
    %v1139 = vpop.f32.mrb[0].mxu0
    %v1140 = vpop.f32.mrb[0].mxu0
    %v1141 = vpop.f32.mrb[0].mxu0
    %1142 = vdwg.mxu0
    %v1143 = vmul.f32 %v1086, 0.17677669
    %v1144 = vmul.f32 %v1138, 0.17677669
    %v1145 = vsel %vm917, %v1143, -inf
    %1146 = vmax.xlane.f32.xlu0 %v1145
    %v1147 = vpop.xlane.xlu0 %1146
    %v1148 = vsel %vm917, %v1144, -inf
    %1149 = vmax.xlane.f32.xlu0 %v1148
    %v1150 = vpop.xlane.xlu0 %1149
    %v1151 = vsub.f32 %v1143, %v1147
    %v1152 = vsub.f32 %v1144, %v1150
    %v1153 = vmul.f32 %v1151, 1.442695
    %v1154 = vpow.pop %v1153
    %v1155 = vmul.f32 %v1152, 1.442695
    %v1156 = vpow.pop %v1155
    %v1157 = vsel %vm917, %v1154, 0.0
    %1158 = vadd.xlane.f32.xlu0 %v1157
    %v1159 = vpop.xlane.xlu0 %1158
    %v1160 = vsel %vm917, %v1156, 0.0
    %1161 = vadd.xlane.f32.xlu0 %v1160
    %v1162 = vpop.xlane.xlu0 %1161
    %v1163 = vrcp.pop %v1159
    %v1164 = vrcp.pop %v1162
    %v1165 = vmul.f32 %v1154, %v1163
    %v1166 = vmul.f32 %v1156, %v1164
    %v1167 = vpack.c.bf16 %v1165, %v1165
    %v1168 = vpack.c.bf16 %v1166, %v1166
    %1170 = vrot.lane.b32.xlu0 %v942, 96
    %v1171 = vpop.permute.xlu0 %1170
    %v1173 = vsel %vm917, %v1167, 0
    %v1176 = vsel %vm947, %v1171, 0
    %1178 = vmatprep.subr.bf16.mxu0 0
    %1179 = vmatpush1.bf16.msra.mxu0 %v1176
    %1180 = vmatprep.subr.bf16.mxu0 0
    %1181 = vmatpush1.bf16.msra.mxu0 0
    %1182 = vmatprep.subr.bf16.mxu0 0
    %1183 = vmatpush1.bf16.msra.mxu0 0
    %1184 = vmatprep.subr.bf16.mxu0 0
    %1185 = vmatpush1.bf16.msra.mxu0 0
    %1186 = vmatprep.subr.bf16.mxu0 0
    %1187 = vmatpush1.bf16.msra.mxu0 0
    %1188 = vmatprep.subr.bf16.mxu0 0
    %1189 = vmatpush1.bf16.msra.mxu0 0
    %1190 = vmatprep.subr.bf16.mxu0 0
    %1191 = vmatpush1.bf16.msra.mxu0 0
    %1192 = vmatprep.subr.bf16.mxu0 0
    %1193 = vmatpush1.bf16.msra.mxu0 0
    %1194 = vmatprep.subr.bf16.mxu0 0
    %1195 = vmatpush1.bf16.msra.mxu0 0
    %1196 = vmatprep.subr.bf16.mxu0 0
    %1197 = vmatpush1.bf16.msra.mxu0 0
    %1198 = vmatprep.subr.bf16.mxu0 0
    %1199 = vmatpush1.bf16.msra.mxu0 0
    %1200 = vmatprep.subr.bf16.mxu0 0
    %1201 = vmatpush1.bf16.msra.mxu0 0
    %1202 = vmatprep.subr.bf16.mxu0 0
    %1203 = vmatpush1.bf16.msra.mxu0 0
    %1204 = vmatprep.subr.bf16.mxu0 0
    %1205 = vmatpush1.bf16.msra.mxu0 0
    %1206 = vmatprep.subr.bf16.mxu0 0
    %1207 = vmatpush1.bf16.msra.mxu0 0
    %1208 = vmatprep.subr.bf16.mxu0 0
    %1209 = vmatpush1.bf16.msra.mxu0 0
    %1210 = vmatprep.mubr.bf16.mxu0 0
    %1211 = vmatmul.mubr.bf16.gmra.mrb[0].mxu0 %v1173
    %v1212 = vpop.f32.mrb[0].mxu0
    %v1213 = vadd.f32 0.0, %v1212
    %v1214 = vpop.f32.mrb[0].mxu0
    %v1215 = vpop.f32.mrb[0].mxu0
    %v1216 = vpop.f32.mrb[0].mxu0
    %1217 = vdwg.mxu0
    %1219 = vrot.lane.b32.xlu0 %v943, 96
    %v1220 = vpop.permute.xlu0 %1219
    %v1222 = vsel %vm917, %v1168, 0
    %v1225 = vsel %vm947, %v1220, 0
    %1227 = vmatprep.subr.bf16.mxu0 0
    %1228 = vmatpush1.bf16.msra.mxu0 %v1225
    %1229 = vmatprep.subr.bf16.mxu0 0
    %1230 = vmatpush1.bf16.msra.mxu0 0
    %1231 = vmatprep.subr.bf16.mxu0 0
    %1232 = vmatpush1.bf16.msra.mxu0 0
    %1233 = vmatprep.subr.bf16.mxu0 0
    %1234 = vmatpush1.bf16.msra.mxu0 0
    %1235 = vmatprep.subr.bf16.mxu0 0
    %1236 = vmatpush1.bf16.msra.mxu0 0
    %1237 = vmatprep.subr.bf16.mxu0 0
    %1238 = vmatpush1.bf16.msra.mxu0 0
    %1239 = vmatprep.subr.bf16.mxu0 0
    %1240 = vmatpush1.bf16.msra.mxu0 0
    %1241 = vmatprep.subr.bf16.mxu0 0
    %1242 = vmatpush1.bf16.msra.mxu0 0
    %1243 = vmatprep.subr.bf16.mxu0 0
    %1244 = vmatpush1.bf16.msra.mxu0 0
    %1245 = vmatprep.subr.bf16.mxu0 0
    %1246 = vmatpush1.bf16.msra.mxu0 0
    %1247 = vmatprep.subr.bf16.mxu0 0
    %1248 = vmatpush1.bf16.msra.mxu0 0
    %1249 = vmatprep.subr.bf16.mxu0 0
    %1250 = vmatpush1.bf16.msra.mxu0 0
    %1251 = vmatprep.subr.bf16.mxu0 0
    %1252 = vmatpush1.bf16.msra.mxu0 0
    %1253 = vmatprep.subr.bf16.mxu0 0
    %1254 = vmatpush1.bf16.msra.mxu0 0
    %1255 = vmatprep.subr.bf16.mxu0 0
    %1256 = vmatpush1.bf16.msra.mxu0 0
    %1257 = vmatprep.subr.bf16.mxu0 0
    %1258 = vmatpush1.bf16.msra.mxu0 0
    %1259 = vmatprep.mubr.bf16.mxu0 0
    %1260 = vmatmul.mubr.bf16.gmra.mrb[0].mxu0 %v1222
    %v1261 = vpop.f32.mrb[0].mxu0
    %v1262 = vadd.f32 0.0, %v1261
    %v1263 = vpop.f32.mrb[0].mxu0
    %v1264 = vpop.f32.mrb[0].mxu0
    %v1265 = vpop.f32.mrb[0].mxu0
    %1266 = vdwg.mxu0
    %1269 = vrot.lane.b32.xlu0 %v1213, 32
    %v1270 = vpop.permute.xlu0 %1269
    %1271 = vrot.lane.b32.xlu0 %v1262, 32
    %v1272 = vpop.permute.xlu0 %1271
    %vm1275 = vcmask 523520
    %1276 = vst.msk [vmem:[#allocation2] sm:$0xff] %vm1275, %v1270
    %1277 = vst.msk [vmem:[#allocation2 + $0x10] sm:$0xff] %vm1275, %v1272
    %1278 = vrot.lane.b32.xlu0 %v818, 64
    %v1279 = vpop.permute.xlu0 %1278
    %1280 = vrot.lane.b32.xlu0 %v820, 64
    %v1281 = vpop.permute.xlu0 %1280
    %v1283 = vsel %vm822, %v1279, 0
    %v1286 = vsel %vm822, %v1281, 0
    %1288 = vmatprep.subr.bf16.mxu0 0
    %1289 = vmatpush1.bf16.xpose.msra.mxu0 %v1286
    %1290 = vmatprep.subr.bf16.mxu0 0
    %1291 = vmatpush1.bf16.xpose.msra.mxu0 0
    %1292 = vmatprep.subr.bf16.mxu0 0
    %1293 = vmatpush1.bf16.xpose.msra.mxu0 0
    %1294 = vmatprep.subr.bf16.mxu0 0
    %1295 = vmatpush1.bf16.xpose.msra.mxu0 0
    %1296 = vmatprep.subr.bf16.mxu0 0
    %1297 = vmatpush1.bf16.xpose.msra.mxu0 0
    %1298 = vmatprep.subr.bf16.mxu0 0
    %1299 = vmatpush1.bf16.xpose.msra.mxu0 0
    %1300 = vmatprep.subr.bf16.mxu0 0
    %1301 = vmatpush1.bf16.xpose.msra.mxu0 0
    %1302 = vmatprep.subr.bf16.mxu0 0
    %1303 = vmatpush1.bf16.xpose.msra.mxu0 0
    %1304 = vmatprep.subr.bf16.mxu0 0
    %1305 = vmatpush1.bf16.xpose.msra.mxu0 0
    %1306 = vmatprep.subr.bf16.mxu0 0
    %1307 = vmatpush1.bf16.xpose.msra.mxu0 0
    %1308 = vmatprep.subr.bf16.mxu0 0
    %1309 = vmatpush1.bf16.xpose.msra.mxu0 0
    %1310 = vmatprep.subr.bf16.mxu0 0
    %1311 = vmatpush1.bf16.xpose.msra.mxu0 0
    %1312 = vmatprep.subr.bf16.mxu0 0
    %1313 = vmatpush1.bf16.xpose.msra.mxu0 0
    %1314 = vmatprep.subr.bf16.mxu0 0
    %1315 = vmatpush1.bf16.xpose.msra.mxu0 0
    %1316 = vmatprep.subr.bf16.mxu0 0
    %1317 = vmatpush1.bf16.xpose.msra.mxu0 0
    %1318 = vmatprep.subr.bf16.mxu0 0
    %1319 = vmatpush1.bf16.xpose.msra.mxu0 0
    %1320 = vmatprep.mubr.bf16.mxu0 0
    %1321 = vmatmul.mubr.bf16.gmra.mrb[0].mxu0 %v1283
    %v1322 = vpop.f32.mrb[0].mxu0
    %v1323 = vadd.f32 0.0, %v1322
    %v1324 = vpop.f32.mrb[0].mxu0
    %v1325 = vpop.f32.mrb[0].mxu0
    %v1326 = vpop.f32.mrb[0].mxu0
    %1327 = vdwg.mxu0
    %1328 = vrot.lane.b32.xlu0 %v819, 64
    %v1329 = vpop.permute.xlu0 %1328
    %1330 = vrot.lane.b32.xlu0 %v821, 64
    %v1331 = vpop.permute.xlu0 %1330
    %v1333 = vsel %vm822, %v1329, 0
    %v1336 = vsel %vm822, %v1331, 0
    %1338 = vmatprep.subr.bf16.mxu0 0
    %1339 = vmatpush1.bf16.xpose.msra.mxu0 %v1336
    %1340 = vmatprep.subr.bf16.mxu0 0
    %1341 = vmatpush1.bf16.xpose.msra.mxu0 0
    %1342 = vmatprep.subr.bf16.mxu0 0
    %1343 = vmatpush1.bf16.xpose.msra.mxu0 0
    %1344 = vmatprep.subr.bf16.mxu0 0
    %1345 = vmatpush1.bf16.xpose.msra.mxu0 0
    %1346 = vmatprep.subr.bf16.mxu0 0
    %1347 = vmatpush1.bf16.xpose.msra.mxu0 0
    %1348 = vmatprep.subr.bf16.mxu0 0
    %1349 = vmatpush1.bf16.xpose.msra.mxu0 0
    %1350 = vmatprep.subr.bf16.mxu0 0
    %1351 = vmatpush1.bf16.xpose.msra.mxu0 0
    %1352 = vmatprep.subr.bf16.mxu0 0
    %1353 = vmatpush1.bf16.xpose.msra.mxu0 0
    %1354 = vmatprep.subr.bf16.mxu0 0
    %1355 = vmatpush1.bf16.xpose.msra.mxu0 0
    %1356 = vmatprep.subr.bf16.mxu0 0
    %1357 = vmatpush1.bf16.xpose.msra.mxu0 0
    %1358 = vmatprep.subr.bf16.mxu0 0
    %1359 = vmatpush1.bf16.xpose.msra.mxu0 0
    %1360 = vmatprep.subr.bf16.mxu0 0
    %1361 = vmatpush1.bf16.xpose.msra.mxu0 0
    %1362 = vmatprep.subr.bf16.mxu0 0
    %1363 = vmatpush1.bf16.xpose.msra.mxu0 0
    %1364 = vmatprep.subr.bf16.mxu0 0
    %1365 = vmatpush1.bf16.xpose.msra.mxu0 0
    %1366 = vmatprep.subr.bf16.mxu0 0
    %1367 = vmatpush1.bf16.xpose.msra.mxu0 0
    %1368 = vmatprep.subr.bf16.mxu0 0
    %1369 = vmatpush1.bf16.xpose.msra.mxu0 0
    %1370 = vmatprep.mubr.bf16.mxu0 0
    %1371 = vmatmul.mubr.bf16.gmra.mrb[0].mxu0 %v1333
    %v1372 = vpop.f32.mrb[0].mxu0
    %v1373 = vadd.f32 0.0, %v1372
    %v1374 = vpop.f32.mrb[0].mxu0
    %v1375 = vpop.f32.mrb[0].mxu0
    %v1376 = vpop.f32.mrb[0].mxu0
    %1377 = vdwg.mxu0
    %v1378 = vmul.f32 %v1323, 0.17677669
    %v1379 = vmul.f32 %v1373, 0.17677669
    %v1380 = vsel %vm917, %v1378, -inf
    %1381 = vmax.xlane.f32.xlu0 %v1380
    %v1382 = vpop.xlane.xlu0 %1381
    %v1383 = vsel %vm917, %v1379, -inf
    %1384 = vmax.xlane.f32.xlu0 %v1383
    %v1385 = vpop.xlane.xlu0 %1384
    %v1386 = vsub.f32 %v1378, %v1382
    %v1387 = vsub.f32 %v1379, %v1385
    %v1388 = vmul.f32 %v1386, 1.442695
    %v1389 = vpow.pop %v1388
    %v1390 = vmul.f32 %v1387, 1.442695
    %v1391 = vpow.pop %v1390
    %v1392 = vsel %vm917, %v1389, 0.0
    %1393 = vadd.xlane.f32.xlu0 %v1392
    %v1394 = vpop.xlane.xlu0 %1393
    %v1395 = vsel %vm917, %v1391, 0.0
    %1396 = vadd.xlane.f32.xlu0 %v1395
    %v1397 = vpop.xlane.xlu0 %1396
    %v1398 = vrcp.pop %v1394
    %v1399 = vrcp.pop %v1397
    %v1400 = vmul.f32 %v1389, %v1398
    %v1401 = vmul.f32 %v1391, %v1399
    %v1402 = vpack.c.bf16 %v1400, %v1400
    %v1403 = vpack.c.bf16 %v1401, %v1401
    %1404 = vrot.lane.b32.xlu0 %v942, 64
    %v1405 = vpop.permute.xlu0 %1404
    %v1407 = vsel %vm917, %v1402, 0
    %v1410 = vsel %vm947, %v1405, 0
    %1412 = vmatprep.subr.bf16.mxu0 0
    %1413 = vmatpush1.bf16.msra.mxu0 %v1410
    %1414 = vmatprep.subr.bf16.mxu0 0
    %1415 = vmatpush1.bf16.msra.mxu0 0
    %1416 = vmatprep.subr.bf16.mxu0 0
    %1417 = vmatpush1.bf16.msra.mxu0 0
    %1418 = vmatprep.subr.bf16.mxu0 0
    %1419 = vmatpush1.bf16.msra.mxu0 0
    %1420 = vmatprep.subr.bf16.mxu0 0
    %1421 = vmatpush1.bf16.msra.mxu0 0
    %1422 = vmatprep.subr.bf16.mxu0 0
    %1423 = vmatpush1.bf16.msra.mxu0 0
    %1424 = vmatprep.subr.bf16.mxu0 0
    %1425 = vmatpush1.bf16.msra.mxu0 0
    %1426 = vmatprep.subr.bf16.mxu0 0
    %1427 = vmatpush1.bf16.msra.mxu0 0
    %1428 = vmatprep.subr.bf16.mxu0 0
    %1429 = vmatpush1.bf16.msra.mxu0 0
    %1430 = vmatprep.subr.bf16.mxu0 0
    %1431 = vmatpush1.bf16.msra.mxu0 0
    %1432 = vmatprep.subr.bf16.mxu0 0
    %1433 = vmatpush1.bf16.msra.mxu0 0
    %1434 = vmatprep.subr.bf16.mxu0 0
    %1435 = vmatpush1.bf16.msra.mxu0 0
    %1436 = vmatprep.subr.bf16.mxu0 0
    %1437 = vmatpush1.bf16.msra.mxu0 0
    %1438 = vmatprep.subr.bf16.mxu0 0
    %1439 = vmatpush1.bf16.msra.mxu0 0
    %1440 = vmatprep.subr.bf16.mxu0 0
    %1441 = vmatpush1.bf16.msra.mxu0 0
    %1442 = vmatprep.subr.bf16.mxu0 0
    %1443 = vmatpush1.bf16.msra.mxu0 0
    %1444 = vmatprep.mubr.bf16.mxu0 0
    %1445 = vmatmul.mubr.bf16.gmra.mrb[0].mxu0 %v1407
    %v1446 = vpop.f32.mrb[0].mxu0
    %v1447 = vadd.f32 0.0, %v1446
    %v1448 = vpop.f32.mrb[0].mxu0
    %v1449 = vpop.f32.mrb[0].mxu0
    %v1450 = vpop.f32.mrb[0].mxu0
    %1451 = vdwg.mxu0
    %1452 = vrot.lane.b32.xlu0 %v943, 64
    %v1453 = vpop.permute.xlu0 %1452
    %v1455 = vsel %vm917, %v1403, 0
    %v1458 = vsel %vm947, %v1453, 0
    %1460 = vmatprep.subr.bf16.mxu0 0
    %1461 = vmatpush1.bf16.msra.mxu0 %v1458
    %1462 = vmatprep.subr.bf16.mxu0 0
    %1463 = vmatpush1.bf16.msra.mxu0 0
    %1464 = vmatprep.subr.bf16.mxu0 0
    %1465 = vmatpush1.bf16.msra.mxu0 0
    %1466 = vmatprep.subr.bf16.mxu0 0
    %1467 = vmatpush1.bf16.msra.mxu0 0
    %1468 = vmatprep.subr.bf16.mxu0 0
    %1469 = vmatpush1.bf16.msra.mxu0 0
    %1470 = vmatprep.subr.bf16.mxu0 0
    %1471 = vmatpush1.bf16.msra.mxu0 0
    %1472 = vmatprep.subr.bf16.mxu0 0
    %1473 = vmatpush1.bf16.msra.mxu0 0
    %1474 = vmatprep.subr.bf16.mxu0 0
    %1475 = vmatpush1.bf16.msra.mxu0 0
    %1476 = vmatprep.subr.bf16.mxu0 0
    %1477 = vmatpush1.bf16.msra.mxu0 0
    %1478 = vmatprep.subr.bf16.mxu0 0
    %1479 = vmatpush1.bf16.msra.mxu0 0
    %1480 = vmatprep.subr.bf16.mxu0 0
    %1481 = vmatpush1.bf16.msra.mxu0 0
    %1482 = vmatprep.subr.bf16.mxu0 0
    %1483 = vmatpush1.bf16.msra.mxu0 0
    %1484 = vmatprep.subr.bf16.mxu0 0
    %1485 = vmatpush1.bf16.msra.mxu0 0
    %1486 = vmatprep.subr.bf16.mxu0 0
    %1487 = vmatpush1.bf16.msra.mxu0 0
    %1488 = vmatprep.subr.bf16.mxu0 0
    %1489 = vmatpush1.bf16.msra.mxu0 0
    %1490 = vmatprep.subr.bf16.mxu0 0
    %1491 = vmatpush1.bf16.msra.mxu0 0
    %1492 = vmatprep.mubr.bf16.mxu0 0
    %1493 = vmatmul.mubr.bf16.gmra.mrb[0].mxu0 %v1455
    %v1494 = vpop.f32.mrb[0].mxu0
    %v1495 = vadd.f32 0.0, %v1494
    %v1496 = vpop.f32.mrb[0].mxu0
    %v1497 = vpop.f32.mrb[0].mxu0
    %v1498 = vpop.f32.mrb[0].mxu0
    %1499 = vdwg.mxu0
    %1502 = vrot.lane.b32.xlu0 %v1447, 64
    %v1503 = vpop.permute.xlu0 %1502
    %1504 = vrot.lane.b32.xlu0 %v1495, 64
    %v1505 = vpop.permute.xlu0 %1504
    %vm1508 = vcmask 785920
    %1509 = vst.msk [vmem:[#allocation2] sm:$0xff] %vm1508, %v1503
    %1510 = vst.msk [vmem:[#allocation2 + $0x10] sm:$0xff] %vm1508, %v1505
    %1511 = vrot.lane.b32.xlu0 %v818, 32
    %v1512 = vpop.permute.xlu0 %1511
    %1513 = vrot.lane.b32.xlu0 %v820, 32
    %v1514 = vpop.permute.xlu0 %1513
    %v1516 = vsel %vm822, %v1512, 0
    %v1519 = vsel %vm822, %v1514, 0
    %1521 = vmatprep.subr.bf16.mxu0 0
    %1522 = vmatpush1.bf16.xpose.msra.mxu0 %v1519
    %1523 = vmatprep.subr.bf16.mxu0 0
    %1524 = vmatpush1.bf16.xpose.msra.mxu0 0
    %1525 = vmatprep.subr.bf16.mxu0 0
    %1526 = vmatpush1.bf16.xpose.msra.mxu0 0
    %1527 = vmatprep.subr.bf16.mxu0 0
    %1528 = vmatpush1.bf16.xpose.msra.mxu0 0
    %1529 = vmatprep.subr.bf16.mxu0 0
    %1530 = vmatpush1.bf16.xpose.msra.mxu0 0
    %1531 = vmatprep.subr.bf16.mxu0 0
    %1532 = vmatpush1.bf16.xpose.msra.mxu0 0
    %1533 = vmatprep.subr.bf16.mxu0 0
    %1534 = vmatpush1.bf16.xpose.msra.mxu0 0
    %1535 = vmatprep.subr.bf16.mxu0 0
    %1536 = vmatpush1.bf16.xpose.msra.mxu0 0
    %1537 = vmatprep.subr.bf16.mxu0 0
    %1538 = vmatpush1.bf16.xpose.msra.mxu0 0
    %1539 = vmatprep.subr.bf16.mxu0 0
    %1540 = vmatpush1.bf16.xpose.msra.mxu0 0
    %1541 = vmatprep.subr.bf16.mxu0 0
    %1542 = vmatpush1.bf16.xpose.msra.mxu0 0
    %1543 = vmatprep.subr.bf16.mxu0 0
    %1544 = vmatpush1.bf16.xpose.msra.mxu0 0
    %1545 = vmatprep.subr.bf16.mxu0 0
    %1546 = vmatpush1.bf16.xpose.msra.mxu0 0
    %1547 = vmatprep.subr.bf16.mxu0 0
    %1548 = vmatpush1.bf16.xpose.msra.mxu0 0
    %1549 = vmatprep.subr.bf16.mxu0 0
    %1550 = vmatpush1.bf16.xpose.msra.mxu0 0
    %1551 = vmatprep.subr.bf16.mxu0 0
    %1552 = vmatpush1.bf16.xpose.msra.mxu0 0
    %1553 = vmatprep.mubr.bf16.mxu0 0
    %1554 = vmatmul.mubr.bf16.gmra.mrb[0].mxu0 %v1516
    %v1555 = vpop.f32.mrb[0].mxu0
    %v1556 = vadd.f32 0.0, %v1555
    %v1557 = vpop.f32.mrb[0].mxu0
    %v1558 = vpop.f32.mrb[0].mxu0
    %v1559 = vpop.f32.mrb[0].mxu0
    %1560 = vdwg.mxu0
    %1561 = vrot.lane.b32.xlu0 %v819, 32
    %v1562 = vpop.permute.xlu0 %1561
    %1563 = vrot.lane.b32.xlu0 %v821, 32
    %v1564 = vpop.permute.xlu0 %1563
    %v1566 = vsel %vm822, %v1562, 0
    %v1569 = vsel %vm822, %v1564, 0
    %1571 = vmatprep.subr.bf16.mxu0 0
    %1572 = vmatpush1.bf16.xpose.msra.mxu0 %v1569
    %1573 = vmatprep.subr.bf16.mxu0 0
    %1574 = vmatpush1.bf16.xpose.msra.mxu0 0
    %1575 = vmatprep.subr.bf16.mxu0 0
    %1576 = vmatpush1.bf16.xpose.msra.mxu0 0
    %1577 = vmatprep.subr.bf16.mxu0 0
    %1578 = vmatpush1.bf16.xpose.msra.mxu0 0
    %1579 = vmatprep.subr.bf16.mxu0 0
    %1580 = vmatpush1.bf16.xpose.msra.mxu0 0
    %1581 = vmatprep.subr.bf16.mxu0 0
    %1582 = vmatpush1.bf16.xpose.msra.mxu0 0
    %1583 = vmatprep.subr.bf16.mxu0 0
    %1584 = vmatpush1.bf16.xpose.msra.mxu0 0
    %1585 = vmatprep.subr.bf16.mxu0 0
    %1586 = vmatpush1.bf16.xpose.msra.mxu0 0
    %1587 = vmatprep.subr.bf16.mxu0 0
    %1588 = vmatpush1.bf16.xpose.msra.mxu0 0
    %1589 = vmatprep.subr.bf16.mxu0 0
    %1590 = vmatpush1.bf16.xpose.msra.mxu0 0
    %1591 = vmatprep.subr.bf16.mxu0 0
    %1592 = vmatpush1.bf16.xpose.msra.mxu0 0
    %1593 = vmatprep.subr.bf16.mxu0 0
    %1594 = vmatpush1.bf16.xpose.msra.mxu0 0
    %1595 = vmatprep.subr.bf16.mxu0 0
    %1596 = vmatpush1.bf16.xpose.msra.mxu0 0
    %1597 = vmatprep.subr.bf16.mxu0 0
    %1598 = vmatpush1.bf16.xpose.msra.mxu0 0
    %1599 = vmatprep.subr.bf16.mxu0 0
    %1600 = vmatpush1.bf16.xpose.msra.mxu0 0
    %1601 = vmatprep.subr.bf16.mxu0 0
    %1602 = vmatpush1.bf16.xpose.msra.mxu0 0
    %1603 = vmatprep.mubr.bf16.mxu0 0
    %1604 = vmatmul.mubr.bf16.gmra.mrb[0].mxu0 %v1566
    %v1605 = vpop.f32.mrb[0].mxu0
    %v1606 = vadd.f32 0.0, %v1605
    %v1607 = vpop.f32.mrb[0].mxu0
    %v1608 = vpop.f32.mrb[0].mxu0
    %v1609 = vpop.f32.mrb[0].mxu0
    %1610 = vdwg.mxu0
    %v1611 = vmul.f32 %v1556, 0.17677669
    %v1612 = vmul.f32 %v1606, 0.17677669
    %v1613 = vsel %vm917, %v1611, -inf
    %1614 = vmax.xlane.f32.xlu0 %v1613
    %v1615 = vpop.xlane.xlu0 %1614
    %v1616 = vsel %vm917, %v1612, -inf
    %1617 = vmax.xlane.f32.xlu0 %v1616
    %v1618 = vpop.xlane.xlu0 %1617
    %v1619 = vsub.f32 %v1611, %v1615
    %v1620 = vsub.f32 %v1612, %v1618
    %v1621 = vmul.f32 %v1619, 1.442695
    %v1622 = vpow.pop %v1621
    %v1623 = vmul.f32 %v1620, 1.442695
    %v1624 = vpow.pop %v1623
    %v1625 = vsel %vm917, %v1622, 0.0
    %1626 = vadd.xlane.f32.xlu0 %v1625
    %v1627 = vpop.xlane.xlu0 %1626
    %v1628 = vsel %vm917, %v1624, 0.0
    %1629 = vadd.xlane.f32.xlu0 %v1628
    %v1630 = vpop.xlane.xlu0 %1629
    %v1631 = vrcp.pop %v1627
    %v1632 = vrcp.pop %v1630
    %v1633 = vmul.f32 %v1622, %v1631
    %v1634 = vmul.f32 %v1624, %v1632
    %v1635 = vpack.c.bf16 %v1633, %v1633
    %v1636 = vpack.c.bf16 %v1634, %v1634
    %1637 = vrot.lane.b32.xlu0 %v942, 32
    %v1638 = vpop.permute.xlu0 %1637
    %v1640 = vsel %vm917, %v1635, 0
    %v1643 = vsel %vm947, %v1638, 0
    %1645 = vmatprep.subr.bf16.mxu0 0
    %1646 = vmatpush1.bf16.msra.mxu0 %v1643
    %1647 = vmatprep.subr.bf16.mxu0 0
    %1648 = vmatpush1.bf16.msra.mxu0 0
    %1649 = vmatprep.subr.bf16.mxu0 0
    %1650 = vmatpush1.bf16.msra.mxu0 0
    %1651 = vmatprep.subr.bf16.mxu0 0
    %1652 = vmatpush1.bf16.msra.mxu0 0
    %1653 = vmatprep.subr.bf16.mxu0 0
    %1654 = vmatpush1.bf16.msra.mxu0 0
    %1655 = vmatprep.subr.bf16.mxu0 0
    %1656 = vmatpush1.bf16.msra.mxu0 0
    %1657 = vmatprep.subr.bf16.mxu0 0
    %1658 = vmatpush1.bf16.msra.mxu0 0
    %1659 = vmatprep.subr.bf16.mxu0 0
    %1660 = vmatpush1.bf16.msra.mxu0 0
    %1661 = vmatprep.subr.bf16.mxu0 0
    %1662 = vmatpush1.bf16.msra.mxu0 0
    %1663 = vmatprep.subr.bf16.mxu0 0
    %1664 = vmatpush1.bf16.msra.mxu0 0
    %1665 = vmatprep.subr.bf16.mxu0 0
    %1666 = vmatpush1.bf16.msra.mxu0 0
    %1667 = vmatprep.subr.bf16.mxu0 0
    %1668 = vmatpush1.bf16.msra.mxu0 0
    %1669 = vmatprep.subr.bf16.mxu0 0
    %1670 = vmatpush1.bf16.msra.mxu0 0
    %1671 = vmatprep.subr.bf16.mxu0 0
    %1672 = vmatpush1.bf16.msra.mxu0 0
    %1673 = vmatprep.subr.bf16.mxu0 0
    %1674 = vmatpush1.bf16.msra.mxu0 0
    %1675 = vmatprep.subr.bf16.mxu0 0
    %1676 = vmatpush1.bf16.msra.mxu0 0
    %1677 = vmatprep.mubr.bf16.mxu0 0
    %1678 = vmatmul.mubr.bf16.gmra.mrb[0].mxu0 %v1640
    %v1679 = vpop.f32.mrb[0].mxu0
    %v1680 = vadd.f32 0.0, %v1679
    %v1681 = vpop.f32.mrb[0].mxu0
    %v1682 = vpop.f32.mrb[0].mxu0
    %v1683 = vpop.f32.mrb[0].mxu0
    %1684 = vdwg.mxu0
    %1685 = vrot.lane.b32.xlu0 %v943, 32
    %v1686 = vpop.permute.xlu0 %1685
    %v1688 = vsel %vm917, %v1636, 0
    %v1691 = vsel %vm947, %v1686, 0
    %1693 = vmatprep.subr.bf16.mxu0 0
    %1694 = vmatpush1.bf16.msra.mxu0 %v1691
    %1695 = vmatprep.subr.bf16.mxu0 0
    %1696 = vmatpush1.bf16.msra.mxu0 0
    %1697 = vmatprep.subr.bf16.mxu0 0
    %1698 = vmatpush1.bf16.msra.mxu0 0
    %1699 = vmatprep.subr.bf16.mxu0 0
    %1700 = vmatpush1.bf16.msra.mxu0 0
    %1701 = vmatprep.subr.bf16.mxu0 0
    %1702 = vmatpush1.bf16.msra.mxu0 0
    %1703 = vmatprep.subr.bf16.mxu0 0
    %1704 = vmatpush1.bf16.msra.mxu0 0
    %1705 = vmatprep.subr.bf16.mxu0 0
    %1706 = vmatpush1.bf16.msra.mxu0 0
    %1707 = vmatprep.subr.bf16.mxu0 0
    %1708 = vmatpush1.bf16.msra.mxu0 0
    %1709 = vmatprep.subr.bf16.mxu0 0
    %1710 = vmatpush1.bf16.msra.mxu0 0
    %1711 = vmatprep.subr.bf16.mxu0 0
    %1712 = vmatpush1.bf16.msra.mxu0 0
    %1713 = vmatprep.subr.bf16.mxu0 0
    %1714 = vmatpush1.bf16.msra.mxu0 0
    %1715 = vmatprep.subr.bf16.mxu0 0
    %1716 = vmatpush1.bf16.msra.mxu0 0
    %1717 = vmatprep.subr.bf16.mxu0 0
    %1718 = vmatpush1.bf16.msra.mxu0 0
    %1719 = vmatprep.subr.bf16.mxu0 0
    %1720 = vmatpush1.bf16.msra.mxu0 0
    %1721 = vmatprep.subr.bf16.mxu0 0
    %1722 = vmatpush1.bf16.msra.mxu0 0
    %1723 = vmatprep.subr.bf16.mxu0 0
    %1724 = vmatpush1.bf16.msra.mxu0 0
    %1725 = vmatprep.mubr.bf16.mxu0 0
    %1726 = vmatmul.mubr.bf16.gmra.mrb[0].mxu0 %v1688
    %v1727 = vpop.f32.mrb[0].mxu0
    %v1728 = vadd.f32 0.0, %v1727
    %v1729 = vpop.f32.mrb[0].mxu0
    %v1730 = vpop.f32.mrb[0].mxu0
    %v1731 = vpop.f32.mrb[0].mxu0
    %1732 = vdwg.mxu0
    %1735 = vrot.lane.b32.xlu0 %v1680, 96
    %v1736 = vpop.permute.xlu0 %1735
    %1737 = vrot.lane.b32.xlu0 %v1728, 96
    %v1738 = vpop.permute.xlu0 %1737
    %vm1741 = vcmask 1048320
    %1742 = vst.msk [vmem:[#allocation2] sm:$0xff] %vm1741, %v1736
    %1743 = vst.msk [vmem:[#allocation2 + $0x10] sm:$0xff] %vm1741, %v1738
    %v1744 = vpack.c.bf16 %v726, %v726
    %v1745 = vpack.c.bf16 %v730, %v730
    %v1746 = vpack.c.bf16 %v769, %v769
    %v1747 = vpack.c.bf16 %v773, %v773
    %v1749 = vsel %vm822, %v1744, 0
    %v1752 = vsel %vm822, %v1746, 0
    %1754 = vmatprep.subr.bf16.mxu0 0
    %1755 = vmatpush1.bf16.xpose.msra.mxu0 %v1752
    %1756 = vmatprep.subr.bf16.mxu0 0
    %1757 = vmatpush1.bf16.xpose.msra.mxu0 0
    %1758 = vmatprep.subr.bf16.mxu0 0
    %1759 = vmatpush1.bf16.xpose.msra.mxu0 0
    %1760 = vmatprep.subr.bf16.mxu0 0
    %1761 = vmatpush1.bf16.xpose.msra.mxu0 0
    %1762 = vmatprep.subr.bf16.mxu0 0
    %1763 = vmatpush1.bf16.xpose.msra.mxu0 0
    %1764 = vmatprep.subr.bf16.mxu0 0
    %1765 = vmatpush1.bf16.xpose.msra.mxu0 0
    %1766 = vmatprep.subr.bf16.mxu0 0
    %1767 = vmatpush1.bf16.xpose.msra.mxu0 0
    %1768 = vmatprep.subr.bf16.mxu0 0
    %1769 = vmatpush1.bf16.xpose.msra.mxu0 0
    %1770 = vmatprep.subr.bf16.mxu0 0
    %1771 = vmatpush1.bf16.xpose.msra.mxu0 0
    %1772 = vmatprep.subr.bf16.mxu0 0
    %1773 = vmatpush1.bf16.xpose.msra.mxu0 0
    %1774 = vmatprep.subr.bf16.mxu0 0
    %1775 = vmatpush1.bf16.xpose.msra.mxu0 0
    %1776 = vmatprep.subr.bf16.mxu0 0
    %1777 = vmatpush1.bf16.xpose.msra.mxu0 0
    %1778 = vmatprep.subr.bf16.mxu0 0
    %1779 = vmatpush1.bf16.xpose.msra.mxu0 0
    %1780 = vmatprep.subr.bf16.mxu0 0
    %1781 = vmatpush1.bf16.xpose.msra.mxu0 0
    %1782 = vmatprep.subr.bf16.mxu0 0
    %1783 = vmatpush1.bf16.xpose.msra.mxu0 0
    %1784 = vmatprep.subr.bf16.mxu0 0
    %1785 = vmatpush1.bf16.xpose.msra.mxu0 0
    %1786 = vmatprep.mubr.bf16.mxu0 0
    %1787 = vmatmul.mubr.bf16.gmra.mrb[0].mxu0 %v1749
    %v1788 = vpop.f32.mrb[0].mxu0
    %v1789 = vadd.f32 0.0, %v1788
    %v1790 = vpop.f32.mrb[0].mxu0
    %v1791 = vpop.f32.mrb[0].mxu0
    %v1792 = vpop.f32.mrb[0].mxu0
    %1793 = vdwg.mxu0
    %v1795 = vsel %vm822, %v1745, 0
    %v1798 = vsel %vm822, %v1747, 0
    %1800 = vmatprep.subr.bf16.mxu0 0
    %1801 = vmatpush1.bf16.xpose.msra.mxu0 %v1798
    %1802 = vmatprep.subr.bf16.mxu0 0
    %1803 = vmatpush1.bf16.xpose.msra.mxu0 0
    %1804 = vmatprep.subr.bf16.mxu0 0
    %1805 = vmatpush1.bf16.xpose.msra.mxu0 0
    %1806 = vmatprep.subr.bf16.mxu0 0
    %1807 = vmatpush1.bf16.xpose.msra.mxu0 0
    %1808 = vmatprep.subr.bf16.mxu0 0
    %1809 = vmatpush1.bf16.xpose.msra.mxu0 0
    %1810 = vmatprep.subr.bf16.mxu0 0
    %1811 = vmatpush1.bf16.xpose.msra.mxu0 0
    %1812 = vmatprep.subr.bf16.mxu0 0
    %1813 = vmatpush1.bf16.xpose.msra.mxu0 0
    %1814 = vmatprep.subr.bf16.mxu0 0
    %1815 = vmatpush1.bf16.xpose.msra.mxu0 0
    %1816 = vmatprep.subr.bf16.mxu0 0
    %1817 = vmatpush1.bf16.xpose.msra.mxu0 0
    %1818 = vmatprep.subr.bf16.mxu0 0
    %1819 = vmatpush1.bf16.xpose.msra.mxu0 0
    %1820 = vmatprep.subr.bf16.mxu0 0
    %1821 = vmatpush1.bf16.xpose.msra.mxu0 0
    %1822 = vmatprep.subr.bf16.mxu0 0
    %1823 = vmatpush1.bf16.xpose.msra.mxu0 0
    %1824 = vmatprep.subr.bf16.mxu0 0
    %1825 = vmatpush1.bf16.xpose.msra.mxu0 0
    %1826 = vmatprep.subr.bf16.mxu0 0
    %1827 = vmatpush1.bf16.xpose.msra.mxu0 0
    %1828 = vmatprep.subr.bf16.mxu0 0
    %1829 = vmatpush1.bf16.xpose.msra.mxu0 0
    %1830 = vmatprep.subr.bf16.mxu0 0
    %1831 = vmatpush1.bf16.xpose.msra.mxu0 0
    %1832 = vmatprep.mubr.bf16.mxu0 0
    %1833 = vmatmul.mubr.bf16.gmra.mrb[0].mxu0 %v1795
    %v1834 = vpop.f32.mrb[0].mxu0
    %v1835 = vadd.f32 0.0, %v1834
    %v1836 = vpop.f32.mrb[0].mxu0
    %v1837 = vpop.f32.mrb[0].mxu0
    %v1838 = vpop.f32.mrb[0].mxu0
    %1839 = vdwg.mxu0
    %v1840 = vmul.f32 %v1789, 0.17677669
    %v1841 = vmul.f32 %v1835, 0.17677669
    %v1842 = vsel %vm917, %v1840, -inf
    %1843 = vmax.xlane.f32.xlu0 %v1842
    %v1844 = vpop.xlane.xlu0 %1843
    %v1845 = vsel %vm917, %v1841, -inf
    %1846 = vmax.xlane.f32.xlu0 %v1845
    %v1847 = vpop.xlane.xlu0 %1846
    %v1848 = vsub.f32 %v1840, %v1844
    %v1849 = vsub.f32 %v1841, %v1847
    %v1850 = vmul.f32 %v1848, 1.442695
    %v1851 = vpow.pop %v1850
    %v1852 = vmul.f32 %v1849, 1.442695
    %v1853 = vpow.pop %v1852
    %v1854 = vsel %vm917, %v1851, 0.0
    %1855 = vadd.xlane.f32.xlu0 %v1854
    %v1856 = vpop.xlane.xlu0 %1855
    %v1857 = vsel %vm917, %v1853, 0.0
    %1858 = vadd.xlane.f32.xlu0 %v1857
    %v1859 = vpop.xlane.xlu0 %1858
    %v1860 = vrcp.pop %v1856
    %v1861 = vrcp.pop %v1859
    %v1862 = vmul.f32 %v1851, %v1860
    %v1863 = vmul.f32 %v1853, %v1861
    %v1864 = vpack.c.bf16 %v1862, %v1862
    %v1865 = vpack.c.bf16 %v1863, %v1863
    %v1866 = vpack.c.bf16 %v812, %v812
    %v1867 = vpack.c.bf16 %v816, %v816
    %v1869 = vsel %vm917, %v1864, 0
    %v1872 = vsel %vm947, %v1866, 0
    %1874 = vmatprep.subr.bf16.mxu0 0
    %1875 = vmatpush1.bf16.msra.mxu0 %v1872
    %1876 = vmatprep.subr.bf16.mxu0 0
    %1877 = vmatpush1.bf16.msra.mxu0 0
    %1878 = vmatprep.subr.bf16.mxu0 0
    %1879 = vmatpush1.bf16.msra.mxu0 0
    %1880 = vmatprep.subr.bf16.mxu0 0
    %1881 = vmatpush1.bf16.msra.mxu0 0
    %1882 = vmatprep.subr.bf16.mxu0 0
    %1883 = vmatpush1.bf16.msra.mxu0 0
    %1884 = vmatprep.subr.bf16.mxu0 0
    %1885 = vmatpush1.bf16.msra.mxu0 0
    %1886 = vmatprep.subr.bf16.mxu0 0
    %1887 = vmatpush1.bf16.msra.mxu0 0
    %1888 = vmatprep.subr.bf16.mxu0 0
    %1889 = vmatpush1.bf16.msra.mxu0 0
    %1890 = vmatprep.subr.bf16.mxu0 0
    %1891 = vmatpush1.bf16.msra.mxu0 0
    %1892 = vmatprep.subr.bf16.mxu0 0
    %1893 = vmatpush1.bf16.msra.mxu0 0
    %1894 = vmatprep.subr.bf16.mxu0 0
    %1895 = vmatpush1.bf16.msra.mxu0 0
    %1896 = vmatprep.subr.bf16.mxu0 0
    %1897 = vmatpush1.bf16.msra.mxu0 0
    %1898 = vmatprep.subr.bf16.mxu0 0
    %1899 = vmatpush1.bf16.msra.mxu0 0
    %1900 = vmatprep.subr.bf16.mxu0 0
    %1901 = vmatpush1.bf16.msra.mxu0 0
    %1902 = vmatprep.subr.bf16.mxu0 0
    %1903 = vmatpush1.bf16.msra.mxu0 0
    %1904 = vmatprep.subr.bf16.mxu0 0
    %1905 = vmatpush1.bf16.msra.mxu0 0
    %1906 = vmatprep.mubr.bf16.mxu0 0
    %1907 = vmatmul.mubr.bf16.gmra.mrb[0].mxu0 %v1869
    %v1908 = vpop.f32.mrb[0].mxu0
    %v1909 = vadd.f32 0.0, %v1908
    %v1910 = vpop.f32.mrb[0].mxu0
    %v1911 = vpop.f32.mrb[0].mxu0
    %v1912 = vpop.f32.mrb[0].mxu0
    %1913 = vdwg.mxu0
    %v1915 = vsel %vm917, %v1865, 0
    %v1918 = vsel %vm947, %v1867, 0
    %1920 = vmatprep.subr.bf16.mxu0 0
    %1921 = vmatpush1.bf16.msra.mxu0 %v1918
    %1922 = vmatprep.subr.bf16.mxu0 0
    %1923 = vmatpush1.bf16.msra.mxu0 0
    %1924 = vmatprep.subr.bf16.mxu0 0
    %1925 = vmatpush1.bf16.msra.mxu0 0
    %1926 = vmatprep.subr.bf16.mxu0 0
    %1927 = vmatpush1.bf16.msra.mxu0 0
    %1928 = vmatprep.subr.bf16.mxu0 0
    %1929 = vmatpush1.bf16.msra.mxu0 0
    %1930 = vmatprep.subr.bf16.mxu0 0
    %1931 = vmatpush1.bf16.msra.mxu0 0
    %1932 = vmatprep.subr.bf16.mxu0 0
    %1933 = vmatpush1.bf16.msra.mxu0 0
    %1934 = vmatprep.subr.bf16.mxu0 0
    %1935 = vmatpush1.bf16.msra.mxu0 0
    %1936 = vmatprep.subr.bf16.mxu0 0
    %1937 = vmatpush1.bf16.msra.mxu0 0
    %1938 = vmatprep.subr.bf16.mxu0 0
    %1939 = vmatpush1.bf16.msra.mxu0 0
    %1940 = vmatprep.subr.bf16.mxu0 0
    %1941 = vmatpush1.bf16.msra.mxu0 0
    %1942 = vmatprep.subr.bf16.mxu0 0
    %1943 = vmatpush1.bf16.msra.mxu0 0
    %1944 = vmatprep.subr.bf16.mxu0 0
    %1945 = vmatpush1.bf16.msra.mxu0 0
    %1946 = vmatprep.subr.bf16.mxu0 0
    %1947 = vmatpush1.bf16.msra.mxu0 0
    %1948 = vmatprep.subr.bf16.mxu0 0
    %1949 = vmatpush1.bf16.msra.mxu0 0
    %1950 = vmatprep.subr.bf16.mxu0 0
    %1951 = vmatpush1.bf16.msra.mxu0 0
    %1952 = vmatprep.mubr.bf16.mxu0 0
    %1953 = vmatmul.mubr.bf16.gmra.mrb[0].mxu0 %v1915
    %v1954 = vpop.f32.mrb[0].mxu0
    %v1955 = vadd.f32 0.0, %v1954
    %v1956 = vpop.f32.mrb[0].mxu0
    %v1957 = vpop.f32.mrb[0].mxu0
    %v1958 = vpop.f32.mrb[0].mxu0
    %1959 = vdwg.mxu0
    %1960 = vst.msk [vmem:[#allocation2 + $0x8] sm:$0xff] %vm822, %v1909
    %1961 = vst.msk [vmem:[#allocation2 + $0x18] sm:$0xff] %vm822, %v1955
    %1963 = vrot.lane.b32.xlu0 %v1744, 96
    %v1964 = vpop.permute.xlu0 %1963
    %1966 = vrot.lane.b32.xlu0 %v1746, 96
    %v1967 = vpop.permute.xlu0 %1966
    %v1969 = vsel %vm822, %v1964, 0
    %v1972 = vsel %vm822, %v1967, 0
    %1974 = vmatprep.subr.bf16.mxu0 0
    %1975 = vmatpush1.bf16.xpose.msra.mxu0 %v1972
    %1976 = vmatprep.subr.bf16.mxu0 0
    %1977 = vmatpush1.bf16.xpose.msra.mxu0 0
    %1978 = vmatprep.subr.bf16.mxu0 0
    %1979 = vmatpush1.bf16.xpose.msra.mxu0 0
    %1980 = vmatprep.subr.bf16.mxu0 0
    %1981 = vmatpush1.bf16.xpose.msra.mxu0 0
    %1982 = vmatprep.subr.bf16.mxu0 0
    %1983 = vmatpush1.bf16.xpose.msra.mxu0 0
    %1984 = vmatprep.subr.bf16.mxu0 0
    %1985 = vmatpush1.bf16.xpose.msra.mxu0 0
    %1986 = vmatprep.subr.bf16.mxu0 0
    %1987 = vmatpush1.bf16.xpose.msra.mxu0 0
    %1988 = vmatprep.subr.bf16.mxu0 0
    %1989 = vmatpush1.bf16.xpose.msra.mxu0 0
    %1990 = vmatprep.subr.bf16.mxu0 0
    %1991 = vmatpush1.bf16.xpose.msra.mxu0 0
    %1992 = vmatprep.subr.bf16.mxu0 0
    %1993 = vmatpush1.bf16.xpose.msra.mxu0 0
    %1994 = vmatprep.subr.bf16.mxu0 0
    %1995 = vmatpush1.bf16.xpose.msra.mxu0 0
    %1996 = vmatprep.subr.bf16.mxu0 0
    %1997 = vmatpush1.bf16.xpose.msra.mxu0 0
    %1998 = vmatprep.subr.bf16.mxu0 0
    %1999 = vmatpush1.bf16.xpose.msra.mxu0 0
    %2000 = vmatprep.subr.bf16.mxu0 0
    %2001 = vmatpush1.bf16.xpose.msra.mxu0 0
    %2002 = vmatprep.subr.bf16.mxu0 0
    %2003 = vmatpush1.bf16.xpose.msra.mxu0 0
    %2004 = vmatprep.subr.bf16.mxu0 0
    %2005 = vmatpush1.bf16.xpose.msra.mxu0 0
    %2006 = vmatprep.mubr.bf16.mxu0 0
    %2007 = vmatmul.mubr.bf16.gmra.mrb[0].mxu0 %v1969
    %v2008 = vpop.f32.mrb[0].mxu0
    %v2009 = vadd.f32 0.0, %v2008
    %v2010 = vpop.f32.mrb[0].mxu0
    %v2011 = vpop.f32.mrb[0].mxu0
    %v2012 = vpop.f32.mrb[0].mxu0
    %2013 = vdwg.mxu0
    %2015 = vrot.lane.b32.xlu0 %v1745, 96
    %v2016 = vpop.permute.xlu0 %2015
    %2018 = vrot.lane.b32.xlu0 %v1747, 96
    %v2019 = vpop.permute.xlu0 %2018
    %v2021 = vsel %vm822, %v2016, 0
    %v2024 = vsel %vm822, %v2019, 0
    %2026 = vmatprep.subr.bf16.mxu0 0
    %2027 = vmatpush1.bf16.xpose.msra.mxu0 %v2024
    %2028 = vmatprep.subr.bf16.mxu0 0
    %2029 = vmatpush1.bf16.xpose.msra.mxu0 0
    %2030 = vmatprep.subr.bf16.mxu0 0
    %2031 = vmatpush1.bf16.xpose.msra.mxu0 0
    %2032 = vmatprep.subr.bf16.mxu0 0
    %2033 = vmatpush1.bf16.xpose.msra.mxu0 0
    %2034 = vmatprep.subr.bf16.mxu0 0
    %2035 = vmatpush1.bf16.xpose.msra.mxu0 0
    %2036 = vmatprep.subr.bf16.mxu0 0
    %2037 = vmatpush1.bf16.xpose.msra.mxu0 0
    %2038 = vmatprep.subr.bf16.mxu0 0
    %2039 = vmatpush1.bf16.xpose.msra.mxu0 0
    %2040 = vmatprep.subr.bf16.mxu0 0
    %2041 = vmatpush1.bf16.xpose.msra.mxu0 0
    %2042 = vmatprep.subr.bf16.mxu0 0
    %2043 = vmatpush1.bf16.xpose.msra.mxu0 0
    %2044 = vmatprep.subr.bf16.mxu0 0
    %2045 = vmatpush1.bf16.xpose.msra.mxu0 0
    %2046 = vmatprep.subr.bf16.mxu0 0
    %2047 = vmatpush1.bf16.xpose.msra.mxu0 0
    %2048 = vmatprep.subr.bf16.mxu0 0
    %2049 = vmatpush1.bf16.xpose.msra.mxu0 0
    %2050 = vmatprep.subr.bf16.mxu0 0
    %2051 = vmatpush1.bf16.xpose.msra.mxu0 0
    %2052 = vmatprep.subr.bf16.mxu0 0
    %2053 = vmatpush1.bf16.xpose.msra.mxu0 0
    %2054 = vmatprep.subr.bf16.mxu0 0
    %2055 = vmatpush1.bf16.xpose.msra.mxu0 0
    %2056 = vmatprep.subr.bf16.mxu0 0
    %2057 = vmatpush1.bf16.xpose.msra.mxu0 0
    %2058 = vmatprep.mubr.bf16.mxu0 0
    %2059 = vmatmul.mubr.bf16.gmra.mrb[0].mxu0 %v2021
    %v2060 = vpop.f32.mrb[0].mxu0
    %v2061 = vadd.f32 0.0, %v2060
    %v2062 = vpop.f32.mrb[0].mxu0
    %v2063 = vpop.f32.mrb[0].mxu0
    %v2064 = vpop.f32.mrb[0].mxu0
    %2065 = vdwg.mxu0
    %v2066 = vmul.f32 %v2009, 0.17677669
    %v2067 = vmul.f32 %v2061, 0.17677669
    %v2068 = vsel %vm917, %v2066, -inf
    %2069 = vmax.xlane.f32.xlu0 %v2068
    %v2070 = vpop.xlane.xlu0 %2069
    %v2071 = vsel %vm917, %v2067, -inf
    %2072 = vmax.xlane.f32.xlu0 %v2071
    %v2073 = vpop.xlane.xlu0 %2072
    %v2074 = vsub.f32 %v2066, %v2070
    %v2075 = vsub.f32 %v2067, %v2073
    %v2076 = vmul.f32 %v2074, 1.442695
    %v2077 = vpow.pop %v2076
    %v2078 = vmul.f32 %v2075, 1.442695
    %v2079 = vpow.pop %v2078
    %v2080 = vsel %vm917, %v2077, 0.0
    %2081 = vadd.xlane.f32.xlu0 %v2080
    %v2082 = vpop.xlane.xlu0 %2081
    %v2083 = vsel %vm917, %v2079, 0.0
    %2084 = vadd.xlane.f32.xlu0 %v2083
    %v2085 = vpop.xlane.xlu0 %2084
    %v2086 = vrcp.pop %v2082
    %v2087 = vrcp.pop %v2085
    %v2088 = vmul.f32 %v2077, %v2086
    %v2089 = vmul.f32 %v2079, %v2087
    %v2090 = vpack.c.bf16 %v2088, %v2088
    %v2091 = vpack.c.bf16 %v2089, %v2089
    %2093 = vrot.lane.b32.xlu0 %v1866, 96
    %v2094 = vpop.permute.xlu0 %2093
    %v2096 = vsel %vm917, %v2090, 0
    %v2099 = vsel %vm947, %v2094, 0
    %2101 = vmatprep.subr.bf16.mxu0 0
    %2102 = vmatpush1.bf16.msra.mxu0 %v2099
    %2103 = vmatprep.subr.bf16.mxu0 0
    %2104 = vmatpush1.bf16.msra.mxu0 0
    %2105 = vmatprep.subr.bf16.mxu0 0
    %2106 = vmatpush1.bf16.msra.mxu0 0
    %2107 = vmatprep.subr.bf16.mxu0 0
    %2108 = vmatpush1.bf16.msra.mxu0 0
    %2109 = vmatprep.subr.bf16.mxu0 0
    %2110 = vmatpush1.bf16.msra.mxu0 0
    %2111 = vmatprep.subr.bf16.mxu0 0
    %2112 = vmatpush1.bf16.msra.mxu0 0
    %2113 = vmatprep.subr.bf16.mxu0 0
    %2114 = vmatpush1.bf16.msra.mxu0 0
    %2115 = vmatprep.subr.bf16.mxu0 0
    %2116 = vmatpush1.bf16.msra.mxu0 0
    %2117 = vmatprep.subr.bf16.mxu0 0
    %2118 = vmatpush1.bf16.msra.mxu0 0
    %2119 = vmatprep.subr.bf16.mxu0 0
    %2120 = vmatpush1.bf16.msra.mxu0 0
    %2121 = vmatprep.subr.bf16.mxu0 0
    %2122 = vmatpush1.bf16.msra.mxu0 0
    %2123 = vmatprep.subr.bf16.mxu0 0
    %2124 = vmatpush1.bf16.msra.mxu0 0
    %2125 = vmatprep.subr.bf16.mxu0 0
    %2126 = vmatpush1.bf16.msra.mxu0 0
    %2127 = vmatprep.subr.bf16.mxu0 0
    %2128 = vmatpush1.bf16.msra.mxu0 0
    %2129 = vmatprep.subr.bf16.mxu0 0
    %2130 = vmatpush1.bf16.msra.mxu0 0
    %2131 = vmatprep.subr.bf16.mxu0 0
    %2132 = vmatpush1.bf16.msra.mxu0 0
    %2133 = vmatprep.mubr.bf16.mxu0 0
    %2134 = vmatmul.mubr.bf16.gmra.mrb[0].mxu0 %v2096
    %v2135 = vpop.f32.mrb[0].mxu0
    %v2136 = vadd.f32 0.0, %v2135
    %v2137 = vpop.f32.mrb[0].mxu0
    %v2138 = vpop.f32.mrb[0].mxu0
    %v2139 = vpop.f32.mrb[0].mxu0
    %2140 = vdwg.mxu0
    %2142 = vrot.lane.b32.xlu0 %v1867, 96
    %v2143 = vpop.permute.xlu0 %2142
    %v2145 = vsel %vm917, %v2091, 0
    %v2148 = vsel %vm947, %v2143, 0
    %2150 = vmatprep.subr.bf16.mxu0 0
    %2151 = vmatpush1.bf16.msra.mxu0 %v2148
    %2152 = vmatprep.subr.bf16.mxu0 0
    %2153 = vmatpush1.bf16.msra.mxu0 0
    %2154 = vmatprep.subr.bf16.mxu0 0
    %2155 = vmatpush1.bf16.msra.mxu0 0
    %2156 = vmatprep.subr.bf16.mxu0 0
    %2157 = vmatpush1.bf16.msra.mxu0 0
    %2158 = vmatprep.subr.bf16.mxu0 0
    %2159 = vmatpush1.bf16.msra.mxu0 0
    %2160 = vmatprep.subr.bf16.mxu0 0
    %2161 = vmatpush1.bf16.msra.mxu0 0
    %2162 = vmatprep.subr.bf16.mxu0 0
    %2163 = vmatpush1.bf16.msra.mxu0 0
    %2164 = vmatprep.subr.bf16.mxu0 0
    %2165 = vmatpush1.bf16.msra.mxu0 0
    %2166 = vmatprep.subr.bf16.mxu0 0
    %2167 = vmatpush1.bf16.msra.mxu0 0
    %2168 = vmatprep.subr.bf16.mxu0 0
    %2169 = vmatpush1.bf16.msra.mxu0 0
    %2170 = vmatprep.subr.bf16.mxu0 0
    %2171 = vmatpush1.bf16.msra.mxu0 0
    %2172 = vmatprep.subr.bf16.mxu0 0
    %2173 = vmatpush1.bf16.msra.mxu0 0
    %2174 = vmatprep.subr.bf16.mxu0 0
    %2175 = vmatpush1.bf16.msra.mxu0 0
    %2176 = vmatprep.subr.bf16.mxu0 0
    %2177 = vmatpush1.bf16.msra.mxu0 0
    %2178 = vmatprep.subr.bf16.mxu0 0
    %2179 = vmatpush1.bf16.msra.mxu0 0
    %2180 = vmatprep.subr.bf16.mxu0 0
    %2181 = vmatpush1.bf16.msra.mxu0 0
    %2182 = vmatprep.mubr.bf16.mxu0 0
    %2183 = vmatmul.mubr.bf16.gmra.mrb[0].mxu0 %v2145
    %v2184 = vpop.f32.mrb[0].mxu0
    %v2185 = vadd.f32 0.0, %v2184
    %v2186 = vpop.f32.mrb[0].mxu0
    %v2187 = vpop.f32.mrb[0].mxu0
    %v2188 = vpop.f32.mrb[0].mxu0
    %2189 = vdwg.mxu0
    %2192 = vrot.lane.b32.xlu0 %v2136, 32
    %v2193 = vpop.permute.xlu0 %2192
    %2194 = vrot.lane.b32.xlu0 %v2185, 32
    %v2195 = vpop.permute.xlu0 %2194
    %2198 = vst.msk [vmem:[#allocation2 + $0x8] sm:$0xff] %vm1275, %v2193
    %2199 = vst.msk [vmem:[#allocation2 + $0x18] sm:$0xff] %vm1275, %v2195
    %2200 = vrot.lane.b32.xlu0 %v1744, 64
    %v2201 = vpop.permute.xlu0 %2200
    %2202 = vrot.lane.b32.xlu0 %v1746, 64
    %v2203 = vpop.permute.xlu0 %2202
    %v2205 = vsel %vm822, %v2201, 0
    %v2208 = vsel %vm822, %v2203, 0
    %2210 = vmatprep.subr.bf16.mxu0 0
    %2211 = vmatpush1.bf16.xpose.msra.mxu0 %v2208
    %2212 = vmatprep.subr.bf16.mxu0 0
    %2213 = vmatpush1.bf16.xpose.msra.mxu0 0
    %2214 = vmatprep.subr.bf16.mxu0 0
    %2215 = vmatpush1.bf16.xpose.msra.mxu0 0
    %2216 = vmatprep.subr.bf16.mxu0 0
    %2217 = vmatpush1.bf16.xpose.msra.mxu0 0
    %2218 = vmatprep.subr.bf16.mxu0 0
    %2219 = vmatpush1.bf16.xpose.msra.mxu0 0
    %2220 = vmatprep.subr.bf16.mxu0 0
    %2221 = vmatpush1.bf16.xpose.msra.mxu0 0
    %2222 = vmatprep.subr.bf16.mxu0 0
    %2223 = vmatpush1.bf16.xpose.msra.mxu0 0
    %2224 = vmatprep.subr.bf16.mxu0 0
    %2225 = vmatpush1.bf16.xpose.msra.mxu0 0
    %2226 = vmatprep.subr.bf16.mxu0 0
    %2227 = vmatpush1.bf16.xpose.msra.mxu0 0
    %2228 = vmatprep.subr.bf16.mxu0 0
    %2229 = vmatpush1.bf16.xpose.msra.mxu0 0
    %2230 = vmatprep.subr.bf16.mxu0 0
    %2231 = vmatpush1.bf16.xpose.msra.mxu0 0
    %2232 = vmatprep.subr.bf16.mxu0 0
    %2233 = vmatpush1.bf16.xpose.msra.mxu0 0
    %2234 = vmatprep.subr.bf16.mxu0 0
    %2235 = vmatpush1.bf16.xpose.msra.mxu0 0
    %2236 = vmatprep.subr.bf16.mxu0 0
    %2237 = vmatpush1.bf16.xpose.msra.mxu0 0
    %2238 = vmatprep.subr.bf16.mxu0 0
    %2239 = vmatpush1.bf16.xpose.msra.mxu0 0
    %2240 = vmatprep.subr.bf16.mxu0 0
    %2241 = vmatpush1.bf16.xpose.msra.mxu0 0
    %2242 = vmatprep.mubr.bf16.mxu0 0
    %2243 = vmatmul.mubr.bf16.gmra.mrb[0].mxu0 %v2205
    %v2244 = vpop.f32.mrb[0].mxu0
    %v2245 = vadd.f32 0.0, %v2244
    %v2246 = vpop.f32.mrb[0].mxu0
    %v2247 = vpop.f32.mrb[0].mxu0
    %v2248 = vpop.f32.mrb[0].mxu0
    %2249 = vdwg.mxu0
    %2250 = vrot.lane.b32.xlu0 %v1745, 64
    %v2251 = vpop.permute.xlu0 %2250
    %2252 = vrot.lane.b32.xlu0 %v1747, 64
    %v2253 = vpop.permute.xlu0 %2252
    %v2255 = vsel %vm822, %v2251, 0
    %v2258 = vsel %vm822, %v2253, 0
    %2260 = vmatprep.subr.bf16.mxu0 0
    %2261 = vmatpush1.bf16.xpose.msra.mxu0 %v2258
    %2262 = vmatprep.subr.bf16.mxu0 0
    %2263 = vmatpush1.bf16.xpose.msra.mxu0 0
    %2264 = vmatprep.subr.bf16.mxu0 0
    %2265 = vmatpush1.bf16.xpose.msra.mxu0 0
    %2266 = vmatprep.subr.bf16.mxu0 0
    %2267 = vmatpush1.bf16.xpose.msra.mxu0 0
    %2268 = vmatprep.subr.bf16.mxu0 0
    %2269 = vmatpush1.bf16.xpose.msra.mxu0 0
    %2270 = vmatprep.subr.bf16.mxu0 0
    %2271 = vmatpush1.bf16.xpose.msra.mxu0 0
    %2272 = vmatprep.subr.bf16.mxu0 0
    %2273 = vmatpush1.bf16.xpose.msra.mxu0 0
    %2274 = vmatprep.subr.bf16.mxu0 0
    %2275 = vmatpush1.bf16.xpose.msra.mxu0 0
    %2276 = vmatprep.subr.bf16.mxu0 0
    %2277 = vmatpush1.bf16.xpose.msra.mxu0 0
    %2278 = vmatprep.subr.bf16.mxu0 0
    %2279 = vmatpush1.bf16.xpose.msra.mxu0 0
    %2280 = vmatprep.subr.bf16.mxu0 0
    %2281 = vmatpush1.bf16.xpose.msra.mxu0 0
    %2282 = vmatprep.subr.bf16.mxu0 0
    %2283 = vmatpush1.bf16.xpose.msra.mxu0 0
    %2284 = vmatprep.subr.bf16.mxu0 0
    %2285 = vmatpush1.bf16.xpose.msra.mxu0 0
    %2286 = vmatprep.subr.bf16.mxu0 0
    %2287 = vmatpush1.bf16.xpose.msra.mxu0 0
    %2288 = vmatprep.subr.bf16.mxu0 0
    %2289 = vmatpush1.bf16.xpose.msra.mxu0 0
    %2290 = vmatprep.subr.bf16.mxu0 0
    %2291 = vmatpush1.bf16.xpose.msra.mxu0 0
    %2292 = vmatprep.mubr.bf16.mxu0 0
    %2293 = vmatmul.mubr.bf16.gmra.mrb[0].mxu0 %v2255
    %v2294 = vpop.f32.mrb[0].mxu0
    %v2295 = vadd.f32 0.0, %v2294
    %v2296 = vpop.f32.mrb[0].mxu0
    %v2297 = vpop.f32.mrb[0].mxu0
    %v2298 = vpop.f32.mrb[0].mxu0
    %2299 = vdwg.mxu0
    %v2300 = vmul.f32 %v2245, 0.17677669
    %v2301 = vmul.f32 %v2295, 0.17677669
    %v2302 = vsel %vm917, %v2300, -inf
    %2303 = vmax.xlane.f32.xlu0 %v2302
    %v2304 = vpop.xlane.xlu0 %2303
    %v2305 = vsel %vm917, %v2301, -inf
    %2306 = vmax.xlane.f32.xlu0 %v2305
    %v2307 = vpop.xlane.xlu0 %2306
    %v2308 = vsub.f32 %v2300, %v2304
    %v2309 = vsub.f32 %v2301, %v2307
    %v2310 = vmul.f32 %v2308, 1.442695
    %v2311 = vpow.pop %v2310
    %v2312 = vmul.f32 %v2309, 1.442695
    %v2313 = vpow.pop %v2312
    %v2314 = vsel %vm917, %v2311, 0.0
    %2315 = vadd.xlane.f32.xlu0 %v2314
    %v2316 = vpop.xlane.xlu0 %2315
    %v2317 = vsel %vm917, %v2313, 0.0
    %2318 = vadd.xlane.f32.xlu0 %v2317
    %v2319 = vpop.xlane.xlu0 %2318
    %v2320 = vrcp.pop %v2316
    %v2321 = vrcp.pop %v2319
    %v2322 = vmul.f32 %v2311, %v2320
    %v2323 = vmul.f32 %v2313, %v2321
    %v2324 = vpack.c.bf16 %v2322, %v2322
    %v2325 = vpack.c.bf16 %v2323, %v2323
    %2326 = vrot.lane.b32.xlu0 %v1866, 64
    %v2327 = vpop.permute.xlu0 %2326
    %v2329 = vsel %vm917, %v2324, 0
    %v2332 = vsel %vm947, %v2327, 0
    %2334 = vmatprep.subr.bf16.mxu0 0
    %2335 = vmatpush1.bf16.msra.mxu0 %v2332
    %2336 = vmatprep.subr.bf16.mxu0 0
    %2337 = vmatpush1.bf16.msra.mxu0 0
    %2338 = vmatprep.subr.bf16.mxu0 0
    %2339 = vmatpush1.bf16.msra.mxu0 0
    %2340 = vmatprep.subr.bf16.mxu0 0
    %2341 = vmatpush1.bf16.msra.mxu0 0
    %2342 = vmatprep.subr.bf16.mxu0 0
    %2343 = vmatpush1.bf16.msra.mxu0 0
    %2344 = vmatprep.subr.bf16.mxu0 0
    %2345 = vmatpush1.bf16.msra.mxu0 0
    %2346 = vmatprep.subr.bf16.mxu0 0
    %2347 = vmatpush1.bf16.msra.mxu0 0
    %2348 = vmatprep.subr.bf16.mxu0 0
    %2349 = vmatpush1.bf16.msra.mxu0 0
    %2350 = vmatprep.subr.bf16.mxu0 0
    %2351 = vmatpush1.bf16.msra.mxu0 0
    %2352 = vmatprep.subr.bf16.mxu0 0
    %2353 = vmatpush1.bf16.msra.mxu0 0
    %2354 = vmatprep.subr.bf16.mxu0 0
    %2355 = vmatpush1.bf16.msra.mxu0 0
    %2356 = vmatprep.subr.bf16.mxu0 0
    %2357 = vmatpush1.bf16.msra.mxu0 0
    %2358 = vmatprep.subr.bf16.mxu0 0
    %2359 = vmatpush1.bf16.msra.mxu0 0
    %2360 = vmatprep.subr.bf16.mxu0 0
    %2361 = vmatpush1.bf16.msra.mxu0 0
    %2362 = vmatprep.subr.bf16.mxu0 0
    %2363 = vmatpush1.bf16.msra.mxu0 0
    %2364 = vmatprep.subr.bf16.mxu0 0
    %2365 = vmatpush1.bf16.msra.mxu0 0
    %2366 = vmatprep.mubr.bf16.mxu0 0
    %2367 = vmatmul.mubr.bf16.gmra.mrb[0].mxu0 %v2329
    %v2368 = vpop.f32.mrb[0].mxu0
    %v2369 = vadd.f32 0.0, %v2368
    %v2370 = vpop.f32.mrb[0].mxu0
    %v2371 = vpop.f32.mrb[0].mxu0
    %v2372 = vpop.f32.mrb[0].mxu0
    %2373 = vdwg.mxu0
    %2374 = vrot.lane.b32.xlu0 %v1867, 64
    %v2375 = vpop.permute.xlu0 %2374
    %v2377 = vsel %vm917, %v2325, 0
    %v2380 = vsel %vm947, %v2375, 0
    %2382 = vmatprep.subr.bf16.mxu0 0
    %2383 = vmatpush1.bf16.msra.mxu0 %v2380
    %2384 = vmatprep.subr.bf16.mxu0 0
    %2385 = vmatpush1.bf16.msra.mxu0 0
    %2386 = vmatprep.subr.bf16.mxu0 0
    %2387 = vmatpush1.bf16.msra.mxu0 0
    %2388 = vmatprep.subr.bf16.mxu0 0
    %2389 = vmatpush1.bf16.msra.mxu0 0
    %2390 = vmatprep.subr.bf16.mxu0 0
    %2391 = vmatpush1.bf16.msra.mxu0 0
    %2392 = vmatprep.subr.bf16.mxu0 0
    %2393 = vmatpush1.bf16.msra.mxu0 0
    %2394 = vmatprep.subr.bf16.mxu0 0
    %2395 = vmatpush1.bf16.msra.mxu0 0
    %2396 = vmatprep.subr.bf16.mxu0 0
    %2397 = vmatpush1.bf16.msra.mxu0 0
    %2398 = vmatprep.subr.bf16.mxu0 0
    %2399 = vmatpush1.bf16.msra.mxu0 0
    %2400 = vmatprep.subr.bf16.mxu0 0
    %2401 = vmatpush1.bf16.msra.mxu0 0
    %2402 = vmatprep.subr.bf16.mxu0 0
    %2403 = vmatpush1.bf16.msra.mxu0 0
    %2404 = vmatprep.subr.bf16.mxu0 0
    %2405 = vmatpush1.bf16.msra.mxu0 0
    %2406 = vmatprep.subr.bf16.mxu0 0
    %2407 = vmatpush1.bf16.msra.mxu0 0
    %2408 = vmatprep.subr.bf16.mxu0 0
    %2409 = vmatpush1.bf16.msra.mxu0 0
    %2410 = vmatprep.subr.bf16.mxu0 0
    %2411 = vmatpush1.bf16.msra.mxu0 0
    %2412 = vmatprep.subr.bf16.mxu0 0
    %2413 = vmatpush1.bf16.msra.mxu0 0
    %2414 = vmatprep.mubr.bf16.mxu0 0
    %2415 = vmatmul.mubr.bf16.gmra.mrb[0].mxu0 %v2377
    %v2416 = vpop.f32.mrb[0].mxu0
    %v2417 = vadd.f32 0.0, %v2416
    %v2418 = vpop.f32.mrb[0].mxu0
    %v2419 = vpop.f32.mrb[0].mxu0
    %v2420 = vpop.f32.mrb[0].mxu0
    %2421 = vdwg.mxu0
    %2424 = vrot.lane.b32.xlu0 %v2369, 64
    %v2425 = vpop.permute.xlu0 %2424
    %2426 = vrot.lane.b32.xlu0 %v2417, 64
    %v2427 = vpop.permute.xlu0 %2426
    %2430 = vst.msk [vmem:[#allocation2 + $0x8] sm:$0xff] %vm1508, %v2425
    %2431 = vst.msk [vmem:[#allocation2 + $0x18] sm:$0xff] %vm1508, %v2427
    %2432 = vrot.lane.b32.xlu0 %v1744, 32
    %v2433 = vpop.permute.xlu0 %2432
    %2434 = vrot.lane.b32.xlu0 %v1746, 32
    %v2435 = vpop.permute.xlu0 %2434
    %v2437 = vsel %vm822, %v2433, 0
    %v2440 = vsel %vm822, %v2435, 0
    %2442 = vmatprep.subr.bf16.mxu0 0
    %2443 = vmatpush1.bf16.xpose.msra.mxu0 %v2440
    %2444 = vmatprep.subr.bf16.mxu0 0
    %2445 = vmatpush1.bf16.xpose.msra.mxu0 0
    %2446 = vmatprep.subr.bf16.mxu0 0
    %2447 = vmatpush1.bf16.xpose.msra.mxu0 0
    %2448 = vmatprep.subr.bf16.mxu0 0
    %2449 = vmatpush1.bf16.xpose.msra.mxu0 0
    %2450 = vmatprep.subr.bf16.mxu0 0
    %2451 = vmatpush1.bf16.xpose.msra.mxu0 0
    %2452 = vmatprep.subr.bf16.mxu0 0
    %2453 = vmatpush1.bf16.xpose.msra.mxu0 0
    %2454 = vmatprep.subr.bf16.mxu0 0
    %2455 = vmatpush1.bf16.xpose.msra.mxu0 0
    %2456 = vmatprep.subr.bf16.mxu0 0
    %2457 = vmatpush1.bf16.xpose.msra.mxu0 0
    %2458 = vmatprep.subr.bf16.mxu0 0
    %2459 = vmatpush1.bf16.xpose.msra.mxu0 0
    %2460 = vmatprep.subr.bf16.mxu0 0
    %2461 = vmatpush1.bf16.xpose.msra.mxu0 0
    %2462 = vmatprep.subr.bf16.mxu0 0
    %2463 = vmatpush1.bf16.xpose.msra.mxu0 0
    %2464 = vmatprep.subr.bf16.mxu0 0
    %2465 = vmatpush1.bf16.xpose.msra.mxu0 0
    %2466 = vmatprep.subr.bf16.mxu0 0
    %2467 = vmatpush1.bf16.xpose.msra.mxu0 0
    %2468 = vmatprep.subr.bf16.mxu0 0
    %2469 = vmatpush1.bf16.xpose.msra.mxu0 0
    %2470 = vmatprep.subr.bf16.mxu0 0
    %2471 = vmatpush1.bf16.xpose.msra.mxu0 0
    %2472 = vmatprep.subr.bf16.mxu0 0
    %2473 = vmatpush1.bf16.xpose.msra.mxu0 0
    %2474 = vmatprep.mubr.bf16.mxu0 0
    %2475 = vmatmul.mubr.bf16.gmra.mrb[0].mxu0 %v2437
    %v2476 = vpop.f32.mrb[0].mxu0
    %v2477 = vadd.f32 0.0, %v2476
    %v2478 = vpop.f32.mrb[0].mxu0
    %v2479 = vpop.f32.mrb[0].mxu0
    %v2480 = vpop.f32.mrb[0].mxu0
    %2481 = vdwg.mxu0
    %2482 = vrot.lane.b32.xlu0 %v1745, 32
    %v2483 = vpop.permute.xlu0 %2482
    %2484 = vrot.lane.b32.xlu0 %v1747, 32
    %v2485 = vpop.permute.xlu0 %2484
    %v2487 = vsel %vm822, %v2483, 0
    %v2490 = vsel %vm822, %v2485, 0
    %2492 = vmatprep.subr.bf16.mxu0 0
    %2493 = vmatpush1.bf16.xpose.msra.mxu0 %v2490
    %2494 = vmatprep.subr.bf16.mxu0 0
    %2495 = vmatpush1.bf16.xpose.msra.mxu0 0
    %2496 = vmatprep.subr.bf16.mxu0 0
    %2497 = vmatpush1.bf16.xpose.msra.mxu0 0
    %2498 = vmatprep.subr.bf16.mxu0 0
    %2499 = vmatpush1.bf16.xpose.msra.mxu0 0
    %2500 = vmatprep.subr.bf16.mxu0 0
    %2501 = vmatpush1.bf16.xpose.msra.mxu0 0
    %2502 = vmatprep.subr.bf16.mxu0 0
    %2503 = vmatpush1.bf16.xpose.msra.mxu0 0
    %2504 = vmatprep.subr.bf16.mxu0 0
    %2505 = vmatpush1.bf16.xpose.msra.mxu0 0
    %2506 = vmatprep.subr.bf16.mxu0 0
    %2507 = vmatpush1.bf16.xpose.msra.mxu0 0
    %2508 = vmatprep.subr.bf16.mxu0 0
    %2509 = vmatpush1.bf16.xpose.msra.mxu0 0
    %2510 = vmatprep.subr.bf16.mxu0 0
    %2511 = vmatpush1.bf16.xpose.msra.mxu0 0
    %2512 = vmatprep.subr.bf16.mxu0 0
    %2513 = vmatpush1.bf16.xpose.msra.mxu0 0
    %2514 = vmatprep.subr.bf16.mxu0 0
    %2515 = vmatpush1.bf16.xpose.msra.mxu0 0
    %2516 = vmatprep.subr.bf16.mxu0 0
    %2517 = vmatpush1.bf16.xpose.msra.mxu0 0
    %2518 = vmatprep.subr.bf16.mxu0 0
    %2519 = vmatpush1.bf16.xpose.msra.mxu0 0
    %2520 = vmatprep.subr.bf16.mxu0 0
    %2521 = vmatpush1.bf16.xpose.msra.mxu0 0
    %2522 = vmatprep.subr.bf16.mxu0 0
    %2523 = vmatpush1.bf16.xpose.msra.mxu0 0
    %2524 = vmatprep.mubr.bf16.mxu0 0
    %2525 = vmatmul.mubr.bf16.gmra.mrb[0].mxu0 %v2487
    %v2526 = vpop.f32.mrb[0].mxu0
    %v2527 = vadd.f32 0.0, %v2526
    %v2528 = vpop.f32.mrb[0].mxu0
    %v2529 = vpop.f32.mrb[0].mxu0
    %v2530 = vpop.f32.mrb[0].mxu0
    %2531 = vdwg.mxu0
    %v2532 = vmul.f32 %v2477, 0.17677669
    %v2533 = vmul.f32 %v2527, 0.17677669
    %v2534 = vsel %vm917, %v2532, -inf
    %2535 = vmax.xlane.f32.xlu0 %v2534
    %v2536 = vpop.xlane.xlu0 %2535
    %v2537 = vsel %vm917, %v2533, -inf
    %2538 = vmax.xlane.f32.xlu0 %v2537
    %v2539 = vpop.xlane.xlu0 %2538
    %v2540 = vsub.f32 %v2532, %v2536
    %v2541 = vsub.f32 %v2533, %v2539
    %v2542 = vmul.f32 %v2540, 1.442695
    %v2543 = vpow.pop %v2542
    %v2544 = vmul.f32 %v2541, 1.442695
    %v2545 = vpow.pop %v2544
    %v2546 = vsel %vm917, %v2543, 0.0
    %2547 = vadd.xlane.f32.xlu0 %v2546
    %v2548 = vpop.xlane.xlu0 %2547
    %v2549 = vsel %vm917, %v2545, 0.0
    %2550 = vadd.xlane.f32.xlu0 %v2549
    %v2551 = vpop.xlane.xlu0 %2550
    %v2552 = vrcp.pop %v2548
    %v2553 = vrcp.pop %v2551
    %v2554 = vmul.f32 %v2543, %v2552
    %v2555 = vmul.f32 %v2545, %v2553
    %v2556 = vpack.c.bf16 %v2554, %v2554
    %v2557 = vpack.c.bf16 %v2555, %v2555
    %2558 = vrot.lane.b32.xlu0 %v1866, 32
    %v2559 = vpop.permute.xlu0 %2558
    %v2561 = vsel %vm917, %v2556, 0
    %v2564 = vsel %vm947, %v2559, 0
    %2566 = vmatprep.subr.bf16.mxu0 0
    %2567 = vmatpush1.bf16.msra.mxu0 %v2564
    %2568 = vmatprep.subr.bf16.mxu0 0
    %2569 = vmatpush1.bf16.msra.mxu0 0
    %2570 = vmatprep.subr.bf16.mxu0 0
    %2571 = vmatpush1.bf16.msra.mxu0 0
    %2572 = vmatprep.subr.bf16.mxu0 0
    %2573 = vmatpush1.bf16.msra.mxu0 0
    %2574 = vmatprep.subr.bf16.mxu0 0
    %2575 = vmatpush1.bf16.msra.mxu0 0
    %2576 = vmatprep.subr.bf16.mxu0 0
    %2577 = vmatpush1.bf16.msra.mxu0 0
    %2578 = vmatprep.subr.bf16.mxu0 0
    %2579 = vmatpush1.bf16.msra.mxu0 0
    %2580 = vmatprep.subr.bf16.mxu0 0
    %2581 = vmatpush1.bf16.msra.mxu0 0
    %2582 = vmatprep.subr.bf16.mxu0 0
    %2583 = vmatpush1.bf16.msra.mxu0 0
    %2584 = vmatprep.subr.bf16.mxu0 0
    %2585 = vmatpush1.bf16.msra.mxu0 0
    %2586 = vmatprep.subr.bf16.mxu0 0
    %2587 = vmatpush1.bf16.msra.mxu0 0
    %2588 = vmatprep.subr.bf16.mxu0 0
    %2589 = vmatpush1.bf16.msra.mxu0 0
    %2590 = vmatprep.subr.bf16.mxu0 0
    %2591 = vmatpush1.bf16.msra.mxu0 0
    %2592 = vmatprep.subr.bf16.mxu0 0
    %2593 = vmatpush1.bf16.msra.mxu0 0
    %2594 = vmatprep.subr.bf16.mxu0 0
    %2595 = vmatpush1.bf16.msra.mxu0 0
    %2596 = vmatprep.subr.bf16.mxu0 0
    %2597 = vmatpush1.bf16.msra.mxu0 0
    %2598 = vmatprep.mubr.bf16.mxu0 0
    %2599 = vmatmul.mubr.bf16.gmra.mrb[0].mxu0 %v2561
    %v2600 = vpop.f32.mrb[0].mxu0
    %v2601 = vadd.f32 0.0, %v2600
    %v2602 = vpop.f32.mrb[0].mxu0
    %v2603 = vpop.f32.mrb[0].mxu0
    %v2604 = vpop.f32.mrb[0].mxu0
    %2605 = vdwg.mxu0
    %2606 = vrot.lane.b32.xlu0 %v1867, 32
    %v2607 = vpop.permute.xlu0 %2606
    %v2609 = vsel %vm917, %v2557, 0
    %v2612 = vsel %vm947, %v2607, 0
    %2614 = vmatprep.subr.bf16.mxu0 0
    %2615 = vmatpush1.bf16.msra.mxu0 %v2612
    %2616 = vmatprep.subr.bf16.mxu0 0
    %2617 = vmatpush1.bf16.msra.mxu0 0
    %2618 = vmatprep.subr.bf16.mxu0 0
    %2619 = vmatpush1.bf16.msra.mxu0 0
    %2620 = vmatprep.subr.bf16.mxu0 0
    %2621 = vmatpush1.bf16.msra.mxu0 0
    %2622 = vmatprep.subr.bf16.mxu0 0
    %2623 = vmatpush1.bf16.msra.mxu0 0
    %2624 = vmatprep.subr.bf16.mxu0 0
    %2625 = vmatpush1.bf16.msra.mxu0 0
    %2626 = vmatprep.subr.bf16.mxu0 0
    %2627 = vmatpush1.bf16.msra.mxu0 0
    %2628 = vmatprep.subr.bf16.mxu0 0
    %2629 = vmatpush1.bf16.msra.mxu0 0
    %2630 = vmatprep.subr.bf16.mxu0 0
    %2631 = vmatpush1.bf16.msra.mxu0 0
    %2632 = vmatprep.subr.bf16.mxu0 0
    %2633 = vmatpush1.bf16.msra.mxu0 0
    %2634 = vmatprep.subr.bf16.mxu0 0
    %2635 = vmatpush1.bf16.msra.mxu0 0
    %2636 = vmatprep.subr.bf16.mxu0 0
    %2637 = vmatpush1.bf16.msra.mxu0 0
    %2638 = vmatprep.subr.bf16.mxu0 0
    %2639 = vmatpush1.bf16.msra.mxu0 0
    %2640 = vmatprep.subr.bf16.mxu0 0
    %2641 = vmatpush1.bf16.msra.mxu0 0
    %2642 = vmatprep.subr.bf16.mxu0 0
    %2643 = vmatpush1.bf16.msra.mxu0 0
    %2644 = vmatprep.subr.bf16.mxu0 0
    %2645 = vmatpush1.bf16.msra.mxu0 0
    %2646 = vmatprep.mubr.bf16.mxu0 0
    %2647 = vmatmul.mubr.bf16.gmra.mrb[0].mxu0 %v2609
    %v2648 = vpop.f32.mrb[0].mxu0
    %v2649 = vadd.f32 0.0, %v2648
    %v2650 = vpop.f32.mrb[0].mxu0
    %v2651 = vpop.f32.mrb[0].mxu0
    %v2652 = vpop.f32.mrb[0].mxu0
    %2653 = vdwg.mxu0
    %2656 = vrot.lane.b32.xlu0 %v2601, 96
    %v2657 = vpop.permute.xlu0 %2656
    %2658 = vrot.lane.b32.xlu0 %v2649, 96
    %v2659 = vpop.permute.xlu0 %2658
    %2662 = vst.msk [vmem:[#allocation2 + $0x8] sm:$0xff] %vm1741, %v2657
    %2663 = vst.msk [vmem:[#allocation2 + $0x18] sm:$0xff] %vm1741, %v2659
    %v2664 = vld [vmem:[#allocation2] sm:$0xff]
    %v2665 = vld [vmem:[#allocation2 + $0x8] sm:$0xff]
    %v2666 = vld [vmem:[#allocation2 + $0x10] sm:$0xff]
    %v2667 = vld [vmem:[#allocation2 + $0x18] sm:$0xff]
    %v2668 = vpack.c.bf16 %v2666, %v2664
    %v2669 = vpack.c.bf16 %v2667, %v2665
    %v2670 = vld [vmem:[%s4] sm:$0xff]
    %v2671 = vld [vmem:[%s4 + $0x8] sm:$0xff]
    %v2672 = vld [vmem:[%s4 + $0x10] sm:$0xff]
    %v2673 = vld [vmem:[%s4 + $0x18] sm:$0xff]
    %v2674 = vld [vmem:[%s4 + $0x20] sm:$0xff]
    %v2675 = vld [vmem:[%s4 + $0x28] sm:$0xff]
    %v2676 = vld [vmem:[%s4 + $0x30] sm:$0xff]
    %v2677 = vld [vmem:[%s4 + $0x38] sm:$0xff]
    %v2678 = vld [vmem:[%s4 + $0x40] sm:$0xff]
    %v2679 = vld [vmem:[%s4 + $0x48] sm:$0xff]
    %v2680 = vld [vmem:[%s4 + $0x50] sm:$0xff]
    %v2681 = vld [vmem:[%s4 + $0x58] sm:$0xff]
    %v2682 = vld [vmem:[%s4 + $0x60] sm:$0xff]
    %v2683 = vld [vmem:[%s4 + $0x68] sm:$0xff]
    %v2684 = vld [vmem:[%s4 + $0x70] sm:$0xff]
    %v2685 = vld [vmem:[%s4 + $0x78] sm:$0xff]
    %v2686 = vld [vmem:[%s4 + $0x80] sm:$0xff]
    %v2687 = vld [vmem:[%s4 + $0x88] sm:$0xff]
    %v2688 = vld [vmem:[%s4 + $0x90] sm:$0xff]
    %v2689 = vld [vmem:[%s4 + $0x98] sm:$0xff]
    %v2690 = vld [vmem:[%s4 + $0xa0] sm:$0xff]
    %v2691 = vld [vmem:[%s4 + $0xa8] sm:$0xff]
    %v2692 = vld [vmem:[%s4 + $0xb0] sm:$0xff]
    %v2693 = vld [vmem:[%s4 + $0xb8] sm:$0xff]
    %v2694 = vld [vmem:[%s4 + $0xc0] sm:$0xff]
    %v2695 = vld [vmem:[%s4 + $0xc8] sm:$0xff]
    %v2696 = vld [vmem:[%s4 + $0xd0] sm:$0xff]
    %v2697 = vld [vmem:[%s4 + $0xd8] sm:$0xff]
    %v2698 = vld [vmem:[%s4 + $0xe0] sm:$0xff]
    %v2699 = vld [vmem:[%s4 + $0xe8] sm:$0xff]
    %v2700 = vld [vmem:[%s4 + $0xf0] sm:$0xff]
    %v2701 = vld [vmem:[%s4 + $0xf8] sm:$0xff]
    %v2702 = vld [vmem:[%s5] sm:$0x3]
    %v2704 = vlaneseq
    %v2705 = vshrl.u32 %v2704, 7
    %v2706 = vsub.s32 0, %v2705
    %v2707 = vrot.slane %v2702, %v2706
    %v2708 = vlaneseq
    %v2709 = vshrl.u32 %v2708, 7
    %v2710 = vsub.s32 1, %v2709
    %v2711 = vrot.slane %v2702, %v2710
    %v2746 = vunpack.c.l.b16 %v2670
    %v2747 = vunpack.c.h.b16 %v2670
    %v2748 = vunpack.c.l.b16 %v2671
    %v2749 = vunpack.c.h.b16 %v2671
    %v2750 = vunpack.c.l.b16 %v2672
    %v2751 = vunpack.c.h.b16 %v2672
    %v2752 = vunpack.c.l.b16 %v2673
    %v2753 = vunpack.c.h.b16 %v2673
    %v2754 = vunpack.c.l.b16 %v2674
    %v2755 = vunpack.c.h.b16 %v2674
    %v2756 = vunpack.c.l.b16 %v2675
    %v2757 = vunpack.c.h.b16 %v2675
    %v2758 = vunpack.c.l.b16 %v2676
    %v2759 = vunpack.c.h.b16 %v2676
    %v2760 = vunpack.c.l.b16 %v2677
    %v2761 = vunpack.c.h.b16 %v2677
    %v2762 = vunpack.c.l.b16 %v2678
    %v2763 = vunpack.c.h.b16 %v2678
    %v2764 = vunpack.c.l.b16 %v2679
    %v2765 = vunpack.c.h.b16 %v2679
    %v2766 = vunpack.c.l.b16 %v2680
    %v2767 = vunpack.c.h.b16 %v2680
    %v2768 = vunpack.c.l.b16 %v2681
    %v2769 = vunpack.c.h.b16 %v2681
    %v2770 = vunpack.c.l.b16 %v2682
    %v2771 = vunpack.c.h.b16 %v2682
    %v2772 = vunpack.c.l.b16 %v2683
    %v2773 = vunpack.c.h.b16 %v2683
    %v2774 = vunpack.c.l.b16 %v2684
    %v2775 = vunpack.c.h.b16 %v2684
    %v2776 = vunpack.c.l.b16 %v2685
    %v2777 = vunpack.c.h.b16 %v2685
    %v2778 = vunpack.c.l.b16 %v2686
    %v2779 = vunpack.c.h.b16 %v2686
    %v2780 = vunpack.c.l.b16 %v2687
    %v2781 = vunpack.c.h.b16 %v2687
    %v2782 = vunpack.c.l.b16 %v2688
    %v2783 = vunpack.c.h.b16 %v2688
    %v2784 = vunpack.c.l.b16 %v2689
    %v2785 = vunpack.c.h.b16 %v2689
    %v2786 = vunpack.c.l.b16 %v2690
    %v2787 = vunpack.c.h.b16 %v2690
    %v2788 = vunpack.c.l.b16 %v2691
    %v2789 = vunpack.c.h.b16 %v2691
    %v2790 = vunpack.c.l.b16 %v2692
    %v2791 = vunpack.c.h.b16 %v2692
    %v2792 = vunpack.c.l.b16 %v2693
    %v2793 = vunpack.c.h.b16 %v2693
    %v2794 = vunpack.c.l.b16 %v2694
    %v2795 = vunpack.c.h.b16 %v2694
    %v2796 = vunpack.c.l.b16 %v2695
    %v2797 = vunpack.c.h.b16 %v2695
    %v2798 = vunpack.c.l.b16 %v2696
    %v2799 = vunpack.c.h.b16 %v2696
    %v2800 = vunpack.c.l.b16 %v2697
    %v2801 = vunpack.c.h.b16 %v2697
    %v2802 = vunpack.c.l.b16 %v2698
    %v2803 = vunpack.c.h.b16 %v2698
    %v2804 = vunpack.c.l.b16 %v2699
    %v2805 = vunpack.c.h.b16 %v2699
    %v2806 = vunpack.c.l.b16 %v2700
    %v2807 = vunpack.c.h.b16 %v2700
    %v2808 = vunpack.c.l.b16 %v2701
    %v2809 = vunpack.c.h.b16 %v2701
    %v2810 = vpack.c.b16 %v2748, %v2746
    %v2811 = vpack.c.b16 %v2749, %v2747
    %v2812 = vpack.c.b16 %v2752, %v2750
    %v2813 = vpack.c.b16 %v2753, %v2751
    %v2814 = vpack.c.b16 %v2756, %v2754
    %v2815 = vpack.c.b16 %v2757, %v2755
    %v2816 = vpack.c.b16 %v2760, %v2758
    %v2817 = vpack.c.b16 %v2761, %v2759
    %v2818 = vpack.c.b16 %v2764, %v2762
    %v2819 = vpack.c.b16 %v2765, %v2763
    %v2820 = vpack.c.b16 %v2768, %v2766
    %v2821 = vpack.c.b16 %v2769, %v2767
    %v2822 = vpack.c.b16 %v2772, %v2770
    %v2823 = vpack.c.b16 %v2773, %v2771
    %v2824 = vpack.c.b16 %v2776, %v2774
    %v2825 = vpack.c.b16 %v2777, %v2775
    %v2826 = vpack.c.b16 %v2780, %v2778
    %v2827 = vpack.c.b16 %v2781, %v2779
    %v2828 = vpack.c.b16 %v2784, %v2782
    %v2829 = vpack.c.b16 %v2785, %v2783
    %v2830 = vpack.c.b16 %v2788, %v2786
    %v2831 = vpack.c.b16 %v2789, %v2787
    %v2832 = vpack.c.b16 %v2792, %v2790
    %v2833 = vpack.c.b16 %v2793, %v2791
    %v2834 = vpack.c.b16 %v2796, %v2794
    %v2835 = vpack.c.b16 %v2797, %v2795
    %v2836 = vpack.c.b16 %v2800, %v2798
    %v2837 = vpack.c.b16 %v2801, %v2799
    %v2838 = vpack.c.b16 %v2804, %v2802
    %v2839 = vpack.c.b16 %v2805, %v2803
    %v2840 = vpack.c.b16 %v2808, %v2806
    %v2841 = vpack.c.b16 %v2809, %v2807
    %2874 = vmatprep.subr.bf16.mxu0 %v2811
    %2875 = vmatpush1.bf16.msra.mxu0 %v2810
    %2876 = vmatprep.subr.bf16.mxu0 %v2813
    %2877 = vmatpush1.bf16.msra.mxu0 %v2812
    %2878 = vmatprep.subr.bf16.mxu0 %v2815
    %2879 = vmatpush1.bf16.msra.mxu0 %v2814
    %2880 = vmatprep.subr.bf16.mxu0 %v2817
    %2881 = vmatpush1.bf16.msra.mxu0 %v2816
    %2882 = vmatprep.subr.bf16.mxu0 %v2819
    %2883 = vmatpush1.bf16.msra.mxu0 %v2818
    %2884 = vmatprep.subr.bf16.mxu0 %v2821
    %2885 = vmatpush1.bf16.msra.mxu0 %v2820
    %2886 = vmatprep.subr.bf16.mxu0 %v2823
    %2887 = vmatpush1.bf16.msra.mxu0 %v2822
    %2888 = vmatprep.subr.bf16.mxu0 %v2825
    %2889 = vmatpush1.bf16.msra.mxu0 %v2824
    %2890 = vmatprep.subr.bf16.mxu0 %v2827
    %2891 = vmatpush1.bf16.msra.mxu0 %v2826
    %2892 = vmatprep.subr.bf16.mxu0 %v2829
    %2893 = vmatpush1.bf16.msra.mxu0 %v2828
    %2894 = vmatprep.subr.bf16.mxu0 %v2831
    %2895 = vmatpush1.bf16.msra.mxu0 %v2830
    %2896 = vmatprep.subr.bf16.mxu0 %v2833
    %2897 = vmatpush1.bf16.msra.mxu0 %v2832
    %2898 = vmatprep.subr.bf16.mxu0 %v2835
    %2899 = vmatpush1.bf16.msra.mxu0 %v2834
    %2900 = vmatprep.subr.bf16.mxu0 %v2837
    %2901 = vmatpush1.bf16.msra.mxu0 %v2836
    %2902 = vmatprep.subr.bf16.mxu0 %v2839
    %2903 = vmatpush1.bf16.msra.mxu0 %v2838
    %2904 = vmatprep.subr.bf16.mxu0 %v2841
    %2905 = vmatpush1.bf16.msra.mxu0 %v2840
    %2906 = vmatprep.mubr.bf16.mxu0 %v2669
    %2907 = vmatmul.mubr.bf16.gmra.mrb[0].mxu0 %v2668
    %v2908 = vpop.f32.mrb[0].mxu0
    %v2909 = vadd.f32 %v2707, %v2908
    %v2910 = vpop.f32.mrb[0].mxu0
    %v2911 = vadd.f32 %v2711, %v2910
    %v2912 = vpop.f32.mrb[0].mxu0
    %v2913 = vadd.f32 %v2707, %v2912
    %v2914 = vpop.f32.mrb[0].mxu0
    %v2915 = vadd.f32 %v2711, %v2914
    %2916 = vdwg.mxu0
    %v2917 = vadd.f32 %v75, %v2909
    %v2918 = vadd.f32 %v76, %v2911
    %v2919 = vadd.f32 %v77, %v2913
    %v2920 = vadd.f32 %v78, %v2915
    %v2921 = vld [vmem:[%s6] sm:$0x3]
    %v2922 = vld [vmem:[%s7] sm:$0x3]
    %v2923 = vadd.f32 %v2917, %v2918
    %2924 = vadd.xlane.f32.xlu0 %v2923
    %v2925 = vpop.xlane.xlu0 %2924
    %v2926 = vadd.f32 %v2919, %v2920
    %2927 = vadd.xlane.f32.xlu0 %v2926
    %v2928 = vpop.xlane.xlu0 %2927
    %v2929 = vrcp.pop 256.0
    %v2930 = vmul.f32 %v2925, %v2929
    %v2931 = vmul.f32 %v2928, %v2929
    %v2932 = vsub.f32 %v2917, %v2930
    %v2933 = vsub.f32 %v2918, %v2930
    %v2934 = vsub.f32 %v2919, %v2931
    %v2935 = vsub.f32 %v2920, %v2931
    %v2936 = vmul.f32 %v2932, %v2932
    %v2937 = vmul.f32 %v2933, %v2933
    %v2938 = vmul.f32 %v2934, %v2934
    %v2939 = vmul.f32 %v2935, %v2935
    %v2940 = vadd.f32 %v2936, %v2937
    %2941 = vadd.xlane.f32.xlu0 %v2940
    %v2942 = vpop.xlane.xlu0 %2941
    %v2943 = vadd.f32 %v2938, %v2939
    %2944 = vadd.xlane.f32.xlu0 %v2943
    %v2945 = vpop.xlane.xlu0 %2944
    %v2946 = vmul.f32 %v2942, %v2929
    %v2947 = vmul.f32 %v2945, %v2929
    %v2948 = vadd.f32 %v2946, 1e-05
    %v2949 = vadd.f32 %v2947, 1e-05
    %v2950 = vrsqrt.pop %v2948
    %v2951 = vrsqrt.pop %v2949
    %v2952 = vmul.f32 %v2932, %v2950
    %v2953 = vmul.f32 %v2933, %v2950
    %v2954 = vmul.f32 %v2934, %v2951
    %v2955 = vmul.f32 %v2935, %v2951
    %v2957 = vlaneseq
    %v2958 = vshrl.u32 %v2957, 7
    %v2959 = vsub.s32 0, %v2958
    %v2960 = vrot.slane %v2921, %v2959
    %v2961 = vlaneseq
    %v2962 = vshrl.u32 %v2961, 7
    %v2963 = vsub.s32 1, %v2962
    %v2964 = vrot.slane %v2921, %v2963
    %v2967 = vmul.f32 %v2952, %v2960
    %v2968 = vmul.f32 %v2953, %v2964
    %v2969 = vmul.f32 %v2954, %v2960
    %v2970 = vmul.f32 %v2955, %v2964
    %v2972 = vlaneseq
    %v2973 = vshrl.u32 %v2972, 7
    %v2974 = vsub.s32 0, %v2973
    %v2975 = vrot.slane %v2922, %v2974
    %v2976 = vlaneseq
    %v2977 = vshrl.u32 %v2976, 7
    %v2978 = vsub.s32 1, %v2977
    %v2979 = vrot.slane %v2922, %v2978
    %v2982 = vadd.f32 %v2967, %v2975
    %v2983 = vadd.f32 %v2968, %v2979
    %v2984 = vadd.f32 %v2969, %v2975
    %v2985 = vadd.f32 %v2970, %v2979
    %v2986 = vpack.c.bf16 %v2984, %v2982
    %v2987 = vpack.c.bf16 %v2985, %v2983
    %v2988 = vld [vmem:[%s8] sm:$0xff]
    %v2989 = vld [vmem:[%s8 + $0x8] sm:$0xff]
    %v2990 = vld [vmem:[%s8 + $0x10] sm:$0xff]
    %v2991 = vld [vmem:[%s8 + $0x18] sm:$0xff]
    %v2992 = vld [vmem:[%s8 + $0x20] sm:$0xff]
    %v2993 = vld [vmem:[%s8 + $0x28] sm:$0xff]
    %v2994 = vld [vmem:[%s8 + $0x30] sm:$0xff]
    %v2995 = vld [vmem:[%s8 + $0x38] sm:$0xff]
    %v2996 = vld [vmem:[%s8 + $0x40] sm:$0xff]
    %v2997 = vld [vmem:[%s8 + $0x48] sm:$0xff]
    %v2998 = vld [vmem:[%s8 + $0x50] sm:$0xff]
    %v2999 = vld [vmem:[%s8 + $0x58] sm:$0xff]
    %v3000 = vld [vmem:[%s8 + $0x60] sm:$0xff]
    %v3001 = vld [vmem:[%s8 + $0x68] sm:$0xff]
    %v3002 = vld [vmem:[%s8 + $0x70] sm:$0xff]
    %v3003 = vld [vmem:[%s8 + $0x78] sm:$0xff]
    %v3004 = vld [vmem:[%s8 + $0x80] sm:$0xff]
    %v3005 = vld [vmem:[%s8 + $0x88] sm:$0xff]
    %v3006 = vld [vmem:[%s8 + $0x90] sm:$0xff]
    %v3007 = vld [vmem:[%s8 + $0x98] sm:$0xff]
    %v3008 = vld [vmem:[%s8 + $0xa0] sm:$0xff]
    %v3009 = vld [vmem:[%s8 + $0xa8] sm:$0xff]
    %v3010 = vld [vmem:[%s8 + $0xb0] sm:$0xff]
    %v3011 = vld [vmem:[%s8 + $0xb8] sm:$0xff]
    %v3012 = vld [vmem:[%s8 + $0xc0] sm:$0xff]
    %v3013 = vld [vmem:[%s8 + $0xc8] sm:$0xff]
    %v3014 = vld [vmem:[%s8 + $0xd0] sm:$0xff]
    %v3015 = vld [vmem:[%s8 + $0xd8] sm:$0xff]
    %v3016 = vld [vmem:[%s8 + $0xe0] sm:$0xff]
    %v3017 = vld [vmem:[%s8 + $0xe8] sm:$0xff]
    %v3018 = vld [vmem:[%s8 + $0xf0] sm:$0xff]
    %v3019 = vld [vmem:[%s8 + $0xf8] sm:$0xff]
    %v3020 = vld [vmem:[%s9] sm:$0x3]
    %v3022 = vlaneseq
    %v3023 = vshrl.u32 %v3022, 7
    %v3024 = vsub.s32 0, %v3023
    %v3025 = vrot.slane %v3020, %v3024
    %v3026 = vlaneseq
    %v3027 = vshrl.u32 %v3026, 7
    %v3028 = vsub.s32 1, %v3027
    %v3029 = vrot.slane %v3020, %v3028
    %v3064 = vunpack.c.l.b16 %v2988
    %v3065 = vunpack.c.h.b16 %v2988
    %v3066 = vunpack.c.l.b16 %v2989
    %v3067 = vunpack.c.h.b16 %v2989
    %v3068 = vunpack.c.l.b16 %v2990
    %v3069 = vunpack.c.h.b16 %v2990
    %v3070 = vunpack.c.l.b16 %v2991
    %v3071 = vunpack.c.h.b16 %v2991
    %v3072 = vunpack.c.l.b16 %v2992
    %v3073 = vunpack.c.h.b16 %v2992
    %v3074 = vunpack.c.l.b16 %v2993
    %v3075 = vunpack.c.h.b16 %v2993
    %v3076 = vunpack.c.l.b16 %v2994
    %v3077 = vunpack.c.h.b16 %v2994
    %v3078 = vunpack.c.l.b16 %v2995
    %v3079 = vunpack.c.h.b16 %v2995
    %v3080 = vunpack.c.l.b16 %v2996
    %v3081 = vunpack.c.h.b16 %v2996
    %v3082 = vunpack.c.l.b16 %v2997
    %v3083 = vunpack.c.h.b16 %v2997
    %v3084 = vunpack.c.l.b16 %v2998
    %v3085 = vunpack.c.h.b16 %v2998
    %v3086 = vunpack.c.l.b16 %v2999
    %v3087 = vunpack.c.h.b16 %v2999
    %v3088 = vunpack.c.l.b16 %v3000
    %v3089 = vunpack.c.h.b16 %v3000
    %v3090 = vunpack.c.l.b16 %v3001
    %v3091 = vunpack.c.h.b16 %v3001
    %v3092 = vunpack.c.l.b16 %v3002
    %v3093 = vunpack.c.h.b16 %v3002
    %v3094 = vunpack.c.l.b16 %v3003
    %v3095 = vunpack.c.h.b16 %v3003
    %v3096 = vunpack.c.l.b16 %v3004
    %v3097 = vunpack.c.h.b16 %v3004
    %v3098 = vunpack.c.l.b16 %v3005
    %v3099 = vunpack.c.h.b16 %v3005
    %v3100 = vunpack.c.l.b16 %v3006
    %v3101 = vunpack.c.h.b16 %v3006
    %v3102 = vunpack.c.l.b16 %v3007
    %v3103 = vunpack.c.h.b16 %v3007
    %v3104 = vunpack.c.l.b16 %v3008
    %v3105 = vunpack.c.h.b16 %v3008
    %v3106 = vunpack.c.l.b16 %v3009
    %v3107 = vunpack.c.h.b16 %v3009
    %v3108 = vunpack.c.l.b16 %v3010
    %v3109 = vunpack.c.h.b16 %v3010
    %v3110 = vunpack.c.l.b16 %v3011
    %v3111 = vunpack.c.h.b16 %v3011
    %v3112 = vunpack.c.l.b16 %v3012
    %v3113 = vunpack.c.h.b16 %v3012
    %v3114 = vunpack.c.l.b16 %v3013
    %v3115 = vunpack.c.h.b16 %v3013
    %v3116 = vunpack.c.l.b16 %v3014
    %v3117 = vunpack.c.h.b16 %v3014
    %v3118 = vunpack.c.l.b16 %v3015
    %v3119 = vunpack.c.h.b16 %v3015
    %v3120 = vunpack.c.l.b16 %v3016
    %v3121 = vunpack.c.h.b16 %v3016
    %v3122 = vunpack.c.l.b16 %v3017
    %v3123 = vunpack.c.h.b16 %v3017
    %v3124 = vunpack.c.l.b16 %v3018
    %v3125 = vunpack.c.h.b16 %v3018
    %v3126 = vunpack.c.l.b16 %v3019
    %v3127 = vunpack.c.h.b16 %v3019
    %v3128 = vpack.c.b16 %v3066, %v3064
    %v3129 = vpack.c.b16 %v3067, %v3065
    %v3130 = vpack.c.b16 %v3070, %v3068
    %v3131 = vpack.c.b16 %v3071, %v3069
    %v3132 = vpack.c.b16 %v3074, %v3072
    %v3133 = vpack.c.b16 %v3075, %v3073
    %v3134 = vpack.c.b16 %v3078, %v3076
    %v3135 = vpack.c.b16 %v3079, %v3077
    %v3136 = vpack.c.b16 %v3082, %v3080
    %v3137 = vpack.c.b16 %v3083, %v3081
    %v3138 = vpack.c.b16 %v3086, %v3084
    %v3139 = vpack.c.b16 %v3087, %v3085
    %v3140 = vpack.c.b16 %v3090, %v3088
    %v3141 = vpack.c.b16 %v3091, %v3089
    %v3142 = vpack.c.b16 %v3094, %v3092
    %v3143 = vpack.c.b16 %v3095, %v3093
    %v3144 = vpack.c.b16 %v3098, %v3096
    %v3145 = vpack.c.b16 %v3099, %v3097
    %v3146 = vpack.c.b16 %v3102, %v3100
    %v3147 = vpack.c.b16 %v3103, %v3101
    %v3148 = vpack.c.b16 %v3106, %v3104
    %v3149 = vpack.c.b16 %v3107, %v3105
    %v3150 = vpack.c.b16 %v3110, %v3108
    %v3151 = vpack.c.b16 %v3111, %v3109
    %v3152 = vpack.c.b16 %v3114, %v3112
    %v3153 = vpack.c.b16 %v3115, %v3113
    %v3154 = vpack.c.b16 %v3118, %v3116
    %v3155 = vpack.c.b16 %v3119, %v3117
    %v3156 = vpack.c.b16 %v3122, %v3120
    %v3157 = vpack.c.b16 %v3123, %v3121
    %v3158 = vpack.c.b16 %v3126, %v3124
    %v3159 = vpack.c.b16 %v3127, %v3125
    %3192 = vmatprep.subr.bf16.mxu0 %v3129
    %3193 = vmatpush1.bf16.msra.mxu0 %v3128
    %3194 = vmatprep.subr.bf16.mxu0 %v3131
    %3195 = vmatpush1.bf16.msra.mxu0 %v3130
    %3196 = vmatprep.subr.bf16.mxu0 %v3133
    %3197 = vmatpush1.bf16.msra.mxu0 %v3132
    %3198 = vmatprep.subr.bf16.mxu0 %v3135
    %3199 = vmatpush1.bf16.msra.mxu0 %v3134
    %3200 = vmatprep.subr.bf16.mxu0 %v3137
    %3201 = vmatpush1.bf16.msra.mxu0 %v3136
    %3202 = vmatprep.subr.bf16.mxu0 %v3139
    %3203 = vmatpush1.bf16.msra.mxu0 %v3138
    %3204 = vmatprep.subr.bf16.mxu0 %v3141
    %3205 = vmatpush1.bf16.msra.mxu0 %v3140
    %3206 = vmatprep.subr.bf16.mxu0 %v3143
    %3207 = vmatpush1.bf16.msra.mxu0 %v3142
    %3208 = vmatprep.subr.bf16.mxu0 %v3145
    %3209 = vmatpush1.bf16.msra.mxu0 %v3144
    %3210 = vmatprep.subr.bf16.mxu0 %v3147
    %3211 = vmatpush1.bf16.msra.mxu0 %v3146
    %3212 = vmatprep.subr.bf16.mxu0 %v3149
    %3213 = vmatpush1.bf16.msra.mxu0 %v3148
    %3214 = vmatprep.subr.bf16.mxu0 %v3151
    %3215 = vmatpush1.bf16.msra.mxu0 %v3150
    %3216 = vmatprep.subr.bf16.mxu0 %v3153
    %3217 = vmatpush1.bf16.msra.mxu0 %v3152
    %3218 = vmatprep.subr.bf16.mxu0 %v3155
    %3219 = vmatpush1.bf16.msra.mxu0 %v3154
    %3220 = vmatprep.subr.bf16.mxu0 %v3157
    %3221 = vmatpush1.bf16.msra.mxu0 %v3156
    %3222 = vmatprep.subr.bf16.mxu0 %v3159
    %3223 = vmatpush1.bf16.msra.mxu0 %v3158
    %3224 = vmatprep.mubr.bf16.mxu0 %v2987
    %3225 = vmatmul.mubr.bf16.gmra.mrb[0].mxu0 %v2986
    %v3226 = vpop.f32.mrb[0].mxu0
    %v3227 = vadd.f32 %v3025, %v3226
    %v3228 = vpop.f32.mrb[0].mxu0
    %v3229 = vadd.f32 %v3029, %v3228
    %v3230 = vpop.f32.mrb[0].mxu0
    %v3231 = vadd.f32 %v3025, %v3230
    %v3232 = vpop.f32.mrb[0].mxu0
    %v3233 = vadd.f32 %v3029, %v3232
    %3234 = vdwg.mxu0
    %v3235 = vmax.f32 %v3227, 0.0
    %v3236 = vmax.f32 %v3229, 0.0
    %v3237 = vmax.f32 %v3231, 0.0
    %v3238 = vmax.f32 %v3233, 0.0
    %v3239 = vpack.c.bf16 %v3237, %v3235
    %v3240 = vpack.c.bf16 %v3238, %v3236
    %v3241 = vld [vmem:[%s10] sm:$0xff]
    %v3242 = vld [vmem:[%s10 + $0x8] sm:$0xff]
    %v3243 = vld [vmem:[%s10 + $0x10] sm:$0xff]
    %v3244 = vld [vmem:[%s10 + $0x18] sm:$0xff]
    %v3245 = vld [vmem:[%s10 + $0x20] sm:$0xff]
    %v3246 = vld [vmem:[%s10 + $0x28] sm:$0xff]
    %v3247 = vld [vmem:[%s10 + $0x30] sm:$0xff]
    %v3248 = vld [vmem:[%s10 + $0x38] sm:$0xff]
    %v3249 = vld [vmem:[%s10 + $0x40] sm:$0xff]
    %v3250 = vld [vmem:[%s10 + $0x48] sm:$0xff]
    %v3251 = vld [vmem:[%s10 + $0x50] sm:$0xff]
    %v3252 = vld [vmem:[%s10 + $0x58] sm:$0xff]
    %v3253 = vld [vmem:[%s10 + $0x60] sm:$0xff]
    %v3254 = vld [vmem:[%s10 + $0x68] sm:$0xff]
    %v3255 = vld [vmem:[%s10 + $0x70] sm:$0xff]
    %v3256 = vld [vmem:[%s10 + $0x78] sm:$0xff]
    %v3257 = vld [vmem:[%s10 + $0x80] sm:$0xff]
    %v3258 = vld [vmem:[%s10 + $0x88] sm:$0xff]
    %v3259 = vld [vmem:[%s10 + $0x90] sm:$0xff]
    %v3260 = vld [vmem:[%s10 + $0x98] sm:$0xff]
    %v3261 = vld [vmem:[%s10 + $0xa0] sm:$0xff]
    %v3262 = vld [vmem:[%s10 + $0xa8] sm:$0xff]
    %v3263 = vld [vmem:[%s10 + $0xb0] sm:$0xff]
    %v3264 = vld [vmem:[%s10 + $0xb8] sm:$0xff]
    %v3265 = vld [vmem:[%s10 + $0xc0] sm:$0xff]
    %v3266 = vld [vmem:[%s10 + $0xc8] sm:$0xff]
    %v3267 = vld [vmem:[%s10 + $0xd0] sm:$0xff]
    %v3268 = vld [vmem:[%s10 + $0xd8] sm:$0xff]
    %v3269 = vld [vmem:[%s10 + $0xe0] sm:$0xff]
    %v3270 = vld [vmem:[%s10 + $0xe8] sm:$0xff]
    %v3271 = vld [vmem:[%s10 + $0xf0] sm:$0xff]
    %v3272 = vld [vmem:[%s10 + $0xf8] sm:$0xff]
    %v3273 = vld [vmem:[%s11] sm:$0x3]
    %v3275 = vlaneseq
    %v3276 = vshrl.u32 %v3275, 7
    %v3277 = vsub.s32 0, %v3276
    %v3278 = vrot.slane %v3273, %v3277
    %v3279 = vlaneseq
    %v3280 = vshrl.u32 %v3279, 7
    %v3281 = vsub.s32 1, %v3280
    %v3282 = vrot.slane %v3273, %v3281
    %v3317 = vunpack.c.l.b16 %v3241
    %v3318 = vunpack.c.h.b16 %v3241
    %v3319 = vunpack.c.l.b16 %v3242
    %v3320 = vunpack.c.h.b16 %v3242
    %v3321 = vunpack.c.l.b16 %v3243
    %v3322 = vunpack.c.h.b16 %v3243
    %v3323 = vunpack.c.l.b16 %v3244
    %v3324 = vunpack.c.h.b16 %v3244
    %v3325 = vunpack.c.l.b16 %v3245
    %v3326 = vunpack.c.h.b16 %v3245
    %v3327 = vunpack.c.l.b16 %v3246
    %v3328 = vunpack.c.h.b16 %v3246
    %v3329 = vunpack.c.l.b16 %v3247
    %v3330 = vunpack.c.h.b16 %v3247
    %v3331 = vunpack.c.l.b16 %v3248
    %v3332 = vunpack.c.h.b16 %v3248
    %v3333 = vunpack.c.l.b16 %v3249
    %v3334 = vunpack.c.h.b16 %v3249
    %v3335 = vunpack.c.l.b16 %v3250
    %v3336 = vunpack.c.h.b16 %v3250
    %v3337 = vunpack.c.l.b16 %v3251
    %v3338 = vunpack.c.h.b16 %v3251
    %v3339 = vunpack.c.l.b16 %v3252
    %v3340 = vunpack.c.h.b16 %v3252
    %v3341 = vunpack.c.l.b16 %v3253
    %v3342 = vunpack.c.h.b16 %v3253
    %v3343 = vunpack.c.l.b16 %v3254
    %v3344 = vunpack.c.h.b16 %v3254
    %v3345 = vunpack.c.l.b16 %v3255
    %v3346 = vunpack.c.h.b16 %v3255
    %v3347 = vunpack.c.l.b16 %v3256
    %v3348 = vunpack.c.h.b16 %v3256
    %v3349 = vunpack.c.l.b16 %v3257
    %v3350 = vunpack.c.h.b16 %v3257
    %v3351 = vunpack.c.l.b16 %v3258
    %v3352 = vunpack.c.h.b16 %v3258
    %v3353 = vunpack.c.l.b16 %v3259
    %v3354 = vunpack.c.h.b16 %v3259
    %v3355 = vunpack.c.l.b16 %v3260
    %v3356 = vunpack.c.h.b16 %v3260
    %v3357 = vunpack.c.l.b16 %v3261
    %v3358 = vunpack.c.h.b16 %v3261
    %v3359 = vunpack.c.l.b16 %v3262
    %v3360 = vunpack.c.h.b16 %v3262
    %v3361 = vunpack.c.l.b16 %v3263
    %v3362 = vunpack.c.h.b16 %v3263
    %v3363 = vunpack.c.l.b16 %v3264
    %v3364 = vunpack.c.h.b16 %v3264
    %v3365 = vunpack.c.l.b16 %v3265
    %v3366 = vunpack.c.h.b16 %v3265
    %v3367 = vunpack.c.l.b16 %v3266
    %v3368 = vunpack.c.h.b16 %v3266
    %v3369 = vunpack.c.l.b16 %v3267
    %v3370 = vunpack.c.h.b16 %v3267
    %v3371 = vunpack.c.l.b16 %v3268
    %v3372 = vunpack.c.h.b16 %v3268
    %v3373 = vunpack.c.l.b16 %v3269
    %v3374 = vunpack.c.h.b16 %v3269
    %v3375 = vunpack.c.l.b16 %v3270
    %v3376 = vunpack.c.h.b16 %v3270
    %v3377 = vunpack.c.l.b16 %v3271
    %v3378 = vunpack.c.h.b16 %v3271
    %v3379 = vunpack.c.l.b16 %v3272
    %v3380 = vunpack.c.h.b16 %v3272
    %v3381 = vpack.c.b16 %v3319, %v3317
    %v3382 = vpack.c.b16 %v3320, %v3318
    %v3383 = vpack.c.b16 %v3323, %v3321
    %v3384 = vpack.c.b16 %v3324, %v3322
    %v3385 = vpack.c.b16 %v3327, %v3325
    %v3386 = vpack.c.b16 %v3328, %v3326
    %v3387 = vpack.c.b16 %v3331, %v3329
    %v3388 = vpack.c.b16 %v3332, %v3330
    %v3389 = vpack.c.b16 %v3335, %v3333
    %v3390 = vpack.c.b16 %v3336, %v3334
    %v3391 = vpack.c.b16 %v3339, %v3337
    %v3392 = vpack.c.b16 %v3340, %v3338
    %v3393 = vpack.c.b16 %v3343, %v3341
    %v3394 = vpack.c.b16 %v3344, %v3342
    %v3395 = vpack.c.b16 %v3347, %v3345
    %v3396 = vpack.c.b16 %v3348, %v3346
    %v3397 = vpack.c.b16 %v3351, %v3349
    %v3398 = vpack.c.b16 %v3352, %v3350
    %v3399 = vpack.c.b16 %v3355, %v3353
    %v3400 = vpack.c.b16 %v3356, %v3354
    %v3401 = vpack.c.b16 %v3359, %v3357
    %v3402 = vpack.c.b16 %v3360, %v3358
    %v3403 = vpack.c.b16 %v3363, %v3361
    %v3404 = vpack.c.b16 %v3364, %v3362
    %v3405 = vpack.c.b16 %v3367, %v3365
    %v3406 = vpack.c.b16 %v3368, %v3366
    %v3407 = vpack.c.b16 %v3371, %v3369
    %v3408 = vpack.c.b16 %v3372, %v3370
    %v3409 = vpack.c.b16 %v3375, %v3373
    %v3410 = vpack.c.b16 %v3376, %v3374
    %v3411 = vpack.c.b16 %v3379, %v3377
    %v3412 = vpack.c.b16 %v3380, %v3378
    %3445 = vmatprep.subr.bf16.mxu0 %v3382
    %3446 = vmatpush1.bf16.msra.mxu0 %v3381
    %3447 = vmatprep.subr.bf16.mxu0 %v3384
    %3448 = vmatpush1.bf16.msra.mxu0 %v3383
    %3449 = vmatprep.subr.bf16.mxu0 %v3386
    %3450 = vmatpush1.bf16.msra.mxu0 %v3385
    %3451 = vmatprep.subr.bf16.mxu0 %v3388
    %3452 = vmatpush1.bf16.msra.mxu0 %v3387
    %3453 = vmatprep.subr.bf16.mxu0 %v3390
    %3454 = vmatpush1.bf16.msra.mxu0 %v3389
    %3455 = vmatprep.subr.bf16.mxu0 %v3392
    %3456 = vmatpush1.bf16.msra.mxu0 %v3391
    %3457 = vmatprep.subr.bf16.mxu0 %v3394
    %3458 = vmatpush1.bf16.msra.mxu0 %v3393
    %3459 = vmatprep.subr.bf16.mxu0 %v3396
    %3460 = vmatpush1.bf16.msra.mxu0 %v3395
    %3461 = vmatprep.subr.bf16.mxu0 %v3398
    %3462 = vmatpush1.bf16.msra.mxu0 %v3397
    %3463 = vmatprep.subr.bf16.mxu0 %v3400
    %3464 = vmatpush1.bf16.msra.mxu0 %v3399
    %3465 = vmatprep.subr.bf16.mxu0 %v3402
    %3466 = vmatpush1.bf16.msra.mxu0 %v3401
    %3467 = vmatprep.subr.bf16.mxu0 %v3404
    %3468 = vmatpush1.bf16.msra.mxu0 %v3403
    %3469 = vmatprep.subr.bf16.mxu0 %v3406
    %3470 = vmatpush1.bf16.msra.mxu0 %v3405
    %3471 = vmatprep.subr.bf16.mxu0 %v3408
    %3472 = vmatpush1.bf16.msra.mxu0 %v3407
    %3473 = vmatprep.subr.bf16.mxu0 %v3410
    %3474 = vmatpush1.bf16.msra.mxu0 %v3409
    %3475 = vmatprep.subr.bf16.mxu0 %v3412
    %3476 = vmatpush1.bf16.msra.mxu0 %v3411
    %3477 = vmatprep.mubr.bf16.mxu0 %v3240
    %3478 = vmatmul.mubr.bf16.gmra.mrb[0].mxu0 %v3239
    %v3479 = vpop.f32.mrb[0].mxu0
    %v3480 = vadd.f32 %v3278, %v3479
    %v3481 = vpop.f32.mrb[0].mxu0
    %v3482 = vadd.f32 %v3282, %v3481
    %v3483 = vpop.f32.mrb[0].mxu0
    %v3484 = vadd.f32 %v3278, %v3483
    %v3485 = vpop.f32.mrb[0].mxu0
    %v3486 = vadd.f32 %v3282, %v3485
    %3487 = vdwg.mxu0
    %v3488 = vadd.f32 %v2982, %v3480
    %v3489 = vadd.f32 %v2983, %v3482
    %v3490 = vadd.f32 %v2984, %v3484
    %v3491 = vadd.f32 %v2985, %v3486
    %v3492 = vld [vmem:[%s12] sm:$0x3]
    %v3493 = vld [vmem:[%s13] sm:$0x3]
    %v3494 = vadd.f32 %v3488, %v3489
    %3495 = vadd.xlane.f32.xlu0 %v3494
    %v3496 = vpop.xlane.xlu0 %3495
    %v3497 = vadd.f32 %v3490, %v3491
    %3498 = vadd.xlane.f32.xlu0 %v3497
    %v3499 = vpop.xlane.xlu0 %3498
    %v3500 = vmul.f32 %v3496, %v2929
    %v3501 = vmul.f32 %v3499, %v2929
    %v3502 = vsub.f32 %v3488, %v3500
    %v3503 = vsub.f32 %v3489, %v3500
    %v3504 = vsub.f32 %v3490, %v3501
    %v3505 = vsub.f32 %v3491, %v3501
    %v3506 = vmul.f32 %v3502, %v3502
    %v3507 = vmul.f32 %v3503, %v3503
    %v3508 = vmul.f32 %v3504, %v3504
    %v3509 = vmul.f32 %v3505, %v3505
    %v3510 = vadd.f32 %v3506, %v3507
    %3511 = vadd.xlane.f32.xlu0 %v3510
    %v3512 = vpop.xlane.xlu0 %3511
    %v3513 = vadd.f32 %v3508, %v3509
    %3514 = vadd.xlane.f32.xlu0 %v3513
    %v3515 = vpop.xlane.xlu0 %3514
    %v3516 = vmul.f32 %v3512, %v2929
    %v3517 = vmul.f32 %v3515, %v2929
    %v3518 = vadd.f32 %v3516, 1e-05
    %v3519 = vadd.f32 %v3517, 1e-05
    %v3520 = vrsqrt.pop %v3518
    %v3521 = vrsqrt.pop %v3519
    %v3522 = vmul.f32 %v3502, %v3520
    %v3523 = vmul.f32 %v3503, %v3520
    %v3524 = vmul.f32 %v3504, %v3521
    %v3525 = vmul.f32 %v3505, %v3521
    %v3527 = vlaneseq
    %v3528 = vshrl.u32 %v3527, 7
    %v3529 = vsub.s32 0, %v3528
    %v3530 = vrot.slane %v3492, %v3529
    %v3531 = vlaneseq
    %v3532 = vshrl.u32 %v3531, 7
    %v3533 = vsub.s32 1, %v3532
    %v3534 = vrot.slane %v3492, %v3533
    %v3537 = vmul.f32 %v3522, %v3530
    %v3538 = vmul.f32 %v3523, %v3534
    %v3539 = vmul.f32 %v3524, %v3530
    %v3540 = vmul.f32 %v3525, %v3534
    %v3542 = vlaneseq
    %v3543 = vshrl.u32 %v3542, 7
    %v3544 = vsub.s32 0, %v3543
    %v3545 = vrot.slane %v3493, %v3544
    %v3546 = vlaneseq
    %v3547 = vshrl.u32 %v3546, 7
    %v3548 = vsub.s32 1, %v3547
    %v3549 = vrot.slane %v3493, %v3548
    %v3552 = vadd.f32 %v3537, %v3545
    %v3553 = vadd.f32 %v3538, %v3549
    %v3554 = vadd.f32 %v3539, %v3545
    %v3555 = vadd.f32 %v3540, %v3549
    %v3556 = vadd.f32 %v3552, %v67
    %v3557 = vadd.f32 %v3553, %v68
    %v3558 = vadd.f32 %v3554, %v69
    %v3559 = vadd.f32 %v3555, %v70
    %v3560 = vpack.c.bf16 %v3558, %v3556
    %v3561 = vpack.c.bf16 %v3559, %v3557
    %s3562 = scalar_lea.vmem %s2, 768
    %v3563 = vld [vmem:[%s3562] sm:$0xff]
    %v3564 = vld [vmem:[%s3562 + $0x8] sm:$0xff]
    %v3565 = vld [vmem:[%s3562 + $0x10] sm:$0xff]
    %v3566 = vld [vmem:[%s3562 + $0x18] sm:$0xff]
    %v3567 = vld [vmem:[%s3562 + $0x20] sm:$0xff]
    %v3568 = vld [vmem:[%s3562 + $0x28] sm:$0xff]
    %v3569 = vld [vmem:[%s3562 + $0x30] sm:$0xff]
    %v3570 = vld [vmem:[%s3562 + $0x38] sm:$0xff]
    %v3571 = vld [vmem:[%s3562 + $0x40] sm:$0xff]
    %v3572 = vld [vmem:[%s3562 + $0x48] sm:$0xff]
    %v3573 = vld [vmem:[%s3562 + $0x50] sm:$0xff]
    %v3574 = vld [vmem:[%s3562 + $0x58] sm:$0xff]
    %v3575 = vld [vmem:[%s3562 + $0x60] sm:$0xff]
    %v3576 = vld [vmem:[%s3562 + $0x68] sm:$0xff]
    %v3577 = vld [vmem:[%s3562 + $0x70] sm:$0xff]
    %v3578 = vld [vmem:[%s3562 + $0x78] sm:$0xff]
    %v3579 = vld [vmem:[%s3562 + $0x80] sm:$0xff]
    %v3580 = vld [vmem:[%s3562 + $0x88] sm:$0xff]
    %v3581 = vld [vmem:[%s3562 + $0x90] sm:$0xff]
    %v3582 = vld [vmem:[%s3562 + $0x98] sm:$0xff]
    %v3583 = vld [vmem:[%s3562 + $0xa0] sm:$0xff]
    %v3584 = vld [vmem:[%s3562 + $0xa8] sm:$0xff]
    %v3585 = vld [vmem:[%s3562 + $0xb0] sm:$0xff]
    %v3586 = vld [vmem:[%s3562 + $0xb8] sm:$0xff]
    %v3587 = vld [vmem:[%s3562 + $0xc0] sm:$0xff]
    %v3588 = vld [vmem:[%s3562 + $0xc8] sm:$0xff]
    %v3589 = vld [vmem:[%s3562 + $0xd0] sm:$0xff]
    %v3590 = vld [vmem:[%s3562 + $0xd8] sm:$0xff]
    %v3591 = vld [vmem:[%s3562 + $0xe0] sm:$0xff]
    %v3592 = vld [vmem:[%s3562 + $0xe8] sm:$0xff]
    %v3593 = vld [vmem:[%s3562 + $0xf0] sm:$0xff]
    %v3594 = vld [vmem:[%s3562 + $0xf8] sm:$0xff]
    %v3595 = vld [vmem:[%s3562 + $0x100] sm:$0xff]
    %v3596 = vld [vmem:[%s3562 + $0x108] sm:$0xff]
    %v3597 = vld [vmem:[%s3562 + $0x110] sm:$0xff]
    %v3598 = vld [vmem:[%s3562 + $0x118] sm:$0xff]
    %v3599 = vld [vmem:[%s3562 + $0x120] sm:$0xff]
    %v3600 = vld [vmem:[%s3562 + $0x128] sm:$0xff]
    %v3601 = vld [vmem:[%s3562 + $0x130] sm:$0xff]
    %v3602 = vld [vmem:[%s3562 + $0x138] sm:$0xff]
    %v3603 = vld [vmem:[%s3562 + $0x140] sm:$0xff]
    %v3604 = vld [vmem:[%s3562 + $0x148] sm:$0xff]
    %v3605 = vld [vmem:[%s3562 + $0x150] sm:$0xff]
    %v3606 = vld [vmem:[%s3562 + $0x158] sm:$0xff]
    %v3607 = vld [vmem:[%s3562 + $0x160] sm:$0xff]
    %v3608 = vld [vmem:[%s3562 + $0x168] sm:$0xff]
    %v3609 = vld [vmem:[%s3562 + $0x170] sm:$0xff]
    %v3610 = vld [vmem:[%s3562 + $0x178] sm:$0xff]
    %v3611 = vld [vmem:[%s3562 + $0x180] sm:$0xff]
    %v3612 = vld [vmem:[%s3562 + $0x188] sm:$0xff]
    %v3613 = vld [vmem:[%s3562 + $0x190] sm:$0xff]
    %v3614 = vld [vmem:[%s3562 + $0x198] sm:$0xff]
    %v3615 = vld [vmem:[%s3562 + $0x1a0] sm:$0xff]
    %v3616 = vld [vmem:[%s3562 + $0x1a8] sm:$0xff]
    %v3617 = vld [vmem:[%s3562 + $0x1b0] sm:$0xff]
    %v3618 = vld [vmem:[%s3562 + $0x1b8] sm:$0xff]
    %v3619 = vld [vmem:[%s3562 + $0x1c0] sm:$0xff]
    %v3620 = vld [vmem:[%s3562 + $0x1c8] sm:$0xff]
    %v3621 = vld [vmem:[%s3562 + $0x1d0] sm:$0xff]
    %v3622 = vld [vmem:[%s3562 + $0x1d8] sm:$0xff]
    %v3623 = vld [vmem:[%s3562 + $0x1e0] sm:$0xff]
    %v3624 = vld [vmem:[%s3562 + $0x1e8] sm:$0xff]
    %v3625 = vld [vmem:[%s3562 + $0x1f0] sm:$0xff]
    %v3626 = vld [vmem:[%s3562 + $0x1f8] sm:$0xff]
    %v3627 = vld [vmem:[%s3562 + $0x200] sm:$0xff]
    %v3628 = vld [vmem:[%s3562 + $0x208] sm:$0xff]
    %v3629 = vld [vmem:[%s3562 + $0x210] sm:$0xff]
    %v3630 = vld [vmem:[%s3562 + $0x218] sm:$0xff]
    %v3631 = vld [vmem:[%s3562 + $0x220] sm:$0xff]
    %v3632 = vld [vmem:[%s3562 + $0x228] sm:$0xff]
    %v3633 = vld [vmem:[%s3562 + $0x230] sm:$0xff]
    %v3634 = vld [vmem:[%s3562 + $0x238] sm:$0xff]
    %v3635 = vld [vmem:[%s3562 + $0x240] sm:$0xff]
    %v3636 = vld [vmem:[%s3562 + $0x248] sm:$0xff]
    %v3637 = vld [vmem:[%s3562 + $0x250] sm:$0xff]
    %v3638 = vld [vmem:[%s3562 + $0x258] sm:$0xff]
    %v3639 = vld [vmem:[%s3562 + $0x260] sm:$0xff]
    %v3640 = vld [vmem:[%s3562 + $0x268] sm:$0xff]
    %v3641 = vld [vmem:[%s3562 + $0x270] sm:$0xff]
    %v3642 = vld [vmem:[%s3562 + $0x278] sm:$0xff]
    %v3643 = vld [vmem:[%s3562 + $0x280] sm:$0xff]
    %v3644 = vld [vmem:[%s3562 + $0x288] sm:$0xff]
    %v3645 = vld [vmem:[%s3562 + $0x290] sm:$0xff]
    %v3646 = vld [vmem:[%s3562 + $0x298] sm:$0xff]
    %v3647 = vld [vmem:[%s3562 + $0x2a0] sm:$0xff]
    %v3648 = vld [vmem:[%s3562 + $0x2a8] sm:$0xff]
    %v3649 = vld [vmem:[%s3562 + $0x2b0] sm:$0xff]
    %v3650 = vld [vmem:[%s3562 + $0x2b8] sm:$0xff]
    %v3651 = vld [vmem:[%s3562 + $0x2c0] sm:$0xff]
    %v3652 = vld [vmem:[%s3562 + $0x2c8] sm:$0xff]
    %v3653 = vld [vmem:[%s3562 + $0x2d0] sm:$0xff]
    %v3654 = vld [vmem:[%s3562 + $0x2d8] sm:$0xff]
    %v3655 = vld [vmem:[%s3562 + $0x2e0] sm:$0xff]
    %v3656 = vld [vmem:[%s3562 + $0x2e8] sm:$0xff]
    %v3657 = vld [vmem:[%s3562 + $0x2f0] sm:$0xff]
    %v3658 = vld [vmem:[%s3562 + $0x2f8] sm:$0xff]
    %s3659 = scalar_lea.vmem %s3, 6
    %v3660 = vld [vmem:[%s3659] sm:$0x3f]
    %v3662 = vlaneseq
    %v3663 = vshrl.u32 %v3662, 7
    %v3664 = vsub.s32 0, %v3663
    %v3665 = vrot.slane %v3660, %v3664
    %v3666 = vlaneseq
    %v3667 = vshrl.u32 %v3666, 7
    %v3668 = vsub.s32 1, %v3667
    %v3669 = vrot.slane %v3660, %v3668
    %v3670 = vlaneseq
    %v3671 = vshrl.u32 %v3670, 7
    %v3672 = vsub.s32 2, %v3671
    %v3673 = vrot.slane %v3660, %v3672
    %v3674 = vlaneseq
    %v3675 = vshrl.u32 %v3674, 7
    %v3676 = vsub.s32 3, %v3675
    %v3677 = vrot.slane %v3660, %v3676
    %v3678 = vlaneseq
    %v3679 = vshrl.u32 %v3678, 7
    %v3680 = vsub.s32 4, %v3679
    %v3681 = vrot.slane %v3660, %v3680
    %v3682 = vlaneseq
    %v3683 = vshrl.u32 %v3682, 7
    %v3684 = vsub.s32 5, %v3683
    %v3685 = vrot.slane %v3660, %v3684
    %v3788 = vunpack.c.l.b16 %v3563
    %v3789 = vunpack.c.h.b16 %v3563
    %v3790 = vunpack.c.l.b16 %v3564
    %v3791 = vunpack.c.h.b16 %v3564
    %v3792 = vunpack.c.l.b16 %v3565
    %v3793 = vunpack.c.h.b16 %v3565
    %v3794 = vunpack.c.l.b16 %v3566
    %v3795 = vunpack.c.h.b16 %v3566
    %v3796 = vunpack.c.l.b16 %v3567
    %v3797 = vunpack.c.h.b16 %v3567
    %v3798 = vunpack.c.l.b16 %v3568
    %v3799 = vunpack.c.h.b16 %v3568
    %v3800 = vunpack.c.l.b16 %v3569
    %v3801 = vunpack.c.h.b16 %v3569
    %v3802 = vunpack.c.l.b16 %v3570
    %v3803 = vunpack.c.h.b16 %v3570
    %v3804 = vunpack.c.l.b16 %v3571
    %v3805 = vunpack.c.h.b16 %v3571
    %v3806 = vunpack.c.l.b16 %v3572
    %v3807 = vunpack.c.h.b16 %v3572
    %v3808 = vunpack.c.l.b16 %v3573
    %v3809 = vunpack.c.h.b16 %v3573
    %v3810 = vunpack.c.l.b16 %v3574
    %v3811 = vunpack.c.h.b16 %v3574
    %v3812 = vunpack.c.l.b16 %v3575
    %v3813 = vunpack.c.h.b16 %v3575
    %v3814 = vunpack.c.l.b16 %v3576
    %v3815 = vunpack.c.h.b16 %v3576
    %v3816 = vunpack.c.l.b16 %v3577
    %v3817 = vunpack.c.h.b16 %v3577
    %v3818 = vunpack.c.l.b16 %v3578
    %v3819 = vunpack.c.h.b16 %v3578
    %v3820 = vunpack.c.l.b16 %v3579
    %v3821 = vunpack.c.h.b16 %v3579
    %v3822 = vunpack.c.l.b16 %v3580
    %v3823 = vunpack.c.h.b16 %v3580
    %v3824 = vunpack.c.l.b16 %v3581
    %v3825 = vunpack.c.h.b16 %v3581
    %v3826 = vunpack.c.l.b16 %v3582
    %v3827 = vunpack.c.h.b16 %v3582
    %v3828 = vunpack.c.l.b16 %v3583
    %v3829 = vunpack.c.h.b16 %v3583
    %v3830 = vunpack.c.l.b16 %v3584
    %v3831 = vunpack.c.h.b16 %v3584
    %v3832 = vunpack.c.l.b16 %v3585
    %v3833 = vunpack.c.h.b16 %v3585
    %v3834 = vunpack.c.l.b16 %v3586
    %v3835 = vunpack.c.h.b16 %v3586
    %v3836 = vunpack.c.l.b16 %v3587
    %v3837 = vunpack.c.h.b16 %v3587
    %v3838 = vunpack.c.l.b16 %v3588
    %v3839 = vunpack.c.h.b16 %v3588
    %v3840 = vunpack.c.l.b16 %v3589
    %v3841 = vunpack.c.h.b16 %v3589
    %v3842 = vunpack.c.l.b16 %v3590
    %v3843 = vunpack.c.h.b16 %v3590
    %v3844 = vunpack.c.l.b16 %v3591
    %v3845 = vunpack.c.h.b16 %v3591
    %v3846 = vunpack.c.l.b16 %v3592
    %v3847 = vunpack.c.h.b16 %v3592
    %v3848 = vunpack.c.l.b16 %v3593
    %v3849 = vunpack.c.h.b16 %v3593
    %v3850 = vunpack.c.l.b16 %v3594
    %v3851 = vunpack.c.h.b16 %v3594
    %v3852 = vunpack.c.l.b16 %v3595
    %v3853 = vunpack.c.h.b16 %v3595
    %v3854 = vunpack.c.l.b16 %v3596
    %v3855 = vunpack.c.h.b16 %v3596
    %v3856 = vunpack.c.l.b16 %v3597
    %v3857 = vunpack.c.h.b16 %v3597
    %v3858 = vunpack.c.l.b16 %v3598
    %v3859 = vunpack.c.h.b16 %v3598
    %v3860 = vunpack.c.l.b16 %v3599
    %v3861 = vunpack.c.h.b16 %v3599
    %v3862 = vunpack.c.l.b16 %v3600
    %v3863 = vunpack.c.h.b16 %v3600
    %v3864 = vunpack.c.l.b16 %v3601
    %v3865 = vunpack.c.h.b16 %v3601
    %v3866 = vunpack.c.l.b16 %v3602
    %v3867 = vunpack.c.h.b16 %v3602
    %v3868 = vunpack.c.l.b16 %v3603
    %v3869 = vunpack.c.h.b16 %v3603
    %v3870 = vunpack.c.l.b16 %v3604
    %v3871 = vunpack.c.h.b16 %v3604
    %v3872 = vunpack.c.l.b16 %v3605
    %v3873 = vunpack.c.h.b16 %v3605
    %v3874 = vunpack.c.l.b16 %v3606
    %v3875 = vunpack.c.h.b16 %v3606
    %v3876 = vunpack.c.l.b16 %v3607
    %v3877 = vunpack.c.h.b16 %v3607
    %v3878 = vunpack.c.l.b16 %v3608
    %v3879 = vunpack.c.h.b16 %v3608
    %v3880 = vunpack.c.l.b16 %v3609
    %v3881 = vunpack.c.h.b16 %v3609
    %v3882 = vunpack.c.l.b16 %v3610
    %v3883 = vunpack.c.h.b16 %v3610
    %v3884 = vunpack.c.l.b16 %v3611
    %v3885 = vunpack.c.h.b16 %v3611
    %v3886 = vunpack.c.l.b16 %v3612
    %v3887 = vunpack.c.h.b16 %v3612
    %v3888 = vunpack.c.l.b16 %v3613
    %v3889 = vunpack.c.h.b16 %v3613
    %v3890 = vunpack.c.l.b16 %v3614
    %v3891 = vunpack.c.h.b16 %v3614
    %v3892 = vunpack.c.l.b16 %v3615
    %v3893 = vunpack.c.h.b16 %v3615
    %v3894 = vunpack.c.l.b16 %v3616
    %v3895 = vunpack.c.h.b16 %v3616
    %v3896 = vunpack.c.l.b16 %v3617
    %v3897 = vunpack.c.h.b16 %v3617
    %v3898 = vunpack.c.l.b16 %v3618
    %v3899 = vunpack.c.h.b16 %v3618
    %v3900 = vunpack.c.l.b16 %v3619
    %v3901 = vunpack.c.h.b16 %v3619
    %v3902 = vunpack.c.l.b16 %v3620
    %v3903 = vunpack.c.h.b16 %v3620
    %v3904 = vunpack.c.l.b16 %v3621
    %v3905 = vunpack.c.h.b16 %v3621
    %v3906 = vunpack.c.l.b16 %v3622
    %v3907 = vunpack.c.h.b16 %v3622
    %v3908 = vunpack.c.l.b16 %v3623
    %v3909 = vunpack.c.h.b16 %v3623
    %v3910 = vunpack.c.l.b16 %v3624
    %v3911 = vunpack.c.h.b16 %v3624
    %v3912 = vunpack.c.l.b16 %v3625
    %v3913 = vunpack.c.h.b16 %v3625
    %v3914 = vunpack.c.l.b16 %v3626
    %v3915 = vunpack.c.h.b16 %v3626
    %v3916 = vunpack.c.l.b16 %v3627
    %v3917 = vunpack.c.h.b16 %v3627
    %v3918 = vunpack.c.l.b16 %v3628
    %v3919 = vunpack.c.h.b16 %v3628
    %v3920 = vunpack.c.l.b16 %v3629
    %v3921 = vunpack.c.h.b16 %v3629
    %v3922 = vunpack.c.l.b16 %v3630
    %v3923 = vunpack.c.h.b16 %v3630
    %v3924 = vunpack.c.l.b16 %v3631
    %v3925 = vunpack.c.h.b16 %v3631
    %v3926 = vunpack.c.l.b16 %v3632
    %v3927 = vunpack.c.h.b16 %v3632
    %v3928 = vunpack.c.l.b16 %v3633
    %v3929 = vunpack.c.h.b16 %v3633
    %v3930 = vunpack.c.l.b16 %v3634
    %v3931 = vunpack.c.h.b16 %v3634
    %v3932 = vunpack.c.l.b16 %v3635
    %v3933 = vunpack.c.h.b16 %v3635
    %v3934 = vunpack.c.l.b16 %v3636
    %v3935 = vunpack.c.h.b16 %v3636
    %v3936 = vunpack.c.l.b16 %v3637
    %v3937 = vunpack.c.h.b16 %v3637
    %v3938 = vunpack.c.l.b16 %v3638
    %v3939 = vunpack.c.h.b16 %v3638
    %v3940 = vunpack.c.l.b16 %v3639
    %v3941 = vunpack.c.h.b16 %v3639
    %v3942 = vunpack.c.l.b16 %v3640
    %v3943 = vunpack.c.h.b16 %v3640
    %v3944 = vunpack.c.l.b16 %v3641
    %v3945 = vunpack.c.h.b16 %v3641
    %v3946 = vunpack.c.l.b16 %v3642
    %v3947 = vunpack.c.h.b16 %v3642
    %v3948 = vunpack.c.l.b16 %v3643
    %v3949 = vunpack.c.h.b16 %v3643
    %v3950 = vunpack.c.l.b16 %v3644
    %v3951 = vunpack.c.h.b16 %v3644
    %v3952 = vunpack.c.l.b16 %v3645
    %v3953 = vunpack.c.h.b16 %v3645
    %v3954 = vunpack.c.l.b16 %v3646
    %v3955 = vunpack.c.h.b16 %v3646
    %v3956 = vunpack.c.l.b16 %v3647
    %v3957 = vunpack.c.h.b16 %v3647
    %v3958 = vunpack.c.l.b16 %v3648
    %v3959 = vunpack.c.h.b16 %v3648
    %v3960 = vunpack.c.l.b16 %v3649
    %v3961 = vunpack.c.h.b16 %v3649
    %v3962 = vunpack.c.l.b16 %v3650
    %v3963 = vunpack.c.h.b16 %v3650
    %v3964 = vunpack.c.l.b16 %v3651
    %v3965 = vunpack.c.h.b16 %v3651
    %v3966 = vunpack.c.l.b16 %v3652
    %v3967 = vunpack.c.h.b16 %v3652
    %v3968 = vunpack.c.l.b16 %v3653
    %v3969 = vunpack.c.h.b16 %v3653
    %v3970 = vunpack.c.l.b16 %v3654
    %v3971 = vunpack.c.h.b16 %v3654
    %v3972 = vunpack.c.l.b16 %v3655
    %v3973 = vunpack.c.h.b16 %v3655
    %v3974 = vunpack.c.l.b16 %v3656
    %v3975 = vunpack.c.h.b16 %v3656
    %v3976 = vunpack.c.l.b16 %v3657
    %v3977 = vunpack.c.h.b16 %v3657
    %v3978 = vunpack.c.l.b16 %v3658
    %v3979 = vunpack.c.h.b16 %v3658
    %v3980 = vpack.c.b16 %v3794, %v3788
    %v3981 = vpack.c.b16 %v3795, %v3789
    %v3982 = vpack.c.b16 %v3796, %v3790
    %v3983 = vpack.c.b16 %v3797, %v3791
    %v3984 = vpack.c.b16 %v3798, %v3792
    %v3985 = vpack.c.b16 %v3799, %v3793
    %v3986 = vpack.c.b16 %v3806, %v3800
    %v3987 = vpack.c.b16 %v3807, %v3801
    %v3988 = vpack.c.b16 %v3808, %v3802
    %v3989 = vpack.c.b16 %v3809, %v3803
    %v3990 = vpack.c.b16 %v3810, %v3804
    %v3991 = vpack.c.b16 %v3811, %v3805
    %v3992 = vpack.c.b16 %v3818, %v3812
    %v3993 = vpack.c.b16 %v3819, %v3813
    %v3994 = vpack.c.b16 %v3820, %v3814
    %v3995 = vpack.c.b16 %v3821, %v3815
    %v3996 = vpack.c.b16 %v3822, %v3816
    %v3997 = vpack.c.b16 %v3823, %v3817
    %v3998 = vpack.c.b16 %v3830, %v3824
    %v3999 = vpack.c.b16 %v3831, %v3825
    %v4000 = vpack.c.b16 %v3832, %v3826
    %v4001 = vpack.c.b16 %v3833, %v3827
    %v4002 = vpack.c.b16 %v3834, %v3828
    %v4003 = vpack.c.b16 %v3835, %v3829
    %v4004 = vpack.c.b16 %v3842, %v3836
    %v4005 = vpack.c.b16 %v3843, %v3837
    %v4006 = vpack.c.b16 %v3844, %v3838
    %v4007 = vpack.c.b16 %v3845, %v3839
    %v4008 = vpack.c.b16 %v3846, %v3840
    %v4009 = vpack.c.b16 %v3847, %v3841
    %v4010 = vpack.c.b16 %v3854, %v3848
    %v4011 = vpack.c.b16 %v3855, %v3849
    %v4012 = vpack.c.b16 %v3856, %v3850
    %v4013 = vpack.c.b16 %v3857, %v3851
    %v4014 = vpack.c.b16 %v3858, %v3852
    %v4015 = vpack.c.b16 %v3859, %v3853
    %v4016 = vpack.c.b16 %v3866, %v3860
    %v4017 = vpack.c.b16 %v3867, %v3861
    %v4018 = vpack.c.b16 %v3868, %v3862
    %v4019 = vpack.c.b16 %v3869, %v3863
    %v4020 = vpack.c.b16 %v3870, %v3864
    %v4021 = vpack.c.b16 %v3871, %v3865
    %v4022 = vpack.c.b16 %v3878, %v3872
    %v4023 = vpack.c.b16 %v3879, %v3873
    %v4024 = vpack.c.b16 %v3880, %v3874
    %v4025 = vpack.c.b16 %v3881, %v3875
    %v4026 = vpack.c.b16 %v3882, %v3876
    %v4027 = vpack.c.b16 %v3883, %v3877
    %v4028 = vpack.c.b16 %v3890, %v3884
    %v4029 = vpack.c.b16 %v3891, %v3885
    %v4030 = vpack.c.b16 %v3892, %v3886
    %v4031 = vpack.c.b16 %v3893, %v3887
    %v4032 = vpack.c.b16 %v3894, %v3888
    %v4033 = vpack.c.b16 %v3895, %v3889
    %v4034 = vpack.c.b16 %v3902, %v3896
    %v4035 = vpack.c.b16 %v3903, %v3897
    %v4036 = vpack.c.b16 %v3904, %v3898
    %v4037 = vpack.c.b16 %v3905, %v3899
    %v4038 = vpack.c.b16 %v3906, %v3900
    %v4039 = vpack.c.b16 %v3907, %v3901
    %v4040 = vpack.c.b16 %v3914, %v3908
    %v4041 = vpack.c.b16 %v3915, %v3909
    %v4042 = vpack.c.b16 %v3916, %v3910
    %v4043 = vpack.c.b16 %v3917, %v3911
    %v4044 = vpack.c.b16 %v3918, %v3912
    %v4045 = vpack.c.b16 %v3919, %v3913
    %v4046 = vpack.c.b16 %v3926, %v3920
    %v4047 = vpack.c.b16 %v3927, %v3921
    %v4048 = vpack.c.b16 %v3928, %v3922
    %v4049 = vpack.c.b16 %v3929, %v3923
    %v4050 = vpack.c.b16 %v3930, %v3924
    %v4051 = vpack.c.b16 %v3931, %v3925
    %v4052 = vpack.c.b16 %v3938, %v3932
    %v4053 = vpack.c.b16 %v3939, %v3933
    %v4054 = vpack.c.b16 %v3940, %v3934
    %v4055 = vpack.c.b16 %v3941, %v3935
    %v4056 = vpack.c.b16 %v3942, %v3936
    %v4057 = vpack.c.b16 %v3943, %v3937
    %v4058 = vpack.c.b16 %v3950, %v3944
    %v4059 = vpack.c.b16 %v3951, %v3945
    %v4060 = vpack.c.b16 %v3952, %v3946
    %v4061 = vpack.c.b16 %v3953, %v3947
    %v4062 = vpack.c.b16 %v3954, %v3948
    %v4063 = vpack.c.b16 %v3955, %v3949
    %v4064 = vpack.c.b16 %v3962, %v3956
    %v4065 = vpack.c.b16 %v3963, %v3957
    %v4066 = vpack.c.b16 %v3964, %v3958
    %v4067 = vpack.c.b16 %v3965, %v3959
    %v4068 = vpack.c.b16 %v3966, %v3960
    %v4069 = vpack.c.b16 %v3967, %v3961
    %v4070 = vpack.c.b16 %v3974, %v3968
    %v4071 = vpack.c.b16 %v3975, %v3969
    %v4072 = vpack.c.b16 %v3976, %v3970
    %v4073 = vpack.c.b16 %v3977, %v3971
    %v4074 = vpack.c.b16 %v3978, %v3972
    %v4075 = vpack.c.b16 %v3979, %v3973
    %4172 = vmatprep.subr.bf16.mxu0 %v3981
    %4173 = vmatpush1.bf16.msra.mxu0 %v3980
    %4174 = vmatprep.subr.bf16.mxu0 %v3987
    %4175 = vmatpush1.bf16.msra.mxu0 %v3986
    %4176 = vmatprep.subr.bf16.mxu0 %v3993
    %4177 = vmatpush1.bf16.msra.mxu0 %v3992
    %4178 = vmatprep.subr.bf16.mxu0 %v3999
    %4179 = vmatpush1.bf16.msra.mxu0 %v3998
    %4180 = vmatprep.subr.bf16.mxu0 %v4005
    %4181 = vmatpush1.bf16.msra.mxu0 %v4004
    %4182 = vmatprep.subr.bf16.mxu0 %v4011
    %4183 = vmatpush1.bf16.msra.mxu0 %v4010
    %4184 = vmatprep.subr.bf16.mxu0 %v4017
    %4185 = vmatpush1.bf16.msra.mxu0 %v4016
    %4186 = vmatprep.subr.bf16.mxu0 %v4023
    %4187 = vmatpush1.bf16.msra.mxu0 %v4022
    %4188 = vmatprep.subr.bf16.mxu0 %v4029
    %4189 = vmatpush1.bf16.msra.mxu0 %v4028
    %4190 = vmatprep.subr.bf16.mxu0 %v4035
    %4191 = vmatpush1.bf16.msra.mxu0 %v4034
    %4192 = vmatprep.subr.bf16.mxu0 %v4041
    %4193 = vmatpush1.bf16.msra.mxu0 %v4040
    %4194 = vmatprep.subr.bf16.mxu0 %v4047
    %4195 = vmatpush1.bf16.msra.mxu0 %v4046
    %4196 = vmatprep.subr.bf16.mxu0 %v4053
    %4197 = vmatpush1.bf16.msra.mxu0 %v4052
    %4198 = vmatprep.subr.bf16.mxu0 %v4059
    %4199 = vmatpush1.bf16.msra.mxu0 %v4058
    %4200 = vmatprep.subr.bf16.mxu0 %v4065
    %4201 = vmatpush1.bf16.msra.mxu0 %v4064
    %4202 = vmatprep.subr.bf16.mxu0 %v4071
    %4203 = vmatpush1.bf16.msra.mxu0 %v4070
    %4204 = vmatprep.mubr.bf16.mxu0 %v3561
    %4205 = vmatmul.mubr.bf16.gmra.mrb[0].mxu0 %v3560
    %v4206 = vpop.f32.mrb[0].mxu0
    %v4207 = vadd.f32 %v3665, %v4206
    %v4208 = vpop.f32.mrb[0].mxu0
    %v4209 = vadd.f32 %v3669, %v4208
    %v4210 = vpop.f32.mrb[0].mxu0
    %v4211 = vadd.f32 %v3665, %v4210
    %v4212 = vpop.f32.mrb[0].mxu0
    %v4213 = vadd.f32 %v3669, %v4212
    %4214 = vdwg.mxu0
    %4215 = vmatprep.subr.bf16.mxu0 %v3983
    %4216 = vmatpush1.bf16.msra.mxu0 %v3982
    %4217 = vmatprep.subr.bf16.mxu0 %v3989
    %4218 = vmatpush1.bf16.msra.mxu0 %v3988
    %4219 = vmatprep.subr.bf16.mxu0 %v3995
    %4220 = vmatpush1.bf16.msra.mxu0 %v3994
    %4221 = vmatprep.subr.bf16.mxu0 %v4001
    %4222 = vmatpush1.bf16.msra.mxu0 %v4000
    %4223 = vmatprep.subr.bf16.mxu0 %v4007
    %4224 = vmatpush1.bf16.msra.mxu0 %v4006
    %4225 = vmatprep.subr.bf16.mxu0 %v4013
    %4226 = vmatpush1.bf16.msra.mxu0 %v4012
    %4227 = vmatprep.subr.bf16.mxu0 %v4019
    %4228 = vmatpush1.bf16.msra.mxu0 %v4018
    %4229 = vmatprep.subr.bf16.mxu0 %v4025
    %4230 = vmatpush1.bf16.msra.mxu0 %v4024
    %4231 = vmatprep.subr.bf16.mxu0 %v4031
    %4232 = vmatpush1.bf16.msra.mxu0 %v4030
    %4233 = vmatprep.subr.bf16.mxu0 %v4037
    %4234 = vmatpush1.bf16.msra.mxu0 %v4036
    %4235 = vmatprep.subr.bf16.mxu0 %v4043
    %4236 = vmatpush1.bf16.msra.mxu0 %v4042
    %4237 = vmatprep.subr.bf16.mxu0 %v4049
    %4238 = vmatpush1.bf16.msra.mxu0 %v4048
    %4239 = vmatprep.subr.bf16.mxu0 %v4055
    %4240 = vmatpush1.bf16.msra.mxu0 %v4054
    %4241 = vmatprep.subr.bf16.mxu0 %v4061
    %4242 = vmatpush1.bf16.msra.mxu0 %v4060
    %4243 = vmatprep.subr.bf16.mxu0 %v4067
    %4244 = vmatpush1.bf16.msra.mxu0 %v4066
    %4245 = vmatprep.subr.bf16.mxu0 %v4073
    %4246 = vmatpush1.bf16.msra.mxu0 %v4072
    %4247 = vmatprep.mubr.bf16.mxu0 %v3561
    %4248 = vmatmul.mubr.bf16.gmra.mrb[0].mxu0 %v3560
    %v4249 = vpop.f32.mrb[0].mxu0
    %v4250 = vadd.f32 %v3673, %v4249
    %v4251 = vpop.f32.mrb[0].mxu0
    %v4252 = vadd.f32 %v3677, %v4251
    %v4253 = vpop.f32.mrb[0].mxu0
    %v4254 = vadd.f32 %v3673, %v4253
    %v4255 = vpop.f32.mrb[0].mxu0
    %v4256 = vadd.f32 %v3677, %v4255
    %4257 = vdwg.mxu0
    %4258 = vmatprep.subr.bf16.mxu0 %v3985
    %4259 = vmatpush1.bf16.msra.mxu0 %v3984
    %4260 = vmatprep.subr.bf16.mxu0 %v3991
    %4261 = vmatpush1.bf16.msra.mxu0 %v3990
    %4262 = vmatprep.subr.bf16.mxu0 %v3997
    %4263 = vmatpush1.bf16.msra.mxu0 %v3996
    %4264 = vmatprep.subr.bf16.mxu0 %v4003
    %4265 = vmatpush1.bf16.msra.mxu0 %v4002
    %4266 = vmatprep.subr.bf16.mxu0 %v4009
    %4267 = vmatpush1.bf16.msra.mxu0 %v4008
    %4268 = vmatprep.subr.bf16.mxu0 %v4015
    %4269 = vmatpush1.bf16.msra.mxu0 %v4014
    %4270 = vmatprep.subr.bf16.mxu0 %v4021
    %4271 = vmatpush1.bf16.msra.mxu0 %v4020
    %4272 = vmatprep.subr.bf16.mxu0 %v4027
    %4273 = vmatpush1.bf16.msra.mxu0 %v4026
    %4274 = vmatprep.subr.bf16.mxu0 %v4033
    %4275 = vmatpush1.bf16.msra.mxu0 %v4032
    %4276 = vmatprep.subr.bf16.mxu0 %v4039
    %4277 = vmatpush1.bf16.msra.mxu0 %v4038
    %4278 = vmatprep.subr.bf16.mxu0 %v4045
    %4279 = vmatpush1.bf16.msra.mxu0 %v4044
    %4280 = vmatprep.subr.bf16.mxu0 %v4051
    %4281 = vmatpush1.bf16.msra.mxu0 %v4050
    %4282 = vmatprep.subr.bf16.mxu0 %v4057
    %4283 = vmatpush1.bf16.msra.mxu0 %v4056
    %4284 = vmatprep.subr.bf16.mxu0 %v4063
    %4285 = vmatpush1.bf16.msra.mxu0 %v4062
    %4286 = vmatprep.subr.bf16.mxu0 %v4069
    %4287 = vmatpush1.bf16.msra.mxu0 %v4068
    %4288 = vmatprep.subr.bf16.mxu0 %v4075
    %4289 = vmatpush1.bf16.msra.mxu0 %v4074
    %4290 = vmatprep.mubr.bf16.mxu0 %v3561
    %4291 = vmatmul.mubr.bf16.gmra.mrb[0].mxu0 %v3560
    %v4292 = vpop.f32.mrb[0].mxu0
    %v4293 = vadd.f32 %v3681, %v4292
    %v4294 = vpop.f32.mrb[0].mxu0
    %v4295 = vadd.f32 %v3685, %v4294
    %v4296 = vpop.f32.mrb[0].mxu0
    %v4297 = vadd.f32 %v3681, %v4296
    %v4298 = vpop.f32.mrb[0].mxu0
    %v4299 = vadd.f32 %v3685, %v4298
    %4300 = vdwg.mxu0
    %v4301 = vpack.c.bf16 %v4207, %v4207
    %v4302 = vpack.c.bf16 %v4211, %v4211
    %v4303 = vpack.c.bf16 %v4250, %v4250
    %v4304 = vpack.c.bf16 %v4254, %v4254
    %v4306 = vsel %vm822, %v4301, 0
    %v4309 = vsel %vm822, %v4303, 0
    %4311 = vmatprep.subr.bf16.mxu0 0
    %4312 = vmatpush1.bf16.xpose.msra.mxu0 %v4309
    %4313 = vmatprep.subr.bf16.mxu0 0
    %4314 = vmatpush1.bf16.xpose.msra.mxu0 0
    %4315 = vmatprep.subr.bf16.mxu0 0
    %4316 = vmatpush1.bf16.xpose.msra.mxu0 0
    %4317 = vmatprep.subr.bf16.mxu0 0
    %4318 = vmatpush1.bf16.xpose.msra.mxu0 0
    %4319 = vmatprep.subr.bf16.mxu0 0
    %4320 = vmatpush1.bf16.xpose.msra.mxu0 0
    %4321 = vmatprep.subr.bf16.mxu0 0
    %4322 = vmatpush1.bf16.xpose.msra.mxu0 0
    %4323 = vmatprep.subr.bf16.mxu0 0
    %4324 = vmatpush1.bf16.xpose.msra.mxu0 0
    %4325 = vmatprep.subr.bf16.mxu0 0
    %4326 = vmatpush1.bf16.xpose.msra.mxu0 0
    %4327 = vmatprep.subr.bf16.mxu0 0
    %4328 = vmatpush1.bf16.xpose.msra.mxu0 0
    %4329 = vmatprep.subr.bf16.mxu0 0
    %4330 = vmatpush1.bf16.xpose.msra.mxu0 0
    %4331 = vmatprep.subr.bf16.mxu0 0
    %4332 = vmatpush1.bf16.xpose.msra.mxu0 0
    %4333 = vmatprep.subr.bf16.mxu0 0
    %4334 = vmatpush1.bf16.xpose.msra.mxu0 0
    %4335 = vmatprep.subr.bf16.mxu0 0
    %4336 = vmatpush1.bf16.xpose.msra.mxu0 0
    %4337 = vmatprep.subr.bf16.mxu0 0
    %4338 = vmatpush1.bf16.xpose.msra.mxu0 0
    %4339 = vmatprep.subr.bf16.mxu0 0
    %4340 = vmatpush1.bf16.xpose.msra.mxu0 0
    %4341 = vmatprep.subr.bf16.mxu0 0
    %4342 = vmatpush1.bf16.xpose.msra.mxu0 0
    %4343 = vmatprep.mubr.bf16.mxu0 0
    %4344 = vmatmul.mubr.bf16.gmra.mrb[0].mxu0 %v4306
    %v4345 = vpop.f32.mrb[0].mxu0
    %v4346 = vadd.f32 0.0, %v4345
    %v4347 = vpop.f32.mrb[0].mxu0
    %v4348 = vpop.f32.mrb[0].mxu0
    %v4349 = vpop.f32.mrb[0].mxu0
    %4350 = vdwg.mxu0
    %v4352 = vsel %vm822, %v4302, 0
    %v4355 = vsel %vm822, %v4304, 0
    %4357 = vmatprep.subr.bf16.mxu0 0
    %4358 = vmatpush1.bf16.xpose.msra.mxu0 %v4355
    %4359 = vmatprep.subr.bf16.mxu0 0
    %4360 = vmatpush1.bf16.xpose.msra.mxu0 0
    %4361 = vmatprep.subr.bf16.mxu0 0
    %4362 = vmatpush1.bf16.xpose.msra.mxu0 0
    %4363 = vmatprep.subr.bf16.mxu0 0
    %4364 = vmatpush1.bf16.xpose.msra.mxu0 0
    %4365 = vmatprep.subr.bf16.mxu0 0
    %4366 = vmatpush1.bf16.xpose.msra.mxu0 0
    %4367 = vmatprep.subr.bf16.mxu0 0
    %4368 = vmatpush1.bf16.xpose.msra.mxu0 0
    %4369 = vmatprep.subr.bf16.mxu0 0
    %4370 = vmatpush1.bf16.xpose.msra.mxu0 0
    %4371 = vmatprep.subr.bf16.mxu0 0
    %4372 = vmatpush1.bf16.xpose.msra.mxu0 0
    %4373 = vmatprep.subr.bf16.mxu0 0
    %4374 = vmatpush1.bf16.xpose.msra.mxu0 0
    %4375 = vmatprep.subr.bf16.mxu0 0
    %4376 = vmatpush1.bf16.xpose.msra.mxu0 0
    %4377 = vmatprep.subr.bf16.mxu0 0
    %4378 = vmatpush1.bf16.xpose.msra.mxu0 0
    %4379 = vmatprep.subr.bf16.mxu0 0
    %4380 = vmatpush1.bf16.xpose.msra.mxu0 0
    %4381 = vmatprep.subr.bf16.mxu0 0
    %4382 = vmatpush1.bf16.xpose.msra.mxu0 0
    %4383 = vmatprep.subr.bf16.mxu0 0
    %4384 = vmatpush1.bf16.xpose.msra.mxu0 0
    %4385 = vmatprep.subr.bf16.mxu0 0
    %4386 = vmatpush1.bf16.xpose.msra.mxu0 0
    %4387 = vmatprep.subr.bf16.mxu0 0
    %4388 = vmatpush1.bf16.xpose.msra.mxu0 0
    %4389 = vmatprep.mubr.bf16.mxu0 0
    %4390 = vmatmul.mubr.bf16.gmra.mrb[0].mxu0 %v4352
    %v4391 = vpop.f32.mrb[0].mxu0
    %v4392 = vadd.f32 0.0, %v4391
    %v4393 = vpop.f32.mrb[0].mxu0
    %v4394 = vpop.f32.mrb[0].mxu0
    %v4395 = vpop.f32.mrb[0].mxu0
    %4396 = vdwg.mxu0
    %v4397 = vmul.f32 %v4346, 0.17677669
    %v4398 = vmul.f32 %v4392, 0.17677669
    %v4399 = vsel %vm917, %v4397, -inf
    %4400 = vmax.xlane.f32.xlu0 %v4399
    %v4401 = vpop.xlane.xlu0 %4400
    %v4402 = vsel %vm917, %v4398, -inf
    %4403 = vmax.xlane.f32.xlu0 %v4402
    %v4404 = vpop.xlane.xlu0 %4403
    %v4405 = vsub.f32 %v4397, %v4401
    %v4406 = vsub.f32 %v4398, %v4404
    %v4407 = vmul.f32 %v4405, 1.442695
    %v4408 = vpow.pop %v4407
    %v4409 = vmul.f32 %v4406, 1.442695
    %v4410 = vpow.pop %v4409
    %v4411 = vsel %vm917, %v4408, 0.0
    %4412 = vadd.xlane.f32.xlu0 %v4411
    %v4413 = vpop.xlane.xlu0 %4412
    %v4414 = vsel %vm917, %v4410, 0.0
    %4415 = vadd.xlane.f32.xlu0 %v4414
    %v4416 = vpop.xlane.xlu0 %4415
    %v4417 = vrcp.pop %v4413
    %v4418 = vrcp.pop %v4416
    %v4419 = vmul.f32 %v4408, %v4417
    %v4420 = vmul.f32 %v4410, %v4418
    %v4421 = vpack.c.bf16 %v4419, %v4419
    %v4422 = vpack.c.bf16 %v4420, %v4420
    %v4423 = vpack.c.bf16 %v4293, %v4293
    %v4424 = vpack.c.bf16 %v4297, %v4297
    %v4426 = vsel %vm917, %v4421, 0
    %v4429 = vsel %vm947, %v4423, 0
    %4431 = vmatprep.subr.bf16.mxu0 0
    %4432 = vmatpush1.bf16.msra.mxu0 %v4429
    %4433 = vmatprep.subr.bf16.mxu0 0
    %4434 = vmatpush1.bf16.msra.mxu0 0
    %4435 = vmatprep.subr.bf16.mxu0 0
    %4436 = vmatpush1.bf16.msra.mxu0 0
    %4437 = vmatprep.subr.bf16.mxu0 0
    %4438 = vmatpush1.bf16.msra.mxu0 0
    %4439 = vmatprep.subr.bf16.mxu0 0
    %4440 = vmatpush1.bf16.msra.mxu0 0
    %4441 = vmatprep.subr.bf16.mxu0 0
    %4442 = vmatpush1.bf16.msra.mxu0 0
    %4443 = vmatprep.subr.bf16.mxu0 0
    %4444 = vmatpush1.bf16.msra.mxu0 0
    %4445 = vmatprep.subr.bf16.mxu0 0
    %4446 = vmatpush1.bf16.msra.mxu0 0
    %4447 = vmatprep.subr.bf16.mxu0 0
    %4448 = vmatpush1.bf16.msra.mxu0 0
    %4449 = vmatprep.subr.bf16.mxu0 0
    %4450 = vmatpush1.bf16.msra.mxu0 0
    %4451 = vmatprep.subr.bf16.mxu0 0
    %4452 = vmatpush1.bf16.msra.mxu0 0
    %4453 = vmatprep.subr.bf16.mxu0 0
    %4454 = vmatpush1.bf16.msra.mxu0 0
    %4455 = vmatprep.subr.bf16.mxu0 0
    %4456 = vmatpush1.bf16.msra.mxu0 0
    %4457 = vmatprep.subr.bf16.mxu0 0
    %4458 = vmatpush1.bf16.msra.mxu0 0
    %4459 = vmatprep.subr.bf16.mxu0 0
    %4460 = vmatpush1.bf16.msra.mxu0 0
    %4461 = vmatprep.subr.bf16.mxu0 0
    %4462 = vmatpush1.bf16.msra.mxu0 0
    %4463 = vmatprep.mubr.bf16.mxu0 0
    %4464 = vmatmul.mubr.bf16.gmra.mrb[0].mxu0 %v4426
    %v4465 = vpop.f32.mrb[0].mxu0
    %v4466 = vadd.f32 0.0, %v4465
    %v4467 = vpop.f32.mrb[0].mxu0
    %v4468 = vpop.f32.mrb[0].mxu0
    %v4469 = vpop.f32.mrb[0].mxu0
    %4470 = vdwg.mxu0
    %v4472 = vsel %vm917, %v4422, 0
    %v4475 = vsel %vm947, %v4424, 0
    %4477 = vmatprep.subr.bf16.mxu0 0
    %4478 = vmatpush1.bf16.msra.mxu0 %v4475
    %4479 = vmatprep.subr.bf16.mxu0 0
    %4480 = vmatpush1.bf16.msra.mxu0 0
    %4481 = vmatprep.subr.bf16.mxu0 0
    %4482 = vmatpush1.bf16.msra.mxu0 0
    %4483 = vmatprep.subr.bf16.mxu0 0
    %4484 = vmatpush1.bf16.msra.mxu0 0
    %4485 = vmatprep.subr.bf16.mxu0 0
    %4486 = vmatpush1.bf16.msra.mxu0 0
    %4487 = vmatprep.subr.bf16.mxu0 0
    %4488 = vmatpush1.bf16.msra.mxu0 0
    %4489 = vmatprep.subr.bf16.mxu0 0
    %4490 = vmatpush1.bf16.msra.mxu0 0
    %4491 = vmatprep.subr.bf16.mxu0 0
    %4492 = vmatpush1.bf16.msra.mxu0 0
    %4493 = vmatprep.subr.bf16.mxu0 0
    %4494 = vmatpush1.bf16.msra.mxu0 0
    %4495 = vmatprep.subr.bf16.mxu0 0
    %4496 = vmatpush1.bf16.msra.mxu0 0
    %4497 = vmatprep.subr.bf16.mxu0 0
    %4498 = vmatpush1.bf16.msra.mxu0 0
    %4499 = vmatprep.subr.bf16.mxu0 0
    %4500 = vmatpush1.bf16.msra.mxu0 0
    %4501 = vmatprep.subr.bf16.mxu0 0
    %4502 = vmatpush1.bf16.msra.mxu0 0
    %4503 = vmatprep.subr.bf16.mxu0 0
    %4504 = vmatpush1.bf16.msra.mxu0 0
    %4505 = vmatprep.subr.bf16.mxu0 0
    %4506 = vmatpush1.bf16.msra.mxu0 0
    %4507 = vmatprep.subr.bf16.mxu0 0
    %4508 = vmatpush1.bf16.msra.mxu0 0
    %4509 = vmatprep.mubr.bf16.mxu0 0
    %4510 = vmatmul.mubr.bf16.gmra.mrb[0].mxu0 %v4472
    %v4511 = vpop.f32.mrb[0].mxu0
    %v4512 = vadd.f32 0.0, %v4511
    %v4513 = vpop.f32.mrb[0].mxu0
    %v4514 = vpop.f32.mrb[0].mxu0
    %v4515 = vpop.f32.mrb[0].mxu0
    %4516 = vdwg.mxu0
    %4517 = vst.msk [vmem:[#allocation2] sm:$0xff] %vm822, %v4466
    %4518 = vst.msk [vmem:[#allocation2 + $0x10] sm:$0xff] %vm822, %v4512
    %4520 = vrot.lane.b32.xlu0 %v4301, 96
    %v4521 = vpop.permute.xlu0 %4520
    %4523 = vrot.lane.b32.xlu0 %v4303, 96
    %v4524 = vpop.permute.xlu0 %4523
    %v4526 = vsel %vm822, %v4521, 0
    %v4529 = vsel %vm822, %v4524, 0
    %4531 = vmatprep.subr.bf16.mxu0 0
    %4532 = vmatpush1.bf16.xpose.msra.mxu0 %v4529
    %4533 = vmatprep.subr.bf16.mxu0 0
    %4534 = vmatpush1.bf16.xpose.msra.mxu0 0
    %4535 = vmatprep.subr.bf16.mxu0 0
    %4536 = vmatpush1.bf16.xpose.msra.mxu0 0
    %4537 = vmatprep.subr.bf16.mxu0 0
    %4538 = vmatpush1.bf16.xpose.msra.mxu0 0
    %4539 = vmatprep.subr.bf16.mxu0 0
    %4540 = vmatpush1.bf16.xpose.msra.mxu0 0
    %4541 = vmatprep.subr.bf16.mxu0 0
    %4542 = vmatpush1.bf16.xpose.msra.mxu0 0
    %4543 = vmatprep.subr.bf16.mxu0 0
    %4544 = vmatpush1.bf16.xpose.msra.mxu0 0
    %4545 = vmatprep.subr.bf16.mxu0 0
    %4546 = vmatpush1.bf16.xpose.msra.mxu0 0
    %4547 = vmatprep.subr.bf16.mxu0 0
    %4548 = vmatpush1.bf16.xpose.msra.mxu0 0
    %4549 = vmatprep.subr.bf16.mxu0 0
    %4550 = vmatpush1.bf16.xpose.msra.mxu0 0
    %4551 = vmatprep.subr.bf16.mxu0 0
    %4552 = vmatpush1.bf16.xpose.msra.mxu0 0
    %4553 = vmatprep.subr.bf16.mxu0 0
    %4554 = vmatpush1.bf16.xpose.msra.mxu0 0
    %4555 = vmatprep.subr.bf16.mxu0 0
    %4556 = vmatpush1.bf16.xpose.msra.mxu0 0
    %4557 = vmatprep.subr.bf16.mxu0 0
    %4558 = vmatpush1.bf16.xpose.msra.mxu0 0
    %4559 = vmatprep.subr.bf16.mxu0 0
    %4560 = vmatpush1.bf16.xpose.msra.mxu0 0
    %4561 = vmatprep.subr.bf16.mxu0 0
    %4562 = vmatpush1.bf16.xpose.msra.mxu0 0
    %4563 = vmatprep.mubr.bf16.mxu0 0
    %4564 = vmatmul.mubr.bf16.gmra.mrb[0].mxu0 %v4526
    %v4565 = vpop.f32.mrb[0].mxu0
    %v4566 = vadd.f32 0.0, %v4565
    %v4567 = vpop.f32.mrb[0].mxu0
    %v4568 = vpop.f32.mrb[0].mxu0
    %v4569 = vpop.f32.mrb[0].mxu0
    %4570 = vdwg.mxu0
    %4572 = vrot.lane.b32.xlu0 %v4302, 96
    %v4573 = vpop.permute.xlu0 %4572
    %4575 = vrot.lane.b32.xlu0 %v4304, 96
    %v4576 = vpop.permute.xlu0 %4575
    %v4578 = vsel %vm822, %v4573, 0
    %v4581 = vsel %vm822, %v4576, 0
    %4583 = vmatprep.subr.bf16.mxu0 0
    %4584 = vmatpush1.bf16.xpose.msra.mxu0 %v4581
    %4585 = vmatprep.subr.bf16.mxu0 0
    %4586 = vmatpush1.bf16.xpose.msra.mxu0 0
    %4587 = vmatprep.subr.bf16.mxu0 0
    %4588 = vmatpush1.bf16.xpose.msra.mxu0 0
    %4589 = vmatprep.subr.bf16.mxu0 0
    %4590 = vmatpush1.bf16.xpose.msra.mxu0 0
    %4591 = vmatprep.subr.bf16.mxu0 0
    %4592 = vmatpush1.bf16.xpose.msra.mxu0 0
    %4593 = vmatprep.subr.bf16.mxu0 0
    %4594 = vmatpush1.bf16.xpose.msra.mxu0 0
    %4595 = vmatprep.subr.bf16.mxu0 0
    %4596 = vmatpush1.bf16.xpose.msra.mxu0 0
    %4597 = vmatprep.subr.bf16.mxu0 0
    %4598 = vmatpush1.bf16.xpose.msra.mxu0 0
    %4599 = vmatprep.subr.bf16.mxu0 0
    %4600 = vmatpush1.bf16.xpose.msra.mxu0 0
    %4601 = vmatprep.subr.bf16.mxu0 0
    %4602 = vmatpush1.bf16.xpose.msra.mxu0 0
    %4603 = vmatprep.subr.bf16.mxu0 0
    %4604 = vmatpush1.bf16.xpose.msra.mxu0 0
    %4605 = vmatprep.subr.bf16.mxu0 0
    %4606 = vmatpush1.bf16.xpose.msra.mxu0 0
    %4607 = vmatprep.subr.bf16.mxu0 0
    %4608 = vmatpush1.bf16.xpose.msra.mxu0 0
    %4609 = vmatprep.subr.bf16.mxu0 0
    %4610 = vmatpush1.bf16.xpose.msra.mxu0 0
    %4611 = vmatprep.subr.bf16.mxu0 0
    %4612 = vmatpush1.bf16.xpose.msra.mxu0 0
    %4613 = vmatprep.subr.bf16.mxu0 0
    %4614 = vmatpush1.bf16.xpose.msra.mxu0 0
    %4615 = vmatprep.mubr.bf16.mxu0 0
    %4616 = vmatmul.mubr.bf16.gmra.mrb[0].mxu0 %v4578
    %v4617 = vpop.f32.mrb[0].mxu0
    %v4618 = vadd.f32 0.0, %v4617
    %v4619 = vpop.f32.mrb[0].mxu0
    %v4620 = vpop.f32.mrb[0].mxu0
    %v4621 = vpop.f32.mrb[0].mxu0
    %4622 = vdwg.mxu0
    %v4623 = vmul.f32 %v4566, 0.17677669
    %v4624 = vmul.f32 %v4618, 0.17677669
    %v4625 = vsel %vm917, %v4623, -inf
    %4626 = vmax.xlane.f32.xlu0 %v4625
    %v4627 = vpop.xlane.xlu0 %4626
    %v4628 = vsel %vm917, %v4624, -inf
    %4629 = vmax.xlane.f32.xlu0 %v4628
    %v4630 = vpop.xlane.xlu0 %4629
    %v4631 = vsub.f32 %v4623, %v4627
    %v4632 = vsub.f32 %v4624, %v4630
    %v4633 = vmul.f32 %v4631, 1.442695
    %v4634 = vpow.pop %v4633
    %v4635 = vmul.f32 %v4632, 1.442695
    %v4636 = vpow.pop %v4635
    %v4637 = vsel %vm917, %v4634, 0.0
    %4638 = vadd.xlane.f32.xlu0 %v4637
    %v4639 = vpop.xlane.xlu0 %4638
    %v4640 = vsel %vm917, %v4636, 0.0
    %4641 = vadd.xlane.f32.xlu0 %v4640
    %v4642 = vpop.xlane.xlu0 %4641
    %v4643 = vrcp.pop %v4639
    %v4644 = vrcp.pop %v4642
    %v4645 = vmul.f32 %v4634, %v4643
    %v4646 = vmul.f32 %v4636, %v4644
    %v4647 = vpack.c.bf16 %v4645, %v4645
    %v4648 = vpack.c.bf16 %v4646, %v4646
    %4650 = vrot.lane.b32.xlu0 %v4423, 96
    %v4651 = vpop.permute.xlu0 %4650
    %v4653 = vsel %vm917, %v4647, 0
    %v4656 = vsel %vm947, %v4651, 0
    %4658 = vmatprep.subr.bf16.mxu0 0
    %4659 = vmatpush1.bf16.msra.mxu0 %v4656
    %4660 = vmatprep.subr.bf16.mxu0 0
    %4661 = vmatpush1.bf16.msra.mxu0 0
    %4662 = vmatprep.subr.bf16.mxu0 0
    %4663 = vmatpush1.bf16.msra.mxu0 0
    %4664 = vmatprep.subr.bf16.mxu0 0
    %4665 = vmatpush1.bf16.msra.mxu0 0
    %4666 = vmatprep.subr.bf16.mxu0 0
    %4667 = vmatpush1.bf16.msra.mxu0 0
    %4668 = vmatprep.subr.bf16.mxu0 0
    %4669 = vmatpush1.bf16.msra.mxu0 0
    %4670 = vmatprep.subr.bf16.mxu0 0
    %4671 = vmatpush1.bf16.msra.mxu0 0
    %4672 = vmatprep.subr.bf16.mxu0 0
    %4673 = vmatpush1.bf16.msra.mxu0 0
    %4674 = vmatprep.subr.bf16.mxu0 0
    %4675 = vmatpush1.bf16.msra.mxu0 0
    %4676 = vmatprep.subr.bf16.mxu0 0
    %4677 = vmatpush1.bf16.msra.mxu0 0
    %4678 = vmatprep.subr.bf16.mxu0 0
    %4679 = vmatpush1.bf16.msra.mxu0 0
    %4680 = vmatprep.subr.bf16.mxu0 0
    %4681 = vmatpush1.bf16.msra.mxu0 0
    %4682 = vmatprep.subr.bf16.mxu0 0
    %4683 = vmatpush1.bf16.msra.mxu0 0
    %4684 = vmatprep.subr.bf16.mxu0 0
    %4685 = vmatpush1.bf16.msra.mxu0 0
    %4686 = vmatprep.subr.bf16.mxu0 0
    %4687 = vmatpush1.bf16.msra.mxu0 0
    %4688 = vmatprep.subr.bf16.mxu0 0
    %4689 = vmatpush1.bf16.msra.mxu0 0
    %4690 = vmatprep.mubr.bf16.mxu0 0
    %4691 = vmatmul.mubr.bf16.gmra.mrb[0].mxu0 %v4653
    %v4692 = vpop.f32.mrb[0].mxu0
    %v4693 = vadd.f32 0.0, %v4692
    %v4694 = vpop.f32.mrb[0].mxu0
    %v4695 = vpop.f32.mrb[0].mxu0
    %v4696 = vpop.f32.mrb[0].mxu0
    %4697 = vdwg.mxu0
    %4699 = vrot.lane.b32.xlu0 %v4424, 96
    %v4700 = vpop.permute.xlu0 %4699
    %v4702 = vsel %vm917, %v4648, 0
    %v4705 = vsel %vm947, %v4700, 0
    %4707 = vmatprep.subr.bf16.mxu0 0
    %4708 = vmatpush1.bf16.msra.mxu0 %v4705
    %4709 = vmatprep.subr.bf16.mxu0 0
    %4710 = vmatpush1.bf16.msra.mxu0 0
    %4711 = vmatprep.subr.bf16.mxu0 0
    %4712 = vmatpush1.bf16.msra.mxu0 0
    %4713 = vmatprep.subr.bf16.mxu0 0
    %4714 = vmatpush1.bf16.msra.mxu0 0
    %4715 = vmatprep.subr.bf16.mxu0 0
    %4716 = vmatpush1.bf16.msra.mxu0 0
    %4717 = vmatprep.subr.bf16.mxu0 0
    %4718 = vmatpush1.bf16.msra.mxu0 0
    %4719 = vmatprep.subr.bf16.mxu0 0
    %4720 = vmatpush1.bf16.msra.mxu0 0
    %4721 = vmatprep.subr.bf16.mxu0 0
    %4722 = vmatpush1.bf16.msra.mxu0 0
    %4723 = vmatprep.subr.bf16.mxu0 0
    %4724 = vmatpush1.bf16.msra.mxu0 0
    %4725 = vmatprep.subr.bf16.mxu0 0
    %4726 = vmatpush1.bf16.msra.mxu0 0
    %4727 = vmatprep.subr.bf16.mxu0 0
    %4728 = vmatpush1.bf16.msra.mxu0 0
    %4729 = vmatprep.subr.bf16.mxu0 0
    %4730 = vmatpush1.bf16.msra.mxu0 0
    %4731 = vmatprep.subr.bf16.mxu0 0
    %4732 = vmatpush1.bf16.msra.mxu0 0
    %4733 = vmatprep.subr.bf16.mxu0 0
    %4734 = vmatpush1.bf16.msra.mxu0 0
    %4735 = vmatprep.subr.bf16.mxu0 0
    %4736 = vmatpush1.bf16.msra.mxu0 0
    %4737 = vmatprep.subr.bf16.mxu0 0
    %4738 = vmatpush1.bf16.msra.mxu0 0
    %4739 = vmatprep.mubr.bf16.mxu0 0
    %4740 = vmatmul.mubr.bf16.gmra.mrb[0].mxu0 %v4702
    %v4741 = vpop.f32.mrb[0].mxu0
    %v4742 = vadd.f32 0.0, %v4741
    %v4743 = vpop.f32.mrb[0].mxu0
    %v4744 = vpop.f32.mrb[0].mxu0
    %v4745 = vpop.f32.mrb[0].mxu0
    %4746 = vdwg.mxu0
    %4749 = vrot.lane.b32.xlu0 %v4693, 32
    %v4750 = vpop.permute.xlu0 %4749
    %4751 = vrot.lane.b32.xlu0 %v4742, 32
    %v4752 = vpop.permute.xlu0 %4751
    %4755 = vst.msk [vmem:[#allocation2] sm:$0xff] %vm1275, %v4750
    %4756 = vst.msk [vmem:[#allocation2 + $0x10] sm:$0xff] %vm1275, %v4752
    %4757 = vrot.lane.b32.xlu0 %v4301, 64
    %v4758 = vpop.permute.xlu0 %4757
    %4759 = vrot.lane.b32.xlu0 %v4303, 64
    %v4760 = vpop.permute.xlu0 %4759
    %v4762 = vsel %vm822, %v4758, 0
    %v4765 = vsel %vm822, %v4760, 0
    %4767 = vmatprep.subr.bf16.mxu0 0
    %4768 = vmatpush1.bf16.xpose.msra.mxu0 %v4765
    %4769 = vmatprep.subr.bf16.mxu0 0
    %4770 = vmatpush1.bf16.xpose.msra.mxu0 0
    %4771 = vmatprep.subr.bf16.mxu0 0
    %4772 = vmatpush1.bf16.xpose.msra.mxu0 0
    %4773 = vmatprep.subr.bf16.mxu0 0
    %4774 = vmatpush1.bf16.xpose.msra.mxu0 0
    %4775 = vmatprep.subr.bf16.mxu0 0
    %4776 = vmatpush1.bf16.xpose.msra.mxu0 0
    %4777 = vmatprep.subr.bf16.mxu0 0
    %4778 = vmatpush1.bf16.xpose.msra.mxu0 0
    %4779 = vmatprep.subr.bf16.mxu0 0
    %4780 = vmatpush1.bf16.xpose.msra.mxu0 0
    %4781 = vmatprep.subr.bf16.mxu0 0
    %4782 = vmatpush1.bf16.xpose.msra.mxu0 0
    %4783 = vmatprep.subr.bf16.mxu0 0
    %4784 = vmatpush1.bf16.xpose.msra.mxu0 0
    %4785 = vmatprep.subr.bf16.mxu0 0
    %4786 = vmatpush1.bf16.xpose.msra.mxu0 0
    %4787 = vmatprep.subr.bf16.mxu0 0
    %4788 = vmatpush1.bf16.xpose.msra.mxu0 0
    %4789 = vmatprep.subr.bf16.mxu0 0
    %4790 = vmatpush1.bf16.xpose.msra.mxu0 0
    %4791 = vmatprep.subr.bf16.mxu0 0
    %4792 = vmatpush1.bf16.xpose.msra.mxu0 0
    %4793 = vmatprep.subr.bf16.mxu0 0
    %4794 = vmatpush1.bf16.xpose.msra.mxu0 0
    %4795 = vmatprep.subr.bf16.mxu0 0
    %4796 = vmatpush1.bf16.xpose.msra.mxu0 0
    %4797 = vmatprep.subr.bf16.mxu0 0
    %4798 = vmatpush1.bf16.xpose.msra.mxu0 0
    %4799 = vmatprep.mubr.bf16.mxu0 0
    %4800 = vmatmul.mubr.bf16.gmra.mrb[0].mxu0 %v4762
    %v4801 = vpop.f32.mrb[0].mxu0
    %v4802 = vadd.f32 0.0, %v4801
    %v4803 = vpop.f32.mrb[0].mxu0
    %v4804 = vpop.f32.mrb[0].mxu0
    %v4805 = vpop.f32.mrb[0].mxu0
    %4806 = vdwg.mxu0
    %4807 = vrot.lane.b32.xlu0 %v4302, 64
    %v4808 = vpop.permute.xlu0 %4807
    %4809 = vrot.lane.b32.xlu0 %v4304, 64
    %v4810 = vpop.permute.xlu0 %4809
    %v4812 = vsel %vm822, %v4808, 0
    %v4815 = vsel %vm822, %v4810, 0
    %4817 = vmatprep.subr.bf16.mxu0 0
    %4818 = vmatpush1.bf16.xpose.msra.mxu0 %v4815
    %4819 = vmatprep.subr.bf16.mxu0 0
    %4820 = vmatpush1.bf16.xpose.msra.mxu0 0
    %4821 = vmatprep.subr.bf16.mxu0 0
    %4822 = vmatpush1.bf16.xpose.msra.mxu0 0
    %4823 = vmatprep.subr.bf16.mxu0 0
    %4824 = vmatpush1.bf16.xpose.msra.mxu0 0
    %4825 = vmatprep.subr.bf16.mxu0 0
    %4826 = vmatpush1.bf16.xpose.msra.mxu0 0
    %4827 = vmatprep.subr.bf16.mxu0 0
    %4828 = vmatpush1.bf16.xpose.msra.mxu0 0
    %4829 = vmatprep.subr.bf16.mxu0 0
    %4830 = vmatpush1.bf16.xpose.msra.mxu0 0
    %4831 = vmatprep.subr.bf16.mxu0 0
    %4832 = vmatpush1.bf16.xpose.msra.mxu0 0
    %4833 = vmatprep.subr.bf16.mxu0 0
    %4834 = vmatpush1.bf16.xpose.msra.mxu0 0
    %4835 = vmatprep.subr.bf16.mxu0 0
    %4836 = vmatpush1.bf16.xpose.msra.mxu0 0
    %4837 = vmatprep.subr.bf16.mxu0 0
    %4838 = vmatpush1.bf16.xpose.msra.mxu0 0
    %4839 = vmatprep.subr.bf16.mxu0 0
    %4840 = vmatpush1.bf16.xpose.msra.mxu0 0
    %4841 = vmatprep.subr.bf16.mxu0 0
    %4842 = vmatpush1.bf16.xpose.msra.mxu0 0
    %4843 = vmatprep.subr.bf16.mxu0 0
    %4844 = vmatpush1.bf16.xpose.msra.mxu0 0
    %4845 = vmatprep.subr.bf16.mxu0 0
    %4846 = vmatpush1.bf16.xpose.msra.mxu0 0
    %4847 = vmatprep.subr.bf16.mxu0 0
    %4848 = vmatpush1.bf16.xpose.msra.mxu0 0
    %4849 = vmatprep.mubr.bf16.mxu0 0
    %4850 = vmatmul.mubr.bf16.gmra.mrb[0].mxu0 %v4812
    %v4851 = vpop.f32.mrb[0].mxu0
    %v4852 = vadd.f32 0.0, %v4851
    %v4853 = vpop.f32.mrb[0].mxu0
    %v4854 = vpop.f32.mrb[0].mxu0
    %v4855 = vpop.f32.mrb[0].mxu0
    %4856 = vdwg.mxu0
    %v4857 = vmul.f32 %v4802, 0.17677669
    %v4858 = vmul.f32 %v4852, 0.17677669
    %v4859 = vsel %vm917, %v4857, -inf
    %4860 = vmax.xlane.f32.xlu0 %v4859
    %v4861 = vpop.xlane.xlu0 %4860
    %v4862 = vsel %vm917, %v4858, -inf
    %4863 = vmax.xlane.f32.xlu0 %v4862
    %v4864 = vpop.xlane.xlu0 %4863
    %v4865 = vsub.f32 %v4857, %v4861
    %v4866 = vsub.f32 %v4858, %v4864
    %v4867 = vmul.f32 %v4865, 1.442695
    %v4868 = vpow.pop %v4867
    %v4869 = vmul.f32 %v4866, 1.442695
    %v4870 = vpow.pop %v4869
    %v4871 = vsel %vm917, %v4868, 0.0
    %4872 = vadd.xlane.f32.xlu0 %v4871
    %v4873 = vpop.xlane.xlu0 %4872
    %v4874 = vsel %vm917, %v4870, 0.0
    %4875 = vadd.xlane.f32.xlu0 %v4874
    %v4876 = vpop.xlane.xlu0 %4875
    %v4877 = vrcp.pop %v4873
    %v4878 = vrcp.pop %v4876
    %v4879 = vmul.f32 %v4868, %v4877
    %v4880 = vmul.f32 %v4870, %v4878
    %v4881 = vpack.c.bf16 %v4879, %v4879
    %v4882 = vpack.c.bf16 %v4880, %v4880
    %4883 = vrot.lane.b32.xlu0 %v4423, 64
    %v4884 = vpop.permute.xlu0 %4883
    %v4886 = vsel %vm917, %v4881, 0
    %v4889 = vsel %vm947, %v4884, 0
    %4891 = vmatprep.subr.bf16.mxu0 0
    %4892 = vmatpush1.bf16.msra.mxu0 %v4889
    %4893 = vmatprep.subr.bf16.mxu0 0
    %4894 = vmatpush1.bf16.msra.mxu0 0
    %4895 = vmatprep.subr.bf16.mxu0 0
    %4896 = vmatpush1.bf16.msra.mxu0 0
    %4897 = vmatprep.subr.bf16.mxu0 0
    %4898 = vmatpush1.bf16.msra.mxu0 0
    %4899 = vmatprep.subr.bf16.mxu0 0
    %4900 = vmatpush1.bf16.msra.mxu0 0
    %4901 = vmatprep.subr.bf16.mxu0 0
    %4902 = vmatpush1.bf16.msra.mxu0 0
    %4903 = vmatprep.subr.bf16.mxu0 0
    %4904 = vmatpush1.bf16.msra.mxu0 0
    %4905 = vmatprep.subr.bf16.mxu0 0
    %4906 = vmatpush1.bf16.msra.mxu0 0
    %4907 = vmatprep.subr.bf16.mxu0 0
    %4908 = vmatpush1.bf16.msra.mxu0 0
    %4909 = vmatprep.subr.bf16.mxu0 0
    %4910 = vmatpush1.bf16.msra.mxu0 0
    %4911 = vmatprep.subr.bf16.mxu0 0
    %4912 = vmatpush1.bf16.msra.mxu0 0
    %4913 = vmatprep.subr.bf16.mxu0 0
    %4914 = vmatpush1.bf16.msra.mxu0 0
    %4915 = vmatprep.subr.bf16.mxu0 0
    %4916 = vmatpush1.bf16.msra.mxu0 0
    %4917 = vmatprep.subr.bf16.mxu0 0
    %4918 = vmatpush1.bf16.msra.mxu0 0
    %4919 = vmatprep.subr.bf16.mxu0 0
    %4920 = vmatpush1.bf16.msra.mxu0 0
    %4921 = vmatprep.subr.bf16.mxu0 0
    %4922 = vmatpush1.bf16.msra.mxu0 0
    %4923 = vmatprep.mubr.bf16.mxu0 0
    %4924 = vmatmul.mubr.bf16.gmra.mrb[0].mxu0 %v4886
    %v4925 = vpop.f32.mrb[0].mxu0
    %v4926 = vadd.f32 0.0, %v4925
    %v4927 = vpop.f32.mrb[0].mxu0
    %v4928 = vpop.f32.mrb[0].mxu0
    %v4929 = vpop.f32.mrb[0].mxu0
    %4930 = vdwg.mxu0
    %4931 = vrot.lane.b32.xlu0 %v4424, 64
    %v4932 = vpop.permute.xlu0 %4931
    %v4934 = vsel %vm917, %v4882, 0
    %v4937 = vsel %vm947, %v4932, 0
    %4939 = vmatprep.subr.bf16.mxu0 0
    %4940 = vmatpush1.bf16.msra.mxu0 %v4937
    %4941 = vmatprep.subr.bf16.mxu0 0
    %4942 = vmatpush1.bf16.msra.mxu0 0
    %4943 = vmatprep.subr.bf16.mxu0 0
    %4944 = vmatpush1.bf16.msra.mxu0 0
    %4945 = vmatprep.subr.bf16.mxu0 0
    %4946 = vmatpush1.bf16.msra.mxu0 0
    %4947 = vmatprep.subr.bf16.mxu0 0
    %4948 = vmatpush1.bf16.msra.mxu0 0
    %4949 = vmatprep.subr.bf16.mxu0 0
    %4950 = vmatpush1.bf16.msra.mxu0 0
    %4951 = vmatprep.subr.bf16.mxu0 0
    %4952 = vmatpush1.bf16.msra.mxu0 0
    %4953 = vmatprep.subr.bf16.mxu0 0
    %4954 = vmatpush1.bf16.msra.mxu0 0
    %4955 = vmatprep.subr.bf16.mxu0 0
    %4956 = vmatpush1.bf16.msra.mxu0 0
    %4957 = vmatprep.subr.bf16.mxu0 0
    %4958 = vmatpush1.bf16.msra.mxu0 0
    %4959 = vmatprep.subr.bf16.mxu0 0
    %4960 = vmatpush1.bf16.msra.mxu0 0
    %4961 = vmatprep.subr.bf16.mxu0 0
    %4962 = vmatpush1.bf16.msra.mxu0 0
    %4963 = vmatprep.subr.bf16.mxu0 0
    %4964 = vmatpush1.bf16.msra.mxu0 0
    %4965 = vmatprep.subr.bf16.mxu0 0
    %4966 = vmatpush1.bf16.msra.mxu0 0
    %4967 = vmatprep.subr.bf16.mxu0 0
    %4968 = vmatpush1.bf16.msra.mxu0 0
    %4969 = vmatprep.subr.bf16.mxu0 0
    %4970 = vmatpush1.bf16.msra.mxu0 0
    %4971 = vmatprep.mubr.bf16.mxu0 0
    %4972 = vmatmul.mubr.bf16.gmra.mrb[0].mxu0 %v4934
    %v4973 = vpop.f32.mrb[0].mxu0
    %v4974 = vadd.f32 0.0, %v4973
    %v4975 = vpop.f32.mrb[0].mxu0
    %v4976 = vpop.f32.mrb[0].mxu0
    %v4977 = vpop.f32.mrb[0].mxu0
    %4978 = vdwg.mxu0
    %4981 = vrot.lane.b32.xlu0 %v4926, 64
    %v4982 = vpop.permute.xlu0 %4981
    %4983 = vrot.lane.b32.xlu0 %v4974, 64
    %v4984 = vpop.permute.xlu0 %4983
    %4987 = vst.msk [vmem:[#allocation2] sm:$0xff] %vm1508, %v4982
    %4988 = vst.msk [vmem:[#allocation2 + $0x10] sm:$0xff] %vm1508, %v4984
    %4989 = vrot.lane.b32.xlu0 %v4301, 32
    %v4990 = vpop.permute.xlu0 %4989
    %4991 = vrot.lane.b32.xlu0 %v4303, 32
    %v4992 = vpop.permute.xlu0 %4991
    %v4994 = vsel %vm822, %v4990, 0
    %v4997 = vsel %vm822, %v4992, 0
    %4999 = vmatprep.subr.bf16.mxu0 0
    %5000 = vmatpush1.bf16.xpose.msra.mxu0 %v4997
    %5001 = vmatprep.subr.bf16.mxu0 0
    %5002 = vmatpush1.bf16.xpose.msra.mxu0 0
    %5003 = vmatprep.subr.bf16.mxu0 0
    %5004 = vmatpush1.bf16.xpose.msra.mxu0 0
    %5005 = vmatprep.subr.bf16.mxu0 0
    %5006 = vmatpush1.bf16.xpose.msra.mxu0 0
    %5007 = vmatprep.subr.bf16.mxu0 0
    %5008 = vmatpush1.bf16.xpose.msra.mxu0 0
    %5009 = vmatprep.subr.bf16.mxu0 0
    %5010 = vmatpush1.bf16.xpose.msra.mxu0 0
    %5011 = vmatprep.subr.bf16.mxu0 0
    %5012 = vmatpush1.bf16.xpose.msra.mxu0 0
    %5013 = vmatprep.subr.bf16.mxu0 0
    %5014 = vmatpush1.bf16.xpose.msra.mxu0 0
    %5015 = vmatprep.subr.bf16.mxu0 0
    %5016 = vmatpush1.bf16.xpose.msra.mxu0 0
    %5017 = vmatprep.subr.bf16.mxu0 0
    %5018 = vmatpush1.bf16.xpose.msra.mxu0 0
    %5019 = vmatprep.subr.bf16.mxu0 0
    %5020 = vmatpush1.bf16.xpose.msra.mxu0 0
    %5021 = vmatprep.subr.bf16.mxu0 0
    %5022 = vmatpush1.bf16.xpose.msra.mxu0 0
    %5023 = vmatprep.subr.bf16.mxu0 0
    %5024 = vmatpush1.bf16.xpose.msra.mxu0 0
    %5025 = vmatprep.subr.bf16.mxu0 0
    %5026 = vmatpush1.bf16.xpose.msra.mxu0 0
    %5027 = vmatprep.subr.bf16.mxu0 0
    %5028 = vmatpush1.bf16.xpose.msra.mxu0 0
    %5029 = vmatprep.subr.bf16.mxu0 0
    %5030 = vmatpush1.bf16.xpose.msra.mxu0 0
    %5031 = vmatprep.mubr.bf16.mxu0 0
    %5032 = vmatmul.mubr.bf16.gmra.mrb[0].mxu0 %v4994
    %v5033 = vpop.f32.mrb[0].mxu0
    %v5034 = vadd.f32 0.0, %v5033
    %v5035 = vpop.f32.mrb[0].mxu0
    %v5036 = vpop.f32.mrb[0].mxu0
    %v5037 = vpop.f32.mrb[0].mxu0
    %5038 = vdwg.mxu0
    %5039 = vrot.lane.b32.xlu0 %v4302, 32
    %v5040 = vpop.permute.xlu0 %5039
    %5041 = vrot.lane.b32.xlu0 %v4304, 32
    %v5042 = vpop.permute.xlu0 %5041
    %v5044 = vsel %vm822, %v5040, 0
    %v5047 = vsel %vm822, %v5042, 0
    %5049 = vmatprep.subr.bf16.mxu0 0
    %5050 = vmatpush1.bf16.xpose.msra.mxu0 %v5047
    %5051 = vmatprep.subr.bf16.mxu0 0
    %5052 = vmatpush1.bf16.xpose.msra.mxu0 0
    %5053 = vmatprep.subr.bf16.mxu0 0
    %5054 = vmatpush1.bf16.xpose.msra.mxu0 0
    %5055 = vmatprep.subr.bf16.mxu0 0
    %5056 = vmatpush1.bf16.xpose.msra.mxu0 0
    %5057 = vmatprep.subr.bf16.mxu0 0
    %5058 = vmatpush1.bf16.xpose.msra.mxu0 0
    %5059 = vmatprep.subr.bf16.mxu0 0
    %5060 = vmatpush1.bf16.xpose.msra.mxu0 0
    %5061 = vmatprep.subr.bf16.mxu0 0
    %5062 = vmatpush1.bf16.xpose.msra.mxu0 0
    %5063 = vmatprep.subr.bf16.mxu0 0
    %5064 = vmatpush1.bf16.xpose.msra.mxu0 0
    %5065 = vmatprep.subr.bf16.mxu0 0
    %5066 = vmatpush1.bf16.xpose.msra.mxu0 0
    %5067 = vmatprep.subr.bf16.mxu0 0
    %5068 = vmatpush1.bf16.xpose.msra.mxu0 0
    %5069 = vmatprep.subr.bf16.mxu0 0
    %5070 = vmatpush1.bf16.xpose.msra.mxu0 0
    %5071 = vmatprep.subr.bf16.mxu0 0
    %5072 = vmatpush1.bf16.xpose.msra.mxu0 0
    %5073 = vmatprep.subr.bf16.mxu0 0
    %5074 = vmatpush1.bf16.xpose.msra.mxu0 0
    %5075 = vmatprep.subr.bf16.mxu0 0
    %5076 = vmatpush1.bf16.xpose.msra.mxu0 0
    %5077 = vmatprep.subr.bf16.mxu0 0
    %5078 = vmatpush1.bf16.xpose.msra.mxu0 0
    %5079 = vmatprep.subr.bf16.mxu0 0
    %5080 = vmatpush1.bf16.xpose.msra.mxu0 0
    %5081 = vmatprep.mubr.bf16.mxu0 0
    %5082 = vmatmul.mubr.bf16.gmra.mrb[0].mxu0 %v5044
    %v5083 = vpop.f32.mrb[0].mxu0
    %v5084 = vadd.f32 0.0, %v5083
    %v5085 = vpop.f32.mrb[0].mxu0
    %v5086 = vpop.f32.mrb[0].mxu0
    %v5087 = vpop.f32.mrb[0].mxu0
    %5088 = vdwg.mxu0
    %v5089 = vmul.f32 %v5034, 0.17677669
    %v5090 = vmul.f32 %v5084, 0.17677669
    %v5091 = vsel %vm917, %v5089, -inf
    %5092 = vmax.xlane.f32.xlu0 %v5091
    %v5093 = vpop.xlane.xlu0 %5092
    %v5094 = vsel %vm917, %v5090, -inf
    %5095 = vmax.xlane.f32.xlu0 %v5094
    %v5096 = vpop.xlane.xlu0 %5095
    %v5097 = vsub.f32 %v5089, %v5093
    %v5098 = vsub.f32 %v5090, %v5096
    %v5099 = vmul.f32 %v5097, 1.442695
    %v5100 = vpow.pop %v5099
    %v5101 = vmul.f32 %v5098, 1.442695
    %v5102 = vpow.pop %v5101
    %v5103 = vsel %vm917, %v5100, 0.0
    %5104 = vadd.xlane.f32.xlu0 %v5103
    %v5105 = vpop.xlane.xlu0 %5104
    %v5106 = vsel %vm917, %v5102, 0.0
    %5107 = vadd.xlane.f32.xlu0 %v5106
    %v5108 = vpop.xlane.xlu0 %5107
    %v5109 = vrcp.pop %v5105
    %v5110 = vrcp.pop %v5108
    %v5111 = vmul.f32 %v5100, %v5109
    %v5112 = vmul.f32 %v5102, %v5110
    %v5113 = vpack.c.bf16 %v5111, %v5111
    %v5114 = vpack.c.bf16 %v5112, %v5112
    %5115 = vrot.lane.b32.xlu0 %v4423, 32
    %v5116 = vpop.permute.xlu0 %5115
    %v5118 = vsel %vm917, %v5113, 0
    %v5121 = vsel %vm947, %v5116, 0
    %5123 = vmatprep.subr.bf16.mxu0 0
    %5124 = vmatpush1.bf16.msra.mxu0 %v5121
    %5125 = vmatprep.subr.bf16.mxu0 0
    %5126 = vmatpush1.bf16.msra.mxu0 0
    %5127 = vmatprep.subr.bf16.mxu0 0
    %5128 = vmatpush1.bf16.msra.mxu0 0
    %5129 = vmatprep.subr.bf16.mxu0 0
    %5130 = vmatpush1.bf16.msra.mxu0 0
    %5131 = vmatprep.subr.bf16.mxu0 0
    %5132 = vmatpush1.bf16.msra.mxu0 0
    %5133 = vmatprep.subr.bf16.mxu0 0
    %5134 = vmatpush1.bf16.msra.mxu0 0
    %5135 = vmatprep.subr.bf16.mxu0 0
    %5136 = vmatpush1.bf16.msra.mxu0 0
    %5137 = vmatprep.subr.bf16.mxu0 0
    %5138 = vmatpush1.bf16.msra.mxu0 0
    %5139 = vmatprep.subr.bf16.mxu0 0
    %5140 = vmatpush1.bf16.msra.mxu0 0
    %5141 = vmatprep.subr.bf16.mxu0 0
    %5142 = vmatpush1.bf16.msra.mxu0 0
    %5143 = vmatprep.subr.bf16.mxu0 0
    %5144 = vmatpush1.bf16.msra.mxu0 0
    %5145 = vmatprep.subr.bf16.mxu0 0
    %5146 = vmatpush1.bf16.msra.mxu0 0
    %5147 = vmatprep.subr.bf16.mxu0 0
    %5148 = vmatpush1.bf16.msra.mxu0 0
    %5149 = vmatprep.subr.bf16.mxu0 0
    %5150 = vmatpush1.bf16.msra.mxu0 0
    %5151 = vmatprep.subr.bf16.mxu0 0
    %5152 = vmatpush1.bf16.msra.mxu0 0
    %5153 = vmatprep.subr.bf16.mxu0 0
    %5154 = vmatpush1.bf16.msra.mxu0 0
    %5155 = vmatprep.mubr.bf16.mxu0 0
    %5156 = vmatmul.mubr.bf16.gmra.mrb[0].mxu0 %v5118
    %v5157 = vpop.f32.mrb[0].mxu0
    %v5158 = vadd.f32 0.0, %v5157
    %v5159 = vpop.f32.mrb[0].mxu0
    %v5160 = vpop.f32.mrb[0].mxu0
    %v5161 = vpop.f32.mrb[0].mxu0
    %5162 = vdwg.mxu0
    %5163 = vrot.lane.b32.xlu0 %v4424, 32
    %v5164 = vpop.permute.xlu0 %5163
    %v5166 = vsel %vm917, %v5114, 0
    %v5169 = vsel %vm947, %v5164, 0
    %5171 = vmatprep.subr.bf16.mxu0 0
    %5172 = vmatpush1.bf16.msra.mxu0 %v5169
    %5173 = vmatprep.subr.bf16.mxu0 0
    %5174 = vmatpush1.bf16.msra.mxu0 0
    %5175 = vmatprep.subr.bf16.mxu0 0
    %5176 = vmatpush1.bf16.msra.mxu0 0
    %5177 = vmatprep.subr.bf16.mxu0 0
    %5178 = vmatpush1.bf16.msra.mxu0 0
    %5179 = vmatprep.subr.bf16.mxu0 0
    %5180 = vmatpush1.bf16.msra.mxu0 0
    %5181 = vmatprep.subr.bf16.mxu0 0
    %5182 = vmatpush1.bf16.msra.mxu0 0
    %5183 = vmatprep.subr.bf16.mxu0 0
    %5184 = vmatpush1.bf16.msra.mxu0 0
    %5185 = vmatprep.subr.bf16.mxu0 0
    %5186 = vmatpush1.bf16.msra.mxu0 0
    %5187 = vmatprep.subr.bf16.mxu0 0
    %5188 = vmatpush1.bf16.msra.mxu0 0
    %5189 = vmatprep.subr.bf16.mxu0 0
    %5190 = vmatpush1.bf16.msra.mxu0 0
    %5191 = vmatprep.subr.bf16.mxu0 0
    %5192 = vmatpush1.bf16.msra.mxu0 0
    %5193 = vmatprep.subr.bf16.mxu0 0
    %5194 = vmatpush1.bf16.msra.mxu0 0
    %5195 = vmatprep.subr.bf16.mxu0 0
    %5196 = vmatpush1.bf16.msra.mxu0 0
    %5197 = vmatprep.subr.bf16.mxu0 0
    %5198 = vmatpush1.bf16.msra.mxu0 0
    %5199 = vmatprep.subr.bf16.mxu0 0
    %5200 = vmatpush1.bf16.msra.mxu0 0
    %5201 = vmatprep.subr.bf16.mxu0 0
    %5202 = vmatpush1.bf16.msra.mxu0 0
    %5203 = vmatprep.mubr.bf16.mxu0 0
    %5204 = vmatmul.mubr.bf16.gmra.mrb[0].mxu0 %v5166
    %v5205 = vpop.f32.mrb[0].mxu0
    %v5206 = vadd.f32 0.0, %v5205
    %v5207 = vpop.f32.mrb[0].mxu0
    %v5208 = vpop.f32.mrb[0].mxu0
    %v5209 = vpop.f32.mrb[0].mxu0
    %5210 = vdwg.mxu0
    %5213 = vrot.lane.b32.xlu0 %v5158, 96
    %v5214 = vpop.permute.xlu0 %5213
    %5215 = vrot.lane.b32.xlu0 %v5206, 96
    %v5216 = vpop.permute.xlu0 %5215
    %5219 = vst.msk [vmem:[#allocation2] sm:$0xff] %vm1741, %v5214
    %5220 = vst.msk [vmem:[#allocation2 + $0x10] sm:$0xff] %vm1741, %v5216
    %v5221 = vpack.c.bf16 %v4209, %v4209
    %v5222 = vpack.c.bf16 %v4213, %v4213
    %v5223 = vpack.c.bf16 %v4252, %v4252
    %v5224 = vpack.c.bf16 %v4256, %v4256
    %v5226 = vsel %vm822, %v5221, 0
    %v5229 = vsel %vm822, %v5223, 0
    %5231 = vmatprep.subr.bf16.mxu0 0
    %5232 = vmatpush1.bf16.xpose.msra.mxu0 %v5229
    %5233 = vmatprep.subr.bf16.mxu0 0
    %5234 = vmatpush1.bf16.xpose.msra.mxu0 0
    %5235 = vmatprep.subr.bf16.mxu0 0
    %5236 = vmatpush1.bf16.xpose.msra.mxu0 0
    %5237 = vmatprep.subr.bf16.mxu0 0
    %5238 = vmatpush1.bf16.xpose.msra.mxu0 0
    %5239 = vmatprep.subr.bf16.mxu0 0
    %5240 = vmatpush1.bf16.xpose.msra.mxu0 0
    %5241 = vmatprep.subr.bf16.mxu0 0
    %5242 = vmatpush1.bf16.xpose.msra.mxu0 0
    %5243 = vmatprep.subr.bf16.mxu0 0
    %5244 = vmatpush1.bf16.xpose.msra.mxu0 0
    %5245 = vmatprep.subr.bf16.mxu0 0
    %5246 = vmatpush1.bf16.xpose.msra.mxu0 0
    %5247 = vmatprep.subr.bf16.mxu0 0
    %5248 = vmatpush1.bf16.xpose.msra.mxu0 0
    %5249 = vmatprep.subr.bf16.mxu0 0
    %5250 = vmatpush1.bf16.xpose.msra.mxu0 0
    %5251 = vmatprep.subr.bf16.mxu0 0
    %5252 = vmatpush1.bf16.xpose.msra.mxu0 0
    %5253 = vmatprep.subr.bf16.mxu0 0
    %5254 = vmatpush1.bf16.xpose.msra.mxu0 0
    %5255 = vmatprep.subr.bf16.mxu0 0
    %5256 = vmatpush1.bf16.xpose.msra.mxu0 0
    %5257 = vmatprep.subr.bf16.mxu0 0
    %5258 = vmatpush1.bf16.xpose.msra.mxu0 0
    %5259 = vmatprep.subr.bf16.mxu0 0
    %5260 = vmatpush1.bf16.xpose.msra.mxu0 0
    %5261 = vmatprep.subr.bf16.mxu0 0
    %5262 = vmatpush1.bf16.xpose.msra.mxu0 0
    %5263 = vmatprep.mubr.bf16.mxu0 0
    %5264 = vmatmul.mubr.bf16.gmra.mrb[0].mxu0 %v5226
    %v5265 = vpop.f32.mrb[0].mxu0
    %v5266 = vadd.f32 0.0, %v5265
    %v5267 = vpop.f32.mrb[0].mxu0
    %v5268 = vpop.f32.mrb[0].mxu0
    %v5269 = vpop.f32.mrb[0].mxu0
    %5270 = vdwg.mxu0
    %v5272 = vsel %vm822, %v5222, 0
    %v5275 = vsel %vm822, %v5224, 0
    %5277 = vmatprep.subr.bf16.mxu0 0
    %5278 = vmatpush1.bf16.xpose.msra.mxu0 %v5275
    %5279 = vmatprep.subr.bf16.mxu0 0
    %5280 = vmatpush1.bf16.xpose.msra.mxu0 0
    %5281 = vmatprep.subr.bf16.mxu0 0
    %5282 = vmatpush1.bf16.xpose.msra.mxu0 0
    %5283 = vmatprep.subr.bf16.mxu0 0
    %5284 = vmatpush1.bf16.xpose.msra.mxu0 0
    %5285 = vmatprep.subr.bf16.mxu0 0
    %5286 = vmatpush1.bf16.xpose.msra.mxu0 0
    %5287 = vmatprep.subr.bf16.mxu0 0
    %5288 = vmatpush1.bf16.xpose.msra.mxu0 0
    %5289 = vmatprep.subr.bf16.mxu0 0
    %5290 = vmatpush1.bf16.xpose.msra.mxu0 0
    %5291 = vmatprep.subr.bf16.mxu0 0
    %5292 = vmatpush1.bf16.xpose.msra.mxu0 0
    %5293 = vmatprep.subr.bf16.mxu0 0
    %5294 = vmatpush1.bf16.xpose.msra.mxu0 0
    %5295 = vmatprep.subr.bf16.mxu0 0
    %5296 = vmatpush1.bf16.xpose.msra.mxu0 0
    %5297 = vmatprep.subr.bf16.mxu0 0
    %5298 = vmatpush1.bf16.xpose.msra.mxu0 0
    %5299 = vmatprep.subr.bf16.mxu0 0
    %5300 = vmatpush1.bf16.xpose.msra.mxu0 0
    %5301 = vmatprep.subr.bf16.mxu0 0
    %5302 = vmatpush1.bf16.xpose.msra.mxu0 0
    %5303 = vmatprep.subr.bf16.mxu0 0
    %5304 = vmatpush1.bf16.xpose.msra.mxu0 0
    %5305 = vmatprep.subr.bf16.mxu0 0
    %5306 = vmatpush1.bf16.xpose.msra.mxu0 0
    %5307 = vmatprep.subr.bf16.mxu0 0
    %5308 = vmatpush1.bf16.xpose.msra.mxu0 0
    %5309 = vmatprep.mubr.bf16.mxu0 0
    %5310 = vmatmul.mubr.bf16.gmra.mrb[0].mxu0 %v5272
    %v5311 = vpop.f32.mrb[0].mxu0
    %v5312 = vadd.f32 0.0, %v5311
    %v5313 = vpop.f32.mrb[0].mxu0
    %v5314 = vpop.f32.mrb[0].mxu0
    %v5315 = vpop.f32.mrb[0].mxu0
    %5316 = vdwg.mxu0
    %v5317 = vmul.f32 %v5266, 0.17677669
    %v5318 = vmul.f32 %v5312, 0.17677669
    %v5319 = vsel %vm917, %v5317, -inf
    %5320 = vmax.xlane.f32.xlu0 %v5319
    %v5321 = vpop.xlane.xlu0 %5320
    %v5322 = vsel %vm917, %v5318, -inf
    %5323 = vmax.xlane.f32.xlu0 %v5322
    %v5324 = vpop.xlane.xlu0 %5323
    %v5325 = vsub.f32 %v5317, %v5321
    %v5326 = vsub.f32 %v5318, %v5324
    %v5327 = vmul.f32 %v5325, 1.442695
    %v5328 = vpow.pop %v5327
    %v5329 = vmul.f32 %v5326, 1.442695
    %v5330 = vpow.pop %v5329
    %v5331 = vsel %vm917, %v5328, 0.0
    %5332 = vadd.xlane.f32.xlu0 %v5331
    %v5333 = vpop.xlane.xlu0 %5332
    %v5334 = vsel %vm917, %v5330, 0.0
    %5335 = vadd.xlane.f32.xlu0 %v5334
    %v5336 = vpop.xlane.xlu0 %5335
    %v5337 = vrcp.pop %v5333
    %v5338 = vrcp.pop %v5336
    %v5339 = vmul.f32 %v5328, %v5337
    %v5340 = vmul.f32 %v5330, %v5338
    %v5341 = vpack.c.bf16 %v5339, %v5339
    %v5342 = vpack.c.bf16 %v5340, %v5340
    %v5343 = vpack.c.bf16 %v4295, %v4295
    %v5344 = vpack.c.bf16 %v4299, %v4299
    %v5346 = vsel %vm917, %v5341, 0
    %v5349 = vsel %vm947, %v5343, 0
    %5351 = vmatprep.subr.bf16.mxu0 0
    %5352 = vmatpush1.bf16.msra.mxu0 %v5349
    %5353 = vmatprep.subr.bf16.mxu0 0
    %5354 = vmatpush1.bf16.msra.mxu0 0
    %5355 = vmatprep.subr.bf16.mxu0 0
    %5356 = vmatpush1.bf16.msra.mxu0 0
    %5357 = vmatprep.subr.bf16.mxu0 0
    %5358 = vmatpush1.bf16.msra.mxu0 0
    %5359 = vmatprep.subr.bf16.mxu0 0
    %5360 = vmatpush1.bf16.msra.mxu0 0
    %5361 = vmatprep.subr.bf16.mxu0 0
    %5362 = vmatpush1.bf16.msra.mxu0 0
    %5363 = vmatprep.subr.bf16.mxu0 0
    %5364 = vmatpush1.bf16.msra.mxu0 0
    %5365 = vmatprep.subr.bf16.mxu0 0
    %5366 = vmatpush1.bf16.msra.mxu0 0
    %5367 = vmatprep.subr.bf16.mxu0 0
    %5368 = vmatpush1.bf16.msra.mxu0 0
    %5369 = vmatprep.subr.bf16.mxu0 0
    %5370 = vmatpush1.bf16.msra.mxu0 0
    %5371 = vmatprep.subr.bf16.mxu0 0
    %5372 = vmatpush1.bf16.msra.mxu0 0
    %5373 = vmatprep.subr.bf16.mxu0 0
    %5374 = vmatpush1.bf16.msra.mxu0 0
    %5375 = vmatprep.subr.bf16.mxu0 0
    %5376 = vmatpush1.bf16.msra.mxu0 0
    %5377 = vmatprep.subr.bf16.mxu0 0
    %5378 = vmatpush1.bf16.msra.mxu0 0
    %5379 = vmatprep.subr.bf16.mxu0 0
    %5380 = vmatpush1.bf16.msra.mxu0 0
    %5381 = vmatprep.subr.bf16.mxu0 0
    %5382 = vmatpush1.bf16.msra.mxu0 0
    %5383 = vmatprep.mubr.bf16.mxu0 0
    %5384 = vmatmul.mubr.bf16.gmra.mrb[0].mxu0 %v5346
    %v5385 = vpop.f32.mrb[0].mxu0
    %v5386 = vadd.f32 0.0, %v5385
    %v5387 = vpop.f32.mrb[0].mxu0
    %v5388 = vpop.f32.mrb[0].mxu0
    %v5389 = vpop.f32.mrb[0].mxu0
    %5390 = vdwg.mxu0
    %v5392 = vsel %vm917, %v5342, 0
    %v5395 = vsel %vm947, %v5344, 0
    %5397 = vmatprep.subr.bf16.mxu0 0
    %5398 = vmatpush1.bf16.msra.mxu0 %v5395
    %5399 = vmatprep.subr.bf16.mxu0 0
    %5400 = vmatpush1.bf16.msra.mxu0 0
    %5401 = vmatprep.subr.bf16.mxu0 0
    %5402 = vmatpush1.bf16.msra.mxu0 0
    %5403 = vmatprep.subr.bf16.mxu0 0
    %5404 = vmatpush1.bf16.msra.mxu0 0
    %5405 = vmatprep.subr.bf16.mxu0 0
    %5406 = vmatpush1.bf16.msra.mxu0 0
    %5407 = vmatprep.subr.bf16.mxu0 0
    %5408 = vmatpush1.bf16.msra.mxu0 0
    %5409 = vmatprep.subr.bf16.mxu0 0
    %5410 = vmatpush1.bf16.msra.mxu0 0
    %5411 = vmatprep.subr.bf16.mxu0 0
    %5412 = vmatpush1.bf16.msra.mxu0 0
    %5413 = vmatprep.subr.bf16.mxu0 0
    %5414 = vmatpush1.bf16.msra.mxu0 0
    %5415 = vmatprep.subr.bf16.mxu0 0
    %5416 = vmatpush1.bf16.msra.mxu0 0
    %5417 = vmatprep.subr.bf16.mxu0 0
    %5418 = vmatpush1.bf16.msra.mxu0 0
    %5419 = vmatprep.subr.bf16.mxu0 0
    %5420 = vmatpush1.bf16.msra.mxu0 0
    %5421 = vmatprep.subr.bf16.mxu0 0
    %5422 = vmatpush1.bf16.msra.mxu0 0
    %5423 = vmatprep.subr.bf16.mxu0 0
    %5424 = vmatpush1.bf16.msra.mxu0 0
    %5425 = vmatprep.subr.bf16.mxu0 0
    %5426 = vmatpush1.bf16.msra.mxu0 0
    %5427 = vmatprep.subr.bf16.mxu0 0
    %5428 = vmatpush1.bf16.msra.mxu0 0
    %5429 = vmatprep.mubr.bf16.mxu0 0
    %5430 = vmatmul.mubr.bf16.gmra.mrb[0].mxu0 %v5392
    %v5431 = vpop.f32.mrb[0].mxu0
    %v5432 = vadd.f32 0.0, %v5431
    %v5433 = vpop.f32.mrb[0].mxu0
    %v5434 = vpop.f32.mrb[0].mxu0
    %v5435 = vpop.f32.mrb[0].mxu0
    %5436 = vdwg.mxu0
    %5437 = vst.msk [vmem:[#allocation2 + $0x8] sm:$0xff] %vm822, %v5386
    %5438 = vst.msk [vmem:[#allocation2 + $0x18] sm:$0xff] %vm822, %v5432
    %5440 = vrot.lane.b32.xlu0 %v5221, 96
    %v5441 = vpop.permute.xlu0 %5440
    %5443 = vrot.lane.b32.xlu0 %v5223, 96
    %v5444 = vpop.permute.xlu0 %5443
    %v5446 = vsel %vm822, %v5441, 0
    %v5449 = vsel %vm822, %v5444, 0
    %5451 = vmatprep.subr.bf16.mxu0 0
    %5452 = vmatpush1.bf16.xpose.msra.mxu0 %v5449
    %5453 = vmatprep.subr.bf16.mxu0 0
    %5454 = vmatpush1.bf16.xpose.msra.mxu0 0
    %5455 = vmatprep.subr.bf16.mxu0 0
    %5456 = vmatpush1.bf16.xpose.msra.mxu0 0
    %5457 = vmatprep.subr.bf16.mxu0 0
    %5458 = vmatpush1.bf16.xpose.msra.mxu0 0
    %5459 = vmatprep.subr.bf16.mxu0 0
    %5460 = vmatpush1.bf16.xpose.msra.mxu0 0
    %5461 = vmatprep.subr.bf16.mxu0 0
    %5462 = vmatpush1.bf16.xpose.msra.mxu0 0
    %5463 = vmatprep.subr.bf16.mxu0 0
    %5464 = vmatpush1.bf16.xpose.msra.mxu0 0
    %5465 = vmatprep.subr.bf16.mxu0 0
    %5466 = vmatpush1.bf16.xpose.msra.mxu0 0
    %5467 = vmatprep.subr.bf16.mxu0 0
    %5468 = vmatpush1.bf16.xpose.msra.mxu0 0
    %5469 = vmatprep.subr.bf16.mxu0 0
    %5470 = vmatpush1.bf16.xpose.msra.mxu0 0
    %5471 = vmatprep.subr.bf16.mxu0 0
    %5472 = vmatpush1.bf16.xpose.msra.mxu0 0
    %5473 = vmatprep.subr.bf16.mxu0 0
    %5474 = vmatpush1.bf16.xpose.msra.mxu0 0
    %5475 = vmatprep.subr.bf16.mxu0 0
    %5476 = vmatpush1.bf16.xpose.msra.mxu0 0
    %5477 = vmatprep.subr.bf16.mxu0 0
    %5478 = vmatpush1.bf16.xpose.msra.mxu0 0
    %5479 = vmatprep.subr.bf16.mxu0 0
    %5480 = vmatpush1.bf16.xpose.msra.mxu0 0
    %5481 = vmatprep.subr.bf16.mxu0 0
    %5482 = vmatpush1.bf16.xpose.msra.mxu0 0
    %5483 = vmatprep.mubr.bf16.mxu0 0
    %5484 = vmatmul.mubr.bf16.gmra.mrb[0].mxu0 %v5446
    %v5485 = vpop.f32.mrb[0].mxu0
    %v5486 = vadd.f32 0.0, %v5485
    %v5487 = vpop.f32.mrb[0].mxu0
    %v5488 = vpop.f32.mrb[0].mxu0
    %v5489 = vpop.f32.mrb[0].mxu0
    %5490 = vdwg.mxu0
    %5492 = vrot.lane.b32.xlu0 %v5222, 96
    %v5493 = vpop.permute.xlu0 %5492
    %5495 = vrot.lane.b32.xlu0 %v5224, 96
    %v5496 = vpop.permute.xlu0 %5495
    %v5498 = vsel %vm822, %v5493, 0
    %v5501 = vsel %vm822, %v5496, 0
    %5503 = vmatprep.subr.bf16.mxu0 0
    %5504 = vmatpush1.bf16.xpose.msra.mxu0 %v5501
    %5505 = vmatprep.subr.bf16.mxu0 0
    %5506 = vmatpush1.bf16.xpose.msra.mxu0 0
    %5507 = vmatprep.subr.bf16.mxu0 0
    %5508 = vmatpush1.bf16.xpose.msra.mxu0 0
    %5509 = vmatprep.subr.bf16.mxu0 0
    %5510 = vmatpush1.bf16.xpose.msra.mxu0 0
    %5511 = vmatprep.subr.bf16.mxu0 0
    %5512 = vmatpush1.bf16.xpose.msra.mxu0 0
    %5513 = vmatprep.subr.bf16.mxu0 0
    %5514 = vmatpush1.bf16.xpose.msra.mxu0 0
    %5515 = vmatprep.subr.bf16.mxu0 0
    %5516 = vmatpush1.bf16.xpose.msra.mxu0 0
    %5517 = vmatprep.subr.bf16.mxu0 0
    %5518 = vmatpush1.bf16.xpose.msra.mxu0 0
    %5519 = vmatprep.subr.bf16.mxu0 0
    %5520 = vmatpush1.bf16.xpose.msra.mxu0 0
    %5521 = vmatprep.subr.bf16.mxu0 0
    %5522 = vmatpush1.bf16.xpose.msra.mxu0 0
    %5523 = vmatprep.subr.bf16.mxu0 0
    %5524 = vmatpush1.bf16.xpose.msra.mxu0 0
    %5525 = vmatprep.subr.bf16.mxu0 0
    %5526 = vmatpush1.bf16.xpose.msra.mxu0 0
    %5527 = vmatprep.subr.bf16.mxu0 0
    %5528 = vmatpush1.bf16.xpose.msra.mxu0 0
    %5529 = vmatprep.subr.bf16.mxu0 0
    %5530 = vmatpush1.bf16.xpose.msra.mxu0 0
    %5531 = vmatprep.subr.bf16.mxu0 0
    %5532 = vmatpush1.bf16.xpose.msra.mxu0 0
    %5533 = vmatprep.subr.bf16.mxu0 0
    %5534 = vmatpush1.bf16.xpose.msra.mxu0 0
    %5535 = vmatprep.mubr.bf16.mxu0 0
    %5536 = vmatmul.mubr.bf16.gmra.mrb[0].mxu0 %v5498
    %v5537 = vpop.f32.mrb[0].mxu0
    %v5538 = vadd.f32 0.0, %v5537
    %v5539 = vpop.f32.mrb[0].mxu0
    %v5540 = vpop.f32.mrb[0].mxu0
    %v5541 = vpop.f32.mrb[0].mxu0
    %5542 = vdwg.mxu0
    %v5543 = vmul.f32 %v5486, 0.17677669
    %v5544 = vmul.f32 %v5538, 0.17677669
    %v5545 = vsel %vm917, %v5543, -inf
    %5546 = vmax.xlane.f32.xlu0 %v5545
    %v5547 = vpop.xlane.xlu0 %5546
    %v5548 = vsel %vm917, %v5544, -inf
    %5549 = vmax.xlane.f32.xlu0 %v5548
    %v5550 = vpop.xlane.xlu0 %5549
    %v5551 = vsub.f32 %v5543, %v5547
    %v5552 = vsub.f32 %v5544, %v5550
    %v5553 = vmul.f32 %v5551, 1.442695
    %v5554 = vpow.pop %v5553
    %v5555 = vmul.f32 %v5552, 1.442695
    %v5556 = vpow.pop %v5555
    %v5557 = vsel %vm917, %v5554, 0.0
    %5558 = vadd.xlane.f32.xlu0 %v5557
    %v5559 = vpop.xlane.xlu0 %5558
    %v5560 = vsel %vm917, %v5556, 0.0
    %5561 = vadd.xlane.f32.xlu0 %v5560
    %v5562 = vpop.xlane.xlu0 %5561
    %v5563 = vrcp.pop %v5559
    %v5564 = vrcp.pop %v5562
    %v5565 = vmul.f32 %v5554, %v5563
    %v5566 = vmul.f32 %v5556, %v5564
    %v5567 = vpack.c.bf16 %v5565, %v5565
    %v5568 = vpack.c.bf16 %v5566, %v5566
    %5570 = vrot.lane.b32.xlu0 %v5343, 96
    %v5571 = vpop.permute.xlu0 %5570
    %v5573 = vsel %vm917, %v5567, 0
    %v5576 = vsel %vm947, %v5571, 0
    %5578 = vmatprep.subr.bf16.mxu0 0
    %5579 = vmatpush1.bf16.msra.mxu0 %v5576
    %5580 = vmatprep.subr.bf16.mxu0 0
    %5581 = vmatpush1.bf16.msra.mxu0 0
    %5582 = vmatprep.subr.bf16.mxu0 0
    %5583 = vmatpush1.bf16.msra.mxu0 0
    %5584 = vmatprep.subr.bf16.mxu0 0
    %5585 = vmatpush1.bf16.msra.mxu0 0
    %5586 = vmatprep.subr.bf16.mxu0 0
    %5587 = vmatpush1.bf16.msra.mxu0 0
    %5588 = vmatprep.subr.bf16.mxu0 0
    %5589 = vmatpush1.bf16.msra.mxu0 0
    %5590 = vmatprep.subr.bf16.mxu0 0
    %5591 = vmatpush1.bf16.msra.mxu0 0
    %5592 = vmatprep.subr.bf16.mxu0 0
    %5593 = vmatpush1.bf16.msra.mxu0 0
    %5594 = vmatprep.subr.bf16.mxu0 0
    %5595 = vmatpush1.bf16.msra.mxu0 0
    %5596 = vmatprep.subr.bf16.mxu0 0
    %5597 = vmatpush1.bf16.msra.mxu0 0
    %5598 = vmatprep.subr.bf16.mxu0 0
    %5599 = vmatpush1.bf16.msra.mxu0 0
    %5600 = vmatprep.subr.bf16.mxu0 0
    %5601 = vmatpush1.bf16.msra.mxu0 0
    %5602 = vmatprep.subr.bf16.mxu0 0
    %5603 = vmatpush1.bf16.msra.mxu0 0
    %5604 = vmatprep.subr.bf16.mxu0 0
    %5605 = vmatpush1.bf16.msra.mxu0 0
    %5606 = vmatprep.subr.bf16.mxu0 0
    %5607 = vmatpush1.bf16.msra.mxu0 0
    %5608 = vmatprep.subr.bf16.mxu0 0
    %5609 = vmatpush1.bf16.msra.mxu0 0
    %5610 = vmatprep.mubr.bf16.mxu0 0
    %5611 = vmatmul.mubr.bf16.gmra.mrb[0].mxu0 %v5573
    %v5612 = vpop.f32.mrb[0].mxu0
    %v5613 = vadd.f32 0.0, %v5612
    %v5614 = vpop.f32.mrb[0].mxu0
    %v5615 = vpop.f32.mrb[0].mxu0
    %v5616 = vpop.f32.mrb[0].mxu0
    %5617 = vdwg.mxu0
    %5619 = vrot.lane.b32.xlu0 %v5344, 96
    %v5620 = vpop.permute.xlu0 %5619
    %v5622 = vsel %vm917, %v5568, 0
    %v5625 = vsel %vm947, %v5620, 0
    %5627 = vmatprep.subr.bf16.mxu0 0
    %5628 = vmatpush1.bf16.msra.mxu0 %v5625
    %5629 = vmatprep.subr.bf16.mxu0 0
    %5630 = vmatpush1.bf16.msra.mxu0 0
    %5631 = vmatprep.subr.bf16.mxu0 0
    %5632 = vmatpush1.bf16.msra.mxu0 0
    %5633 = vmatprep.subr.bf16.mxu0 0
    %5634 = vmatpush1.bf16.msra.mxu0 0
    %5635 = vmatprep.subr.bf16.mxu0 0
    %5636 = vmatpush1.bf16.msra.mxu0 0
    %5637 = vmatprep.subr.bf16.mxu0 0
    %5638 = vmatpush1.bf16.msra.mxu0 0
    %5639 = vmatprep.subr.bf16.mxu0 0
    %5640 = vmatpush1.bf16.msra.mxu0 0
    %5641 = vmatprep.subr.bf16.mxu0 0
    %5642 = vmatpush1.bf16.msra.mxu0 0
    %5643 = vmatprep.subr.bf16.mxu0 0
    %5644 = vmatpush1.bf16.msra.mxu0 0
    %5645 = vmatprep.subr.bf16.mxu0 0
    %5646 = vmatpush1.bf16.msra.mxu0 0
    %5647 = vmatprep.subr.bf16.mxu0 0
    %5648 = vmatpush1.bf16.msra.mxu0 0
    %5649 = vmatprep.subr.bf16.mxu0 0
    %5650 = vmatpush1.bf16.msra.mxu0 0
    %5651 = vmatprep.subr.bf16.mxu0 0
    %5652 = vmatpush1.bf16.msra.mxu0 0
    %5653 = vmatprep.subr.bf16.mxu0 0
    %5654 = vmatpush1.bf16.msra.mxu0 0
    %5655 = vmatprep.subr.bf16.mxu0 0
    %5656 = vmatpush1.bf16.msra.mxu0 0
    %5657 = vmatprep.subr.bf16.mxu0 0
    %5658 = vmatpush1.bf16.msra.mxu0 0
    %5659 = vmatprep.mubr.bf16.mxu0 0
    %5660 = vmatmul.mubr.bf16.gmra.mrb[0].mxu0 %v5622
    %v5661 = vpop.f32.mrb[0].mxu0
    %v5662 = vadd.f32 0.0, %v5661
    %v5663 = vpop.f32.mrb[0].mxu0
    %v5664 = vpop.f32.mrb[0].mxu0
    %v5665 = vpop.f32.mrb[0].mxu0
    %5666 = vdwg.mxu0
    %5669 = vrot.lane.b32.xlu0 %v5613, 32
    %v5670 = vpop.permute.xlu0 %5669
    %5671 = vrot.lane.b32.xlu0 %v5662, 32
    %v5672 = vpop.permute.xlu0 %5671
    %5675 = vst.msk [vmem:[#allocation2 + $0x8] sm:$0xff] %vm1275, %v5670
    %5676 = vst.msk [vmem:[#allocation2 + $0x18] sm:$0xff] %vm1275, %v5672
    %5677 = vrot.lane.b32.xlu0 %v5221, 64
    %v5678 = vpop.permute.xlu0 %5677
    %5679 = vrot.lane.b32.xlu0 %v5223, 64
    %v5680 = vpop.permute.xlu0 %5679
    %v5682 = vsel %vm822, %v5678, 0
    %v5685 = vsel %vm822, %v5680, 0
    %5687 = vmatprep.subr.bf16.mxu0 0
    %5688 = vmatpush1.bf16.xpose.msra.mxu0 %v5685
    %5689 = vmatprep.subr.bf16.mxu0 0
    %5690 = vmatpush1.bf16.xpose.msra.mxu0 0
    %5691 = vmatprep.subr.bf16.mxu0 0
    %5692 = vmatpush1.bf16.xpose.msra.mxu0 0
    %5693 = vmatprep.subr.bf16.mxu0 0
    %5694 = vmatpush1.bf16.xpose.msra.mxu0 0
    %5695 = vmatprep.subr.bf16.mxu0 0
    %5696 = vmatpush1.bf16.xpose.msra.mxu0 0
    %5697 = vmatprep.subr.bf16.mxu0 0
    %5698 = vmatpush1.bf16.xpose.msra.mxu0 0
    %5699 = vmatprep.subr.bf16.mxu0 0
    %5700 = vmatpush1.bf16.xpose.msra.mxu0 0
    %5701 = vmatprep.subr.bf16.mxu0 0
    %5702 = vmatpush1.bf16.xpose.msra.mxu0 0
    %5703 = vmatprep.subr.bf16.mxu0 0
    %5704 = vmatpush1.bf16.xpose.msra.mxu0 0
    %5705 = vmatprep.subr.bf16.mxu0 0
    %5706 = vmatpush1.bf16.xpose.msra.mxu0 0
    %5707 = vmatprep.subr.bf16.mxu0 0
    %5708 = vmatpush1.bf16.xpose.msra.mxu0 0
    %5709 = vmatprep.subr.bf16.mxu0 0
    %5710 = vmatpush1.bf16.xpose.msra.mxu0 0
    %5711 = vmatprep.subr.bf16.mxu0 0
    %5712 = vmatpush1.bf16.xpose.msra.mxu0 0
    %5713 = vmatprep.subr.bf16.mxu0 0
    %5714 = vmatpush1.bf16.xpose.msra.mxu0 0
    %5715 = vmatprep.subr.bf16.mxu0 0
    %5716 = vmatpush1.bf16.xpose.msra.mxu0 0
    %5717 = vmatprep.subr.bf16.mxu0 0
    %5718 = vmatpush1.bf16.xpose.msra.mxu0 0
    %5719 = vmatprep.mubr.bf16.mxu0 0
    %5720 = vmatmul.mubr.bf16.gmra.mrb[0].mxu0 %v5682
    %v5721 = vpop.f32.mrb[0].mxu0
    %v5722 = vadd.f32 0.0, %v5721
    %v5723 = vpop.f32.mrb[0].mxu0
    %v5724 = vpop.f32.mrb[0].mxu0
    %v5725 = vpop.f32.mrb[0].mxu0
    %5726 = vdwg.mxu0
    %5727 = vrot.lane.b32.xlu0 %v5222, 64
    %v5728 = vpop.permute.xlu0 %5727
    %5729 = vrot.lane.b32.xlu0 %v5224, 64
    %v5730 = vpop.permute.xlu0 %5729
    %v5732 = vsel %vm822, %v5728, 0
    %v5735 = vsel %vm822, %v5730, 0
    %5737 = vmatprep.subr.bf16.mxu0 0
    %5738 = vmatpush1.bf16.xpose.msra.mxu0 %v5735
    %5739 = vmatprep.subr.bf16.mxu0 0
    %5740 = vmatpush1.bf16.xpose.msra.mxu0 0
    %5741 = vmatprep.subr.bf16.mxu0 0
    %5742 = vmatpush1.bf16.xpose.msra.mxu0 0
    %5743 = vmatprep.subr.bf16.mxu0 0
    %5744 = vmatpush1.bf16.xpose.msra.mxu0 0
    %5745 = vmatprep.subr.bf16.mxu0 0
    %5746 = vmatpush1.bf16.xpose.msra.mxu0 0
    %5747 = vmatprep.subr.bf16.mxu0 0
    %5748 = vmatpush1.bf16.xpose.msra.mxu0 0
    %5749 = vmatprep.subr.bf16.mxu0 0
    %5750 = vmatpush1.bf16.xpose.msra.mxu0 0
    %5751 = vmatprep.subr.bf16.mxu0 0
    %5752 = vmatpush1.bf16.xpose.msra.mxu0 0
    %5753 = vmatprep.subr.bf16.mxu0 0
    %5754 = vmatpush1.bf16.xpose.msra.mxu0 0
    %5755 = vmatprep.subr.bf16.mxu0 0
    %5756 = vmatpush1.bf16.xpose.msra.mxu0 0
    %5757 = vmatprep.subr.bf16.mxu0 0
    %5758 = vmatpush1.bf16.xpose.msra.mxu0 0
    %5759 = vmatprep.subr.bf16.mxu0 0
    %5760 = vmatpush1.bf16.xpose.msra.mxu0 0
    %5761 = vmatprep.subr.bf16.mxu0 0
    %5762 = vmatpush1.bf16.xpose.msra.mxu0 0
    %5763 = vmatprep.subr.bf16.mxu0 0
    %5764 = vmatpush1.bf16.xpose.msra.mxu0 0
    %5765 = vmatprep.subr.bf16.mxu0 0
    %5766 = vmatpush1.bf16.xpose.msra.mxu0 0
    %5767 = vmatprep.subr.bf16.mxu0 0
    %5768 = vmatpush1.bf16.xpose.msra.mxu0 0
    %5769 = vmatprep.mubr.bf16.mxu0 0
    %5770 = vmatmul.mubr.bf16.gmra.mrb[0].mxu0 %v5732
    %v5771 = vpop.f32.mrb[0].mxu0
    %v5772 = vadd.f32 0.0, %v5771
    %v5773 = vpop.f32.mrb[0].mxu0
    %v5774 = vpop.f32.mrb[0].mxu0
    %v5775 = vpop.f32.mrb[0].mxu0
    %5776 = vdwg.mxu0
    %v5777 = vmul.f32 %v5722, 0.17677669
    %v5778 = vmul.f32 %v5772, 0.17677669
    %v5779 = vsel %vm917, %v5777, -inf
    %5780 = vmax.xlane.f32.xlu0 %v5779
    %v5781 = vpop.xlane.xlu0 %5780
    %v5782 = vsel %vm917, %v5778, -inf
    %5783 = vmax.xlane.f32.xlu0 %v5782
    %v5784 = vpop.xlane.xlu0 %5783
    %v5785 = vsub.f32 %v5777, %v5781
    %v5786 = vsub.f32 %v5778, %v5784
    %v5787 = vmul.f32 %v5785, 1.442695
    %v5788 = vpow.pop %v5787
    %v5789 = vmul.f32 %v5786, 1.442695
    %v5790 = vpow.pop %v5789
    %v5791 = vsel %vm917, %v5788, 0.0
    %5792 = vadd.xlane.f32.xlu0 %v5791
    %v5793 = vpop.xlane.xlu0 %5792
    %v5794 = vsel %vm917, %v5790, 0.0
    %5795 = vadd.xlane.f32.xlu0 %v5794
    %v5796 = vpop.xlane.xlu0 %5795
    %v5797 = vrcp.pop %v5793
    %v5798 = vrcp.pop %v5796
    %v5799 = vmul.f32 %v5788, %v5797
    %v5800 = vmul.f32 %v5790, %v5798
    %v5801 = vpack.c.bf16 %v5799, %v5799
    %v5802 = vpack.c.bf16 %v5800, %v5800
    %5803 = vrot.lane.b32.xlu0 %v5343, 64
    %v5804 = vpop.permute.xlu0 %5803
    %v5806 = vsel %vm917, %v5801, 0
    %v5809 = vsel %vm947, %v5804, 0
    %5811 = vmatprep.subr.bf16.mxu0 0
    %5812 = vmatpush1.bf16.msra.mxu0 %v5809
    %5813 = vmatprep.subr.bf16.mxu0 0
    %5814 = vmatpush1.bf16.msra.mxu0 0
    %5815 = vmatprep.subr.bf16.mxu0 0
    %5816 = vmatpush1.bf16.msra.mxu0 0
    %5817 = vmatprep.subr.bf16.mxu0 0
    %5818 = vmatpush1.bf16.msra.mxu0 0
    %5819 = vmatprep.subr.bf16.mxu0 0
    %5820 = vmatpush1.bf16.msra.mxu0 0
    %5821 = vmatprep.subr.bf16.mxu0 0
    %5822 = vmatpush1.bf16.msra.mxu0 0
    %5823 = vmatprep.subr.bf16.mxu0 0
    %5824 = vmatpush1.bf16.msra.mxu0 0
    %5825 = vmatprep.subr.bf16.mxu0 0
    %5826 = vmatpush1.bf16.msra.mxu0 0
    %5827 = vmatprep.subr.bf16.mxu0 0
    %5828 = vmatpush1.bf16.msra.mxu0 0
    %5829 = vmatprep.subr.bf16.mxu0 0
    %5830 = vmatpush1.bf16.msra.mxu0 0
    %5831 = vmatprep.subr.bf16.mxu0 0
    %5832 = vmatpush1.bf16.msra.mxu0 0
    %5833 = vmatprep.subr.bf16.mxu0 0
    %5834 = vmatpush1.bf16.msra.mxu0 0
    %5835 = vmatprep.subr.bf16.mxu0 0
    %5836 = vmatpush1.bf16.msra.mxu0 0
    %5837 = vmatprep.subr.bf16.mxu0 0
    %5838 = vmatpush1.bf16.msra.mxu0 0
    %5839 = vmatprep.subr.bf16.mxu0 0
    %5840 = vmatpush1.bf16.msra.mxu0 0
    %5841 = vmatprep.subr.bf16.mxu0 0
    %5842 = vmatpush1.bf16.msra.mxu0 0
    %5843 = vmatprep.mubr.bf16.mxu0 0
    %5844 = vmatmul.mubr.bf16.gmra.mrb[0].mxu0 %v5806
    %v5845 = vpop.f32.mrb[0].mxu0
    %v5846 = vadd.f32 0.0, %v5845
    %v5847 = vpop.f32.mrb[0].mxu0
    %v5848 = vpop.f32.mrb[0].mxu0
    %v5849 = vpop.f32.mrb[0].mxu0
    %5850 = vdwg.mxu0
    %5851 = vrot.lane.b32.xlu0 %v5344, 64
    %v5852 = vpop.permute.xlu0 %5851
    %v5854 = vsel %vm917, %v5802, 0
    %v5857 = vsel %vm947, %v5852, 0
    %5859 = vmatprep.subr.bf16.mxu0 0
    %5860 = vmatpush1.bf16.msra.mxu0 %v5857
    %5861 = vmatprep.subr.bf16.mxu0 0
    %5862 = vmatpush1.bf16.msra.mxu0 0
    %5863 = vmatprep.subr.bf16.mxu0 0
    %5864 = vmatpush1.bf16.msra.mxu0 0
    %5865 = vmatprep.subr.bf16.mxu0 0
    %5866 = vmatpush1.bf16.msra.mxu0 0
    %5867 = vmatprep.subr.bf16.mxu0 0
    %5868 = vmatpush1.bf16.msra.mxu0 0
    %5869 = vmatprep.subr.bf16.mxu0 0
    %5870 = vmatpush1.bf16.msra.mxu0 0
    %5871 = vmatprep.subr.bf16.mxu0 0
    %5872 = vmatpush1.bf16.msra.mxu0 0
    %5873 = vmatprep.subr.bf16.mxu0 0
    %5874 = vmatpush1.bf16.msra.mxu0 0
    %5875 = vmatprep.subr.bf16.mxu0 0
    %5876 = vmatpush1.bf16.msra.mxu0 0
    %5877 = vmatprep.subr.bf16.mxu0 0
    %5878 = vmatpush1.bf16.msra.mxu0 0
    %5879 = vmatprep.subr.bf16.mxu0 0
    %5880 = vmatpush1.bf16.msra.mxu0 0
    %5881 = vmatprep.subr.bf16.mxu0 0
    %5882 = vmatpush1.bf16.msra.mxu0 0
    %5883 = vmatprep.subr.bf16.mxu0 0
    %5884 = vmatpush1.bf16.msra.mxu0 0
    %5885 = vmatprep.subr.bf16.mxu0 0
    %5886 = vmatpush1.bf16.msra.mxu0 0
    %5887 = vmatprep.subr.bf16.mxu0 0
    %5888 = vmatpush1.bf16.msra.mxu0 0
    %5889 = vmatprep.subr.bf16.mxu0 0
    %5890 = vmatpush1.bf16.msra.mxu0 0
    %5891 = vmatprep.mubr.bf16.mxu0 0
    %5892 = vmatmul.mubr.bf16.gmra.mrb[0].mxu0 %v5854
    %v5893 = vpop.f32.mrb[0].mxu0
    %v5894 = vadd.f32 0.0, %v5893
    %v5895 = vpop.f32.mrb[0].mxu0
    %v5896 = vpop.f32.mrb[0].mxu0
    %v5897 = vpop.f32.mrb[0].mxu0
    %5898 = vdwg.mxu0
    %5901 = vrot.lane.b32.xlu0 %v5846, 64
    %v5902 = vpop.permute.xlu0 %5901
    %5903 = vrot.lane.b32.xlu0 %v5894, 64
    %v5904 = vpop.permute.xlu0 %5903
    %5907 = vst.msk [vmem:[#allocation2 + $0x8] sm:$0xff] %vm1508, %v5902
    %5908 = vst.msk [vmem:[#allocation2 + $0x18] sm:$0xff] %vm1508, %v5904
    %5909 = vrot.lane.b32.xlu0 %v5221, 32
    %v5910 = vpop.permute.xlu0 %5909
    %5911 = vrot.lane.b32.xlu0 %v5223, 32
    %v5912 = vpop.permute.xlu0 %5911
    %v5914 = vsel %vm822, %v5910, 0
    %v5917 = vsel %vm822, %v5912, 0
    %5919 = vmatprep.subr.bf16.mxu0 0
    %5920 = vmatpush1.bf16.xpose.msra.mxu0 %v5917
    %5921 = vmatprep.subr.bf16.mxu0 0
    %5922 = vmatpush1.bf16.xpose.msra.mxu0 0
    %5923 = vmatprep.subr.bf16.mxu0 0
    %5924 = vmatpush1.bf16.xpose.msra.mxu0 0
    %5925 = vmatprep.subr.bf16.mxu0 0
    %5926 = vmatpush1.bf16.xpose.msra.mxu0 0
    %5927 = vmatprep.subr.bf16.mxu0 0
    %5928 = vmatpush1.bf16.xpose.msra.mxu0 0
    %5929 = vmatprep.subr.bf16.mxu0 0
    %5930 = vmatpush1.bf16.xpose.msra.mxu0 0
    %5931 = vmatprep.subr.bf16.mxu0 0
    %5932 = vmatpush1.bf16.xpose.msra.mxu0 0
    %5933 = vmatprep.subr.bf16.mxu0 0
    %5934 = vmatpush1.bf16.xpose.msra.mxu0 0
    %5935 = vmatprep.subr.bf16.mxu0 0
    %5936 = vmatpush1.bf16.xpose.msra.mxu0 0
    %5937 = vmatprep.subr.bf16.mxu0 0
    %5938 = vmatpush1.bf16.xpose.msra.mxu0 0
    %5939 = vmatprep.subr.bf16.mxu0 0
    %5940 = vmatpush1.bf16.xpose.msra.mxu0 0
    %5941 = vmatprep.subr.bf16.mxu0 0
    %5942 = vmatpush1.bf16.xpose.msra.mxu0 0
    %5943 = vmatprep.subr.bf16.mxu0 0
    %5944 = vmatpush1.bf16.xpose.msra.mxu0 0
    %5945 = vmatprep.subr.bf16.mxu0 0
    %5946 = vmatpush1.bf16.xpose.msra.mxu0 0
    %5947 = vmatprep.subr.bf16.mxu0 0
    %5948 = vmatpush1.bf16.xpose.msra.mxu0 0
    %5949 = vmatprep.subr.bf16.mxu0 0
    %5950 = vmatpush1.bf16.xpose.msra.mxu0 0
    %5951 = vmatprep.mubr.bf16.mxu0 0
    %5952 = vmatmul.mubr.bf16.gmra.mrb[0].mxu0 %v5914
    %v5953 = vpop.f32.mrb[0].mxu0
    %v5954 = vadd.f32 0.0, %v5953
    %v5955 = vpop.f32.mrb[0].mxu0
    %v5956 = vpop.f32.mrb[0].mxu0
    %v5957 = vpop.f32.mrb[0].mxu0
    %5958 = vdwg.mxu0
    %5959 = vrot.lane.b32.xlu0 %v5222, 32
    %v5960 = vpop.permute.xlu0 %5959
    %5961 = vrot.lane.b32.xlu0 %v5224, 32
    %v5962 = vpop.permute.xlu0 %5961
    %v5964 = vsel %vm822, %v5960, 0
    %v5967 = vsel %vm822, %v5962, 0
    %5969 = vmatprep.subr.bf16.mxu0 0
    %5970 = vmatpush1.bf16.xpose.msra.mxu0 %v5967
    %5971 = vmatprep.subr.bf16.mxu0 0
    %5972 = vmatpush1.bf16.xpose.msra.mxu0 0
    %5973 = vmatprep.subr.bf16.mxu0 0
    %5974 = vmatpush1.bf16.xpose.msra.mxu0 0
    %5975 = vmatprep.subr.bf16.mxu0 0
    %5976 = vmatpush1.bf16.xpose.msra.mxu0 0
    %5977 = vmatprep.subr.bf16.mxu0 0
    %5978 = vmatpush1.bf16.xpose.msra.mxu0 0
    %5979 = vmatprep.subr.bf16.mxu0 0
    %5980 = vmatpush1.bf16.xpose.msra.mxu0 0
    %5981 = vmatprep.subr.bf16.mxu0 0
    %5982 = vmatpush1.bf16.xpose.msra.mxu0 0
    %5983 = vmatprep.subr.bf16.mxu0 0
    %5984 = vmatpush1.bf16.xpose.msra.mxu0 0
    %5985 = vmatprep.subr.bf16.mxu0 0
    %5986 = vmatpush1.bf16.xpose.msra.mxu0 0
    %5987 = vmatprep.subr.bf16.mxu0 0
    %5988 = vmatpush1.bf16.xpose.msra.mxu0 0
    %5989 = vmatprep.subr.bf16.mxu0 0
    %5990 = vmatpush1.bf16.xpose.msra.mxu0 0
    %5991 = vmatprep.subr.bf16.mxu0 0
    %5992 = vmatpush1.bf16.xpose.msra.mxu0 0
    %5993 = vmatprep.subr.bf16.mxu0 0
    %5994 = vmatpush1.bf16.xpose.msra.mxu0 0
    %5995 = vmatprep.subr.bf16.mxu0 0
    %5996 = vmatpush1.bf16.xpose.msra.mxu0 0
    %5997 = vmatprep.subr.bf16.mxu0 0
    %5998 = vmatpush1.bf16.xpose.msra.mxu0 0
    %5999 = vmatprep.subr.bf16.mxu0 0
    %6000 = vmatpush1.bf16.xpose.msra.mxu0 0
    %6001 = vmatprep.mubr.bf16.mxu0 0
    %6002 = vmatmul.mubr.bf16.gmra.mrb[0].mxu0 %v5964
    %v6003 = vpop.f32.mrb[0].mxu0
    %v6004 = vadd.f32 0.0, %v6003
    %v6005 = vpop.f32.mrb[0].mxu0
    %v6006 = vpop.f32.mrb[0].mxu0
    %v6007 = vpop.f32.mrb[0].mxu0
    %6008 = vdwg.mxu0
    %v6009 = vmul.f32 %v5954, 0.17677669
    %v6010 = vmul.f32 %v6004, 0.17677669
    %v6011 = vsel %vm917, %v6009, -inf
    %6012 = vmax.xlane.f32.xlu0 %v6011
    %v6013 = vpop.xlane.xlu0 %6012
    %v6014 = vsel %vm917, %v6010, -inf
    %6015 = vmax.xlane.f32.xlu0 %v6014
    %v6016 = vpop.xlane.xlu0 %6015
    %v6017 = vsub.f32 %v6009, %v6013
    %v6018 = vsub.f32 %v6010, %v6016
    %v6019 = vmul.f32 %v6017, 1.442695
    %v6020 = vpow.pop %v6019
    %v6021 = vmul.f32 %v6018, 1.442695
    %v6022 = vpow.pop %v6021
    %v6023 = vsel %vm917, %v6020, 0.0
    %6024 = vadd.xlane.f32.xlu0 %v6023
    %v6025 = vpop.xlane.xlu0 %6024
    %v6026 = vsel %vm917, %v6022, 0.0
    %6027 = vadd.xlane.f32.xlu0 %v6026
    %v6028 = vpop.xlane.xlu0 %6027
    %v6029 = vrcp.pop %v6025
    %v6030 = vrcp.pop %v6028
    %v6031 = vmul.f32 %v6020, %v6029
    %v6032 = vmul.f32 %v6022, %v6030
    %v6033 = vpack.c.bf16 %v6031, %v6031
    %v6034 = vpack.c.bf16 %v6032, %v6032
    %6035 = vrot.lane.b32.xlu0 %v5343, 32
    %v6036 = vpop.permute.xlu0 %6035
    %v6038 = vsel %vm917, %v6033, 0
    %v6041 = vsel %vm947, %v6036, 0
    %6043 = vmatprep.subr.bf16.mxu0 0
    %6044 = vmatpush1.bf16.msra.mxu0 %v6041
    %6045 = vmatprep.subr.bf16.mxu0 0
    %6046 = vmatpush1.bf16.msra.mxu0 0
    %6047 = vmatprep.subr.bf16.mxu0 0
    %6048 = vmatpush1.bf16.msra.mxu0 0
    %6049 = vmatprep.subr.bf16.mxu0 0
    %6050 = vmatpush1.bf16.msra.mxu0 0
    %6051 = vmatprep.subr.bf16.mxu0 0
    %6052 = vmatpush1.bf16.msra.mxu0 0
    %6053 = vmatprep.subr.bf16.mxu0 0
    %6054 = vmatpush1.bf16.msra.mxu0 0
    %6055 = vmatprep.subr.bf16.mxu0 0
    %6056 = vmatpush1.bf16.msra.mxu0 0
    %6057 = vmatprep.subr.bf16.mxu0 0
    %6058 = vmatpush1.bf16.msra.mxu0 0
    %6059 = vmatprep.subr.bf16.mxu0 0
    %6060 = vmatpush1.bf16.msra.mxu0 0
    %6061 = vmatprep.subr.bf16.mxu0 0
    %6062 = vmatpush1.bf16.msra.mxu0 0
    %6063 = vmatprep.subr.bf16.mxu0 0
    %6064 = vmatpush1.bf16.msra.mxu0 0
    %6065 = vmatprep.subr.bf16.mxu0 0
    %6066 = vmatpush1.bf16.msra.mxu0 0
    %6067 = vmatprep.subr.bf16.mxu0 0
    %6068 = vmatpush1.bf16.msra.mxu0 0
    %6069 = vmatprep.subr.bf16.mxu0 0
    %6070 = vmatpush1.bf16.msra.mxu0 0
    %6071 = vmatprep.subr.bf16.mxu0 0
    %6072 = vmatpush1.bf16.msra.mxu0 0
    %6073 = vmatprep.subr.bf16.mxu0 0
    %6074 = vmatpush1.bf16.msra.mxu0 0
    %6075 = vmatprep.mubr.bf16.mxu0 0
    %6076 = vmatmul.mubr.bf16.gmra.mrb[0].mxu0 %v6038
    %v6077 = vpop.f32.mrb[0].mxu0
    %v6078 = vadd.f32 0.0, %v6077
    %v6079 = vpop.f32.mrb[0].mxu0
    %v6080 = vpop.f32.mrb[0].mxu0
    %v6081 = vpop.f32.mrb[0].mxu0
    %6082 = vdwg.mxu0
    %6083 = vrot.lane.b32.xlu0 %v5344, 32
    %v6084 = vpop.permute.xlu0 %6083
    %v6086 = vsel %vm917, %v6034, 0
    %v6089 = vsel %vm947, %v6084, 0
    %6091 = vmatprep.subr.bf16.mxu0 0
    %6092 = vmatpush1.bf16.msra.mxu0 %v6089
    %6093 = vmatprep.subr.bf16.mxu0 0
    %6094 = vmatpush1.bf16.msra.mxu0 0
    %6095 = vmatprep.subr.bf16.mxu0 0
    %6096 = vmatpush1.bf16.msra.mxu0 0
    %6097 = vmatprep.subr.bf16.mxu0 0
    %6098 = vmatpush1.bf16.msra.mxu0 0
    %6099 = vmatprep.subr.bf16.mxu0 0
    %6100 = vmatpush1.bf16.msra.mxu0 0
    %6101 = vmatprep.subr.bf16.mxu0 0
    %6102 = vmatpush1.bf16.msra.mxu0 0
    %6103 = vmatprep.subr.bf16.mxu0 0
    %6104 = vmatpush1.bf16.msra.mxu0 0
    %6105 = vmatprep.subr.bf16.mxu0 0
    %6106 = vmatpush1.bf16.msra.mxu0 0
    %6107 = vmatprep.subr.bf16.mxu0 0
    %6108 = vmatpush1.bf16.msra.mxu0 0
    %6109 = vmatprep.subr.bf16.mxu0 0
    %6110 = vmatpush1.bf16.msra.mxu0 0
    %6111 = vmatprep.subr.bf16.mxu0 0
    %6112 = vmatpush1.bf16.msra.mxu0 0
    %6113 = vmatprep.subr.bf16.mxu0 0
    %6114 = vmatpush1.bf16.msra.mxu0 0
    %6115 = vmatprep.subr.bf16.mxu0 0
    %6116 = vmatpush1.bf16.msra.mxu0 0
    %6117 = vmatprep.subr.bf16.mxu0 0
    %6118 = vmatpush1.bf16.msra.mxu0 0
    %6119 = vmatprep.subr.bf16.mxu0 0
    %6120 = vmatpush1.bf16.msra.mxu0 0
    %6121 = vmatprep.subr.bf16.mxu0 0
    %6122 = vmatpush1.bf16.msra.mxu0 0
    %6123 = vmatprep.mubr.bf16.mxu0 0
    %6124 = vmatmul.mubr.bf16.gmra.mrb[0].mxu0 %v6086
    %v6125 = vpop.f32.mrb[0].mxu0
    %v6126 = vadd.f32 0.0, %v6125
    %v6127 = vpop.f32.mrb[0].mxu0
    %v6128 = vpop.f32.mrb[0].mxu0
    %v6129 = vpop.f32.mrb[0].mxu0
    %6130 = vdwg.mxu0
    %6133 = vrot.lane.b32.xlu0 %v6078, 96
    %v6134 = vpop.permute.xlu0 %6133
    %6135 = vrot.lane.b32.xlu0 %v6126, 96
    %v6136 = vpop.permute.xlu0 %6135
    %6139 = vst.msk [vmem:[#allocation2 + $0x8] sm:$0xff] %vm1741, %v6134
    %6140 = vst.msk [vmem:[#allocation2 + $0x18] sm:$0xff] %vm1741, %v6136
    %v6141 = vld [vmem:[#allocation2] sm:$0xff]
    %v6142 = vld [vmem:[#allocation2 + $0x8] sm:$0xff]
    %v6143 = vld [vmem:[#allocation2 + $0x10] sm:$0xff]
    %v6144 = vld [vmem:[#allocation2 + $0x18] sm:$0xff]
    %v6145 = vpack.c.bf16 %v6143, %v6141
    %v6146 = vpack.c.bf16 %v6144, %v6142
    %s6147 = scalar_lea.vmem %s4, 256
    %v6148 = vld [vmem:[%s6147] sm:$0xff]
    %v6149 = vld [vmem:[%s6147 + $0x8] sm:$0xff]
    %v6150 = vld [vmem:[%s6147 + $0x10] sm:$0xff]
    %v6151 = vld [vmem:[%s6147 + $0x18] sm:$0xff]
    %v6152 = vld [vmem:[%s6147 + $0x20] sm:$0xff]
    %v6153 = vld [vmem:[%s6147 + $0x28] sm:$0xff]
    %v6154 = vld [vmem:[%s6147 + $0x30] sm:$0xff]
    %v6155 = vld [vmem:[%s6147 + $0x38] sm:$0xff]
    %v6156 = vld [vmem:[%s6147 + $0x40] sm:$0xff]
    %v6157 = vld [vmem:[%s6147 + $0x48] sm:$0xff]
    %v6158 = vld [vmem:[%s6147 + $0x50] sm:$0xff]
    %v6159 = vld [vmem:[%s6147 + $0x58] sm:$0xff]
    %v6160 = vld [vmem:[%s6147 + $0x60] sm:$0xff]
    %v6161 = vld [vmem:[%s6147 + $0x68] sm:$0xff]
    %v6162 = vld [vmem:[%s6147 + $0x70] sm:$0xff]
    %v6163 = vld [vmem:[%s6147 + $0x78] sm:$0xff]
    %v6164 = vld [vmem:[%s6147 + $0x80] sm:$0xff]
    %v6165 = vld [vmem:[%s6147 + $0x88] sm:$0xff]
    %v6166 = vld [vmem:[%s6147 + $0x90] sm:$0xff]
    %v6167 = vld [vmem:[%s6147 + $0x98] sm:$0xff]
    %v6168 = vld [vmem:[%s6147 + $0xa0] sm:$0xff]
    %v6169 = vld [vmem:[%s6147 + $0xa8] sm:$0xff]
    %v6170 = vld [vmem:[%s6147 + $0xb0] sm:$0xff]
    %v6171 = vld [vmem:[%s6147 + $0xb8] sm:$0xff]
    %v6172 = vld [vmem:[%s6147 + $0xc0] sm:$0xff]
    %v6173 = vld [vmem:[%s6147 + $0xc8] sm:$0xff]
    %v6174 = vld [vmem:[%s6147 + $0xd0] sm:$0xff]
    %v6175 = vld [vmem:[%s6147 + $0xd8] sm:$0xff]
    %v6176 = vld [vmem:[%s6147 + $0xe0] sm:$0xff]
    %v6177 = vld [vmem:[%s6147 + $0xe8] sm:$0xff]
    %v6178 = vld [vmem:[%s6147 + $0xf0] sm:$0xff]
    %v6179 = vld [vmem:[%s6147 + $0xf8] sm:$0xff]
    %s6180 = scalar_lea.vmem %s5, 2
    %v6181 = vld [vmem:[%s6180] sm:$0x3]
    %v6183 = vlaneseq
    %v6184 = vshrl.u32 %v6183, 7
    %v6185 = vsub.s32 0, %v6184
    %v6186 = vrot.slane %v6181, %v6185
    %v6187 = vlaneseq
    %v6188 = vshrl.u32 %v6187, 7
    %v6189 = vsub.s32 1, %v6188
    %v6190 = vrot.slane %v6181, %v6189
    %v6225 = vunpack.c.l.b16 %v6148
    %v6226 = vunpack.c.h.b16 %v6148
    %v6227 = vunpack.c.l.b16 %v6149
    %v6228 = vunpack.c.h.b16 %v6149
    %v6229 = vunpack.c.l.b16 %v6150
    %v6230 = vunpack.c.h.b16 %v6150
    %v6231 = vunpack.c.l.b16 %v6151
    %v6232 = vunpack.c.h.b16 %v6151
    %v6233 = vunpack.c.l.b16 %v6152
    %v6234 = vunpack.c.h.b16 %v6152
    %v6235 = vunpack.c.l.b16 %v6153
    %v6236 = vunpack.c.h.b16 %v6153
    %v6237 = vunpack.c.l.b16 %v6154
    %v6238 = vunpack.c.h.b16 %v6154
    %v6239 = vunpack.c.l.b16 %v6155
    %v6240 = vunpack.c.h.b16 %v6155
    %v6241 = vunpack.c.l.b16 %v6156
    %v6242 = vunpack.c.h.b16 %v6156
    %v6243 = vunpack.c.l.b16 %v6157
    %v6244 = vunpack.c.h.b16 %v6157
    %v6245 = vunpack.c.l.b16 %v6158
    %v6246 = vunpack.c.h.b16 %v6158
    %v6247 = vunpack.c.l.b16 %v6159
    %v6248 = vunpack.c.h.b16 %v6159
    %v6249 = vunpack.c.l.b16 %v6160
    %v6250 = vunpack.c.h.b16 %v6160
    %v6251 = vunpack.c.l.b16 %v6161
    %v6252 = vunpack.c.h.b16 %v6161
    %v6253 = vunpack.c.l.b16 %v6162
    %v6254 = vunpack.c.h.b16 %v6162
    %v6255 = vunpack.c.l.b16 %v6163
    %v6256 = vunpack.c.h.b16 %v6163
    %v6257 = vunpack.c.l.b16 %v6164
    %v6258 = vunpack.c.h.b16 %v6164
    %v6259 = vunpack.c.l.b16 %v6165
    %v6260 = vunpack.c.h.b16 %v6165
    %v6261 = vunpack.c.l.b16 %v6166
    %v6262 = vunpack.c.h.b16 %v6166
    %v6263 = vunpack.c.l.b16 %v6167
    %v6264 = vunpack.c.h.b16 %v6167
    %v6265 = vunpack.c.l.b16 %v6168
    %v6266 = vunpack.c.h.b16 %v6168
    %v6267 = vunpack.c.l.b16 %v6169
    %v6268 = vunpack.c.h.b16 %v6169
    %v6269 = vunpack.c.l.b16 %v6170
    %v6270 = vunpack.c.h.b16 %v6170
    %v6271 = vunpack.c.l.b16 %v6171
    %v6272 = vunpack.c.h.b16 %v6171
    %v6273 = vunpack.c.l.b16 %v6172
    %v6274 = vunpack.c.h.b16 %v6172
    %v6275 = vunpack.c.l.b16 %v6173
    %v6276 = vunpack.c.h.b16 %v6173
    %v6277 = vunpack.c.l.b16 %v6174
    %v6278 = vunpack.c.h.b16 %v6174
    %v6279 = vunpack.c.l.b16 %v6175
    %v6280 = vunpack.c.h.b16 %v6175
    %v6281 = vunpack.c.l.b16 %v6176
    %v6282 = vunpack.c.h.b16 %v6176
    %v6283 = vunpack.c.l.b16 %v6177
    %v6284 = vunpack.c.h.b16 %v6177
    %v6285 = vunpack.c.l.b16 %v6178
    %v6286 = vunpack.c.h.b16 %v6178
    %v6287 = vunpack.c.l.b16 %v6179
    %v6288 = vunpack.c.h.b16 %v6179
    %v6289 = vpack.c.b16 %v6227, %v6225
    %v6290 = vpack.c.b16 %v6228, %v6226
    %v6291 = vpack.c.b16 %v6231, %v6229
    %v6292 = vpack.c.b16 %v6232, %v6230
    %v6293 = vpack.c.b16 %v6235, %v6233
    %v6294 = vpack.c.b16 %v6236, %v6234
    %v6295 = vpack.c.b16 %v6239, %v6237
    %v6296 = vpack.c.b16 %v6240, %v6238
    %v6297 = vpack.c.b16 %v6243, %v6241
    %v6298 = vpack.c.b16 %v6244, %v6242
    %v6299 = vpack.c.b16 %v6247, %v6245
    %v6300 = vpack.c.b16 %v6248, %v6246
    %v6301 = vpack.c.b16 %v6251, %v6249
    %v6302 = vpack.c.b16 %v6252, %v6250
    %v6303 = vpack.c.b16 %v6255, %v6253
    %v6304 = vpack.c.b16 %v6256, %v6254
    %v6305 = vpack.c.b16 %v6259, %v6257
    %v6306 = vpack.c.b16 %v6260, %v6258
    %v6307 = vpack.c.b16 %v6263, %v6261
    %v6308 = vpack.c.b16 %v6264, %v6262
    %v6309 = vpack.c.b16 %v6267, %v6265
    %v6310 = vpack.c.b16 %v6268, %v6266
    %v6311 = vpack.c.b16 %v6271, %v6269
    %v6312 = vpack.c.b16 %v6272, %v6270
    %v6313 = vpack.c.b16 %v6275, %v6273
    %v6314 = vpack.c.b16 %v6276, %v6274
    %v6315 = vpack.c.b16 %v6279, %v6277
    %v6316 = vpack.c.b16 %v6280, %v6278
    %v6317 = vpack.c.b16 %v6283, %v6281
    %v6318 = vpack.c.b16 %v6284, %v6282
    %v6319 = vpack.c.b16 %v6287, %v6285
    %v6320 = vpack.c.b16 %v6288, %v6286
    %6353 = vmatprep.subr.bf16.mxu0 %v6290
    %6354 = vmatpush1.bf16.msra.mxu0 %v6289
    %6355 = vmatprep.subr.bf16.mxu0 %v6292
    %6356 = vmatpush1.bf16.msra.mxu0 %v6291
    %6357 = vmatprep.subr.bf16.mxu0 %v6294
    %6358 = vmatpush1.bf16.msra.mxu0 %v6293
    %6359 = vmatprep.subr.bf16.mxu0 %v6296
    %6360 = vmatpush1.bf16.msra.mxu0 %v6295
    %6361 = vmatprep.subr.bf16.mxu0 %v6298
    %6362 = vmatpush1.bf16.msra.mxu0 %v6297
    %6363 = vmatprep.subr.bf16.mxu0 %v6300
    %6364 = vmatpush1.bf16.msra.mxu0 %v6299
    %6365 = vmatprep.subr.bf16.mxu0 %v6302
    %6366 = vmatpush1.bf16.msra.mxu0 %v6301
    %6367 = vmatprep.subr.bf16.mxu0 %v6304
    %6368 = vmatpush1.bf16.msra.mxu0 %v6303
    %6369 = vmatprep.subr.bf16.mxu0 %v6306
    %6370 = vmatpush1.bf16.msra.mxu0 %v6305
    %6371 = vmatprep.subr.bf16.mxu0 %v6308
    %6372 = vmatpush1.bf16.msra.mxu0 %v6307
    %6373 = vmatprep.subr.bf16.mxu0 %v6310
    %6374 = vmatpush1.bf16.msra.mxu0 %v6309
    %6375 = vmatprep.subr.bf16.mxu0 %v6312
    %6376 = vmatpush1.bf16.msra.mxu0 %v6311
    %6377 = vmatprep.subr.bf16.mxu0 %v6314
    %6378 = vmatpush1.bf16.msra.mxu0 %v6313
    %6379 = vmatprep.subr.bf16.mxu0 %v6316
    %6380 = vmatpush1.bf16.msra.mxu0 %v6315
    %6381 = vmatprep.subr.bf16.mxu0 %v6318
    %6382 = vmatpush1.bf16.msra.mxu0 %v6317
    %6383 = vmatprep.subr.bf16.mxu0 %v6320
    %6384 = vmatpush1.bf16.msra.mxu0 %v6319
    %6385 = vmatprep.mubr.bf16.mxu0 %v6146
    %6386 = vmatmul.mubr.bf16.gmra.mrb[0].mxu0 %v6145
    %v6387 = vpop.f32.mrb[0].mxu0
    %v6388 = vadd.f32 %v6186, %v6387
    %v6389 = vpop.f32.mrb[0].mxu0
    %v6390 = vadd.f32 %v6190, %v6389
    %v6391 = vpop.f32.mrb[0].mxu0
    %v6392 = vadd.f32 %v6186, %v6391
    %v6393 = vpop.f32.mrb[0].mxu0
    %v6394 = vadd.f32 %v6190, %v6393
    %6395 = vdwg.mxu0
    %v6396 = vadd.f32 %v3556, %v6388
    %v6397 = vadd.f32 %v3557, %v6390
    %v6398 = vadd.f32 %v3558, %v6392
    %v6399 = vadd.f32 %v3559, %v6394
    %s6400 = scalar_lea.vmem %s6, 2
    %v6401 = vld [vmem:[%s6400] sm:$0x3]
    %s6402 = scalar_lea.vmem %s7, 2
    %v6403 = vld [vmem:[%s6402] sm:$0x3]
    %v6404 = vadd.f32 %v6396, %v6397
    %6405 = vadd.xlane.f32.xlu0 %v6404
    %v6406 = vpop.xlane.xlu0 %6405
    %v6407 = vadd.f32 %v6398, %v6399
    %6408 = vadd.xlane.f32.xlu0 %v6407
    %v6409 = vpop.xlane.xlu0 %6408
    %v6410 = vmul.f32 %v6406, %v2929
    %v6411 = vmul.f32 %v6409, %v2929
    %v6412 = vsub.f32 %v6396, %v6410
    %v6413 = vsub.f32 %v6397, %v6410
    %v6414 = vsub.f32 %v6398, %v6411
    %v6415 = vsub.f32 %v6399, %v6411
    %v6416 = vmul.f32 %v6412, %v6412
    %v6417 = vmul.f32 %v6413, %v6413
    %v6418 = vmul.f32 %v6414, %v6414
    %v6419 = vmul.f32 %v6415, %v6415
    %v6420 = vadd.f32 %v6416, %v6417
    %6421 = vadd.xlane.f32.xlu0 %v6420
    %v6422 = vpop.xlane.xlu0 %6421
    %v6423 = vadd.f32 %v6418, %v6419
    %6424 = vadd.xlane.f32.xlu0 %v6423
    %v6425 = vpop.xlane.xlu0 %6424
    %v6426 = vmul.f32 %v6422, %v2929
    %v6427 = vmul.f32 %v6425, %v2929
    %v6428 = vadd.f32 %v6426, 1e-05
    %v6429 = vadd.f32 %v6427, 1e-05
    %v6430 = vrsqrt.pop %v6428
    %v6431 = vrsqrt.pop %v6429
    %v6432 = vmul.f32 %v6412, %v6430
    %v6433 = vmul.f32 %v6413, %v6430
    %v6434 = vmul.f32 %v6414, %v6431
    %v6435 = vmul.f32 %v6415, %v6431
    %v6437 = vlaneseq
    %v6438 = vshrl.u32 %v6437, 7
    %v6439 = vsub.s32 0, %v6438
    %v6440 = vrot.slane %v6401, %v6439
    %v6441 = vlaneseq
    %v6442 = vshrl.u32 %v6441, 7
    %v6443 = vsub.s32 1, %v6442
    %v6444 = vrot.slane %v6401, %v6443
    %v6447 = vmul.f32 %v6432, %v6440
    %v6448 = vmul.f32 %v6433, %v6444
    %v6449 = vmul.f32 %v6434, %v6440
    %v6450 = vmul.f32 %v6435, %v6444
    %v6452 = vlaneseq
    %v6453 = vshrl.u32 %v6452, 7
    %v6454 = vsub.s32 0, %v6453
    %v6455 = vrot.slane %v6403, %v6454
    %v6456 = vlaneseq
    %v6457 = vshrl.u32 %v6456, 7
    %v6458 = vsub.s32 1, %v6457
    %v6459 = vrot.slane %v6403, %v6458
    %v6462 = vadd.f32 %v6447, %v6455
    %v6463 = vadd.f32 %v6448, %v6459
    %v6464 = vadd.f32 %v6449, %v6455
    %v6465 = vadd.f32 %v6450, %v6459
    %v6466 = vpack.c.bf16 %v6464, %v6462
    %v6467 = vpack.c.bf16 %v6465, %v6463
    %s6468 = scalar_lea.vmem %s8, 256
    %v6469 = vld [vmem:[%s6468] sm:$0xff]
    %v6470 = vld [vmem:[%s6468 + $0x8] sm:$0xff]
    %v6471 = vld [vmem:[%s6468 + $0x10] sm:$0xff]
    %v6472 = vld [vmem:[%s6468 + $0x18] sm:$0xff]
    %v6473 = vld [vmem:[%s6468 + $0x20] sm:$0xff]
    %v6474 = vld [vmem:[%s6468 + $0x28] sm:$0xff]
    %v6475 = vld [vmem:[%s6468 + $0x30] sm:$0xff]
    %v6476 = vld [vmem:[%s6468 + $0x38] sm:$0xff]
    %v6477 = vld [vmem:[%s6468 + $0x40] sm:$0xff]
    %v6478 = vld [vmem:[%s6468 + $0x48] sm:$0xff]
    %v6479 = vld [vmem:[%s6468 + $0x50] sm:$0xff]
    %v6480 = vld [vmem:[%s6468 + $0x58] sm:$0xff]
    %v6481 = vld [vmem:[%s6468 + $0x60] sm:$0xff]
    %v6482 = vld [vmem:[%s6468 + $0x68] sm:$0xff]
    %v6483 = vld [vmem:[%s6468 + $0x70] sm:$0xff]
    %v6484 = vld [vmem:[%s6468 + $0x78] sm:$0xff]
    %v6485 = vld [vmem:[%s6468 + $0x80] sm:$0xff]
    %v6486 = vld [vmem:[%s6468 + $0x88] sm:$0xff]
    %v6487 = vld [vmem:[%s6468 + $0x90] sm:$0xff]
    %v6488 = vld [vmem:[%s6468 + $0x98] sm:$0xff]
    %v6489 = vld [vmem:[%s6468 + $0xa0] sm:$0xff]
    %v6490 = vld [vmem:[%s6468 + $0xa8] sm:$0xff]
    %v6491 = vld [vmem:[%s6468 + $0xb0] sm:$0xff]
    %v6492 = vld [vmem:[%s6468 + $0xb8] sm:$0xff]
    %v6493 = vld [vmem:[%s6468 + $0xc0] sm:$0xff]
    %v6494 = vld [vmem:[%s6468 + $0xc8] sm:$0xff]
    %v6495 = vld [vmem:[%s6468 + $0xd0] sm:$0xff]
    %v6496 = vld [vmem:[%s6468 + $0xd8] sm:$0xff]
    %v6497 = vld [vmem:[%s6468 + $0xe0] sm:$0xff]
    %v6498 = vld [vmem:[%s6468 + $0xe8] sm:$0xff]
    %v6499 = vld [vmem:[%s6468 + $0xf0] sm:$0xff]
    %v6500 = vld [vmem:[%s6468 + $0xf8] sm:$0xff]
    %s6501 = scalar_lea.vmem %s9, 2
    %v6502 = vld [vmem:[%s6501] sm:$0x3]
    %v6504 = vlaneseq
    %v6505 = vshrl.u32 %v6504, 7
    %v6506 = vsub.s32 0, %v6505
    %v6507 = vrot.slane %v6502, %v6506
    %v6508 = vlaneseq
    %v6509 = vshrl.u32 %v6508, 7
    %v6510 = vsub.s32 1, %v6509
    %v6511 = vrot.slane %v6502, %v6510
    %v6546 = vunpack.c.l.b16 %v6469
    %v6547 = vunpack.c.h.b16 %v6469
    %v6548 = vunpack.c.l.b16 %v6470
    %v6549 = vunpack.c.h.b16 %v6470
    %v6550 = vunpack.c.l.b16 %v6471
    %v6551 = vunpack.c.h.b16 %v6471
    %v6552 = vunpack.c.l.b16 %v6472
    %v6553 = vunpack.c.h.b16 %v6472
    %v6554 = vunpack.c.l.b16 %v6473
    %v6555 = vunpack.c.h.b16 %v6473
    %v6556 = vunpack.c.l.b16 %v6474
    %v6557 = vunpack.c.h.b16 %v6474
    %v6558 = vunpack.c.l.b16 %v6475
    %v6559 = vunpack.c.h.b16 %v6475
    %v6560 = vunpack.c.l.b16 %v6476
    %v6561 = vunpack.c.h.b16 %v6476
    %v6562 = vunpack.c.l.b16 %v6477
    %v6563 = vunpack.c.h.b16 %v6477
    %v6564 = vunpack.c.l.b16 %v6478
    %v6565 = vunpack.c.h.b16 %v6478
    %v6566 = vunpack.c.l.b16 %v6479
    %v6567 = vunpack.c.h.b16 %v6479
    %v6568 = vunpack.c.l.b16 %v6480
    %v6569 = vunpack.c.h.b16 %v6480
    %v6570 = vunpack.c.l.b16 %v6481
    %v6571 = vunpack.c.h.b16 %v6481
    %v6572 = vunpack.c.l.b16 %v6482
    %v6573 = vunpack.c.h.b16 %v6482
    %v6574 = vunpack.c.l.b16 %v6483
    %v6575 = vunpack.c.h.b16 %v6483
    %v6576 = vunpack.c.l.b16 %v6484
    %v6577 = vunpack.c.h.b16 %v6484
    %v6578 = vunpack.c.l.b16 %v6485
    %v6579 = vunpack.c.h.b16 %v6485
    %v6580 = vunpack.c.l.b16 %v6486
    %v6581 = vunpack.c.h.b16 %v6486
    %v6582 = vunpack.c.l.b16 %v6487
    %v6583 = vunpack.c.h.b16 %v6487
    %v6584 = vunpack.c.l.b16 %v6488
    %v6585 = vunpack.c.h.b16 %v6488
    %v6586 = vunpack.c.l.b16 %v6489
    %v6587 = vunpack.c.h.b16 %v6489
    %v6588 = vunpack.c.l.b16 %v6490
    %v6589 = vunpack.c.h.b16 %v6490
    %v6590 = vunpack.c.l.b16 %v6491
    %v6591 = vunpack.c.h.b16 %v6491
    %v6592 = vunpack.c.l.b16 %v6492
    %v6593 = vunpack.c.h.b16 %v6492
    %v6594 = vunpack.c.l.b16 %v6493
    %v6595 = vunpack.c.h.b16 %v6493
    %v6596 = vunpack.c.l.b16 %v6494
    %v6597 = vunpack.c.h.b16 %v6494
    %v6598 = vunpack.c.l.b16 %v6495
    %v6599 = vunpack.c.h.b16 %v6495
    %v6600 = vunpack.c.l.b16 %v6496
    %v6601 = vunpack.c.h.b16 %v6496
    %v6602 = vunpack.c.l.b16 %v6497
    %v6603 = vunpack.c.h.b16 %v6497
    %v6604 = vunpack.c.l.b16 %v6498
    %v6605 = vunpack.c.h.b16 %v6498
    %v6606 = vunpack.c.l.b16 %v6499
    %v6607 = vunpack.c.h.b16 %v6499
    %v6608 = vunpack.c.l.b16 %v6500
    %v6609 = vunpack.c.h.b16 %v6500
    %v6610 = vpack.c.b16 %v6548, %v6546
    %v6611 = vpack.c.b16 %v6549, %v6547
    %v6612 = vpack.c.b16 %v6552, %v6550
    %v6613 = vpack.c.b16 %v6553, %v6551
    %v6614 = vpack.c.b16 %v6556, %v6554
    %v6615 = vpack.c.b16 %v6557, %v6555
    %v6616 = vpack.c.b16 %v6560, %v6558
    %v6617 = vpack.c.b16 %v6561, %v6559
    %v6618 = vpack.c.b16 %v6564, %v6562
    %v6619 = vpack.c.b16 %v6565, %v6563
    %v6620 = vpack.c.b16 %v6568, %v6566
    %v6621 = vpack.c.b16 %v6569, %v6567
    %v6622 = vpack.c.b16 %v6572, %v6570
    %v6623 = vpack.c.b16 %v6573, %v6571
    %v6624 = vpack.c.b16 %v6576, %v6574
    %v6625 = vpack.c.b16 %v6577, %v6575
    %v6626 = vpack.c.b16 %v6580, %v6578
    %v6627 = vpack.c.b16 %v6581, %v6579
    %v6628 = vpack.c.b16 %v6584, %v6582
    %v6629 = vpack.c.b16 %v6585, %v6583
    %v6630 = vpack.c.b16 %v6588, %v6586
    %v6631 = vpack.c.b16 %v6589, %v6587
    %v6632 = vpack.c.b16 %v6592, %v6590
    %v6633 = vpack.c.b16 %v6593, %v6591
    %v6634 = vpack.c.b16 %v6596, %v6594
    %v6635 = vpack.c.b16 %v6597, %v6595
    %v6636 = vpack.c.b16 %v6600, %v6598
    %v6637 = vpack.c.b16 %v6601, %v6599
    %v6638 = vpack.c.b16 %v6604, %v6602
    %v6639 = vpack.c.b16 %v6605, %v6603
    %v6640 = vpack.c.b16 %v6608, %v6606
    %v6641 = vpack.c.b16 %v6609, %v6607
    %6674 = vmatprep.subr.bf16.mxu0 %v6611
    %6675 = vmatpush1.bf16.msra.mxu0 %v6610
    %6676 = vmatprep.subr.bf16.mxu0 %v6613
    %6677 = vmatpush1.bf16.msra.mxu0 %v6612
    %6678 = vmatprep.subr.bf16.mxu0 %v6615
    %6679 = vmatpush1.bf16.msra.mxu0 %v6614
    %6680 = vmatprep.subr.bf16.mxu0 %v6617
    %6681 = vmatpush1.bf16.msra.mxu0 %v6616
    %6682 = vmatprep.subr.bf16.mxu0 %v6619
    %6683 = vmatpush1.bf16.msra.mxu0 %v6618
    %6684 = vmatprep.subr.bf16.mxu0 %v6621
    %6685 = vmatpush1.bf16.msra.mxu0 %v6620
    %6686 = vmatprep.subr.bf16.mxu0 %v6623
    %6687 = vmatpush1.bf16.msra.mxu0 %v6622
    %6688 = vmatprep.subr.bf16.mxu0 %v6625
    %6689 = vmatpush1.bf16.msra.mxu0 %v6624
    %6690 = vmatprep.subr.bf16.mxu0 %v6627
    %6691 = vmatpush1.bf16.msra.mxu0 %v6626
    %6692 = vmatprep.subr.bf16.mxu0 %v6629
    %6693 = vmatpush1.bf16.msra.mxu0 %v6628
    %6694 = vmatprep.subr.bf16.mxu0 %v6631
    %6695 = vmatpush1.bf16.msra.mxu0 %v6630
    %6696 = vmatprep.subr.bf16.mxu0 %v6633
    %6697 = vmatpush1.bf16.msra.mxu0 %v6632
    %6698 = vmatprep.subr.bf16.mxu0 %v6635
    %6699 = vmatpush1.bf16.msra.mxu0 %v6634
    %6700 = vmatprep.subr.bf16.mxu0 %v6637
    %6701 = vmatpush1.bf16.msra.mxu0 %v6636
    %6702 = vmatprep.subr.bf16.mxu0 %v6639
    %6703 = vmatpush1.bf16.msra.mxu0 %v6638
    %6704 = vmatprep.subr.bf16.mxu0 %v6641
    %6705 = vmatpush1.bf16.msra.mxu0 %v6640
    %6706 = vmatprep.mubr.bf16.mxu0 %v6467
    %6707 = vmatmul.mubr.bf16.gmra.mrb[0].mxu0 %v6466
    %v6708 = vpop.f32.mrb[0].mxu0
    %v6709 = vadd.f32 %v6507, %v6708
    %v6710 = vpop.f32.mrb[0].mxu0
    %v6711 = vadd.f32 %v6511, %v6710
    %v6712 = vpop.f32.mrb[0].mxu0
    %v6713 = vadd.f32 %v6507, %v6712
    %v6714 = vpop.f32.mrb[0].mxu0
    %v6715 = vadd.f32 %v6511, %v6714
    %6716 = vdwg.mxu0
    %v6717 = vmax.f32 %v6709, 0.0
    %v6718 = vmax.f32 %v6711, 0.0
    %v6719 = vmax.f32 %v6713, 0.0
    %v6720 = vmax.f32 %v6715, 0.0
    %v6721 = vpack.c.bf16 %v6719, %v6717
    %v6722 = vpack.c.bf16 %v6720, %v6718
    %s6723 = scalar_lea.vmem %s10, 256
    %v6724 = vld [vmem:[%s6723] sm:$0xff]
    %v6725 = vld [vmem:[%s6723 + $0x8] sm:$0xff]
    %v6726 = vld [vmem:[%s6723 + $0x10] sm:$0xff]
    %v6727 = vld [vmem:[%s6723 + $0x18] sm:$0xff]
    %v6728 = vld [vmem:[%s6723 + $0x20] sm:$0xff]
    %v6729 = vld [vmem:[%s6723 + $0x28] sm:$0xff]
    %v6730 = vld [vmem:[%s6723 + $0x30] sm:$0xff]
    %v6731 = vld [vmem:[%s6723 + $0x38] sm:$0xff]
    %v6732 = vld [vmem:[%s6723 + $0x40] sm:$0xff]
    %v6733 = vld [vmem:[%s6723 + $0x48] sm:$0xff]
    %v6734 = vld [vmem:[%s6723 + $0x50] sm:$0xff]
    %v6735 = vld [vmem:[%s6723 + $0x58] sm:$0xff]
    %v6736 = vld [vmem:[%s6723 + $0x60] sm:$0xff]
    %v6737 = vld [vmem:[%s6723 + $0x68] sm:$0xff]
    %v6738 = vld [vmem:[%s6723 + $0x70] sm:$0xff]
    %v6739 = vld [vmem:[%s6723 + $0x78] sm:$0xff]
    %v6740 = vld [vmem:[%s6723 + $0x80] sm:$0xff]
    %v6741 = vld [vmem:[%s6723 + $0x88] sm:$0xff]
    %v6742 = vld [vmem:[%s6723 + $0x90] sm:$0xff]
    %v6743 = vld [vmem:[%s6723 + $0x98] sm:$0xff]
    %v6744 = vld [vmem:[%s6723 + $0xa0] sm:$0xff]
    %v6745 = vld [vmem:[%s6723 + $0xa8] sm:$0xff]
    %v6746 = vld [vmem:[%s6723 + $0xb0] sm:$0xff]
    %v6747 = vld [vmem:[%s6723 + $0xb8] sm:$0xff]
    %v6748 = vld [vmem:[%s6723 + $0xc0] sm:$0xff]
    %v6749 = vld [vmem:[%s6723 + $0xc8] sm:$0xff]
    %v6750 = vld [vmem:[%s6723 + $0xd0] sm:$0xff]
    %v6751 = vld [vmem:[%s6723 + $0xd8] sm:$0xff]
    %v6752 = vld [vmem:[%s6723 + $0xe0] sm:$0xff]
    %v6753 = vld [vmem:[%s6723 + $0xe8] sm:$0xff]
    %v6754 = vld [vmem:[%s6723 + $0xf0] sm:$0xff]
    %v6755 = vld [vmem:[%s6723 + $0xf8] sm:$0xff]
    %s6756 = scalar_lea.vmem %s11, 2
    %v6757 = vld [vmem:[%s6756] sm:$0x3]
    %v6759 = vlaneseq
    %v6760 = vshrl.u32 %v6759, 7
    %v6761 = vsub.s32 0, %v6760
    %v6762 = vrot.slane %v6757, %v6761
    %v6763 = vlaneseq
    %v6764 = vshrl.u32 %v6763, 7
    %v6765 = vsub.s32 1, %v6764
    %v6766 = vrot.slane %v6757, %v6765
    %v6801 = vunpack.c.l.b16 %v6724
    %v6802 = vunpack.c.h.b16 %v6724
    %v6803 = vunpack.c.l.b16 %v6725
    %v6804 = vunpack.c.h.b16 %v6725
    %v6805 = vunpack.c.l.b16 %v6726
    %v6806 = vunpack.c.h.b16 %v6726
    %v6807 = vunpack.c.l.b16 %v6727
    %v6808 = vunpack.c.h.b16 %v6727
    %v6809 = vunpack.c.l.b16 %v6728
    %v6810 = vunpack.c.h.b16 %v6728
    %v6811 = vunpack.c.l.b16 %v6729
    %v6812 = vunpack.c.h.b16 %v6729
    %v6813 = vunpack.c.l.b16 %v6730
    %v6814 = vunpack.c.h.b16 %v6730
    %v6815 = vunpack.c.l.b16 %v6731
    %v6816 = vunpack.c.h.b16 %v6731
    %v6817 = vunpack.c.l.b16 %v6732
    %v6818 = vunpack.c.h.b16 %v6732
    %v6819 = vunpack.c.l.b16 %v6733
    %v6820 = vunpack.c.h.b16 %v6733
    %v6821 = vunpack.c.l.b16 %v6734
    %v6822 = vunpack.c.h.b16 %v6734
    %v6823 = vunpack.c.l.b16 %v6735
    %v6824 = vunpack.c.h.b16 %v6735
    %v6825 = vunpack.c.l.b16 %v6736
    %v6826 = vunpack.c.h.b16 %v6736
    %v6827 = vunpack.c.l.b16 %v6737
    %v6828 = vunpack.c.h.b16 %v6737
    %v6829 = vunpack.c.l.b16 %v6738
    %v6830 = vunpack.c.h.b16 %v6738
    %v6831 = vunpack.c.l.b16 %v6739
    %v6832 = vunpack.c.h.b16 %v6739
    %v6833 = vunpack.c.l.b16 %v6740
    %v6834 = vunpack.c.h.b16 %v6740
    %v6835 = vunpack.c.l.b16 %v6741
    %v6836 = vunpack.c.h.b16 %v6741
    %v6837 = vunpack.c.l.b16 %v6742
    %v6838 = vunpack.c.h.b16 %v6742
    %v6839 = vunpack.c.l.b16 %v6743
    %v6840 = vunpack.c.h.b16 %v6743
    %v6841 = vunpack.c.l.b16 %v6744
    %v6842 = vunpack.c.h.b16 %v6744
    %v6843 = vunpack.c.l.b16 %v6745
    %v6844 = vunpack.c.h.b16 %v6745
    %v6845 = vunpack.c.l.b16 %v6746
    %v6846 = vunpack.c.h.b16 %v6746
    %v6847 = vunpack.c.l.b16 %v6747
    %v6848 = vunpack.c.h.b16 %v6747
    %v6849 = vunpack.c.l.b16 %v6748
    %v6850 = vunpack.c.h.b16 %v6748
    %v6851 = vunpack.c.l.b16 %v6749
    %v6852 = vunpack.c.h.b16 %v6749
    %v6853 = vunpack.c.l.b16 %v6750
    %v6854 = vunpack.c.h.b16 %v6750
    %v6855 = vunpack.c.l.b16 %v6751
    %v6856 = vunpack.c.h.b16 %v6751
    %v6857 = vunpack.c.l.b16 %v6752
    %v6858 = vunpack.c.h.b16 %v6752
    %v6859 = vunpack.c.l.b16 %v6753
    %v6860 = vunpack.c.h.b16 %v6753
    %v6861 = vunpack.c.l.b16 %v6754
    %v6862 = vunpack.c.h.b16 %v6754
    %v6863 = vunpack.c.l.b16 %v6755
    %v6864 = vunpack.c.h.b16 %v6755
    %v6865 = vpack.c.b16 %v6803, %v6801
    %v6866 = vpack.c.b16 %v6804, %v6802
    %v6867 = vpack.c.b16 %v6807, %v6805
    %v6868 = vpack.c.b16 %v6808, %v6806
    %v6869 = vpack.c.b16 %v6811, %v6809
    %v6870 = vpack.c.b16 %v6812, %v6810
    %v6871 = vpack.c.b16 %v6815, %v6813
    %v6872 = vpack.c.b16 %v6816, %v6814
    %v6873 = vpack.c.b16 %v6819, %v6817
    %v6874 = vpack.c.b16 %v6820, %v6818
    %v6875 = vpack.c.b16 %v6823, %v6821
    %v6876 = vpack.c.b16 %v6824, %v6822
    %v6877 = vpack.c.b16 %v6827, %v6825
    %v6878 = vpack.c.b16 %v6828, %v6826
    %v6879 = vpack.c.b16 %v6831, %v6829
    %v6880 = vpack.c.b16 %v6832, %v6830
    %v6881 = vpack.c.b16 %v6835, %v6833
    %v6882 = vpack.c.b16 %v6836, %v6834
    %v6883 = vpack.c.b16 %v6839, %v6837
    %v6884 = vpack.c.b16 %v6840, %v6838
    %v6885 = vpack.c.b16 %v6843, %v6841
    %v6886 = vpack.c.b16 %v6844, %v6842
    %v6887 = vpack.c.b16 %v6847, %v6845
    %v6888 = vpack.c.b16 %v6848, %v6846
    %v6889 = vpack.c.b16 %v6851, %v6849
    %v6890 = vpack.c.b16 %v6852, %v6850
    %v6891 = vpack.c.b16 %v6855, %v6853
    %v6892 = vpack.c.b16 %v6856, %v6854
    %v6893 = vpack.c.b16 %v6859, %v6857
    %v6894 = vpack.c.b16 %v6860, %v6858
    %v6895 = vpack.c.b16 %v6863, %v6861
    %v6896 = vpack.c.b16 %v6864, %v6862
    %6929 = vmatprep.subr.bf16.mxu0 %v6866
    %6930 = vmatpush1.bf16.msra.mxu0 %v6865
    %6931 = vmatprep.subr.bf16.mxu0 %v6868
    %6932 = vmatpush1.bf16.msra.mxu0 %v6867
    %6933 = vmatprep.subr.bf16.mxu0 %v6870
    %6934 = vmatpush1.bf16.msra.mxu0 %v6869
    %6935 = vmatprep.subr.bf16.mxu0 %v6872
    %6936 = vmatpush1.bf16.msra.mxu0 %v6871
    %6937 = vmatprep.subr.bf16.mxu0 %v6874
    %6938 = vmatpush1.bf16.msra.mxu0 %v6873
    %6939 = vmatprep.subr.bf16.mxu0 %v6876
    %6940 = vmatpush1.bf16.msra.mxu0 %v6875
    %6941 = vmatprep.subr.bf16.mxu0 %v6878
    %6942 = vmatpush1.bf16.msra.mxu0 %v6877
    %6943 = vmatprep.subr.bf16.mxu0 %v6880
    %6944 = vmatpush1.bf16.msra.mxu0 %v6879
    %6945 = vmatprep.subr.bf16.mxu0 %v6882
    %6946 = vmatpush1.bf16.msra.mxu0 %v6881
    %6947 = vmatprep.subr.bf16.mxu0 %v6884
    %6948 = vmatpush1.bf16.msra.mxu0 %v6883
    %6949 = vmatprep.subr.bf16.mxu0 %v6886
    %6950 = vmatpush1.bf16.msra.mxu0 %v6885
    %6951 = vmatprep.subr.bf16.mxu0 %v6888
    %6952 = vmatpush1.bf16.msra.mxu0 %v6887
    %6953 = vmatprep.subr.bf16.mxu0 %v6890
    %6954 = vmatpush1.bf16.msra.mxu0 %v6889
    %6955 = vmatprep.subr.bf16.mxu0 %v6892
    %6956 = vmatpush1.bf16.msra.mxu0 %v6891
    %6957 = vmatprep.subr.bf16.mxu0 %v6894
    %6958 = vmatpush1.bf16.msra.mxu0 %v6893
    %6959 = vmatprep.subr.bf16.mxu0 %v6896
    %6960 = vmatpush1.bf16.msra.mxu0 %v6895
    %6961 = vmatprep.mubr.bf16.mxu0 %v6722
    %6962 = vmatmul.mubr.bf16.gmra.mrb[0].mxu0 %v6721
    %v6963 = vpop.f32.mrb[0].mxu0
    %v6964 = vadd.f32 %v6762, %v6963
    %v6965 = vpop.f32.mrb[0].mxu0
    %v6966 = vadd.f32 %v6766, %v6965
    %v6967 = vpop.f32.mrb[0].mxu0
    %v6968 = vadd.f32 %v6762, %v6967
    %v6969 = vpop.f32.mrb[0].mxu0
    %v6970 = vadd.f32 %v6766, %v6969
    %6971 = vdwg.mxu0
    %v6972 = vadd.f32 %v6462, %v6964
    %v6973 = vadd.f32 %v6463, %v6966
    %v6974 = vadd.f32 %v6464, %v6968
    %v6975 = vadd.f32 %v6465, %v6970
    %s6976 = scalar_lea.vmem %s12, 2
    %v6977 = vld [vmem:[%s6976] sm:$0x3]
    %s6978 = scalar_lea.vmem %s13, 2
    %v6979 = vld [vmem:[%s6978] sm:$0x3]
    %v6980 = vadd.f32 %v6972, %v6973
    %6981 = vadd.xlane.f32.xlu0 %v6980
    %v6982 = vpop.xlane.xlu0 %6981
    %v6983 = vadd.f32 %v6974, %v6975
    %6984 = vadd.xlane.f32.xlu0 %v6983
    %v6985 = vpop.xlane.xlu0 %6984
    %v6986 = vmul.f32 %v6982, %v2929
    %v6987 = vmul.f32 %v6985, %v2929
    %v6988 = vsub.f32 %v6972, %v6986
    %v6989 = vsub.f32 %v6973, %v6986
    %v6990 = vsub.f32 %v6974, %v6987
    %v6991 = vsub.f32 %v6975, %v6987
    %v6992 = vmul.f32 %v6988, %v6988
    %v6993 = vmul.f32 %v6989, %v6989
    %v6994 = vmul.f32 %v6990, %v6990
    %v6995 = vmul.f32 %v6991, %v6991
    %v6996 = vadd.f32 %v6992, %v6993
    %6997 = vadd.xlane.f32.xlu0 %v6996
    %v6998 = vpop.xlane.xlu0 %6997
    %v6999 = vadd.f32 %v6994, %v6995
    %7000 = vadd.xlane.f32.xlu0 %v6999
    %v7001 = vpop.xlane.xlu0 %7000
    %v7002 = vmul.f32 %v6998, %v2929
    %v7003 = vmul.f32 %v7001, %v2929
    %v7004 = vadd.f32 %v7002, 1e-05
    %v7005 = vadd.f32 %v7003, 1e-05
    %v7006 = vrsqrt.pop %v7004
    %v7007 = vrsqrt.pop %v7005
    %v7008 = vmul.f32 %v6988, %v7006
    %v7009 = vmul.f32 %v6989, %v7006
    %v7010 = vmul.f32 %v6990, %v7007
    %v7011 = vmul.f32 %v6991, %v7007
    %v7013 = vlaneseq
    %v7014 = vshrl.u32 %v7013, 7
    %v7015 = vsub.s32 0, %v7014
    %v7016 = vrot.slane %v6977, %v7015
    %v7017 = vlaneseq
    %v7018 = vshrl.u32 %v7017, 7
    %v7019 = vsub.s32 1, %v7018
    %v7020 = vrot.slane %v6977, %v7019
    %v7023 = vmul.f32 %v7008, %v7016
    %v7024 = vmul.f32 %v7009, %v7020
    %v7025 = vmul.f32 %v7010, %v7016
    %v7026 = vmul.f32 %v7011, %v7020
    %v7028 = vlaneseq
    %v7029 = vshrl.u32 %v7028, 7
    %v7030 = vsub.s32 0, %v7029
    %v7031 = vrot.slane %v6979, %v7030
    %v7032 = vlaneseq
    %v7033 = vshrl.u32 %v7032, 7
    %v7034 = vsub.s32 1, %v7033
    %v7035 = vrot.slane %v6979, %v7034
    %v7038 = vadd.f32 %v7023, %v7031
    %v7039 = vadd.f32 %v7024, %v7035
    %v7040 = vadd.f32 %v7025, %v7031
    %v7041 = vadd.f32 %v7026, %v7035
    %v7046 = vrot.slane %v7040, 7
    %vm7047 = vcmask 1041409
    %v7048 = vsel %vm7047, %v7046, %v7038
    %v7049 = vrot.slane %v7041, 7
    %v7050 = vsel %vm7047, %v7049, %v7039
    %v7053 = vrot.slane %v7038, 1
    %v7054 = vsel %vm7047, %v7040, %v7053
    %v7055 = vrot.slane %v7039, 1
    %v7056 = vsel %vm7047, %v7041, %v7055
    %v7059 = vrot.slane %v7038, 2
    %v7060 = vrot.slane %v7040, 1
    %v7061 = vsel %vm7047, %v7060, %v7059
    %v7062 = vrot.slane %v7039, 2
    %v7063 = vrot.slane %v7041, 1
    %v7064 = vsel %vm7047, %v7063, %v7062
    %v7067 = vrot.slane %v7038, 3
    %v7068 = vrot.slane %v7040, 2
    %v7069 = vsel %vm7047, %v7068, %v7067
    %v7070 = vrot.slane %v7039, 3
    %v7071 = vrot.slane %v7041, 2
    %v7072 = vsel %vm7047, %v7071, %v7070
    %v7075 = vrot.slane %v7038, 4
    %v7076 = vrot.slane %v7040, 3
    %v7077 = vsel %vm7047, %v7076, %v7075
    %v7078 = vrot.slane %v7039, 4
    %v7079 = vrot.slane %v7041, 3
    %v7080 = vsel %vm7047, %v7079, %v7078
    %v7083 = vrot.slane %v7038, 5
    %v7084 = vrot.slane %v7040, 4
    %v7085 = vsel %vm7047, %v7084, %v7083
    %v7086 = vrot.slane %v7039, 5
    %v7087 = vrot.slane %v7041, 4
    %v7088 = vsel %vm7047, %v7087, %v7086
    %v7091 = vrot.slane %v7038, 6
    %v7092 = vrot.slane %v7040, 5
    %v7093 = vsel %vm7047, %v7092, %v7091
    %v7094 = vrot.slane %v7039, 6
    %v7095 = vrot.slane %v7041, 5
    %v7096 = vsel %vm7047, %v7095, %v7094
    %v7099 = vrot.slane %v7038, 7
    %v7100 = vrot.slane %v7040, 6
    %v7101 = vsel %vm7047, %v7100, %v7099
    %v7102 = vrot.slane %v7039, 7
    %v7103 = vrot.slane %v7041, 6
    %v7104 = vsel %vm7047, %v7103, %v7102
    %v7107 = vpack.c.bf16 %v7048, %v7048
    %v7108 = vpack.c.bf16 %v7050, %v7050
    %v7109 = vpack.c.bf16 %v7054, %v7054
    %v7110 = vpack.c.bf16 %v7056, %v7056
    %v7111 = vpack.c.bf16 %v7061, %v7061
    %v7112 = vpack.c.bf16 %v7064, %v7064
    %v7113 = vpack.c.bf16 %v7069, %v7069
    %v7114 = vpack.c.bf16 %v7072, %v7072
    %v7115 = vpack.c.bf16 %v7077, %v7077
    %v7116 = vpack.c.bf16 %v7080, %v7080
    %v7117 = vpack.c.bf16 %v7085, %v7085
    %v7118 = vpack.c.bf16 %v7088, %v7088
    %v7119 = vpack.c.bf16 %v7093, %v7093
    %v7120 = vpack.c.bf16 %v7096, %v7096
    %v7121 = vpack.c.bf16 %v7101, %v7101
    %v7122 = vpack.c.bf16 %v7104, %v7104
    %v7123 = vld [vmem:[%s14] sm:$0xf]
    %v7124 = vld [vmem:[%s14 + $0x4] sm:$0xf]
    %v7125 = vld [vmem:[%s14 + $0x8] sm:$0xf]
    %v7126 = vld [vmem:[%s14 + $0xc] sm:$0xf]
    %v7127 = vld [vmem:[%s14 + $0x10] sm:$0xf]
    %v7128 = vld [vmem:[%s14 + $0x14] sm:$0xf]
    %v7129 = vld [vmem:[%s14 + $0x18] sm:$0xf]
    %v7130 = vld [vmem:[%s14 + $0x1c] sm:$0xf]
    %v7131 = vld [vmem:[%s14 + $0x20] sm:$0xf]
    %v7132 = vld [vmem:[%s14 + $0x24] sm:$0xf]
    %v7133 = vld [vmem:[%s14 + $0x28] sm:$0xf]
    %v7134 = vld [vmem:[%s14 + $0x2c] sm:$0xf]
    %v7135 = vld [vmem:[%s14 + $0x30] sm:$0xf]
    %v7136 = vld [vmem:[%s14 + $0x34] sm:$0xf]
    %v7137 = vld [vmem:[%s14 + $0x38] sm:$0xf]
    %v7138 = vld [vmem:[%s14 + $0x3c] sm:$0xf]
    %v7139 = vld [vmem:[%s14 + $0x40] sm:$0xf]
    %v7140 = vld [vmem:[%s14 + $0x44] sm:$0xf]
    %v7141 = vld [vmem:[%s14 + $0x48] sm:$0xf]
    %v7142 = vld [vmem:[%s14 + $0x4c] sm:$0xf]
    %v7143 = vld [vmem:[%s14 + $0x50] sm:$0xf]
    %v7144 = vld [vmem:[%s14 + $0x54] sm:$0xf]
    %v7145 = vld [vmem:[%s14 + $0x58] sm:$0xf]
    %v7146 = vld [vmem:[%s14 + $0x5c] sm:$0xf]
    %v7147 = vld [vmem:[%s14 + $0x60] sm:$0xf]
    %v7148 = vld [vmem:[%s14 + $0x64] sm:$0xf]
    %v7149 = vld [vmem:[%s14 + $0x68] sm:$0xf]
    %v7150 = vld [vmem:[%s14 + $0x6c] sm:$0xf]
    %v7151 = vld [vmem:[%s14 + $0x70] sm:$0xf]
    %v7152 = vld [vmem:[%s14 + $0x74] sm:$0xf]
    %v7153 = vld [vmem:[%s14 + $0x78] sm:$0xf]
    %v7154 = vld [vmem:[%s14 + $0x7c] sm:$0xf]
    %v7155 = vld [vmem:[%s14 + $0x80] sm:$0xf]
    %v7156 = vld [vmem:[%s14 + $0x84] sm:$0xf]
    %v7157 = vld [vmem:[%s14 + $0x88] sm:$0xf]
    %v7158 = vld [vmem:[%s14 + $0x8c] sm:$0xf]
    %v7159 = vld [vmem:[%s14 + $0x90] sm:$0xf]
    %v7160 = vld [vmem:[%s14 + $0x94] sm:$0xf]
    %v7161 = vld [vmem:[%s14 + $0x98] sm:$0xf]
    %v7162 = vld [vmem:[%s14 + $0x9c] sm:$0xf]
    %v7163 = vld [vmem:[%s14 + $0xa0] sm:$0xf]
    %v7164 = vld [vmem:[%s14 + $0xa4] sm:$0xf]
    %v7165 = vld [vmem:[%s14 + $0xa8] sm:$0xf]
    %v7166 = vld [vmem:[%s14 + $0xac] sm:$0xf]
    %v7167 = vld [vmem:[%s14 + $0xb0] sm:$0xf]
    %v7168 = vld [vmem:[%s14 + $0xb4] sm:$0xf]
    %v7169 = vld [vmem:[%s14 + $0xb8] sm:$0xf]
    %v7170 = vld [vmem:[%s14 + $0xbc] sm:$0xf]
    %v7171 = vld [vmem:[%s14 + $0xc0] sm:$0xf]
    %v7172 = vld [vmem:[%s14 + $0xc4] sm:$0xf]
    %v7173 = vld [vmem:[%s14 + $0xc8] sm:$0xf]
    %v7174 = vld [vmem:[%s14 + $0xcc] sm:$0xf]
    %v7175 = vld [vmem:[%s14 + $0xd0] sm:$0xf]
    %v7176 = vld [vmem:[%s14 + $0xd4] sm:$0xf]
    %v7177 = vld [vmem:[%s14 + $0xd8] sm:$0xf]
    %v7178 = vld [vmem:[%s14 + $0xdc] sm:$0xf]
    %v7179 = vld [vmem:[%s14 + $0xe0] sm:$0xf]
    %v7180 = vld [vmem:[%s14 + $0xe4] sm:$0xf]
    %v7181 = vld [vmem:[%s14 + $0xe8] sm:$0xf]
    %v7182 = vld [vmem:[%s14 + $0xec] sm:$0xf]
    %v7183 = vld [vmem:[%s14 + $0xf0] sm:$0xf]
    %v7184 = vld [vmem:[%s14 + $0xf4] sm:$0xf]
    %v7185 = vld [vmem:[%s14 + $0xf8] sm:$0xf]
    %v7186 = vld [vmem:[%s14 + $0xfc] sm:$0xf]
    %v7187 = vld [vmem:[%s14 + $0x100] sm:$0xf]
    %v7188 = vld [vmem:[%s14 + $0x104] sm:$0xf]
    %v7189 = vld [vmem:[%s14 + $0x108] sm:$0xf]
    %v7190 = vld [vmem:[%s14 + $0x10c] sm:$0xf]
    %v7191 = vld [vmem:[%s14 + $0x110] sm:$0xf]
    %v7192 = vld [vmem:[%s14 + $0x114] sm:$0xf]
    %v7193 = vld [vmem:[%s14 + $0x118] sm:$0xf]
    %v7194 = vld [vmem:[%s14 + $0x11c] sm:$0xf]
    %v7195 = vld [vmem:[%s14 + $0x120] sm:$0xf]
    %v7196 = vld [vmem:[%s14 + $0x124] sm:$0xf]
    %v7197 = vld [vmem:[%s14 + $0x128] sm:$0xf]
    %v7198 = vld [vmem:[%s14 + $0x12c] sm:$0xf]
    %v7199 = vld [vmem:[%s14 + $0x130] sm:$0xf]
    %v7200 = vld [vmem:[%s14 + $0x134] sm:$0xf]
    %v7201 = vld [vmem:[%s14 + $0x138] sm:$0xf]
    %v7202 = vld [vmem:[%s14 + $0x13c] sm:$0xf]
    %v7203 = vld [vmem:[%s14 + $0x140] sm:$0xf]
    %v7204 = vld [vmem:[%s14 + $0x144] sm:$0xf]
    %v7205 = vld [vmem:[%s14 + $0x148] sm:$0xf]
    %v7206 = vld [vmem:[%s14 + $0x14c] sm:$0xf]
    %v7207 = vld [vmem:[%s14 + $0x150] sm:$0xf]
    %v7208 = vld [vmem:[%s14 + $0x154] sm:$0xf]
    %v7209 = vld [vmem:[%s14 + $0x158] sm:$0xf]
    %v7210 = vld [vmem:[%s14 + $0x15c] sm:$0xf]
    %v7211 = vld [vmem:[%s14 + $0x160] sm:$0xf]
    %v7212 = vld [vmem:[%s14 + $0x164] sm:$0xf]
    %v7213 = vld [vmem:[%s14 + $0x168] sm:$0xf]
    %v7214 = vld [vmem:[%s14 + $0x16c] sm:$0xf]
    %v7215 = vld [vmem:[%s14 + $0x170] sm:$0xf]
    %v7216 = vld [vmem:[%s14 + $0x174] sm:$0xf]
    %v7217 = vld [vmem:[%s14 + $0x178] sm:$0xf]
    %v7218 = vld [vmem:[%s14 + $0x17c] sm:$0xf]
    %v7219 = vld [vmem:[%s14 + $0x180] sm:$0xf]
    %v7220 = vld [vmem:[%s14 + $0x184] sm:$0xf]
    %v7221 = vld [vmem:[%s14 + $0x188] sm:$0xf]
    %v7222 = vld [vmem:[%s14 + $0x18c] sm:$0xf]
    %v7223 = vld [vmem:[%s14 + $0x190] sm:$0xf]
    %v7224 = vld [vmem:[%s14 + $0x194] sm:$0xf]
    %v7225 = vld [vmem:[%s14 + $0x198] sm:$0xf]
    %v7226 = vld [vmem:[%s14 + $0x19c] sm:$0xf]
    %v7227 = vld [vmem:[%s14 + $0x1a0] sm:$0xf]
    %v7228 = vld [vmem:[%s14 + $0x1a4] sm:$0xf]
    %v7229 = vld [vmem:[%s14 + $0x1a8] sm:$0xf]
    %v7230 = vld [vmem:[%s14 + $0x1ac] sm:$0xf]
    %v7231 = vld [vmem:[%s14 + $0x1b0] sm:$0xf]
    %v7232 = vld [vmem:[%s14 + $0x1b4] sm:$0xf]
    %v7233 = vld [vmem:[%s14 + $0x1b8] sm:$0xf]
    %v7234 = vld [vmem:[%s14 + $0x1bc] sm:$0xf]
    %v7235 = vld [vmem:[%s14 + $0x1c0] sm:$0xf]
    %v7236 = vld [vmem:[%s14 + $0x1c4] sm:$0xf]
    %v7237 = vld [vmem:[%s14 + $0x1c8] sm:$0xf]
    %v7238 = vld [vmem:[%s14 + $0x1cc] sm:$0xf]
    %v7239 = vld [vmem:[%s14 + $0x1d0] sm:$0xf]
    %v7240 = vld [vmem:[%s14 + $0x1d4] sm:$0xf]
    %v7241 = vld [vmem:[%s14 + $0x1d8] sm:$0xf]
    %v7242 = vld [vmem:[%s14 + $0x1dc] sm:$0xf]
    %v7243 = vld [vmem:[%s14 + $0x1e0] sm:$0xf]
    %v7244 = vld [vmem:[%s14 + $0x1e4] sm:$0xf]
    %v7245 = vld [vmem:[%s14 + $0x1e8] sm:$0xf]
    %v7246 = vld [vmem:[%s14 + $0x1ec] sm:$0xf]
    %v7247 = vld [vmem:[%s14 + $0x1f0] sm:$0xf]
    %v7248 = vld [vmem:[%s14 + $0x1f4] sm:$0xf]
    %v7249 = vld [vmem:[%s14 + $0x1f8] sm:$0xf]
    %v7250 = vld [vmem:[%s14 + $0x1fc] sm:$0xf]
    %v7251 = vld [vmem:[%s14 + $0x200] sm:$0xf]
    %v7252 = vld [vmem:[%s14 + $0x204] sm:$0xf]
    %v7253 = vld [vmem:[%s14 + $0x208] sm:$0xf]
    %v7254 = vld [vmem:[%s14 + $0x20c] sm:$0xf]
    %v7255 = vld [vmem:[%s14 + $0x210] sm:$0xf]
    %v7256 = vld [vmem:[%s14 + $0x214] sm:$0xf]
    %v7257 = vld [vmem:[%s14 + $0x218] sm:$0xf]
    %v7258 = vld [vmem:[%s14 + $0x21c] sm:$0xf]
    %v7259 = vld [vmem:[%s14 + $0x220] sm:$0xf]
    %v7260 = vld [vmem:[%s14 + $0x224] sm:$0xf]
    %v7261 = vld [vmem:[%s14 + $0x228] sm:$0xf]
    %v7262 = vld [vmem:[%s14 + $0x22c] sm:$0xf]
    %v7263 = vld [vmem:[%s14 + $0x230] sm:$0xf]
    %v7264 = vld [vmem:[%s14 + $0x234] sm:$0xf]
    %v7265 = vld [vmem:[%s14 + $0x238] sm:$0xf]
    %v7266 = vld [vmem:[%s14 + $0x23c] sm:$0xf]
    %v7267 = vld [vmem:[%s14 + $0x240] sm:$0xf]
    %v7268 = vld [vmem:[%s14 + $0x244] sm:$0xf]
    %v7269 = vld [vmem:[%s14 + $0x248] sm:$0xf]
    %v7270 = vld [vmem:[%s14 + $0x24c] sm:$0xf]
    %v7271 = vld [vmem:[%s14 + $0x250] sm:$0xf]
    %v7272 = vld [vmem:[%s14 + $0x254] sm:$0xf]
    %v7273 = vld [vmem:[%s14 + $0x258] sm:$0xf]
    %v7274 = vld [vmem:[%s14 + $0x25c] sm:$0xf]
    %v7275 = vld [vmem:[%s14 + $0x260] sm:$0xf]
    %v7276 = vld [vmem:[%s14 + $0x264] sm:$0xf]
    %v7277 = vld [vmem:[%s14 + $0x268] sm:$0xf]
    %v7278 = vld [vmem:[%s14 + $0x26c] sm:$0xf]
    %v7279 = vld [vmem:[%s14 + $0x270] sm:$0xf]
    %v7280 = vld [vmem:[%s14 + $0x274] sm:$0xf]
    %v7281 = vld [vmem:[%s14 + $0x278] sm:$0xf]
    %v7282 = vld [vmem:[%s14 + $0x27c] sm:$0xf]
    %v7283 = vld [vmem:[%s14 + $0x280] sm:$0xf]
    %v7284 = vld [vmem:[%s14 + $0x284] sm:$0xf]
    %v7285 = vld [vmem:[%s14 + $0x288] sm:$0xf]
    %v7286 = vld [vmem:[%s14 + $0x28c] sm:$0xf]
    %v7287 = vld [vmem:[%s14 + $0x290] sm:$0xf]
    %v7288 = vld [vmem:[%s14 + $0x294] sm:$0xf]
    %v7289 = vld [vmem:[%s14 + $0x298] sm:$0xf]
    %v7290 = vld [vmem:[%s14 + $0x29c] sm:$0xf]
    %v7291 = vld [vmem:[%s14 + $0x2a0] sm:$0xf]
    %v7292 = vld [vmem:[%s14 + $0x2a4] sm:$0xf]
    %v7293 = vld [vmem:[%s14 + $0x2a8] sm:$0xf]
    %v7294 = vld [vmem:[%s14 + $0x2ac] sm:$0xf]
    %v7295 = vld [vmem:[%s14 + $0x2b0] sm:$0xf]
    %v7296 = vld [vmem:[%s14 + $0x2b4] sm:$0xf]
    %v7297 = vld [vmem:[%s14 + $0x2b8] sm:$0xf]
    %v7298 = vld [vmem:[%s14 + $0x2bc] sm:$0xf]
    %v7299 = vld [vmem:[%s14 + $0x2c0] sm:$0xf]
    %v7300 = vld [vmem:[%s14 + $0x2c4] sm:$0xf]
    %v7301 = vld [vmem:[%s14 + $0x2c8] sm:$0xf]
    %v7302 = vld [vmem:[%s14 + $0x2cc] sm:$0xf]
    %v7303 = vld [vmem:[%s14 + $0x2d0] sm:$0xf]
    %v7304 = vld [vmem:[%s14 + $0x2d4] sm:$0xf]
    %v7305 = vld [vmem:[%s14 + $0x2d8] sm:$0xf]
    %v7306 = vld [vmem:[%s14 + $0x2dc] sm:$0xf]
    %v7307 = vld [vmem:[%s14 + $0x2e0] sm:$0xf]
    %v7308 = vld [vmem:[%s14 + $0x2e4] sm:$0xf]
    %v7309 = vld [vmem:[%s14 + $0x2e8] sm:$0xf]
    %v7310 = vld [vmem:[%s14 + $0x2ec] sm:$0xf]
    %v7311 = vld [vmem:[%s14 + $0x2f0] sm:$0xf]
    %v7312 = vld [vmem:[%s14 + $0x2f4] sm:$0xf]
    %v7313 = vld [vmem:[%s14 + $0x2f8] sm:$0xf]
    %v7314 = vld [vmem:[%s14 + $0x2fc] sm:$0xf]
    %v7315 = vld [vmem:[%s14 + $0x300] sm:$0xf]
    %v7316 = vld [vmem:[%s14 + $0x304] sm:$0xf]
    %v7317 = vld [vmem:[%s14 + $0x308] sm:$0xf]
    %v7318 = vld [vmem:[%s14 + $0x30c] sm:$0xf]
    %v7319 = vld [vmem:[%s14 + $0x310] sm:$0xf]
    %v7320 = vld [vmem:[%s14 + $0x314] sm:$0xf]
    %v7321 = vld [vmem:[%s14 + $0x318] sm:$0xf]
    %v7322 = vld [vmem:[%s14 + $0x31c] sm:$0xf]
    %v7323 = vld [vmem:[%s14 + $0x320] sm:$0xf]
    %v7324 = vld [vmem:[%s14 + $0x324] sm:$0xf]
    %v7325 = vld [vmem:[%s14 + $0x328] sm:$0xf]
    %v7326 = vld [vmem:[%s14 + $0x32c] sm:$0xf]
    %v7327 = vld [vmem:[%s14 + $0x330] sm:$0xf]
    %v7328 = vld [vmem:[%s14 + $0x334] sm:$0xf]
    %v7329 = vld [vmem:[%s14 + $0x338] sm:$0xf]
    %v7330 = vld [vmem:[%s14 + $0x33c] sm:$0xf]
    %v7331 = vld [vmem:[%s14 + $0x340] sm:$0xf]
    %v7332 = vld [vmem:[%s14 + $0x344] sm:$0xf]
    %v7333 = vld [vmem:[%s14 + $0x348] sm:$0xf]
    %v7334 = vld [vmem:[%s14 + $0x34c] sm:$0xf]
    %v7335 = vld [vmem:[%s14 + $0x350] sm:$0xf]
    %v7336 = vld [vmem:[%s14 + $0x354] sm:$0xf]
    %v7337 = vld [vmem:[%s14 + $0x358] sm:$0xf]
    %v7338 = vld [vmem:[%s14 + $0x35c] sm:$0xf]
    %v7339 = vld [vmem:[%s14 + $0x360] sm:$0xf]
    %v7340 = vld [vmem:[%s14 + $0x364] sm:$0xf]
    %v7341 = vld [vmem:[%s14 + $0x368] sm:$0xf]
    %v7342 = vld [vmem:[%s14 + $0x36c] sm:$0xf]
    %v7343 = vld [vmem:[%s14 + $0x370] sm:$0xf]
    %v7344 = vld [vmem:[%s14 + $0x374] sm:$0xf]
    %v7345 = vld [vmem:[%s14 + $0x378] sm:$0xf]
    %v7346 = vld [vmem:[%s14 + $0x37c] sm:$0xf]
    %v7347 = vld [vmem:[%s14 + $0x380] sm:$0xf]
    %v7348 = vld [vmem:[%s14 + $0x384] sm:$0xf]
    %v7349 = vld [vmem:[%s14 + $0x388] sm:$0xf]
    %v7350 = vld [vmem:[%s14 + $0x38c] sm:$0xf]
    %v7351 = vld [vmem:[%s14 + $0x390] sm:$0xf]
    %v7352 = vld [vmem:[%s14 + $0x394] sm:$0xf]
    %v7353 = vld [vmem:[%s14 + $0x398] sm:$0xf]
    %v7354 = vld [vmem:[%s14 + $0x39c] sm:$0xf]
    %v7355 = vld [vmem:[%s14 + $0x3a0] sm:$0xf]
    %v7356 = vld [vmem:[%s14 + $0x3a4] sm:$0xf]
    %v7357 = vld [vmem:[%s14 + $0x3a8] sm:$0xf]
    %v7358 = vld [vmem:[%s14 + $0x3ac] sm:$0xf]
    %v7359 = vld [vmem:[%s14 + $0x3b0] sm:$0xf]
    %v7360 = vld [vmem:[%s14 + $0x3b4] sm:$0xf]
    %v7361 = vld [vmem:[%s14 + $0x3b8] sm:$0xf]
    %v7362 = vld [vmem:[%s14 + $0x3bc] sm:$0xf]
    %v7363 = vld [vmem:[%s14 + $0x3c0] sm:$0xf]
    %v7364 = vld [vmem:[%s14 + $0x3c4] sm:$0xf]
    %v7365 = vld [vmem:[%s14 + $0x3c8] sm:$0xf]
    %v7366 = vld [vmem:[%s14 + $0x3cc] sm:$0xf]
    %v7367 = vld [vmem:[%s14 + $0x3d0] sm:$0xf]
    %v7368 = vld [vmem:[%s14 + $0x3d4] sm:$0xf]
    %v7369 = vld [vmem:[%s14 + $0x3d8] sm:$0xf]
    %v7370 = vld [vmem:[%s14 + $0x3dc] sm:$0xf]
    %v7371 = vld [vmem:[%s14 + $0x3e0] sm:$0xf]
    %v7372 = vld [vmem:[%s14 + $0x3e4] sm:$0xf]
    %v7373 = vld [vmem:[%s14 + $0x3e8] sm:$0xf]
    %v7374 = vld [vmem:[%s14 + $0x3ec] sm:$0xf]
    %v7375 = vld [vmem:[%s14 + $0x3f0] sm:$0xf]
    %v7376 = vld [vmem:[%s14 + $0x3f4] sm:$0xf]
    %v7377 = vld [vmem:[%s14 + $0x3f8] sm:$0xf]
    %v7378 = vld [vmem:[%s14 + $0x3fc] sm:$0xf]
    %v7379 = vld [vmem:[%s15] sm:$0x1]
    %v7381 = vlaneseq
    %v7382 = vshrl.u32 %v7381, 7
    %v7383 = vsub.s32 0, %v7382
    %v7384 = vrot.slane %v7379, %v7383
    %v7642 = vunpack.c.l.b16 %v7123
    %v7643 = vunpack.c.l.b16 %v7124
    %v7644 = vunpack.c.l.b16 %v7125
    %v7645 = vunpack.c.l.b16 %v7126
    %v7646 = vunpack.c.l.b16 %v7127
    %v7647 = vunpack.c.l.b16 %v7128
    %v7648 = vunpack.c.l.b16 %v7129
    %v7649 = vunpack.c.l.b16 %v7130
    %v7650 = vunpack.c.l.b16 %v7131
    %v7651 = vunpack.c.l.b16 %v7132
    %v7652 = vunpack.c.l.b16 %v7133
    %v7653 = vunpack.c.l.b16 %v7134
    %v7654 = vunpack.c.l.b16 %v7135
    %v7655 = vunpack.c.l.b16 %v7136
    %v7656 = vunpack.c.l.b16 %v7137
    %v7657 = vunpack.c.l.b16 %v7138
    %v7658 = vunpack.c.l.b16 %v7139
    %v7659 = vunpack.c.l.b16 %v7140
    %v7660 = vunpack.c.l.b16 %v7141
    %v7661 = vunpack.c.l.b16 %v7142
    %v7662 = vunpack.c.l.b16 %v7143
    %v7663 = vunpack.c.l.b16 %v7144
    %v7664 = vunpack.c.l.b16 %v7145
    %v7665 = vunpack.c.l.b16 %v7146
    %v7666 = vunpack.c.l.b16 %v7147
    %v7667 = vunpack.c.l.b16 %v7148
    %v7668 = vunpack.c.l.b16 %v7149
    %v7669 = vunpack.c.l.b16 %v7150
    %v7670 = vunpack.c.l.b16 %v7151
    %v7671 = vunpack.c.l.b16 %v7152
    %v7672 = vunpack.c.l.b16 %v7153
    %v7673 = vunpack.c.l.b16 %v7154
    %v7674 = vunpack.c.l.b16 %v7155
    %v7675 = vunpack.c.l.b16 %v7156
    %v7676 = vunpack.c.l.b16 %v7157
    %v7677 = vunpack.c.l.b16 %v7158
    %v7678 = vunpack.c.l.b16 %v7159
    %v7679 = vunpack.c.l.b16 %v7160
    %v7680 = vunpack.c.l.b16 %v7161
    %v7681 = vunpack.c.l.b16 %v7162
    %v7682 = vunpack.c.l.b16 %v7163
    %v7683 = vunpack.c.l.b16 %v7164
    %v7684 = vunpack.c.l.b16 %v7165
    %v7685 = vunpack.c.l.b16 %v7166
    %v7686 = vunpack.c.l.b16 %v7167
    %v7687 = vunpack.c.l.b16 %v7168
    %v7688 = vunpack.c.l.b16 %v7169
    %v7689 = vunpack.c.l.b16 %v7170
    %v7690 = vunpack.c.l.b16 %v7171
    %v7691 = vunpack.c.l.b16 %v7172
    %v7692 = vunpack.c.l.b16 %v7173
    %v7693 = vunpack.c.l.b16 %v7174
    %v7694 = vunpack.c.l.b16 %v7175
    %v7695 = vunpack.c.l.b16 %v7176
    %v7696 = vunpack.c.l.b16 %v7177
    %v7697 = vunpack.c.l.b16 %v7178
    %v7698 = vunpack.c.l.b16 %v7179
    %v7699 = vunpack.c.l.b16 %v7180
    %v7700 = vunpack.c.l.b16 %v7181
    %v7701 = vunpack.c.l.b16 %v7182
    %v7702 = vunpack.c.l.b16 %v7183
    %v7703 = vunpack.c.l.b16 %v7184
    %v7704 = vunpack.c.l.b16 %v7185
    %v7705 = vunpack.c.l.b16 %v7186
    %v7706 = vunpack.c.l.b16 %v7187
    %v7707 = vunpack.c.l.b16 %v7188
    %v7708 = vunpack.c.l.b16 %v7189
    %v7709 = vunpack.c.l.b16 %v7190
    %v7710 = vunpack.c.l.b16 %v7191
    %v7711 = vunpack.c.l.b16 %v7192
    %v7712 = vunpack.c.l.b16 %v7193
    %v7713 = vunpack.c.l.b16 %v7194
    %v7714 = vunpack.c.l.b16 %v7195
    %v7715 = vunpack.c.l.b16 %v7196
    %v7716 = vunpack.c.l.b16 %v7197
    %v7717 = vunpack.c.l.b16 %v7198
    %v7718 = vunpack.c.l.b16 %v7199
    %v7719 = vunpack.c.l.b16 %v7200
    %v7720 = vunpack.c.l.b16 %v7201
    %v7721 = vunpack.c.l.b16 %v7202
    %v7722 = vunpack.c.l.b16 %v7203
    %v7723 = vunpack.c.l.b16 %v7204
    %v7724 = vunpack.c.l.b16 %v7205
    %v7725 = vunpack.c.l.b16 %v7206
    %v7726 = vunpack.c.l.b16 %v7207
    %v7727 = vunpack.c.l.b16 %v7208
    %v7728 = vunpack.c.l.b16 %v7209
    %v7729 = vunpack.c.l.b16 %v7210
    %v7730 = vunpack.c.l.b16 %v7211
    %v7731 = vunpack.c.l.b16 %v7212
    %v7732 = vunpack.c.l.b16 %v7213
    %v7733 = vunpack.c.l.b16 %v7214
    %v7734 = vunpack.c.l.b16 %v7215
    %v7735 = vunpack.c.l.b16 %v7216
    %v7736 = vunpack.c.l.b16 %v7217
    %v7737 = vunpack.c.l.b16 %v7218
    %v7738 = vunpack.c.l.b16 %v7219
    %v7739 = vunpack.c.l.b16 %v7220
    %v7740 = vunpack.c.l.b16 %v7221
    %v7741 = vunpack.c.l.b16 %v7222
    %v7742 = vunpack.c.l.b16 %v7223
    %v7743 = vunpack.c.l.b16 %v7224
    %v7744 = vunpack.c.l.b16 %v7225
    %v7745 = vunpack.c.l.b16 %v7226
    %v7746 = vunpack.c.l.b16 %v7227
    %v7747 = vunpack.c.l.b16 %v7228
    %v7748 = vunpack.c.l.b16 %v7229
    %v7749 = vunpack.c.l.b16 %v7230
    %v7750 = vunpack.c.l.b16 %v7231
    %v7751 = vunpack.c.l.b16 %v7232
    %v7752 = vunpack.c.l.b16 %v7233
    %v7753 = vunpack.c.l.b16 %v7234
    %v7754 = vunpack.c.l.b16 %v7235
    %v7755 = vunpack.c.l.b16 %v7236
    %v7756 = vunpack.c.l.b16 %v7237
    %v7757 = vunpack.c.l.b16 %v7238
    %v7758 = vunpack.c.l.b16 %v7239
    %v7759 = vunpack.c.l.b16 %v7240
    %v7760 = vunpack.c.l.b16 %v7241
    %v7761 = vunpack.c.l.b16 %v7242
    %v7762 = vunpack.c.l.b16 %v7243
    %v7763 = vunpack.c.l.b16 %v7244
    %v7764 = vunpack.c.l.b16 %v7245
    %v7765 = vunpack.c.l.b16 %v7246
    %v7766 = vunpack.c.l.b16 %v7247
    %v7767 = vunpack.c.l.b16 %v7248
    %v7768 = vunpack.c.l.b16 %v7249
    %v7769 = vunpack.c.l.b16 %v7250
    %v7770 = vunpack.c.l.b16 %v7251
    %v7771 = vunpack.c.l.b16 %v7252
    %v7772 = vunpack.c.l.b16 %v7253
    %v7773 = vunpack.c.l.b16 %v7254
    %v7774 = vunpack.c.l.b16 %v7255
    %v7775 = vunpack.c.l.b16 %v7256
    %v7776 = vunpack.c.l.b16 %v7257
    %v7777 = vunpack.c.l.b16 %v7258
    %v7778 = vunpack.c.l.b16 %v7259
    %v7779 = vunpack.c.l.b16 %v7260
    %v7780 = vunpack.c.l.b16 %v7261
    %v7781 = vunpack.c.l.b16 %v7262
    %v7782 = vunpack.c.l.b16 %v7263
    %v7783 = vunpack.c.l.b16 %v7264
    %v7784 = vunpack.c.l.b16 %v7265
    %v7785 = vunpack.c.l.b16 %v7266
    %v7786 = vunpack.c.l.b16 %v7267
    %v7787 = vunpack.c.l.b16 %v7268
    %v7788 = vunpack.c.l.b16 %v7269
    %v7789 = vunpack.c.l.b16 %v7270
    %v7790 = vunpack.c.l.b16 %v7271
    %v7791 = vunpack.c.l.b16 %v7272
    %v7792 = vunpack.c.l.b16 %v7273
    %v7793 = vunpack.c.l.b16 %v7274
    %v7794 = vunpack.c.l.b16 %v7275
    %v7795 = vunpack.c.l.b16 %v7276
    %v7796 = vunpack.c.l.b16 %v7277
    %v7797 = vunpack.c.l.b16 %v7278
    %v7798 = vunpack.c.l.b16 %v7279
    %v7799 = vunpack.c.l.b16 %v7280
    %v7800 = vunpack.c.l.b16 %v7281
    %v7801 = vunpack.c.l.b16 %v7282
    %v7802 = vunpack.c.l.b16 %v7283
    %v7803 = vunpack.c.l.b16 %v7284
    %v7804 = vunpack.c.l.b16 %v7285
    %v7805 = vunpack.c.l.b16 %v7286
    %v7806 = vunpack.c.l.b16 %v7287
    %v7807 = vunpack.c.l.b16 %v7288
    %v7808 = vunpack.c.l.b16 %v7289
    %v7809 = vunpack.c.l.b16 %v7290
    %v7810 = vunpack.c.l.b16 %v7291
    %v7811 = vunpack.c.l.b16 %v7292
    %v7812 = vunpack.c.l.b16 %v7293
    %v7813 = vunpack.c.l.b16 %v7294
    %v7814 = vunpack.c.l.b16 %v7295
    %v7815 = vunpack.c.l.b16 %v7296
    %v7816 = vunpack.c.l.b16 %v7297
    %v7817 = vunpack.c.l.b16 %v7298
    %v7818 = vunpack.c.l.b16 %v7299
    %v7819 = vunpack.c.l.b16 %v7300
    %v7820 = vunpack.c.l.b16 %v7301
    %v7821 = vunpack.c.l.b16 %v7302
    %v7822 = vunpack.c.l.b16 %v7303
    %v7823 = vunpack.c.l.b16 %v7304
    %v7824 = vunpack.c.l.b16 %v7305
    %v7825 = vunpack.c.l.b16 %v7306
    %v7826 = vunpack.c.l.b16 %v7307
    %v7827 = vunpack.c.l.b16 %v7308
    %v7828 = vunpack.c.l.b16 %v7309
    %v7829 = vunpack.c.l.b16 %v7310
    %v7830 = vunpack.c.l.b16 %v7311
    %v7831 = vunpack.c.l.b16 %v7312
    %v7832 = vunpack.c.l.b16 %v7313
    %v7833 = vunpack.c.l.b16 %v7314
    %v7834 = vunpack.c.l.b16 %v7315
    %v7835 = vunpack.c.l.b16 %v7316
    %v7836 = vunpack.c.l.b16 %v7317
    %v7837 = vunpack.c.l.b16 %v7318
    %v7838 = vunpack.c.l.b16 %v7319
    %v7839 = vunpack.c.l.b16 %v7320
    %v7840 = vunpack.c.l.b16 %v7321
    %v7841 = vunpack.c.l.b16 %v7322
    %v7842 = vunpack.c.l.b16 %v7323
    %v7843 = vunpack.c.l.b16 %v7324
    %v7844 = vunpack.c.l.b16 %v7325
    %v7845 = vunpack.c.l.b16 %v7326
    %v7846 = vunpack.c.l.b16 %v7327
    %v7847 = vunpack.c.l.b16 %v7328
    %v7848 = vunpack.c.l.b16 %v7329
    %v7849 = vunpack.c.l.b16 %v7330
    %v7850 = vunpack.c.l.b16 %v7331
    %v7851 = vunpack.c.l.b16 %v7332
    %v7852 = vunpack.c.l.b16 %v7333
    %v7853 = vunpack.c.l.b16 %v7334
    %v7854 = vunpack.c.l.b16 %v7335
    %v7855 = vunpack.c.l.b16 %v7336
    %v7856 = vunpack.c.l.b16 %v7337
    %v7857 = vunpack.c.l.b16 %v7338
    %v7858 = vunpack.c.l.b16 %v7339
    %v7859 = vunpack.c.l.b16 %v7340
    %v7860 = vunpack.c.l.b16 %v7341
    %v7861 = vunpack.c.l.b16 %v7342
    %v7862 = vunpack.c.l.b16 %v7343
    %v7863 = vunpack.c.l.b16 %v7344
    %v7864 = vunpack.c.l.b16 %v7345
    %v7865 = vunpack.c.l.b16 %v7346
    %v7866 = vunpack.c.l.b16 %v7347
    %v7867 = vunpack.c.l.b16 %v7348
    %v7868 = vunpack.c.l.b16 %v7349
    %v7869 = vunpack.c.l.b16 %v7350
    %v7870 = vunpack.c.l.b16 %v7351
    %v7871 = vunpack.c.l.b16 %v7352
    %v7872 = vunpack.c.l.b16 %v7353
    %v7873 = vunpack.c.l.b16 %v7354
    %v7874 = vunpack.c.l.b16 %v7355
    %v7875 = vunpack.c.l.b16 %v7356
    %v7876 = vunpack.c.l.b16 %v7357
    %v7877 = vunpack.c.l.b16 %v7358
    %v7878 = vunpack.c.l.b16 %v7359
    %v7879 = vunpack.c.l.b16 %v7360
    %v7880 = vunpack.c.l.b16 %v7361
    %v7881 = vunpack.c.l.b16 %v7362
    %v7882 = vunpack.c.l.b16 %v7363
    %v7883 = vunpack.c.l.b16 %v7364
    %v7884 = vunpack.c.l.b16 %v7365
    %v7885 = vunpack.c.l.b16 %v7366
    %v7886 = vunpack.c.l.b16 %v7367
    %v7887 = vunpack.c.l.b16 %v7368
    %v7888 = vunpack.c.l.b16 %v7369
    %v7889 = vunpack.c.l.b16 %v7370
    %v7890 = vunpack.c.l.b16 %v7371
    %v7891 = vunpack.c.l.b16 %v7372
    %v7892 = vunpack.c.l.b16 %v7373
    %v7893 = vunpack.c.l.b16 %v7374
    %v7894 = vunpack.c.l.b16 %v7375
    %v7895 = vunpack.c.l.b16 %v7376
    %v7896 = vunpack.c.l.b16 %v7377
    %v7897 = vunpack.c.l.b16 %v7378
    %v7898 = vpack.c.b16 %v7643, %v7642
    %v7899 = vpack.c.b16 %v7645, %v7644
    %v7900 = vpack.c.b16 %v7647, %v7646
    %v7901 = vpack.c.b16 %v7649, %v7648
    %v7902 = vpack.c.b16 %v7651, %v7650
    %v7903 = vpack.c.b16 %v7653, %v7652
    %v7904 = vpack.c.b16 %v7655, %v7654
    %v7905 = vpack.c.b16 %v7657, %v7656
    %v7906 = vpack.c.b16 %v7659, %v7658
    %v7907 = vpack.c.b16 %v7661, %v7660
    %v7908 = vpack.c.b16 %v7663, %v7662
    %v7909 = vpack.c.b16 %v7665, %v7664
    %v7910 = vpack.c.b16 %v7667, %v7666
    %v7911 = vpack.c.b16 %v7669, %v7668
    %v7912 = vpack.c.b16 %v7671, %v7670
    %v7913 = vpack.c.b16 %v7673, %v7672
    %v7914 = vpack.c.b16 %v7675, %v7674
    %v7915 = vpack.c.b16 %v7677, %v7676
    %v7916 = vpack.c.b16 %v7679, %v7678
    %v7917 = vpack.c.b16 %v7681, %v7680
    %v7918 = vpack.c.b16 %v7683, %v7682
    %v7919 = vpack.c.b16 %v7685, %v7684
    %v7920 = vpack.c.b16 %v7687, %v7686
    %v7921 = vpack.c.b16 %v7689, %v7688
    %v7922 = vpack.c.b16 %v7691, %v7690
    %v7923 = vpack.c.b16 %v7693, %v7692
    %v7924 = vpack.c.b16 %v7695, %v7694
    %v7925 = vpack.c.b16 %v7697, %v7696
    %v7926 = vpack.c.b16 %v7699, %v7698
    %v7927 = vpack.c.b16 %v7701, %v7700
    %v7928 = vpack.c.b16 %v7703, %v7702
    %v7929 = vpack.c.b16 %v7705, %v7704
    %v7930 = vpack.c.b16 %v7707, %v7706
    %v7931 = vpack.c.b16 %v7709, %v7708
    %v7932 = vpack.c.b16 %v7711, %v7710
    %v7933 = vpack.c.b16 %v7713, %v7712
    %v7934 = vpack.c.b16 %v7715, %v7714
    %v7935 = vpack.c.b16 %v7717, %v7716
    %v7936 = vpack.c.b16 %v7719, %v7718
    %v7937 = vpack.c.b16 %v7721, %v7720
    %v7938 = vpack.c.b16 %v7723, %v7722
    %v7939 = vpack.c.b16 %v7725, %v7724
    %v7940 = vpack.c.b16 %v7727, %v7726
    %v7941 = vpack.c.b16 %v7729, %v7728
    %v7942 = vpack.c.b16 %v7731, %v7730
    %v7943 = vpack.c.b16 %v7733, %v7732
    %v7944 = vpack.c.b16 %v7735, %v7734
    %v7945 = vpack.c.b16 %v7737, %v7736
    %v7946 = vpack.c.b16 %v7739, %v7738
    %v7947 = vpack.c.b16 %v7741, %v7740
    %v7948 = vpack.c.b16 %v7743, %v7742
    %v7949 = vpack.c.b16 %v7745, %v7744
    %v7950 = vpack.c.b16 %v7747, %v7746
    %v7951 = vpack.c.b16 %v7749, %v7748
    %v7952 = vpack.c.b16 %v7751, %v7750
    %v7953 = vpack.c.b16 %v7753, %v7752
    %v7954 = vpack.c.b16 %v7755, %v7754
    %v7955 = vpack.c.b16 %v7757, %v7756
    %v7956 = vpack.c.b16 %v7759, %v7758
    %v7957 = vpack.c.b16 %v7761, %v7760
    %v7958 = vpack.c.b16 %v7763, %v7762
    %v7959 = vpack.c.b16 %v7765, %v7764
    %v7960 = vpack.c.b16 %v7767, %v7766
    %v7961 = vpack.c.b16 %v7769, %v7768
    %v7962 = vpack.c.b16 %v7771, %v7770
    %v7963 = vpack.c.b16 %v7773, %v7772
    %v7964 = vpack.c.b16 %v7775, %v7774
    %v7965 = vpack.c.b16 %v7777, %v7776
    %v7966 = vpack.c.b16 %v7779, %v7778
    %v7967 = vpack.c.b16 %v7781, %v7780
    %v7968 = vpack.c.b16 %v7783, %v7782
    %v7969 = vpack.c.b16 %v7785, %v7784
    %v7970 = vpack.c.b16 %v7787, %v7786
    %v7971 = vpack.c.b16 %v7789, %v7788
    %v7972 = vpack.c.b16 %v7791, %v7790
    %v7973 = vpack.c.b16 %v7793, %v7792
    %v7974 = vpack.c.b16 %v7795, %v7794
    %v7975 = vpack.c.b16 %v7797, %v7796
    %v7976 = vpack.c.b16 %v7799, %v7798
    %v7977 = vpack.c.b16 %v7801, %v7800
    %v7978 = vpack.c.b16 %v7803, %v7802
    %v7979 = vpack.c.b16 %v7805, %v7804
    %v7980 = vpack.c.b16 %v7807, %v7806
    %v7981 = vpack.c.b16 %v7809, %v7808
    %v7982 = vpack.c.b16 %v7811, %v7810
    %v7983 = vpack.c.b16 %v7813, %v7812
    %v7984 = vpack.c.b16 %v7815, %v7814
    %v7985 = vpack.c.b16 %v7817, %v7816
    %v7986 = vpack.c.b16 %v7819, %v7818
    %v7987 = vpack.c.b16 %v7821, %v7820
    %v7988 = vpack.c.b16 %v7823, %v7822
    %v7989 = vpack.c.b16 %v7825, %v7824
    %v7990 = vpack.c.b16 %v7827, %v7826
    %v7991 = vpack.c.b16 %v7829, %v7828
    %v7992 = vpack.c.b16 %v7831, %v7830
    %v7993 = vpack.c.b16 %v7833, %v7832
    %v7994 = vpack.c.b16 %v7835, %v7834
    %v7995 = vpack.c.b16 %v7837, %v7836
    %v7996 = vpack.c.b16 %v7839, %v7838
    %v7997 = vpack.c.b16 %v7841, %v7840
    %v7998 = vpack.c.b16 %v7843, %v7842
    %v7999 = vpack.c.b16 %v7845, %v7844
    %v8000 = vpack.c.b16 %v7847, %v7846
    %v8001 = vpack.c.b16 %v7849, %v7848
    %v8002 = vpack.c.b16 %v7851, %v7850
    %v8003 = vpack.c.b16 %v7853, %v7852
    %v8004 = vpack.c.b16 %v7855, %v7854
    %v8005 = vpack.c.b16 %v7857, %v7856
    %v8006 = vpack.c.b16 %v7859, %v7858
    %v8007 = vpack.c.b16 %v7861, %v7860
    %v8008 = vpack.c.b16 %v7863, %v7862
    %v8009 = vpack.c.b16 %v7865, %v7864
    %v8010 = vpack.c.b16 %v7867, %v7866
    %v8011 = vpack.c.b16 %v7869, %v7868
    %v8012 = vpack.c.b16 %v7871, %v7870
    %v8013 = vpack.c.b16 %v7873, %v7872
    %v8014 = vpack.c.b16 %v7875, %v7874
    %v8015 = vpack.c.b16 %v7877, %v7876
    %v8016 = vpack.c.b16 %v7879, %v7878
    %v8017 = vpack.c.b16 %v7881, %v7880
    %v8018 = vpack.c.b16 %v7883, %v7882
    %v8019 = vpack.c.b16 %v7885, %v7884
    %v8020 = vpack.c.b16 %v7887, %v7886
    %v8021 = vpack.c.b16 %v7889, %v7888
    %v8022 = vpack.c.b16 %v7891, %v7890
    %v8023 = vpack.c.b16 %v7893, %v7892
    %v8024 = vpack.c.b16 %v7895, %v7894
    %v8025 = vpack.c.b16 %v7897, %v7896
    %8154 = vmatprep.subr.bf16.mxu0 0
    %8155 = vmatpush1.bf16.msra.mxu0 %v7898
    %8156 = vmatprep.subr.bf16.mxu0 0
    %8157 = vmatpush1.bf16.msra.mxu0 %v7899
    %8158 = vmatprep.subr.bf16.mxu0 0
    %8159 = vmatpush1.bf16.msra.mxu0 %v7900
    %8160 = vmatprep.subr.bf16.mxu0 0
    %8161 = vmatpush1.bf16.msra.mxu0 %v7901
    %8162 = vmatprep.subr.bf16.mxu0 0
    %8163 = vmatpush1.bf16.msra.mxu0 %v7902
    %8164 = vmatprep.subr.bf16.mxu0 0
    %8165 = vmatpush1.bf16.msra.mxu0 %v7903
    %8166 = vmatprep.subr.bf16.mxu0 0
    %8167 = vmatpush1.bf16.msra.mxu0 %v7904
    %8168 = vmatprep.subr.bf16.mxu0 0
    %8169 = vmatpush1.bf16.msra.mxu0 %v7905
    %8170 = vmatprep.subr.bf16.mxu0 0
    %8171 = vmatpush1.bf16.msra.mxu0 %v7906
    %8172 = vmatprep.subr.bf16.mxu0 0
    %8173 = vmatpush1.bf16.msra.mxu0 %v7907
    %8174 = vmatprep.subr.bf16.mxu0 0
    %8175 = vmatpush1.bf16.msra.mxu0 %v7908
    %8176 = vmatprep.subr.bf16.mxu0 0
    %8177 = vmatpush1.bf16.msra.mxu0 %v7909
    %8178 = vmatprep.subr.bf16.mxu0 0
    %8179 = vmatpush1.bf16.msra.mxu0 %v7910
    %8180 = vmatprep.subr.bf16.mxu0 0
    %8181 = vmatpush1.bf16.msra.mxu0 %v7911
    %8182 = vmatprep.subr.bf16.mxu0 0
    %8183 = vmatpush1.bf16.msra.mxu0 %v7912
    %8184 = vmatprep.subr.bf16.mxu0 0
    %8185 = vmatpush1.bf16.msra.mxu0 %v7913
    %8186 = vmatprep.mubr.bf16.mxu0 %v7108
    %8187 = vmatmul.mubr.bf16.gmra.mrb[0].mxu0 %v7107
    %v8188 = vpop.f32.mrb[0].mxu0
    %v8189 = vadd.f32 %v7384, %v8188
    %v8190 = vpop.f32.mrb[0].mxu0
    %v8191 = vpop.f32.mrb[0].mxu0
    %v8192 = vpop.f32.mrb[0].mxu0
    %8193 = vdwg.mxu0
    %8194 = vmatprep.subr.bf16.mxu0 0
    %8195 = vmatpush1.bf16.msra.mxu0 %v7914
    %8196 = vmatprep.subr.bf16.mxu0 0
    %8197 = vmatpush1.bf16.msra.mxu0 %v7915
    %8198 = vmatprep.subr.bf16.mxu0 0
    %8199 = vmatpush1.bf16.msra.mxu0 %v7916
    %8200 = vmatprep.subr.bf16.mxu0 0
    %8201 = vmatpush1.bf16.msra.mxu0 %v7917
    %8202 = vmatprep.subr.bf16.mxu0 0
    %8203 = vmatpush1.bf16.msra.mxu0 %v7918
    %8204 = vmatprep.subr.bf16.mxu0 0
    %8205 = vmatpush1.bf16.msra.mxu0 %v7919
    %8206 = vmatprep.subr.bf16.mxu0 0
    %8207 = vmatpush1.bf16.msra.mxu0 %v7920
    %8208 = vmatprep.subr.bf16.mxu0 0
    %8209 = vmatpush1.bf16.msra.mxu0 %v7921
    %8210 = vmatprep.subr.bf16.mxu0 0
    %8211 = vmatpush1.bf16.msra.mxu0 %v7922
    %8212 = vmatprep.subr.bf16.mxu0 0
    %8213 = vmatpush1.bf16.msra.mxu0 %v7923
    %8214 = vmatprep.subr.bf16.mxu0 0
    %8215 = vmatpush1.bf16.msra.mxu0 %v7924
    %8216 = vmatprep.subr.bf16.mxu0 0
    %8217 = vmatpush1.bf16.msra.mxu0 %v7925
    %8218 = vmatprep.subr.bf16.mxu0 0
    %8219 = vmatpush1.bf16.msra.mxu0 %v7926
    %8220 = vmatprep.subr.bf16.mxu0 0
    %8221 = vmatpush1.bf16.msra.mxu0 %v7927
    %8222 = vmatprep.subr.bf16.mxu0 0
    %8223 = vmatpush1.bf16.msra.mxu0 %v7928
    %8224 = vmatprep.subr.bf16.mxu0 0
    %8225 = vmatpush1.bf16.msra.mxu0 %v7929
    %8226 = vmatprep.mubr.bf16.mxu0 %v7110
    %8227 = vmatmul.mubr.bf16.gmra.mrb[0].mxu0 %v7109
    %v8228 = vpop.f32.mrb[0].mxu0
    %v8229 = vadd.f32 %v8189, %v8228
    %v8230 = vpop.f32.mrb[0].mxu0
    %v8231 = vpop.f32.mrb[0].mxu0
    %v8232 = vpop.f32.mrb[0].mxu0
    %8233 = vdwg.mxu0
    %8234 = vmatprep.subr.bf16.mxu0 0
    %8235 = vmatpush1.bf16.msra.mxu0 %v7930
    %8236 = vmatprep.subr.bf16.mxu0 0
    %8237 = vmatpush1.bf16.msra.mxu0 %v7931
    %8238 = vmatprep.subr.bf16.mxu0 0
    %8239 = vmatpush1.bf16.msra.mxu0 %v7932
    %8240 = vmatprep.subr.bf16.mxu0 0
    %8241 = vmatpush1.bf16.msra.mxu0 %v7933
    %8242 = vmatprep.subr.bf16.mxu0 0
    %8243 = vmatpush1.bf16.msra.mxu0 %v7934
    %8244 = vmatprep.subr.bf16.mxu0 0
    %8245 = vmatpush1.bf16.msra.mxu0 %v7935
    %8246 = vmatprep.subr.bf16.mxu0 0
    %8247 = vmatpush1.bf16.msra.mxu0 %v7936
    %8248 = vmatprep.subr.bf16.mxu0 0
    %8249 = vmatpush1.bf16.msra.mxu0 %v7937
    %8250 = vmatprep.subr.bf16.mxu0 0
    %8251 = vmatpush1.bf16.msra.mxu0 %v7938
    %8252 = vmatprep.subr.bf16.mxu0 0
    %8253 = vmatpush1.bf16.msra.mxu0 %v7939
    %8254 = vmatprep.subr.bf16.mxu0 0
    %8255 = vmatpush1.bf16.msra.mxu0 %v7940
    %8256 = vmatprep.subr.bf16.mxu0 0
    %8257 = vmatpush1.bf16.msra.mxu0 %v7941
    %8258 = vmatprep.subr.bf16.mxu0 0
    %8259 = vmatpush1.bf16.msra.mxu0 %v7942
    %8260 = vmatprep.subr.bf16.mxu0 0
    %8261 = vmatpush1.bf16.msra.mxu0 %v7943
    %8262 = vmatprep.subr.bf16.mxu0 0
    %8263 = vmatpush1.bf16.msra.mxu0 %v7944
    %8264 = vmatprep.subr.bf16.mxu0 0
    %8265 = vmatpush1.bf16.msra.mxu0 %v7945
    %8266 = vmatprep.mubr.bf16.mxu0 %v7112
    %8267 = vmatmul.mubr.bf16.gmra.mrb[0].mxu0 %v7111
    %v8268 = vpop.f32.mrb[0].mxu0
    %v8269 = vadd.f32 %v8229, %v8268
    %v8270 = vpop.f32.mrb[0].mxu0
    %v8271 = vpop.f32.mrb[0].mxu0
    %v8272 = vpop.f32.mrb[0].mxu0
    %8273 = vdwg.mxu0
    %8274 = vmatprep.subr.bf16.mxu0 0
    %8275 = vmatpush1.bf16.msra.mxu0 %v7946
    %8276 = vmatprep.subr.bf16.mxu0 0
    %8277 = vmatpush1.bf16.msra.mxu0 %v7947
    %8278 = vmatprep.subr.bf16.mxu0 0
    %8279 = vmatpush1.bf16.msra.mxu0 %v7948
    %8280 = vmatprep.subr.bf16.mxu0 0
    %8281 = vmatpush1.bf16.msra.mxu0 %v7949
    %8282 = vmatprep.subr.bf16.mxu0 0
    %8283 = vmatpush1.bf16.msra.mxu0 %v7950
    %8284 = vmatprep.subr.bf16.mxu0 0
    %8285 = vmatpush1.bf16.msra.mxu0 %v7951
    %8286 = vmatprep.subr.bf16.mxu0 0
    %8287 = vmatpush1.bf16.msra.mxu0 %v7952
    %8288 = vmatprep.subr.bf16.mxu0 0
    %8289 = vmatpush1.bf16.msra.mxu0 %v7953
    %8290 = vmatprep.subr.bf16.mxu0 0
    %8291 = vmatpush1.bf16.msra.mxu0 %v7954
    %8292 = vmatprep.subr.bf16.mxu0 0
    %8293 = vmatpush1.bf16.msra.mxu0 %v7955
    %8294 = vmatprep.subr.bf16.mxu0 0
    %8295 = vmatpush1.bf16.msra.mxu0 %v7956
    %8296 = vmatprep.subr.bf16.mxu0 0
    %8297 = vmatpush1.bf16.msra.mxu0 %v7957
    %8298 = vmatprep.subr.bf16.mxu0 0
    %8299 = vmatpush1.bf16.msra.mxu0 %v7958
    %8300 = vmatprep.subr.bf16.mxu0 0
    %8301 = vmatpush1.bf16.msra.mxu0 %v7959
    %8302 = vmatprep.subr.bf16.mxu0 0
    %8303 = vmatpush1.bf16.msra.mxu0 %v7960
    %8304 = vmatprep.subr.bf16.mxu0 0
    %8305 = vmatpush1.bf16.msra.mxu0 %v7961
    %8306 = vmatprep.mubr.bf16.mxu0 %v7114
    %8307 = vmatmul.mubr.bf16.gmra.mrb[0].mxu0 %v7113
    %v8308 = vpop.f32.mrb[0].mxu0
    %v8309 = vadd.f32 %v8269, %v8308
    %v8310 = vpop.f32.mrb[0].mxu0
    %v8311 = vpop.f32.mrb[0].mxu0
    %v8312 = vpop.f32.mrb[0].mxu0
    %8313 = vdwg.mxu0
    %8314 = vmatprep.subr.bf16.mxu0 0
    %8315 = vmatpush1.bf16.msra.mxu0 %v7962
    %8316 = vmatprep.subr.bf16.mxu0 0
    %8317 = vmatpush1.bf16.msra.mxu0 %v7963
    %8318 = vmatprep.subr.bf16.mxu0 0
    %8319 = vmatpush1.bf16.msra.mxu0 %v7964
    %8320 = vmatprep.subr.bf16.mxu0 0
    %8321 = vmatpush1.bf16.msra.mxu0 %v7965
    %8322 = vmatprep.subr.bf16.mxu0 0
    %8323 = vmatpush1.bf16.msra.mxu0 %v7966
    %8324 = vmatprep.subr.bf16.mxu0 0
    %8325 = vmatpush1.bf16.msra.mxu0 %v7967
    %8326 = vmatprep.subr.bf16.mxu0 0
    %8327 = vmatpush1.bf16.msra.mxu0 %v7968
    %8328 = vmatprep.subr.bf16.mxu0 0
    %8329 = vmatpush1.bf16.msra.mxu0 %v7969
    %8330 = vmatprep.subr.bf16.mxu0 0
    %8331 = vmatpush1.bf16.msra.mxu0 %v7970
    %8332 = vmatprep.subr.bf16.mxu0 0
    %8333 = vmatpush1.bf16.msra.mxu0 %v7971
    %8334 = vmatprep.subr.bf16.mxu0 0
    %8335 = vmatpush1.bf16.msra.mxu0 %v7972
    %8336 = vmatprep.subr.bf16.mxu0 0
    %8337 = vmatpush1.bf16.msra.mxu0 %v7973
    %8338 = vmatprep.subr.bf16.mxu0 0
    %8339 = vmatpush1.bf16.msra.mxu0 %v7974
    %8340 = vmatprep.subr.bf16.mxu0 0
    %8341 = vmatpush1.bf16.msra.mxu0 %v7975
    %8342 = vmatprep.subr.bf16.mxu0 0
    %8343 = vmatpush1.bf16.msra.mxu0 %v7976
    %8344 = vmatprep.subr.bf16.mxu0 0
    %8345 = vmatpush1.bf16.msra.mxu0 %v7977
    %8346 = vmatprep.mubr.bf16.mxu0 %v7116
    %8347 = vmatmul.mubr.bf16.gmra.mrb[0].mxu0 %v7115
    %v8348 = vpop.f32.mrb[0].mxu0
    %v8349 = vadd.f32 %v8309, %v8348
    %v8350 = vpop.f32.mrb[0].mxu0
    %v8351 = vpop.f32.mrb[0].mxu0
    %v8352 = vpop.f32.mrb[0].mxu0
    %8353 = vdwg.mxu0
    %8354 = vmatprep.subr.bf16.mxu0 0
    %8355 = vmatpush1.bf16.msra.mxu0 %v7978
    %8356 = vmatprep.subr.bf16.mxu0 0
    %8357 = vmatpush1.bf16.msra.mxu0 %v7979
    %8358 = vmatprep.subr.bf16.mxu0 0
    %8359 = vmatpush1.bf16.msra.mxu0 %v7980
    %8360 = vmatprep.subr.bf16.mxu0 0
    %8361 = vmatpush1.bf16.msra.mxu0 %v7981
    %8362 = vmatprep.subr.bf16.mxu0 0
    %8363 = vmatpush1.bf16.msra.mxu0 %v7982
    %8364 = vmatprep.subr.bf16.mxu0 0
    %8365 = vmatpush1.bf16.msra.mxu0 %v7983
    %8366 = vmatprep.subr.bf16.mxu0 0
    %8367 = vmatpush1.bf16.msra.mxu0 %v7984
    %8368 = vmatprep.subr.bf16.mxu0 0
    %8369 = vmatpush1.bf16.msra.mxu0 %v7985
    %8370 = vmatprep.subr.bf16.mxu0 0
    %8371 = vmatpush1.bf16.msra.mxu0 %v7986
    %8372 = vmatprep.subr.bf16.mxu0 0
    %8373 = vmatpush1.bf16.msra.mxu0 %v7987
    %8374 = vmatprep.subr.bf16.mxu0 0
    %8375 = vmatpush1.bf16.msra.mxu0 %v7988
    %8376 = vmatprep.subr.bf16.mxu0 0
    %8377 = vmatpush1.bf16.msra.mxu0 %v7989
    %8378 = vmatprep.subr.bf16.mxu0 0
    %8379 = vmatpush1.bf16.msra.mxu0 %v7990
    %8380 = vmatprep.subr.bf16.mxu0 0
    %8381 = vmatpush1.bf16.msra.mxu0 %v7991
    %8382 = vmatprep.subr.bf16.mxu0 0
    %8383 = vmatpush1.bf16.msra.mxu0 %v7992
    %8384 = vmatprep.subr.bf16.mxu0 0
    %8385 = vmatpush1.bf16.msra.mxu0 %v7993
    %8386 = vmatprep.mubr.bf16.mxu0 %v7118
    %8387 = vmatmul.mubr.bf16.gmra.mrb[0].mxu0 %v7117
    %v8388 = vpop.f32.mrb[0].mxu0
    %v8389 = vadd.f32 %v8349, %v8388
    %v8390 = vpop.f32.mrb[0].mxu0
    %v8391 = vpop.f32.mrb[0].mxu0
    %v8392 = vpop.f32.mrb[0].mxu0
    %8393 = vdwg.mxu0
    %8394 = vmatprep.subr.bf16.mxu0 0
    %8395 = vmatpush1.bf16.msra.mxu0 %v7994
    %8396 = vmatprep.subr.bf16.mxu0 0
    %8397 = vmatpush1.bf16.msra.mxu0 %v7995
    %8398 = vmatprep.subr.bf16.mxu0 0
    %8399 = vmatpush1.bf16.msra.mxu0 %v7996
    %8400 = vmatprep.subr.bf16.mxu0 0
    %8401 = vmatpush1.bf16.msra.mxu0 %v7997
    %8402 = vmatprep.subr.bf16.mxu0 0
    %8403 = vmatpush1.bf16.msra.mxu0 %v7998
    %8404 = vmatprep.subr.bf16.mxu0 0
    %8405 = vmatpush1.bf16.msra.mxu0 %v7999
    %8406 = vmatprep.subr.bf16.mxu0 0
    %8407 = vmatpush1.bf16.msra.mxu0 %v8000
    %8408 = vmatprep.subr.bf16.mxu0 0
    %8409 = vmatpush1.bf16.msra.mxu0 %v8001
    %8410 = vmatprep.subr.bf16.mxu0 0
    %8411 = vmatpush1.bf16.msra.mxu0 %v8002
    %8412 = vmatprep.subr.bf16.mxu0 0
    %8413 = vmatpush1.bf16.msra.mxu0 %v8003
    %8414 = vmatprep.subr.bf16.mxu0 0
    %8415 = vmatpush1.bf16.msra.mxu0 %v8004
    %8416 = vmatprep.subr.bf16.mxu0 0
    %8417 = vmatpush1.bf16.msra.mxu0 %v8005
    %8418 = vmatprep.subr.bf16.mxu0 0
    %8419 = vmatpush1.bf16.msra.mxu0 %v8006
    %8420 = vmatprep.subr.bf16.mxu0 0
    %8421 = vmatpush1.bf16.msra.mxu0 %v8007
    %8422 = vmatprep.subr.bf16.mxu0 0
    %8423 = vmatpush1.bf16.msra.mxu0 %v8008
    %8424 = vmatprep.subr.bf16.mxu0 0
    %8425 = vmatpush1.bf16.msra.mxu0 %v8009
    %8426 = vmatprep.mubr.bf16.mxu0 %v7120
    %8427 = vmatmul.mubr.bf16.gmra.mrb[0].mxu0 %v7119
    %v8428 = vpop.f32.mrb[0].mxu0
    %v8429 = vadd.f32 %v8389, %v8428
    %v8430 = vpop.f32.mrb[0].mxu0
    %v8431 = vpop.f32.mrb[0].mxu0
    %v8432 = vpop.f32.mrb[0].mxu0
    %8433 = vdwg.mxu0
    %8434 = vmatprep.subr.bf16.mxu0 0
    %8435 = vmatpush1.bf16.msra.mxu0 %v8010
    %8436 = vmatprep.subr.bf16.mxu0 0
    %8437 = vmatpush1.bf16.msra.mxu0 %v8011
    %8438 = vmatprep.subr.bf16.mxu0 0
    %8439 = vmatpush1.bf16.msra.mxu0 %v8012
    %8440 = vmatprep.subr.bf16.mxu0 0
    %8441 = vmatpush1.bf16.msra.mxu0 %v8013
    %8442 = vmatprep.subr.bf16.mxu0 0
    %8443 = vmatpush1.bf16.msra.mxu0 %v8014
    %8444 = vmatprep.subr.bf16.mxu0 0
    %8445 = vmatpush1.bf16.msra.mxu0 %v8015
    %8446 = vmatprep.subr.bf16.mxu0 0
    %8447 = vmatpush1.bf16.msra.mxu0 %v8016
    %8448 = vmatprep.subr.bf16.mxu0 0
    %8449 = vmatpush1.bf16.msra.mxu0 %v8017
    %8450 = vmatprep.subr.bf16.mxu0 0
    %8451 = vmatpush1.bf16.msra.mxu0 %v8018
    %8452 = vmatprep.subr.bf16.mxu0 0
    %8453 = vmatpush1.bf16.msra.mxu0 %v8019
    %8454 = vmatprep.subr.bf16.mxu0 0
    %8455 = vmatpush1.bf16.msra.mxu0 %v8020
    %8456 = vmatprep.subr.bf16.mxu0 0
    %8457 = vmatpush1.bf16.msra.mxu0 %v8021
    %8458 = vmatprep.subr.bf16.mxu0 0
    %8459 = vmatpush1.bf16.msra.mxu0 %v8022
    %8460 = vmatprep.subr.bf16.mxu0 0
    %8461 = vmatpush1.bf16.msra.mxu0 %v8023
    %8462 = vmatprep.subr.bf16.mxu0 0
    %8463 = vmatpush1.bf16.msra.mxu0 %v8024
    %8464 = vmatprep.subr.bf16.mxu0 0
    %8465 = vmatpush1.bf16.msra.mxu0 %v8025
    %8466 = vmatprep.mubr.bf16.mxu0 %v7122
    %8467 = vmatmul.mubr.bf16.gmra.mrb[0].mxu0 %v7121
    %v8468 = vpop.f32.mrb[0].mxu0
    %v8469 = vadd.f32 %v8429, %v8468
    %v8470 = vpop.f32.mrb[0].mxu0
    %v8471 = vpop.f32.mrb[0].mxu0
    %v8472 = vpop.f32.mrb[0].mxu0
    %8473 = vdwg.mxu0
    %vm8474 = vcmask 1041408
    %v8475 = vsel %vm8474, %v8469, 0.0
    %v8476 = vrot.slane %v8475, 4
    %v8477 = vadd.f32 %v8475, %v8476
    %v8478 = vrot.slane %v8477, 2
    %v8479 = vadd.f32 %v8477, %v8478
    %v8480 = vrot.slane %v8479, 1
    %v8481 = vadd.f32 %v8479, %v8480
    %v8482 = vrcp.pop 2.0
    %v8483 = vmul.f32 %v8481, %v8482
    %v8484 = vsub.f32 %v8469, %v8483
    %v8485 = vmul.f32 %v8484, %v8484
    %v8486 = vsel %vm8474, %v8485, 0.0
    %v8487 = vrot.slane %v8486, 4
    %v8488 = vadd.f32 %v8486, %v8487
    %v8489 = vrot.slane %v8488, 2
    %v8490 = vadd.f32 %v8488, %v8489
    %v8491 = vrot.slane %v8490, 1
    %v8492 = vadd.f32 %v8490, %v8491
    %v8493 = vmul.f32 %v8492, %v8482
    %v8494 = vadd.f32 %v8493, 1e-05
    %v8495 = vrsqrt.pop %v8494
    %v8496 = vmul.f32 %v8484, %v8495
    %v8497 = vld [vmem:[%s16] sm:$0x1]
    %v8499 = vlaneseq
    %v8500 = vshrl.u32 %v8499, 7
    %v8501 = vsub.s32 0, %v8500
    %v8502 = vrot.slane %v8497, %v8501
    %v8504 = vmul.f32 %v8496, %v8502
    %v8505 = vld [vmem:[%s17] sm:$0x1]
    %v8507 = vlaneseq
    %v8508 = vshrl.u32 %v8507, 7
    %v8509 = vsub.s32 0, %v8508
    %v8510 = vrot.slane %v8505, %v8509
    %v8512 = vadd.f32 %v8504, %v8510
    %v8513 = vpack.c.bf16 %v8512, %v8512
    %v8514 = vld [vmem:[%s18] sm:$0xf]
    %v8515 = vld [vmem:[%s18 + $0x4] sm:$0xf]
    %v8516 = vld [vmem:[%s18 + $0x8] sm:$0xf]
    %v8517 = vld [vmem:[%s18 + $0xc] sm:$0xf]
    %v8518 = vld [vmem:[%s18 + $0x10] sm:$0xf]
    %v8519 = vld [vmem:[%s18 + $0x14] sm:$0xf]
    %v8520 = vld [vmem:[%s18 + $0x18] sm:$0xf]
    %v8521 = vld [vmem:[%s18 + $0x1c] sm:$0xf]
    %v8522 = vld [vmem:[%s18 + $0x20] sm:$0xf]
    %v8523 = vld [vmem:[%s18 + $0x24] sm:$0xf]
    %v8524 = vld [vmem:[%s18 + $0x28] sm:$0xf]
    %v8525 = vld [vmem:[%s18 + $0x2c] sm:$0xf]
    %v8526 = vld [vmem:[%s18 + $0x30] sm:$0xf]
    %v8527 = vld [vmem:[%s18 + $0x34] sm:$0xf]
    %v8528 = vld [vmem:[%s18 + $0x38] sm:$0xf]
    %v8529 = vld [vmem:[%s18 + $0x3c] sm:$0xf]
    %v8530 = vld [vmem:[%s19] sm:$0x1]
    %v8532 = vlaneseq
    %v8533 = vshrl.u32 %v8532, 7
    %v8534 = vsub.s32 0, %v8533
    %v8535 = vrot.slane %v8530, %v8534
    %v8553 = vunpack.c.l.b16 %v8514
    %v8554 = vunpack.c.l.b16 %v8515
    %v8555 = vunpack.c.l.b16 %v8516
    %v8556 = vunpack.c.l.b16 %v8517
    %v8557 = vunpack.c.l.b16 %v8518
    %v8558 = vunpack.c.l.b16 %v8519
    %v8559 = vunpack.c.l.b16 %v8520
    %v8560 = vunpack.c.l.b16 %v8521
    %v8561 = vunpack.c.l.b16 %v8522
    %v8562 = vunpack.c.l.b16 %v8523
    %v8563 = vunpack.c.l.b16 %v8524
    %v8564 = vunpack.c.l.b16 %v8525
    %v8565 = vunpack.c.l.b16 %v8526
    %v8566 = vunpack.c.l.b16 %v8527
    %v8567 = vunpack.c.l.b16 %v8528
    %v8568 = vunpack.c.l.b16 %v8529
    %v8569 = vpack.c.b16 %v8554, %v8553
    %v8570 = vpack.c.b16 %v8556, %v8555
    %v8571 = vpack.c.b16 %v8558, %v8557
    %v8572 = vpack.c.b16 %v8560, %v8559
    %v8573 = vpack.c.b16 %v8562, %v8561
    %v8574 = vpack.c.b16 %v8564, %v8563
    %v8575 = vpack.c.b16 %v8566, %v8565
    %v8576 = vpack.c.b16 %v8568, %v8567
    %8585 = vmatprep.subr.bf16.mxu0 0
    %8586 = vmatpush1.bf16.msra.mxu0 %v8569
    %8587 = vmatprep.subr.bf16.mxu0 0
    %8588 = vmatpush1.bf16.msra.mxu0 %v8570
    %8589 = vmatprep.subr.bf16.mxu0 0
    %8590 = vmatpush1.bf16.msra.mxu0 %v8571
    %8591 = vmatprep.subr.bf16.mxu0 0
    %8592 = vmatpush1.bf16.msra.mxu0 %v8572
    %8593 = vmatprep.subr.bf16.mxu0 0
    %8594 = vmatpush1.bf16.msra.mxu0 %v8573
    %8595 = vmatprep.subr.bf16.mxu0 0
    %8596 = vmatpush1.bf16.msra.mxu0 %v8574
    %8597 = vmatprep.subr.bf16.mxu0 0
    %8598 = vmatpush1.bf16.msra.mxu0 %v8575
    %8599 = vmatprep.subr.bf16.mxu0 0
    %8600 = vmatpush1.bf16.msra.mxu0 %v8576
    %8601 = vmatprep.subr.bf16.mxu0 0
    %8602 = vmatpush1.bf16.msra.mxu0 0
    %8603 = vmatprep.subr.bf16.mxu0 0
    %8604 = vmatpush1.bf16.msra.mxu0 0
    %8605 = vmatprep.subr.bf16.mxu0 0
    %8606 = vmatpush1.bf16.msra.mxu0 0
    %8607 = vmatprep.subr.bf16.mxu0 0
    %8608 = vmatpush1.bf16.msra.mxu0 0
    %8609 = vmatprep.subr.bf16.mxu0 0
    %8610 = vmatpush1.bf16.msra.mxu0 0
    %8611 = vmatprep.subr.bf16.mxu0 0
    %8612 = vmatpush1.bf16.msra.mxu0 0
    %8613 = vmatprep.subr.bf16.mxu0 0
    %8614 = vmatpush1.bf16.msra.mxu0 0
    %8615 = vmatprep.subr.bf16.mxu0 0
    %8616 = vmatpush1.bf16.msra.mxu0 0
    %8617 = vmatprep.mubr.bf16.mxu0 0
    %8618 = vmatmul.mubr.bf16.gmra.mrb[0].mxu0 %v8513
    %v8619 = vpop.f32.mrb[0].mxu0
    %v8620 = vadd.f32 %v8535, %v8619
    %v8621 = vpop.f32.mrb[0].mxu0
    %v8622 = vpop.f32.mrb[0].mxu0
    %v8623 = vpop.f32.mrb[0].mxu0
    %8624 = vdwg.mxu0
    %v8625 = vtanh.pop %v8620
    %8626 = vst [vmem:[#allocation3] sm:$0x3] %v8625
    // Predicated region
    $region82: #{transformer_model_b1_forward.1} parent=1 // pred_check
      _
    $region83: #{transformer_model_b1_forward.1} parent=1 // pred_check_branch
      %8628 = sbr.rel (0) target = $region85
    $region84: #{transformer_model_b1_forward.1} parent=1 // pred_region
      %s8630 = ssub.s32 32, 32
      %8631 = vsyncadd [#allocation4], %s8630
      %s8633 = sshll.u32 [#allocation3], 4
      %s8634 = int_to_ptr.vmem [resolvable:$true] %s8633
      %8636 = dma.vmem_to_hbm [thread:$0]  %s8634, 32, %s20, [#allocation4]
    $region85: #{transformer_model_b1_forward.1} parent=1 // pred_fallthru
      _
    // Predicated region
    $region86: #{transformer_model_b1_forward.1} parent=1 // pred_check
      _
    $region87: #{transformer_model_b1_forward.1} parent=1 // pred_check_branch
      %8638 = sbr.rel (0) target = $region89
    $region88: #{transformer_model_b1_forward.1} parent=1 // pred_region
      %8639 = dma.done [#allocation4], 32
    $region89: #{transformer_model_b1_forward.1} parent=1 // pred_fallthru
      _
    %8640 = vsyncpa [#allocation4], 1

</llo_original>
